<compile_context>
chip_gen: v7x
topology: tpu7x:2x2x1
jax: 0.10.0
libtpu: 0.0.40
codegen_flags: <defaults>
</compile_context>

<pallas_src>
import jax
import jax.numpy as jnp
from jax.experimental import pallas as pl
from jax.experimental.pallas import tpu as pltpu


def _cdiv(a, b):
    return -(-a // b)


def _round_up(a, m):
    return _cdiv(a, m) * m


def _logreg_kernel(x_ref, wp_ref, b_ref, o_ref):
    # x : (tile_r, W) f32 -- W = P*F lanes, P samples packed per row
    # wp: (W, P)      f32 -- block-diagonal packed weight matrix
    # b : (1,)        f32 -- bias scalar in SMEM
    # o : (P, tile_r) f32 -- lane-dense output tile (batch on the lane axis)
    z = jnp.dot(x_ref[...], wp_ref[...], preferred_element_type=jnp.float32)
    # (tile_r, P) -> (P, tile_r): small XLU transpose of the *result* (not the
    # big x operand) so the store below is a dense, unmasked vst.
    zt = z.T + b_ref[0]
    o_ref[...] = jax.nn.sigmoid(zt)          # transcendental on the EUP slot


def logistic_regression(x, w, b, *, block_bytes=4 << 20, small_batch=4096):
    """x: (B, F) f32; w: (F, 1); b: (1,) -> (B, 1) probabilities."""
    B, F = x.shape
    x = x.astype(jnp.float32)
    w = jnp.asarray(w, jnp.float32).reshape(F, 1)
    b = jnp.asarray(b, jnp.float32).reshape(1)

    # Small-batch fast path (the actual Titanic case): one fused XLA op beats
    # the custom-call + pipeline-step overhead by an order of magnitude.
    if B < small_batch:
        return jax.nn.sigmoid(x @ w + b)

    # ---- pack P samples per (up to) 128-lane row: free row-major reshape ----
    P = max(1, 128 // F)
    W = P * F
    if B % P:
        # Only non-multiple-of-P batches pay this pad copy; the padded rows
        # produce sigmoid(bias) values that are sliced off below.
        x = jnp.pad(x, ((0, P - B % P), (0, 0)))
    Bp = x.shape[0]
    R = Bp // P
    xp = x.reshape(R, W)                          # bitcast reshape: no HBM pass

    # Block-diagonal packed weights: wp[p*F + f, p] = w[f]; (xp @ wp)[r, j]
    # is exactly <x[r*P + j, :], w>.
    wp = jnp.kron(jnp.eye(P, dtype=jnp.float32), w)          # (W, P)

    # ---- batch tiling: ~block_bytes of x per grid step, balanced tiles ----
    # tile_r is also the lane dim of the output tile, so keep it a multiple of
    # 128 (or equal to the full R) for dense stores.
    max_rows = max(128, (block_bytes // (W * 4)) // 128 * 128)
    if R <= max_rows:
        tile_r = R                                 # single full-extent block
    else:
        num_tiles = _cdiv(R, max_rows)
        tile_r = _round_up(_cdiv(R, num_tiles), 128)
    grid = (_cdiv(R, tile_r),)                     # ragged last block is clipped

    out = pl.pallas_call(
        _logreg_kernel,
        out_shape=jax.ShapeDtypeStruct((P, R), jnp.float32),
        grid=grid,
        in_specs=[
            pl.BlockSpec((tile_r, W), lambda i: (i, 0)),     # stream x tiles
            pl.BlockSpec((W, P), lambda i: (0, 0)),          # packed weights
            pl.BlockSpec(memory_space=pltpu.SMEM),           # bias scalar
        ],
        out_specs=pl.BlockSpec((P, tile_r), lambda i: (0, i)),  # lane-dense out
        compiler_params=pltpu.CompilerParams(
            dimension_semantics=("parallel",),   # v7x: shard batch across 2 TCs
            vmem_limit_bytes=32 << 20,           # safe on 64 MiB (v7x) parts
        ),
    )(xp, wp, b)

    # out[j, r] is the probability of sample r*P + j -> sample-major order.
    y = out.T.reshape(Bp, 1)
    return y[:B] if Bp != B else y


if __name__ == "__main__":
    key = jax.random.PRNGKey(0)
    kx1, kx2, kx3, kw, kb = jax.random.split(key, 5)

    n_features = 8
    bound = 1.0 / (n_features ** 0.5)   # nn.Linear(n_features, 1) default init
    w = jax.random.uniform(kw, (n_features, 1), minval=-bound, maxval=bound,
                           dtype=jnp.float32)
    b = jax.random.uniform(kb, (1,), minval=-bound, maxval=bound,
                           dtype=jnp.float32)

    def reference(x):
        return jax.nn.sigmoid(x @ w + b)

    # 1) Titanic-sized batch: fused-XLA fast path.
    x_small = jax.random.normal(kx1, (8, n_features), dtype=jnp.float32)
    y_small = jax.block_until_ready(logistic_regression(x_small, w, b))
    assert y_small.shape == (8, 1)
    assert jnp.allclose(y_small, reference(x_small), atol=1e-5, rtol=1e-5)

    # 2) Large batch (multiple of the 16-sample packing): multi-step grid with
    #    a ragged, clipped last block -- exercises the Pallas pipeline.
    x_big = jax.random.normal(kx2, (200_000, n_features), dtype=jnp.float32)
    y_big = jax.block_until_ready(logistic_regression(x_big, w, b))
    assert y_big.shape == (200_000, 1)
    assert jnp.allclose(y_big, reference(x_big), atol=1e-5, rtol=1e-5)

    # 3) Batch that is not a multiple of the packing: exercises pad + slice.
    x_odd = jax.random.normal(kx3, (12_345, n_features), dtype=jnp.float32)
    y_odd = jax.block_until_ready(logistic_regression(x_odd, w, b))
    assert y_odd.shape == (12_345, 1)
    assert jnp.allclose(y_odd, reference(x_odd), atol=1e-5, rtol=1e-5)

    print("KERNEL_OK")
</pallas_src>

<mosaic_0001>
module attributes {stable_mosaic.version = 11 : i64} {
  func.func @_logreg_kernel(%arg0: i32, %arg1: memref<6272x128xf32, #tpu.memory_space<vmem>>, %arg2: memref<128x16xf32, #tpu.memory_space<vmem>>, %arg3: memref<1xf32, #tpu.memory_space<smem>>, %arg4: memref<16x6272xf32, #tpu.memory_space<vmem>>) attributes {dimension_semantics = [#tpu.dimension_semantics<parallel>], iteration_bounds = array<i64: 2>, scalar_prefetch = 0 : i64, scratch_operands = 0 : i64, tpu.core_type = #tpu.core_type<tc>, window_params = [{transform_indices = @transform_0, window_bounds = array<i64: 6272, 128>}, {pipeline_mode = #tpu.pipeline_mode<synchronous>, transform_indices = @transform_1, window_bounds = array<i64: 128, 16>}, {transform_indices = @transform_2, window_bounds = array<i64: 1>}, {transform_indices = @transform_3, window_bounds = array<i64: 16, 6272>}]} {
    %c0 = arith.constant 0 : index
    %c0_0 = arith.constant 0 : index
    %0 = vector.load %arg1[%c0, %c0_0] : memref<6272x128xf32, #tpu.memory_space<vmem>>, vector<6272x128xf32>
    %c0_1 = arith.constant 0 : index
    %c0_2 = arith.constant 0 : index
    %1 = vector.load %arg2[%c0_1, %c0_2] : memref<128x16xf32, #tpu.memory_space<vmem>>, vector<128x16xf32>
    %cst = arith.constant dense<0.000000e+00> : vector<6272x16xf32>
    %2 = tpu.matmul %0, %1, %cst {dimension_numbers = #tpu.dot_dimension_numbers<[1], [0], [0], [1], [0, 0, 1, 1], [], []>} : vector<6272x128xf32>, vector<128x16xf32>, vector<6272x16xf32> -> vector<6272x16xf32>
    %3 = tpu.transpose %2, [1, 0] : vector<6272x16xf32> -> vector<16x6272xf32>
    %c0_3 = arith.constant 0 : index
    %4 = memref.load %arg3[%c0_3] : memref<1xf32, #tpu.memory_space<smem>>
    %5 = vector.broadcast %4 : f32 to vector<16x6272xf32>
    %6 = arith.addf %3, %5 : vector<16x6272xf32>
    %7 = arith.negf %6 : vector<16x6272xf32>
    %8 = math.exp %7 : vector<16x6272xf32>
    %cst_4 = arith.constant 1.000000e+00 : f32
    %9 = vector.broadcast %cst_4 : f32 to vector<16x6272xf32>
    %10 = arith.addf %9, %8 : vector<16x6272xf32>
    %11 = arith.divf %9, %10 : vector<16x6272xf32>
    %c0_5 = arith.constant 0 : index
    %c0_6 = arith.constant 0 : index
    %12 = vector.load %arg4[%c0_5, %c0_6] : memref<16x6272xf32, #tpu.memory_space<vmem>>, vector<16x6272xf32>
    tpu.vector_store %arg4[%c0_5, %c0_6], %11 {strides = array<i32>} : memref<16x6272xf32, #tpu.memory_space<vmem>>, vector<16x6272xf32>,
    return
  }
  func.func @transform_0(%arg0: i32) -> (i32, i32) {
    %c0_i32 = arith.constant 0 : i32
    %c0_i32_0 = arith.constant 0 : i32
    return %arg0, %c0_i32 : i32, i32
  }
  func.func @transform_1(%arg0: i32) -> (i32, i32) {
    %c0_i32 = arith.constant 0 : i32
    %c0_i32_0 = arith.constant 0 : i32
    %c0_i32_1 = arith.constant 0 : i32
    return %c0_i32, %c0_i32_0 : i32, i32
  }
  func.func @transform_2(%arg0: i32) -> i32 {
    %c0_i32 = arith.constant 0 : i32
    %c0_i32_0 = arith.constant 0 : i32
    return %c0_i32 : i32
  }
  func.func @transform_3(%arg0: i32) -> (i32, i32) {
    %c0_i32 = arith.constant 0 : i32
    %c0_i32_0 = arith.constant 0 : i32
    return %c0_i32, %arg0 : i32, i32
  }
}

</mosaic_0001>

<llo_original>
// kernel: tpu_custom_call.1
$region0: #{tpu_custom_call.1}
  #allocation0 [shape = 'u32[]', space=smem, size = 0x4, offset = 0x4, fixed_abs, tag = 'smem constant byte address 0x4 - core index']
  #allocation1 [shape = 'u32[144,128]{1,0:T(1,128)}', space=vmem, size = 0x12000, scoped, tag = 'internal scratch']
  #allocation2 [shape = 'f32[1]{0:T(128)S(6)}', space=smem, size = 0x200, scoped, tag = 'scoped memory for tpu_custom_call.1']
  %s0 = inlined_call_operand.hbm [shape: f32[12500,128], index: 0, kind: input, shape index: {}]
  %s1 = inlined_call_operand.vmem [shape: f32[128,16], index: 1, kind: input, shape index: {}]
  %s2 = inlined_call_operand.<no memory space> [shape: f32[1], index: 2, kind: input, shape index: {}]
  %s3 = inlined_call_operand.hbm [shape: f32[16,12500], index: 3, kind: output, shape index: {}]
  %s4 = sld [smem:[#allocation0]]
  $region49: #{tpu_custom_call.1} parent=0
    _
  %s6 = ssub.s32 1, %s4
  %s7 = scalar_select 0, %s6, %s4
  %8 = sst [smem:[#allocation2]] %s2
  $region1: #{tpu_custom_call.1} parent=0
    #allocation3 [shape = 'u8[6422528]{0}', space=vmem, size = 0x620000, scoped, tag = 'input window, operand 0']
    #allocation4 [shape = 's32[2]{0}', space=sflag, size = 0x8, scoped, tag = 'scoped memory for tpu_custom_call.1']
    #allocation5 [shape = 's32[2]{0}', space=sflag, size = 0x8, scoped, tag = 'scoped memory for tpu_custom_call.1']
    #allocation6 [shape = 'u8[802816]{0}', space=vmem, size = 0xc4000, scoped, tag = 'output window, operand 0']
    %9 = vsyncpa [#allocation4], 0
    %s10 = scalar_lea.sflag [#allocation4], 1
    %11 = vsyncpa %s10, 0
    %12 = vsyncpa [#allocation5], 0
    %s13 = scalar_lea.sflag [#allocation5], 1
    %14 = vsyncpa %s13, 0
    loop: start=0, step=1, limit=4
    $region2: #{tpu_custom_call.1} parent=1 // loop_pre_header
      _
    $region3: #{tpu_custom_call.1} parent=1 // loop_header
      %s16 = sphi 0, %s20
      %p17 = scmp.ge.s32.totalorder %s16, 4
      %s26 = sphi 0, %s28
      %s29 = sphi 0, %s26
      %s30 = sphi 0, %s29
      %s46 = sphi 0, %s30
      %s50 = sphi 0, %s50
      %s52 = sphi 0, %s50
      %s53 = sphi 0, %s52
      %s67 = sphi 0, %s53
      %s71 = sphi 0, %s71
      %s73 = sphi 0, %s71
      %s74 = sphi 0, %s73
      %s88 = sphi 0, %s74
      %s94 = sphi 0, %s96
      %s97 = sphi 0, %s94
      %s98 = sphi 0, %s97
      %s114 = sphi 0, %s98
    $region4: #{tpu_custom_call.1} parent=1 // loop_header_branch
      %19 = sbr.rel (%p17) target = $region8
    $region5: #{tpu_custom_call.1} parent=1 // loop_body
      %s21 = ssub.s32 %s16, 1
      %s22 = ssub.s32 %s16, 2
      %s23 = sadd.s32 %s16, 1
      %s24 = ssub.s32 %s16, %s23
      %p25 = scmp.eq.s32.totalorder %s24, 0
      %s27 = sadd.s32 %s26, 1
      %s28 = scalar_select %p25, %s26, %s27
      %p31 = pneg %p25
      %p32 = scmp.eq.s32.totalorder %s16, 1
      %p33 = por %p31, %p32
      %p34 = scmp.ne.s32.totalorder %s26, %s29
      %p35 = scmp.eq.s32.totalorder %s16, 0
      %p36 = por %p34, %p35
      %p37 = scmp.ne.s32.totalorder %s26, %s29
      %p38 = scmp.eq.s32.totalorder %s21, 1
      %p39 = por %p37, %p38
      %p40 = scmp.ne.s32.totalorder %s29, %s30
      %p41 = scmp.eq.s32.totalorder %s21, 0
      %p42 = por %p40, %p41
      %p43 = scmp.ne.s32.totalorder %s29, %s30
      %p44 = scmp.eq.s32.totalorder %s22, 1
      %p45 = por %p43, %p44
      %p47 = scmp.ne.s32.totalorder %s30, %s46
      %p48 = scmp.eq.s32.totalorder %s22, 0
      %p49 = por %p47, %p48
      %s51 = sadd.s32 %s50, 1
      %p54 = scmp.eq.s32.totalorder %s16, 1
      %p55 = scmp.ne.s32.totalorder %s50, %s52
      %p56 = scmp.eq.s32.totalorder %s16, 0
      %p57 = por %p55, %p56
      %p58 = scmp.ne.s32.totalorder %s50, %s52
      %p59 = scmp.eq.s32.totalorder %s21, 1
      %p60 = por %p58, %p59
      %p61 = scmp.ne.s32.totalorder %s52, %s53
      %p62 = scmp.eq.s32.totalorder %s21, 0
      %p63 = por %p61, %p62
      %p64 = scmp.ne.s32.totalorder %s52, %s53
      %p65 = scmp.eq.s32.totalorder %s22, 1
      %p66 = por %p64, %p65
      %p68 = scmp.ne.s32.totalorder %s53, %s67
      %p69 = scmp.eq.s32.totalorder %s22, 0
      %p70 = por %p68, %p69
      %s72 = sadd.s32 %s71, 1
      %p75 = scmp.eq.s32.totalorder %s16, 1
      %p76 = scmp.ne.s32.totalorder %s71, %s73
      %p77 = scmp.eq.s32.totalorder %s16, 0
      %p78 = por %p76, %p77
      %p79 = scmp.ne.s32.totalorder %s71, %s73
      %p80 = scmp.eq.s32.totalorder %s21, 1
      %p81 = por %p79, %p80
      %p82 = scmp.ne.s32.totalorder %s73, %s74
      %p83 = scmp.eq.s32.totalorder %s21, 0
      %p84 = por %p82, %p83
      %p85 = scmp.ne.s32.totalorder %s73, %s74
      %p86 = scmp.eq.s32.totalorder %s22, 1
      %p87 = por %p85, %p86
      %p89 = scmp.ne.s32.totalorder %s74, %s88
      %p90 = scmp.eq.s32.totalorder %s22, 0
      %p91 = por %p89, %p90
      %s92 = ssub.s32 %s16, %s23
      %p93 = scmp.eq.s32.totalorder %s92, 0
      %s95 = sadd.s32 %s94, 1
      %s96 = scalar_select %p93, %s94, %s95
      %p99 = pneg %p93
      %p100 = scmp.eq.s32.totalorder %s16, 1
      %p101 = por %p99, %p100
      %p102 = scmp.ne.s32.totalorder %s94, %s97
      %p103 = scmp.eq.s32.totalorder %s16, 0
      %p104 = por %p102, %p103
      %p105 = scmp.ne.s32.totalorder %s94, %s97
      %p106 = scmp.eq.s32.totalorder %s21, 1
      %p107 = por %p105, %p106
      %p108 = scmp.ne.s32.totalorder %s97, %s98
      %p109 = scmp.eq.s32.totalorder %s21, 0
      %p110 = por %p108, %p109
      %p111 = scmp.ne.s32.totalorder %s97, %s98
      %p112 = scmp.eq.s32.totalorder %s22, 1
      %p113 = por %p111, %p112
      %p115 = scmp.ne.s32.totalorder %s98, %s114
      %p116 = scmp.eq.s32.totalorder %s22, 0
      %p117 = por %p115, %p116
      %p118 = scmp.le.s32.totalorder 1, %s16
      %p119 = scmp.lt.s32.totalorder %s16, 3
      %p120 = pnand %p118, %p119
      %p121 = pneg %p120
      // Predicated region
      $region9: #{tpu_custom_call.1} parent=5 // pred_check
        _
      $region10: #{tpu_custom_call.1} parent=5 // pred_check_branch
        %123 = sbr.rel (%p120) target = $region12
      $region11: #{tpu_custom_call.1} parent=5 // pred_region
        %s124 = ssub.s32 %s16, 1
        // Predicated region
        $region13: #{tpu_custom_call.1} parent=11 // pred_check
          %p125 = pneg %p63
        $region14: #{tpu_custom_call.1} parent=11 // pred_check_branch
          %127 = sbr.rel (%p125) target = $region16
        $region15: #{tpu_custom_call.1} parent=11 // pred_region
          _
        $region16: #{tpu_custom_call.1} parent=11 // pred_fallthru
          _
        // Predicated region
        $region17: #{tpu_custom_call.1} parent=11 // pred_check
          %p128 = pneg %p84
        $region18: #{tpu_custom_call.1} parent=11 // pred_check_branch
          %130 = sbr.rel (%p128) target = $region20
        $region19: #{tpu_custom_call.1} parent=11 // pred_region
          _
        $region20: #{tpu_custom_call.1} parent=11 // pred_fallthru
          _
      $region12: #{tpu_custom_call.1} parent=5 // pred_fallthru
        _
      %p131 = scmp.lt.s32.totalorder %s16, 2
      // Predicated region
      $region21: #{tpu_custom_call.1} parent=5 // pred_check
        %p132 = pneg %p131
      $region22: #{tpu_custom_call.1} parent=5 // pred_check_branch
        %134 = sbr.rel (%p132) target = $region24
      $region23: #{tpu_custom_call.1} parent=5 // pred_region
        // Predicated region
        $region25: #{tpu_custom_call.1} parent=23 // pred_check
          %p135 = pneg %p36
        $region26: #{tpu_custom_call.1} parent=23 // pred_check_branch
          %137 = sbr.rel (%p135) target = $region28
        $region27: #{tpu_custom_call.1} parent=23 // pred_region
          %s138 = sand.u32 %s26, 1
          %s139 = scalar_lea.sflag [#allocation4], %s138
          %s140 = sand.u32 %s26, 1
          %s141 = smul.addr %s140, 6272
          %s142 = scalar_lea.vmem [#allocation3], %s141
          %s143 = smul.u32 784, %s16
          %s144 = ssub.s32 1563, %s143
          %p145 = scmp.lt.s32.totalorder %s144, 784
          %s146 = scalar_select %p145, %s144, 784
          %s147 = smul.u32 128, %s146
          %s149 = ssub.s32 100352, %s147
          %150 = vsyncadd %s139, %s149
          %p151 = scmp.ne.s32.totalorder 0, %s147
          %s152 = smul.addr %s143, 128
          %s153 = scalar_lea.hbm %s0, %s152
          %s154 = smul.u32 8, %s146
          %s155 = sshll.u32 %s142, 4
          %s156 = int_to_ptr.vmem [resolvable:$true] %s155
          %s157 = sshll.u32 %s154, 4
          %161 = dma.hbm_to_vmem [thread:$0]  (%p151), %s153, %s157, %s156, %s139, 128, 128, 8
        $region28: #{tpu_custom_call.1} parent=23 // pred_fallthru
          _
      $region24: #{tpu_custom_call.1} parent=5 // pred_fallthru
        _
      %p162 = scmp.le.s32.totalorder 1, %s16
      %p163 = scmp.lt.s32.totalorder %s16, 3
      %p164 = pnand %p162, %p163
      %p165 = pneg %p164
      // Predicated region
      $region29: #{tpu_custom_call.1} parent=5 // pred_check
        _
      $region30: #{tpu_custom_call.1} parent=5 // pred_check_branch
        %167 = sbr.rel (%p164) target = $region32
      $region31: #{tpu_custom_call.1} parent=5 // pred_region
        %s168 = ssub.s32 %s16, 1
        %s169 = sand.u32 %s29, 1
        %s170 = scalar_lea.sflag [#allocation4], %s169
        %s171 = sand.u32 %s29, 1
        %s172 = smul.addr %s171, 6272
        %s173 = scalar_lea.vmem [#allocation3], %s172
        // Predicated region
        $region33: #{tpu_custom_call.1} parent=31 // pred_check
          %p174 = pneg %p42
        $region34: #{tpu_custom_call.1} parent=31 // pred_check_branch
          %176 = sbr.rel (%p174) target = $region36
        $region35: #{tpu_custom_call.1} parent=31 // pred_region
          %177 = dma.done %s170, 100352
        $region36: #{tpu_custom_call.1} parent=31 // pred_fallthru
          _
        %s178 = sand.u32 %s29, 1
        %s179 = scalar_lea.sflag [#allocation4], %s178
        %s180 = sand.u32 %s29, 1
        %s181 = smul.addr %s180, 6272
        %s182 = scalar_lea.vmem [#allocation3], %s181
        %p183 = pneg %p42
        %p184 = pneg %p39
        %p185 = pneg %p63
        %p186 = pneg %p60
        %p187 = pneg %p84
        %p188 = pneg %p81
        %p189 = pneg %p110
        %p190 = pneg %p107
        %s191 = sand.u32 %s97, 1
        %s192 = scalar_lea.sflag [#allocation5], %s191
        %s193 = sand.u32 %s97, 1
        %s194 = smul.addr %s193, 784
        %s195 = scalar_lea.vmem [#allocation6], %s194
        %s196 = smul.u32 784, %s21
        %s197 = ssub.s32 1563, %s196
        %p198 = scmp.lt.s32.totalorder %s197, 784
        %s199 = scalar_select %p198, %s197, 784
        %s200 = smul.u32 128, %s199
        %s201 = smul.u32 49, %s21
        %v202 = vld [vmem:[%s173] sm:$0xff]
        %v203 = vld [vmem:[%s173 + $0x8] sm:$0xff]
        %v204 = vld [vmem:[%s173 + $0x10] sm:$0xff]
        %v205 = vld [vmem:[%s173 + $0x18] sm:$0xff]
        %v206 = vld [vmem:[%s173 + $0x20] sm:$0xff]
        %v207 = vld [vmem:[%s173 + $0x28] sm:$0xff]
        %v208 = vld [vmem:[%s173 + $0x30] sm:$0xff]
        %v209 = vld [vmem:[%s173 + $0x38] sm:$0xff]
        %v210 = vld [vmem:[%s173 + $0x40] sm:$0xff]
        %v211 = vld [vmem:[%s173 + $0x48] sm:$0xff]
        %v212 = vld [vmem:[%s173 + $0x50] sm:$0xff]
        %v213 = vld [vmem:[%s173 + $0x58] sm:$0xff]
        %v214 = vld [vmem:[%s173 + $0x60] sm:$0xff]
        %v215 = vld [vmem:[%s173 + $0x68] sm:$0xff]
        %v216 = vld [vmem:[%s173 + $0x70] sm:$0xff]
        %v217 = vld [vmem:[%s173 + $0x78] sm:$0xff]
        %v218 = vld [vmem:[%s173 + $0x80] sm:$0xff]
        %v219 = vld [vmem:[%s173 + $0x88] sm:$0xff]
        %v220 = vld [vmem:[%s173 + $0x90] sm:$0xff]
        %v221 = vld [vmem:[%s173 + $0x98] sm:$0xff]
        %v222 = vld [vmem:[%s173 + $0xa0] sm:$0xff]
        %v223 = vld [vmem:[%s173 + $0xa8] sm:$0xff]
        %v224 = vld [vmem:[%s173 + $0xb0] sm:$0xff]
        %v225 = vld [vmem:[%s173 + $0xb8] sm:$0xff]
        %v226 = vld [vmem:[%s173 + $0xc0] sm:$0xff]
        %v227 = vld [vmem:[%s173 + $0xc8] sm:$0xff]
        %v228 = vld [vmem:[%s173 + $0xd0] sm:$0xff]
        %v229 = vld [vmem:[%s173 + $0xd8] sm:$0xff]
        %v230 = vld [vmem:[%s173 + $0xe0] sm:$0xff]
        %v231 = vld [vmem:[%s173 + $0xe8] sm:$0xff]
        %v232 = vld [vmem:[%s173 + $0xf0] sm:$0xff]
        %v233 = vld [vmem:[%s173 + $0xf8] sm:$0xff]
        %v234 = vld [vmem:[%s173 + $0x100] sm:$0xff]
        %v235 = vld [vmem:[%s173 + $0x108] sm:$0xff]
        %v236 = vld [vmem:[%s173 + $0x110] sm:$0xff]
        %v237 = vld [vmem:[%s173 + $0x118] sm:$0xff]
        %v238 = vld [vmem:[%s173 + $0x120] sm:$0xff]
        %v239 = vld [vmem:[%s173 + $0x128] sm:$0xff]
        %v240 = vld [vmem:[%s173 + $0x130] sm:$0xff]
        %v241 = vld [vmem:[%s173 + $0x138] sm:$0xff]
        %v242 = vld [vmem:[%s173 + $0x140] sm:$0xff]
        %v243 = vld [vmem:[%s173 + $0x148] sm:$0xff]
        %v244 = vld [vmem:[%s173 + $0x150] sm:$0xff]
        %v245 = vld [vmem:[%s173 + $0x158] sm:$0xff]
        %v246 = vld [vmem:[%s173 + $0x160] sm:$0xff]
        %v247 = vld [vmem:[%s173 + $0x168] sm:$0xff]
        %v248 = vld [vmem:[%s173 + $0x170] sm:$0xff]
        %v249 = vld [vmem:[%s173 + $0x178] sm:$0xff]
        %v250 = vld [vmem:[%s173 + $0x180] sm:$0xff]
        %v251 = vld [vmem:[%s173 + $0x188] sm:$0xff]
        %v252 = vld [vmem:[%s173 + $0x190] sm:$0xff]
        %v253 = vld [vmem:[%s173 + $0x198] sm:$0xff]
        %v254 = vld [vmem:[%s173 + $0x1a0] sm:$0xff]
        %v255 = vld [vmem:[%s173 + $0x1a8] sm:$0xff]
        %v256 = vld [vmem:[%s173 + $0x1b0] sm:$0xff]
        %v257 = vld [vmem:[%s173 + $0x1b8] sm:$0xff]
        %v258 = vld [vmem:[%s173 + $0x1c0] sm:$0xff]
        %v259 = vld [vmem:[%s173 + $0x1c8] sm:$0xff]
        %v260 = vld [vmem:[%s173 + $0x1d0] sm:$0xff]
        %v261 = vld [vmem:[%s173 + $0x1d8] sm:$0xff]
        %v262 = vld [vmem:[%s173 + $0x1e0] sm:$0xff]
        %v263 = vld [vmem:[%s173 + $0x1e8] sm:$0xff]
        %v264 = vld [vmem:[%s173 + $0x1f0] sm:$0xff]
        %v265 = vld [vmem:[%s173 + $0x1f8] sm:$0xff]
        %v266 = vld [vmem:[%s173 + $0x200] sm:$0xff]
        %v267 = vld [vmem:[%s173 + $0x208] sm:$0xff]
        %v268 = vld [vmem:[%s173 + $0x210] sm:$0xff]
        %v269 = vld [vmem:[%s173 + $0x218] sm:$0xff]
        %v270 = vld [vmem:[%s173 + $0x220] sm:$0xff]
        %v271 = vld [vmem:[%s173 + $0x228] sm:$0xff]
        %v272 = vld [vmem:[%s173 + $0x230] sm:$0xff]
        %v273 = vld [vmem:[%s173 + $0x238] sm:$0xff]
        %v274 = vld [vmem:[%s173 + $0x240] sm:$0xff]
        %v275 = vld [vmem:[%s173 + $0x248] sm:$0xff]
        %v276 = vld [vmem:[%s173 + $0x250] sm:$0xff]
        %v277 = vld [vmem:[%s173 + $0x258] sm:$0xff]
        %v278 = vld [vmem:[%s173 + $0x260] sm:$0xff]
        %v279 = vld [vmem:[%s173 + $0x268] sm:$0xff]
        %v280 = vld [vmem:[%s173 + $0x270] sm:$0xff]
        %v281 = vld [vmem:[%s173 + $0x278] sm:$0xff]
        %v282 = vld [vmem:[%s173 + $0x280] sm:$0xff]
        %v283 = vld [vmem:[%s173 + $0x288] sm:$0xff]
        %v284 = vld [vmem:[%s173 + $0x290] sm:$0xff]
        %v285 = vld [vmem:[%s173 + $0x298] sm:$0xff]
        %v286 = vld [vmem:[%s173 + $0x2a0] sm:$0xff]
        %v287 = vld [vmem:[%s173 + $0x2a8] sm:$0xff]
        %v288 = vld [vmem:[%s173 + $0x2b0] sm:$0xff]
        %v289 = vld [vmem:[%s173 + $0x2b8] sm:$0xff]
        %v290 = vld [vmem:[%s173 + $0x2c0] sm:$0xff]
        %v291 = vld [vmem:[%s173 + $0x2c8] sm:$0xff]
        %v292 = vld [vmem:[%s173 + $0x2d0] sm:$0xff]
        %v293 = vld [vmem:[%s173 + $0x2d8] sm:$0xff]
        %v294 = vld [vmem:[%s173 + $0x2e0] sm:$0xff]
        %v295 = vld [vmem:[%s173 + $0x2e8] sm:$0xff]
        %v296 = vld [vmem:[%s173 + $0x2f0] sm:$0xff]
        %v297 = vld [vmem:[%s173 + $0x2f8] sm:$0xff]
        %v298 = vld [vmem:[%s173 + $0x300] sm:$0xff]
        %v299 = vld [vmem:[%s173 + $0x308] sm:$0xff]
        %v300 = vld [vmem:[%s173 + $0x310] sm:$0xff]
        %v301 = vld [vmem:[%s173 + $0x318] sm:$0xff]
        %v302 = vld [vmem:[%s173 + $0x320] sm:$0xff]
        %v303 = vld [vmem:[%s173 + $0x328] sm:$0xff]
        %v304 = vld [vmem:[%s173 + $0x330] sm:$0xff]
        %v305 = vld [vmem:[%s173 + $0x338] sm:$0xff]
        %v306 = vld [vmem:[%s173 + $0x340] sm:$0xff]
        %v307 = vld [vmem:[%s173 + $0x348] sm:$0xff]
        %v308 = vld [vmem:[%s173 + $0x350] sm:$0xff]
        %v309 = vld [vmem:[%s173 + $0x358] sm:$0xff]
        %v310 = vld [vmem:[%s173 + $0x360] sm:$0xff]
        %v311 = vld [vmem:[%s173 + $0x368] sm:$0xff]
        %v312 = vld [vmem:[%s173 + $0x370] sm:$0xff]
        %v313 = vld [vmem:[%s173 + $0x378] sm:$0xff]
        %v314 = vld [vmem:[%s173 + $0x380] sm:$0xff]
        %v315 = vld [vmem:[%s173 + $0x388] sm:$0xff]
        %v316 = vld [vmem:[%s173 + $0x390] sm:$0xff]
        %v317 = vld [vmem:[%s173 + $0x398] sm:$0xff]
        %v318 = vld [vmem:[%s173 + $0x3a0] sm:$0xff]
        %v319 = vld [vmem:[%s173 + $0x3a8] sm:$0xff]
        %v320 = vld [vmem:[%s173 + $0x3b0] sm:$0xff]
        %v321 = vld [vmem:[%s173 + $0x3b8] sm:$0xff]
        %v322 = vld [vmem:[%s173 + $0x3c0] sm:$0xff]
        %v323 = vld [vmem:[%s173 + $0x3c8] sm:$0xff]
        %v324 = vld [vmem:[%s173 + $0x3d0] sm:$0xff]
        %v325 = vld [vmem:[%s173 + $0x3d8] sm:$0xff]
        %v326 = vld [vmem:[%s173 + $0x3e0] sm:$0xff]
        %v327 = vld [vmem:[%s173 + $0x3e8] sm:$0xff]
        %v328 = vld [vmem:[%s173 + $0x3f0] sm:$0xff]
        %v329 = vld [vmem:[%s173 + $0x3f8] sm:$0xff]
        %v330 = vld [vmem:[%s173 + $0x400] sm:$0xff]
        %v331 = vld [vmem:[%s173 + $0x408] sm:$0xff]
        %v332 = vld [vmem:[%s173 + $0x410] sm:$0xff]
        %v333 = vld [vmem:[%s173 + $0x418] sm:$0xff]
        %v334 = vld [vmem:[%s173 + $0x420] sm:$0xff]
        %v335 = vld [vmem:[%s173 + $0x428] sm:$0xff]
        %v336 = vld [vmem:[%s173 + $0x430] sm:$0xff]
        %v337 = vld [vmem:[%s173 + $0x438] sm:$0xff]
        %v338 = vld [vmem:[%s173 + $0x440] sm:$0xff]
        %v339 = vld [vmem:[%s173 + $0x448] sm:$0xff]
        %v340 = vld [vmem:[%s173 + $0x450] sm:$0xff]
        %v341 = vld [vmem:[%s173 + $0x458] sm:$0xff]
        %v342 = vld [vmem:[%s173 + $0x460] sm:$0xff]
        %v343 = vld [vmem:[%s173 + $0x468] sm:$0xff]
        %v344 = vld [vmem:[%s173 + $0x470] sm:$0xff]
        %v345 = vld [vmem:[%s173 + $0x478] sm:$0xff]
        %v346 = vld [vmem:[%s173 + $0x480] sm:$0xff]
        %v347 = vld [vmem:[%s173 + $0x488] sm:$0xff]
        %v348 = vld [vmem:[%s173 + $0x490] sm:$0xff]
        %v349 = vld [vmem:[%s173 + $0x498] sm:$0xff]
        %v350 = vld [vmem:[%s173 + $0x4a0] sm:$0xff]
        %v351 = vld [vmem:[%s173 + $0x4a8] sm:$0xff]
        %v352 = vld [vmem:[%s173 + $0x4b0] sm:$0xff]
        %v353 = vld [vmem:[%s173 + $0x4b8] sm:$0xff]
        %v354 = vld [vmem:[%s173 + $0x4c0] sm:$0xff]
        %v355 = vld [vmem:[%s173 + $0x4c8] sm:$0xff]
        %v356 = vld [vmem:[%s173 + $0x4d0] sm:$0xff]
        %v357 = vld [vmem:[%s173 + $0x4d8] sm:$0xff]
        %v358 = vld [vmem:[%s173 + $0x4e0] sm:$0xff]
        %v359 = vld [vmem:[%s173 + $0x4e8] sm:$0xff]
        %v360 = vld [vmem:[%s173 + $0x4f0] sm:$0xff]
        %v361 = vld [vmem:[%s173 + $0x4f8] sm:$0xff]
        %v362 = vld [vmem:[%s173 + $0x500] sm:$0xff]
        %v363 = vld [vmem:[%s173 + $0x508] sm:$0xff]
        %v364 = vld [vmem:[%s173 + $0x510] sm:$0xff]
        %v365 = vld [vmem:[%s173 + $0x518] sm:$0xff]
        %v366 = vld [vmem:[%s173 + $0x520] sm:$0xff]
        %v367 = vld [vmem:[%s173 + $0x528] sm:$0xff]
        %v368 = vld [vmem:[%s173 + $0x530] sm:$0xff]
        %v369 = vld [vmem:[%s173 + $0x538] sm:$0xff]
        %v370 = vld [vmem:[%s173 + $0x540] sm:$0xff]
        %v371 = vld [vmem:[%s173 + $0x548] sm:$0xff]
        %v372 = vld [vmem:[%s173 + $0x550] sm:$0xff]
        %v373 = vld [vmem:[%s173 + $0x558] sm:$0xff]
        %v374 = vld [vmem:[%s173 + $0x560] sm:$0xff]
        %v375 = vld [vmem:[%s173 + $0x568] sm:$0xff]
        %v376 = vld [vmem:[%s173 + $0x570] sm:$0xff]
        %v377 = vld [vmem:[%s173 + $0x578] sm:$0xff]
        %v378 = vld [vmem:[%s173 + $0x580] sm:$0xff]
        %v379 = vld [vmem:[%s173 + $0x588] sm:$0xff]
        %v380 = vld [vmem:[%s173 + $0x590] sm:$0xff]
        %v381 = vld [vmem:[%s173 + $0x598] sm:$0xff]
        %v382 = vld [vmem:[%s173 + $0x5a0] sm:$0xff]
        %v383 = vld [vmem:[%s173 + $0x5a8] sm:$0xff]
        %v384 = vld [vmem:[%s173 + $0x5b0] sm:$0xff]
        %v385 = vld [vmem:[%s173 + $0x5b8] sm:$0xff]
        %v386 = vld [vmem:[%s173 + $0x5c0] sm:$0xff]
        %v387 = vld [vmem:[%s173 + $0x5c8] sm:$0xff]
        %v388 = vld [vmem:[%s173 + $0x5d0] sm:$0xff]
        %v389 = vld [vmem:[%s173 + $0x5d8] sm:$0xff]
        %v390 = vld [vmem:[%s173 + $0x5e0] sm:$0xff]
        %v391 = vld [vmem:[%s173 + $0x5e8] sm:$0xff]
        %v392 = vld [vmem:[%s173 + $0x5f0] sm:$0xff]
        %v393 = vld [vmem:[%s173 + $0x5f8] sm:$0xff]
        %v394 = vld [vmem:[%s173 + $0x600] sm:$0xff]
        %v395 = vld [vmem:[%s173 + $0x608] sm:$0xff]
        %v396 = vld [vmem:[%s173 + $0x610] sm:$0xff]
        %v397 = vld [vmem:[%s173 + $0x618] sm:$0xff]
        %v398 = vld [vmem:[%s173 + $0x620] sm:$0xff]
        %v399 = vld [vmem:[%s173 + $0x628] sm:$0xff]
        %v400 = vld [vmem:[%s173 + $0x630] sm:$0xff]
        %v401 = vld [vmem:[%s173 + $0x638] sm:$0xff]
        %v402 = vld [vmem:[%s173 + $0x640] sm:$0xff]
        %v403 = vld [vmem:[%s173 + $0x648] sm:$0xff]
        %v404 = vld [vmem:[%s173 + $0x650] sm:$0xff]
        %v405 = vld [vmem:[%s173 + $0x658] sm:$0xff]
        %v406 = vld [vmem:[%s173 + $0x660] sm:$0xff]
        %v407 = vld [vmem:[%s173 + $0x668] sm:$0xff]
        %v408 = vld [vmem:[%s173 + $0x670] sm:$0xff]
        %v409 = vld [vmem:[%s173 + $0x678] sm:$0xff]
        %v410 = vld [vmem:[%s173 + $0x680] sm:$0xff]
        %v411 = vld [vmem:[%s173 + $0x688] sm:$0xff]
        %v412 = vld [vmem:[%s173 + $0x690] sm:$0xff]
        %v413 = vld [vmem:[%s173 + $0x698] sm:$0xff]
        %v414 = vld [vmem:[%s173 + $0x6a0] sm:$0xff]
        %v415 = vld [vmem:[%s173 + $0x6a8] sm:$0xff]
        %v416 = vld [vmem:[%s173 + $0x6b0] sm:$0xff]
        %v417 = vld [vmem:[%s173 + $0x6b8] sm:$0xff]
        %v418 = vld [vmem:[%s173 + $0x6c0] sm:$0xff]
        %v419 = vld [vmem:[%s173 + $0x6c8] sm:$0xff]
        %v420 = vld [vmem:[%s173 + $0x6d0] sm:$0xff]
        %v421 = vld [vmem:[%s173 + $0x6d8] sm:$0xff]
        %v422 = vld [vmem:[%s173 + $0x6e0] sm:$0xff]
        %v423 = vld [vmem:[%s173 + $0x6e8] sm:$0xff]
        %v424 = vld [vmem:[%s173 + $0x6f0] sm:$0xff]
        %v425 = vld [vmem:[%s173 + $0x6f8] sm:$0xff]
        %v426 = vld [vmem:[%s173 + $0x700] sm:$0xff]
        %v427 = vld [vmem:[%s173 + $0x708] sm:$0xff]
        %v428 = vld [vmem:[%s173 + $0x710] sm:$0xff]
        %v429 = vld [vmem:[%s173 + $0x718] sm:$0xff]
        %v430 = vld [vmem:[%s173 + $0x720] sm:$0xff]
        %v431 = vld [vmem:[%s173 + $0x728] sm:$0xff]
        %v432 = vld [vmem:[%s173 + $0x730] sm:$0xff]
        %v433 = vld [vmem:[%s173 + $0x738] sm:$0xff]
        %v434 = vld [vmem:[%s173 + $0x740] sm:$0xff]
        %v435 = vld [vmem:[%s173 + $0x748] sm:$0xff]
        %v436 = vld [vmem:[%s173 + $0x750] sm:$0xff]
        %v437 = vld [vmem:[%s173 + $0x758] sm:$0xff]
        %v438 = vld [vmem:[%s173 + $0x760] sm:$0xff]
        %v439 = vld [vmem:[%s173 + $0x768] sm:$0xff]
        %v440 = vld [vmem:[%s173 + $0x770] sm:$0xff]
        %v441 = vld [vmem:[%s173 + $0x778] sm:$0xff]
        %v442 = vld [vmem:[%s173 + $0x780] sm:$0xff]
        %v443 = vld [vmem:[%s173 + $0x788] sm:$0xff]
        %v444 = vld [vmem:[%s173 + $0x790] sm:$0xff]
        %v445 = vld [vmem:[%s173 + $0x798] sm:$0xff]
        %v446 = vld [vmem:[%s173 + $0x7a0] sm:$0xff]
        %v447 = vld [vmem:[%s173 + $0x7a8] sm:$0xff]
        %v448 = vld [vmem:[%s173 + $0x7b0] sm:$0xff]
        %v449 = vld [vmem:[%s173 + $0x7b8] sm:$0xff]
        %v450 = vld [vmem:[%s173 + $0x7c0] sm:$0xff]
        %v451 = vld [vmem:[%s173 + $0x7c8] sm:$0xff]
        %v452 = vld [vmem:[%s173 + $0x7d0] sm:$0xff]
        %v453 = vld [vmem:[%s173 + $0x7d8] sm:$0xff]
        %v454 = vld [vmem:[%s173 + $0x7e0] sm:$0xff]
        %v455 = vld [vmem:[%s173 + $0x7e8] sm:$0xff]
        %v456 = vld [vmem:[%s173 + $0x7f0] sm:$0xff]
        %v457 = vld [vmem:[%s173 + $0x7f8] sm:$0xff]
        %v458 = vld [vmem:[%s173 + $0x800] sm:$0xff]
        %v459 = vld [vmem:[%s173 + $0x808] sm:$0xff]
        %v460 = vld [vmem:[%s173 + $0x810] sm:$0xff]
        %v461 = vld [vmem:[%s173 + $0x818] sm:$0xff]
        %v462 = vld [vmem:[%s173 + $0x820] sm:$0xff]
        %v463 = vld [vmem:[%s173 + $0x828] sm:$0xff]
        %v464 = vld [vmem:[%s173 + $0x830] sm:$0xff]
        %v465 = vld [vmem:[%s173 + $0x838] sm:$0xff]
        %v466 = vld [vmem:[%s173 + $0x840] sm:$0xff]
        %v467 = vld [vmem:[%s173 + $0x848] sm:$0xff]
        %v468 = vld [vmem:[%s173 + $0x850] sm:$0xff]
        %v469 = vld [vmem:[%s173 + $0x858] sm:$0xff]
        %v470 = vld [vmem:[%s173 + $0x860] sm:$0xff]
        %v471 = vld [vmem:[%s173 + $0x868] sm:$0xff]
        %v472 = vld [vmem:[%s173 + $0x870] sm:$0xff]
        %v473 = vld [vmem:[%s173 + $0x878] sm:$0xff]
        %v474 = vld [vmem:[%s173 + $0x880] sm:$0xff]
        %v475 = vld [vmem:[%s173 + $0x888] sm:$0xff]
        %v476 = vld [vmem:[%s173 + $0x890] sm:$0xff]
        %v477 = vld [vmem:[%s173 + $0x898] sm:$0xff]
        %v478 = vld [vmem:[%s173 + $0x8a0] sm:$0xff]
        %v479 = vld [vmem:[%s173 + $0x8a8] sm:$0xff]
        %v480 = vld [vmem:[%s173 + $0x8b0] sm:$0xff]
        %v481 = vld [vmem:[%s173 + $0x8b8] sm:$0xff]
        %v482 = vld [vmem:[%s173 + $0x8c0] sm:$0xff]
        %v483 = vld [vmem:[%s173 + $0x8c8] sm:$0xff]
        %v484 = vld [vmem:[%s173 + $0x8d0] sm:$0xff]
        %v485 = vld [vmem:[%s173 + $0x8d8] sm:$0xff]
        %v486 = vld [vmem:[%s173 + $0x8e0] sm:$0xff]
        %v487 = vld [vmem:[%s173 + $0x8e8] sm:$0xff]
        %v488 = vld [vmem:[%s173 + $0x8f0] sm:$0xff]
        %v489 = vld [vmem:[%s173 + $0x8f8] sm:$0xff]
        %v490 = vld [vmem:[%s173 + $0x900] sm:$0xff]
        %v491 = vld [vmem:[%s173 + $0x908] sm:$0xff]
        %v492 = vld [vmem:[%s173 + $0x910] sm:$0xff]
        %v493 = vld [vmem:[%s173 + $0x918] sm:$0xff]
        %v494 = vld [vmem:[%s173 + $0x920] sm:$0xff]
        %v495 = vld [vmem:[%s173 + $0x928] sm:$0xff]
        %v496 = vld [vmem:[%s173 + $0x930] sm:$0xff]
        %v497 = vld [vmem:[%s173 + $0x938] sm:$0xff]
        %v498 = vld [vmem:[%s173 + $0x940] sm:$0xff]
        %v499 = vld [vmem:[%s173 + $0x948] sm:$0xff]
        %v500 = vld [vmem:[%s173 + $0x950] sm:$0xff]
        %v501 = vld [vmem:[%s173 + $0x958] sm:$0xff]
        %v502 = vld [vmem:[%s173 + $0x960] sm:$0xff]
        %v503 = vld [vmem:[%s173 + $0x968] sm:$0xff]
        %v504 = vld [vmem:[%s173 + $0x970] sm:$0xff]
        %v505 = vld [vmem:[%s173 + $0x978] sm:$0xff]
        %v506 = vld [vmem:[%s173 + $0x980] sm:$0xff]
        %v507 = vld [vmem:[%s173 + $0x988] sm:$0xff]
        %v508 = vld [vmem:[%s173 + $0x990] sm:$0xff]
        %v509 = vld [vmem:[%s173 + $0x998] sm:$0xff]
        %v510 = vld [vmem:[%s173 + $0x9a0] sm:$0xff]
        %v511 = vld [vmem:[%s173 + $0x9a8] sm:$0xff]
        %v512 = vld [vmem:[%s173 + $0x9b0] sm:$0xff]
        %v513 = vld [vmem:[%s173 + $0x9b8] sm:$0xff]
        %v514 = vld [vmem:[%s173 + $0x9c0] sm:$0xff]
        %v515 = vld [vmem:[%s173 + $0x9c8] sm:$0xff]
        %v516 = vld [vmem:[%s173 + $0x9d0] sm:$0xff]
        %v517 = vld [vmem:[%s173 + $0x9d8] sm:$0xff]
        %v518 = vld [vmem:[%s173 + $0x9e0] sm:$0xff]
        %v519 = vld [vmem:[%s173 + $0x9e8] sm:$0xff]
        %v520 = vld [vmem:[%s173 + $0x9f0] sm:$0xff]
        %v521 = vld [vmem:[%s173 + $0x9f8] sm:$0xff]
        %v522 = vld [vmem:[%s173 + $0xa00] sm:$0xff]
        %v523 = vld [vmem:[%s173 + $0xa08] sm:$0xff]
        %v524 = vld [vmem:[%s173 + $0xa10] sm:$0xff]
        %v525 = vld [vmem:[%s173 + $0xa18] sm:$0xff]
        %v526 = vld [vmem:[%s173 + $0xa20] sm:$0xff]
        %v527 = vld [vmem:[%s173 + $0xa28] sm:$0xff]
        %v528 = vld [vmem:[%s173 + $0xa30] sm:$0xff]
        %v529 = vld [vmem:[%s173 + $0xa38] sm:$0xff]
        %v530 = vld [vmem:[%s173 + $0xa40] sm:$0xff]
        %v531 = vld [vmem:[%s173 + $0xa48] sm:$0xff]
        %v532 = vld [vmem:[%s173 + $0xa50] sm:$0xff]
        %v533 = vld [vmem:[%s173 + $0xa58] sm:$0xff]
        %v534 = vld [vmem:[%s173 + $0xa60] sm:$0xff]
        %v535 = vld [vmem:[%s173 + $0xa68] sm:$0xff]
        %v536 = vld [vmem:[%s173 + $0xa70] sm:$0xff]
        %v537 = vld [vmem:[%s173 + $0xa78] sm:$0xff]
        %v538 = vld [vmem:[%s173 + $0xa80] sm:$0xff]
        %v539 = vld [vmem:[%s173 + $0xa88] sm:$0xff]
        %v540 = vld [vmem:[%s173 + $0xa90] sm:$0xff]
        %v541 = vld [vmem:[%s173 + $0xa98] sm:$0xff]
        %v542 = vld [vmem:[%s173 + $0xaa0] sm:$0xff]
        %v543 = vld [vmem:[%s173 + $0xaa8] sm:$0xff]
        %v544 = vld [vmem:[%s173 + $0xab0] sm:$0xff]
        %v545 = vld [vmem:[%s173 + $0xab8] sm:$0xff]
        %v546 = vld [vmem:[%s173 + $0xac0] sm:$0xff]
        %v547 = vld [vmem:[%s173 + $0xac8] sm:$0xff]
        %v548 = vld [vmem:[%s173 + $0xad0] sm:$0xff]
        %v549 = vld [vmem:[%s173 + $0xad8] sm:$0xff]
        %v550 = vld [vmem:[%s173 + $0xae0] sm:$0xff]
        %v551 = vld [vmem:[%s173 + $0xae8] sm:$0xff]
        %v552 = vld [vmem:[%s173 + $0xaf0] sm:$0xff]
        %v553 = vld [vmem:[%s173 + $0xaf8] sm:$0xff]
        %v554 = vld [vmem:[%s173 + $0xb00] sm:$0xff]
        %v555 = vld [vmem:[%s173 + $0xb08] sm:$0xff]
        %v556 = vld [vmem:[%s173 + $0xb10] sm:$0xff]
        %v557 = vld [vmem:[%s173 + $0xb18] sm:$0xff]
        %v558 = vld [vmem:[%s173 + $0xb20] sm:$0xff]
        %v559 = vld [vmem:[%s173 + $0xb28] sm:$0xff]
        %v560 = vld [vmem:[%s173 + $0xb30] sm:$0xff]
        %v561 = vld [vmem:[%s173 + $0xb38] sm:$0xff]
        %v562 = vld [vmem:[%s173 + $0xb40] sm:$0xff]
        %v563 = vld [vmem:[%s173 + $0xb48] sm:$0xff]
        %v564 = vld [vmem:[%s173 + $0xb50] sm:$0xff]
        %v565 = vld [vmem:[%s173 + $0xb58] sm:$0xff]
        %v566 = vld [vmem:[%s173 + $0xb60] sm:$0xff]
        %v567 = vld [vmem:[%s173 + $0xb68] sm:$0xff]
        %v568 = vld [vmem:[%s173 + $0xb70] sm:$0xff]
        %v569 = vld [vmem:[%s173 + $0xb78] sm:$0xff]
        %v570 = vld [vmem:[%s173 + $0xb80] sm:$0xff]
        %v571 = vld [vmem:[%s173 + $0xb88] sm:$0xff]
        %v572 = vld [vmem:[%s173 + $0xb90] sm:$0xff]
        %v573 = vld [vmem:[%s173 + $0xb98] sm:$0xff]
        %v574 = vld [vmem:[%s173 + $0xba0] sm:$0xff]
        %v575 = vld [vmem:[%s173 + $0xba8] sm:$0xff]
        %v576 = vld [vmem:[%s173 + $0xbb0] sm:$0xff]
        %v577 = vld [vmem:[%s173 + $0xbb8] sm:$0xff]
        %v578 = vld [vmem:[%s173 + $0xbc0] sm:$0xff]
        %v579 = vld [vmem:[%s173 + $0xbc8] sm:$0xff]
        %v580 = vld [vmem:[%s173 + $0xbd0] sm:$0xff]
        %v581 = vld [vmem:[%s173 + $0xbd8] sm:$0xff]
        %v582 = vld [vmem:[%s173 + $0xbe0] sm:$0xff]
        %v583 = vld [vmem:[%s173 + $0xbe8] sm:$0xff]
        %v584 = vld [vmem:[%s173 + $0xbf0] sm:$0xff]
        %v585 = vld [vmem:[%s173 + $0xbf8] sm:$0xff]
        %v586 = vld [vmem:[%s173 + $0xc00] sm:$0xff]
        %v587 = vld [vmem:[%s173 + $0xc08] sm:$0xff]
        %v588 = vld [vmem:[%s173 + $0xc10] sm:$0xff]
        %v589 = vld [vmem:[%s173 + $0xc18] sm:$0xff]
        %v590 = vld [vmem:[%s173 + $0xc20] sm:$0xff]
        %v591 = vld [vmem:[%s173 + $0xc28] sm:$0xff]
        %v592 = vld [vmem:[%s173 + $0xc30] sm:$0xff]
        %v593 = vld [vmem:[%s173 + $0xc38] sm:$0xff]
        %v594 = vld [vmem:[%s173 + $0xc40] sm:$0xff]
        %v595 = vld [vmem:[%s173 + $0xc48] sm:$0xff]
        %v596 = vld [vmem:[%s173 + $0xc50] sm:$0xff]
        %v597 = vld [vmem:[%s173 + $0xc58] sm:$0xff]
        %v598 = vld [vmem:[%s173 + $0xc60] sm:$0xff]
        %v599 = vld [vmem:[%s173 + $0xc68] sm:$0xff]
        %v600 = vld [vmem:[%s173 + $0xc70] sm:$0xff]
        %v601 = vld [vmem:[%s173 + $0xc78] sm:$0xff]
        %v602 = vld [vmem:[%s173 + $0xc80] sm:$0xff]
        %v603 = vld [vmem:[%s173 + $0xc88] sm:$0xff]
        %v604 = vld [vmem:[%s173 + $0xc90] sm:$0xff]
        %v605 = vld [vmem:[%s173 + $0xc98] sm:$0xff]
        %v606 = vld [vmem:[%s173 + $0xca0] sm:$0xff]
        %v607 = vld [vmem:[%s173 + $0xca8] sm:$0xff]
        %v608 = vld [vmem:[%s173 + $0xcb0] sm:$0xff]
        %v609 = vld [vmem:[%s173 + $0xcb8] sm:$0xff]
        %v610 = vld [vmem:[%s173 + $0xcc0] sm:$0xff]
        %v611 = vld [vmem:[%s173 + $0xcc8] sm:$0xff]
        %v612 = vld [vmem:[%s173 + $0xcd0] sm:$0xff]
        %v613 = vld [vmem:[%s173 + $0xcd8] sm:$0xff]
        %v614 = vld [vmem:[%s173 + $0xce0] sm:$0xff]
        %v615 = vld [vmem:[%s173 + $0xce8] sm:$0xff]
        %v616 = vld [vmem:[%s173 + $0xcf0] sm:$0xff]
        %v617 = vld [vmem:[%s173 + $0xcf8] sm:$0xff]
        %v618 = vld [vmem:[%s173 + $0xd00] sm:$0xff]
        %v619 = vld [vmem:[%s173 + $0xd08] sm:$0xff]
        %v620 = vld [vmem:[%s173 + $0xd10] sm:$0xff]
        %v621 = vld [vmem:[%s173 + $0xd18] sm:$0xff]
        %v622 = vld [vmem:[%s173 + $0xd20] sm:$0xff]
        %v623 = vld [vmem:[%s173 + $0xd28] sm:$0xff]
        %v624 = vld [vmem:[%s173 + $0xd30] sm:$0xff]
        %v625 = vld [vmem:[%s173 + $0xd38] sm:$0xff]
        %v626 = vld [vmem:[%s173 + $0xd40] sm:$0xff]
        %v627 = vld [vmem:[%s173 + $0xd48] sm:$0xff]
        %v628 = vld [vmem:[%s173 + $0xd50] sm:$0xff]
        %v629 = vld [vmem:[%s173 + $0xd58] sm:$0xff]
        %v630 = vld [vmem:[%s173 + $0xd60] sm:$0xff]
        %v631 = vld [vmem:[%s173 + $0xd68] sm:$0xff]
        %v632 = vld [vmem:[%s173 + $0xd70] sm:$0xff]
        %v633 = vld [vmem:[%s173 + $0xd78] sm:$0xff]
        %v634 = vld [vmem:[%s173 + $0xd80] sm:$0xff]
        %v635 = vld [vmem:[%s173 + $0xd88] sm:$0xff]
        %v636 = vld [vmem:[%s173 + $0xd90] sm:$0xff]
        %v637 = vld [vmem:[%s173 + $0xd98] sm:$0xff]
        %v638 = vld [vmem:[%s173 + $0xda0] sm:$0xff]
        %v639 = vld [vmem:[%s173 + $0xda8] sm:$0xff]
        %v640 = vld [vmem:[%s173 + $0xdb0] sm:$0xff]
        %v641 = vld [vmem:[%s173 + $0xdb8] sm:$0xff]
        %v642 = vld [vmem:[%s173 + $0xdc0] sm:$0xff]
        %v643 = vld [vmem:[%s173 + $0xdc8] sm:$0xff]
        %v644 = vld [vmem:[%s173 + $0xdd0] sm:$0xff]
        %v645 = vld [vmem:[%s173 + $0xdd8] sm:$0xff]
        %v646 = vld [vmem:[%s173 + $0xde0] sm:$0xff]
        %v647 = vld [vmem:[%s173 + $0xde8] sm:$0xff]
        %v648 = vld [vmem:[%s173 + $0xdf0] sm:$0xff]
        %v649 = vld [vmem:[%s173 + $0xdf8] sm:$0xff]
        %v650 = vld [vmem:[%s173 + $0xe00] sm:$0xff]
        %v651 = vld [vmem:[%s173 + $0xe08] sm:$0xff]
        %v652 = vld [vmem:[%s173 + $0xe10] sm:$0xff]
        %v653 = vld [vmem:[%s173 + $0xe18] sm:$0xff]
        %v654 = vld [vmem:[%s173 + $0xe20] sm:$0xff]
        %v655 = vld [vmem:[%s173 + $0xe28] sm:$0xff]
        %v656 = vld [vmem:[%s173 + $0xe30] sm:$0xff]
        %v657 = vld [vmem:[%s173 + $0xe38] sm:$0xff]
        %v658 = vld [vmem:[%s173 + $0xe40] sm:$0xff]
        %v659 = vld [vmem:[%s173 + $0xe48] sm:$0xff]
        %v660 = vld [vmem:[%s173 + $0xe50] sm:$0xff]
        %v661 = vld [vmem:[%s173 + $0xe58] sm:$0xff]
        %v662 = vld [vmem:[%s173 + $0xe60] sm:$0xff]
        %v663 = vld [vmem:[%s173 + $0xe68] sm:$0xff]
        %v664 = vld [vmem:[%s173 + $0xe70] sm:$0xff]
        %v665 = vld [vmem:[%s173 + $0xe78] sm:$0xff]
        %v666 = vld [vmem:[%s173 + $0xe80] sm:$0xff]
        %v667 = vld [vmem:[%s173 + $0xe88] sm:$0xff]
        %v668 = vld [vmem:[%s173 + $0xe90] sm:$0xff]
        %v669 = vld [vmem:[%s173 + $0xe98] sm:$0xff]
        %v670 = vld [vmem:[%s173 + $0xea0] sm:$0xff]
        %v671 = vld [vmem:[%s173 + $0xea8] sm:$0xff]
        %v672 = vld [vmem:[%s173 + $0xeb0] sm:$0xff]
        %v673 = vld [vmem:[%s173 + $0xeb8] sm:$0xff]
        %v674 = vld [vmem:[%s173 + $0xec0] sm:$0xff]
        %v675 = vld [vmem:[%s173 + $0xec8] sm:$0xff]
        %v676 = vld [vmem:[%s173 + $0xed0] sm:$0xff]
        %v677 = vld [vmem:[%s173 + $0xed8] sm:$0xff]
        %v678 = vld [vmem:[%s173 + $0xee0] sm:$0xff]
        %v679 = vld [vmem:[%s173 + $0xee8] sm:$0xff]
        %v680 = vld [vmem:[%s173 + $0xef0] sm:$0xff]
        %v681 = vld [vmem:[%s173 + $0xef8] sm:$0xff]
        %v682 = vld [vmem:[%s173 + $0xf00] sm:$0xff]
        %v683 = vld [vmem:[%s173 + $0xf08] sm:$0xff]
        %v684 = vld [vmem:[%s173 + $0xf10] sm:$0xff]
        %v685 = vld [vmem:[%s173 + $0xf18] sm:$0xff]
        %v686 = vld [vmem:[%s173 + $0xf20] sm:$0xff]
        %v687 = vld [vmem:[%s173 + $0xf28] sm:$0xff]
        %v688 = vld [vmem:[%s173 + $0xf30] sm:$0xff]
        %v689 = vld [vmem:[%s173 + $0xf38] sm:$0xff]
        %v690 = vld [vmem:[%s173 + $0xf40] sm:$0xff]
        %v691 = vld [vmem:[%s173 + $0xf48] sm:$0xff]
        %v692 = vld [vmem:[%s173 + $0xf50] sm:$0xff]
        %v693 = vld [vmem:[%s173 + $0xf58] sm:$0xff]
        %v694 = vld [vmem:[%s173 + $0xf60] sm:$0xff]
        %v695 = vld [vmem:[%s173 + $0xf68] sm:$0xff]
        %v696 = vld [vmem:[%s173 + $0xf70] sm:$0xff]
        %v697 = vld [vmem:[%s173 + $0xf78] sm:$0xff]
        %v698 = vld [vmem:[%s173 + $0xf80] sm:$0xff]
        %v699 = vld [vmem:[%s173 + $0xf88] sm:$0xff]
        %v700 = vld [vmem:[%s173 + $0xf90] sm:$0xff]
        %v701 = vld [vmem:[%s173 + $0xf98] sm:$0xff]
        %v702 = vld [vmem:[%s173 + $0xfa0] sm:$0xff]
        %v703 = vld [vmem:[%s173 + $0xfa8] sm:$0xff]
        %v704 = vld [vmem:[%s173 + $0xfb0] sm:$0xff]
        %v705 = vld [vmem:[%s173 + $0xfb8] sm:$0xff]
        %v706 = vld [vmem:[%s173 + $0xfc0] sm:$0xff]
        %v707 = vld [vmem:[%s173 + $0xfc8] sm:$0xff]
        %v708 = vld [vmem:[%s173 + $0xfd0] sm:$0xff]
        %v709 = vld [vmem:[%s173 + $0xfd8] sm:$0xff]
        %v710 = vld [vmem:[%s173 + $0xfe0] sm:$0xff]
        %v711 = vld [vmem:[%s173 + $0xfe8] sm:$0xff]
        %v712 = vld [vmem:[%s173 + $0xff0] sm:$0xff]
        %v713 = vld [vmem:[%s173 + $0xff8] sm:$0xff]
        %v714 = vld [vmem:[%s173 + $0x1000] sm:$0xff]
        %v715 = vld [vmem:[%s173 + $0x1008] sm:$0xff]
        %v716 = vld [vmem:[%s173 + $0x1010] sm:$0xff]
        %v717 = vld [vmem:[%s173 + $0x1018] sm:$0xff]
        %v718 = vld [vmem:[%s173 + $0x1020] sm:$0xff]
        %v719 = vld [vmem:[%s173 + $0x1028] sm:$0xff]
        %v720 = vld [vmem:[%s173 + $0x1030] sm:$0xff]
        %v721 = vld [vmem:[%s173 + $0x1038] sm:$0xff]
        %v722 = vld [vmem:[%s173 + $0x1040] sm:$0xff]
        %v723 = vld [vmem:[%s173 + $0x1048] sm:$0xff]
        %v724 = vld [vmem:[%s173 + $0x1050] sm:$0xff]
        %v725 = vld [vmem:[%s173 + $0x1058] sm:$0xff]
        %v726 = vld [vmem:[%s173 + $0x1060] sm:$0xff]
        %v727 = vld [vmem:[%s173 + $0x1068] sm:$0xff]
        %v728 = vld [vmem:[%s173 + $0x1070] sm:$0xff]
        %v729 = vld [vmem:[%s173 + $0x1078] sm:$0xff]
        %v730 = vld [vmem:[%s173 + $0x1080] sm:$0xff]
        %v731 = vld [vmem:[%s173 + $0x1088] sm:$0xff]
        %v732 = vld [vmem:[%s173 + $0x1090] sm:$0xff]
        %v733 = vld [vmem:[%s173 + $0x1098] sm:$0xff]
        %v734 = vld [vmem:[%s173 + $0x10a0] sm:$0xff]
        %v735 = vld [vmem:[%s173 + $0x10a8] sm:$0xff]
        %v736 = vld [vmem:[%s173 + $0x10b0] sm:$0xff]
        %v737 = vld [vmem:[%s173 + $0x10b8] sm:$0xff]
        %v738 = vld [vmem:[%s173 + $0x10c0] sm:$0xff]
        %v739 = vld [vmem:[%s173 + $0x10c8] sm:$0xff]
        %v740 = vld [vmem:[%s173 + $0x10d0] sm:$0xff]
        %v741 = vld [vmem:[%s173 + $0x10d8] sm:$0xff]
        %v742 = vld [vmem:[%s173 + $0x10e0] sm:$0xff]
        %v743 = vld [vmem:[%s173 + $0x10e8] sm:$0xff]
        %v744 = vld [vmem:[%s173 + $0x10f0] sm:$0xff]
        %v745 = vld [vmem:[%s173 + $0x10f8] sm:$0xff]
        %v746 = vld [vmem:[%s173 + $0x1100] sm:$0xff]
        %v747 = vld [vmem:[%s173 + $0x1108] sm:$0xff]
        %v748 = vld [vmem:[%s173 + $0x1110] sm:$0xff]
        %v749 = vld [vmem:[%s173 + $0x1118] sm:$0xff]
        %v750 = vld [vmem:[%s173 + $0x1120] sm:$0xff]
        %v751 = vld [vmem:[%s173 + $0x1128] sm:$0xff]
        %v752 = vld [vmem:[%s173 + $0x1130] sm:$0xff]
        %v753 = vld [vmem:[%s173 + $0x1138] sm:$0xff]
        %v754 = vld [vmem:[%s173 + $0x1140] sm:$0xff]
        %v755 = vld [vmem:[%s173 + $0x1148] sm:$0xff]
        %v756 = vld [vmem:[%s173 + $0x1150] sm:$0xff]
        %v757 = vld [vmem:[%s173 + $0x1158] sm:$0xff]
        %v758 = vld [vmem:[%s173 + $0x1160] sm:$0xff]
        %v759 = vld [vmem:[%s173 + $0x1168] sm:$0xff]
        %v760 = vld [vmem:[%s173 + $0x1170] sm:$0xff]
        %v761 = vld [vmem:[%s173 + $0x1178] sm:$0xff]
        %v762 = vld [vmem:[%s173 + $0x1180] sm:$0xff]
        %v763 = vld [vmem:[%s173 + $0x1188] sm:$0xff]
        %v764 = vld [vmem:[%s173 + $0x1190] sm:$0xff]
        %v765 = vld [vmem:[%s173 + $0x1198] sm:$0xff]
        %v766 = vld [vmem:[%s173 + $0x11a0] sm:$0xff]
        %v767 = vld [vmem:[%s173 + $0x11a8] sm:$0xff]
        %v768 = vld [vmem:[%s173 + $0x11b0] sm:$0xff]
        %v769 = vld [vmem:[%s173 + $0x11b8] sm:$0xff]
        %v770 = vld [vmem:[%s173 + $0x11c0] sm:$0xff]
        %v771 = vld [vmem:[%s173 + $0x11c8] sm:$0xff]
        %v772 = vld [vmem:[%s173 + $0x11d0] sm:$0xff]
        %v773 = vld [vmem:[%s173 + $0x11d8] sm:$0xff]
        %v774 = vld [vmem:[%s173 + $0x11e0] sm:$0xff]
        %v775 = vld [vmem:[%s173 + $0x11e8] sm:$0xff]
        %v776 = vld [vmem:[%s173 + $0x11f0] sm:$0xff]
        %v777 = vld [vmem:[%s173 + $0x11f8] sm:$0xff]
        %v778 = vld [vmem:[%s173 + $0x1200] sm:$0xff]
        %v779 = vld [vmem:[%s173 + $0x1208] sm:$0xff]
        %v780 = vld [vmem:[%s173 + $0x1210] sm:$0xff]
        %v781 = vld [vmem:[%s173 + $0x1218] sm:$0xff]
        %v782 = vld [vmem:[%s173 + $0x1220] sm:$0xff]
        %v783 = vld [vmem:[%s173 + $0x1228] sm:$0xff]
        %v784 = vld [vmem:[%s173 + $0x1230] sm:$0xff]
        %v785 = vld [vmem:[%s173 + $0x1238] sm:$0xff]
        %v786 = vld [vmem:[%s173 + $0x1240] sm:$0xff]
        %v787 = vld [vmem:[%s173 + $0x1248] sm:$0xff]
        %v788 = vld [vmem:[%s173 + $0x1250] sm:$0xff]
        %v789 = vld [vmem:[%s173 + $0x1258] sm:$0xff]
        %v790 = vld [vmem:[%s173 + $0x1260] sm:$0xff]
        %v791 = vld [vmem:[%s173 + $0x1268] sm:$0xff]
        %v792 = vld [vmem:[%s173 + $0x1270] sm:$0xff]
        %v793 = vld [vmem:[%s173 + $0x1278] sm:$0xff]
        %v794 = vld [vmem:[%s173 + $0x1280] sm:$0xff]
        %v795 = vld [vmem:[%s173 + $0x1288] sm:$0xff]
        %v796 = vld [vmem:[%s173 + $0x1290] sm:$0xff]
        %v797 = vld [vmem:[%s173 + $0x1298] sm:$0xff]
        %v798 = vld [vmem:[%s173 + $0x12a0] sm:$0xff]
        %v799 = vld [vmem:[%s173 + $0x12a8] sm:$0xff]
        %v800 = vld [vmem:[%s173 + $0x12b0] sm:$0xff]
        %v801 = vld [vmem:[%s173 + $0x12b8] sm:$0xff]
        %v802 = vld [vmem:[%s173 + $0x12c0] sm:$0xff]
        %v803 = vld [vmem:[%s173 + $0x12c8] sm:$0xff]
        %v804 = vld [vmem:[%s173 + $0x12d0] sm:$0xff]
        %v805 = vld [vmem:[%s173 + $0x12d8] sm:$0xff]
        %v806 = vld [vmem:[%s173 + $0x12e0] sm:$0xff]
        %v807 = vld [vmem:[%s173 + $0x12e8] sm:$0xff]
        %v808 = vld [vmem:[%s173 + $0x12f0] sm:$0xff]
        %v809 = vld [vmem:[%s173 + $0x12f8] sm:$0xff]
        %v810 = vld [vmem:[%s173 + $0x1300] sm:$0xff]
        %v811 = vld [vmem:[%s173 + $0x1308] sm:$0xff]
        %v812 = vld [vmem:[%s173 + $0x1310] sm:$0xff]
        %v813 = vld [vmem:[%s173 + $0x1318] sm:$0xff]
        %v814 = vld [vmem:[%s173 + $0x1320] sm:$0xff]
        %v815 = vld [vmem:[%s173 + $0x1328] sm:$0xff]
        %v816 = vld [vmem:[%s173 + $0x1330] sm:$0xff]
        %v817 = vld [vmem:[%s173 + $0x1338] sm:$0xff]
        %v818 = vld [vmem:[%s173 + $0x1340] sm:$0xff]
        %v819 = vld [vmem:[%s173 + $0x1348] sm:$0xff]
        %v820 = vld [vmem:[%s173 + $0x1350] sm:$0xff]
        %v821 = vld [vmem:[%s173 + $0x1358] sm:$0xff]
        %v822 = vld [vmem:[%s173 + $0x1360] sm:$0xff]
        %v823 = vld [vmem:[%s173 + $0x1368] sm:$0xff]
        %v824 = vld [vmem:[%s173 + $0x1370] sm:$0xff]
        %v825 = vld [vmem:[%s173 + $0x1378] sm:$0xff]
        %v826 = vld [vmem:[%s173 + $0x1380] sm:$0xff]
        %v827 = vld [vmem:[%s173 + $0x1388] sm:$0xff]
        %v828 = vld [vmem:[%s173 + $0x1390] sm:$0xff]
        %v829 = vld [vmem:[%s173 + $0x1398] sm:$0xff]
        %v830 = vld [vmem:[%s173 + $0x13a0] sm:$0xff]
        %v831 = vld [vmem:[%s173 + $0x13a8] sm:$0xff]
        %v832 = vld [vmem:[%s173 + $0x13b0] sm:$0xff]
        %v833 = vld [vmem:[%s173 + $0x13b8] sm:$0xff]
        %v834 = vld [vmem:[%s173 + $0x13c0] sm:$0xff]
        %v835 = vld [vmem:[%s173 + $0x13c8] sm:$0xff]
        %v836 = vld [vmem:[%s173 + $0x13d0] sm:$0xff]
        %v837 = vld [vmem:[%s173 + $0x13d8] sm:$0xff]
        %v838 = vld [vmem:[%s173 + $0x13e0] sm:$0xff]
        %v839 = vld [vmem:[%s173 + $0x13e8] sm:$0xff]
        %v840 = vld [vmem:[%s173 + $0x13f0] sm:$0xff]
        %v841 = vld [vmem:[%s173 + $0x13f8] sm:$0xff]
        %v842 = vld [vmem:[%s173 + $0x1400] sm:$0xff]
        %v843 = vld [vmem:[%s173 + $0x1408] sm:$0xff]
        %v844 = vld [vmem:[%s173 + $0x1410] sm:$0xff]
        %v845 = vld [vmem:[%s173 + $0x1418] sm:$0xff]
        %v846 = vld [vmem:[%s173 + $0x1420] sm:$0xff]
        %v847 = vld [vmem:[%s173 + $0x1428] sm:$0xff]
        %v848 = vld [vmem:[%s173 + $0x1430] sm:$0xff]
        %v849 = vld [vmem:[%s173 + $0x1438] sm:$0xff]
        %v850 = vld [vmem:[%s173 + $0x1440] sm:$0xff]
        %v851 = vld [vmem:[%s173 + $0x1448] sm:$0xff]
        %v852 = vld [vmem:[%s173 + $0x1450] sm:$0xff]
        %v853 = vld [vmem:[%s173 + $0x1458] sm:$0xff]
        %v854 = vld [vmem:[%s173 + $0x1460] sm:$0xff]
        %v855 = vld [vmem:[%s173 + $0x1468] sm:$0xff]
        %v856 = vld [vmem:[%s173 + $0x1470] sm:$0xff]
        %v857 = vld [vmem:[%s173 + $0x1478] sm:$0xff]
        %v858 = vld [vmem:[%s173 + $0x1480] sm:$0xff]
        %v859 = vld [vmem:[%s173 + $0x1488] sm:$0xff]
        %v860 = vld [vmem:[%s173 + $0x1490] sm:$0xff]
        %v861 = vld [vmem:[%s173 + $0x1498] sm:$0xff]
        %v862 = vld [vmem:[%s173 + $0x14a0] sm:$0xff]
        %v863 = vld [vmem:[%s173 + $0x14a8] sm:$0xff]
        %v864 = vld [vmem:[%s173 + $0x14b0] sm:$0xff]
        %v865 = vld [vmem:[%s173 + $0x14b8] sm:$0xff]
        %v866 = vld [vmem:[%s173 + $0x14c0] sm:$0xff]
        %v867 = vld [vmem:[%s173 + $0x14c8] sm:$0xff]
        %v868 = vld [vmem:[%s173 + $0x14d0] sm:$0xff]
        %v869 = vld [vmem:[%s173 + $0x14d8] sm:$0xff]
        %v870 = vld [vmem:[%s173 + $0x14e0] sm:$0xff]
        %v871 = vld [vmem:[%s173 + $0x14e8] sm:$0xff]
        %v872 = vld [vmem:[%s173 + $0x14f0] sm:$0xff]
        %v873 = vld [vmem:[%s173 + $0x14f8] sm:$0xff]
        %v874 = vld [vmem:[%s173 + $0x1500] sm:$0xff]
        %v875 = vld [vmem:[%s173 + $0x1508] sm:$0xff]
        %v876 = vld [vmem:[%s173 + $0x1510] sm:$0xff]
        %v877 = vld [vmem:[%s173 + $0x1518] sm:$0xff]
        %v878 = vld [vmem:[%s173 + $0x1520] sm:$0xff]
        %v879 = vld [vmem:[%s173 + $0x1528] sm:$0xff]
        %v880 = vld [vmem:[%s173 + $0x1530] sm:$0xff]
        %v881 = vld [vmem:[%s173 + $0x1538] sm:$0xff]
        %v882 = vld [vmem:[%s173 + $0x1540] sm:$0xff]
        %v883 = vld [vmem:[%s173 + $0x1548] sm:$0xff]
        %v884 = vld [vmem:[%s173 + $0x1550] sm:$0xff]
        %v885 = vld [vmem:[%s173 + $0x1558] sm:$0xff]
        %v886 = vld [vmem:[%s173 + $0x1560] sm:$0xff]
        %v887 = vld [vmem:[%s173 + $0x1568] sm:$0xff]
        %v888 = vld [vmem:[%s173 + $0x1570] sm:$0xff]
        %v889 = vld [vmem:[%s173 + $0x1578] sm:$0xff]
        %v890 = vld [vmem:[%s173 + $0x1580] sm:$0xff]
        %v891 = vld [vmem:[%s173 + $0x1588] sm:$0xff]
        %v892 = vld [vmem:[%s173 + $0x1590] sm:$0xff]
        %v893 = vld [vmem:[%s173 + $0x1598] sm:$0xff]
        %v894 = vld [vmem:[%s173 + $0x15a0] sm:$0xff]
        %v895 = vld [vmem:[%s173 + $0x15a8] sm:$0xff]
        %v896 = vld [vmem:[%s173 + $0x15b0] sm:$0xff]
        %v897 = vld [vmem:[%s173 + $0x15b8] sm:$0xff]
        %v898 = vld [vmem:[%s173 + $0x15c0] sm:$0xff]
        %v899 = vld [vmem:[%s173 + $0x15c8] sm:$0xff]
        %v900 = vld [vmem:[%s173 + $0x15d0] sm:$0xff]
        %v901 = vld [vmem:[%s173 + $0x15d8] sm:$0xff]
        %v902 = vld [vmem:[%s173 + $0x15e0] sm:$0xff]
        %v903 = vld [vmem:[%s173 + $0x15e8] sm:$0xff]
        %v904 = vld [vmem:[%s173 + $0x15f0] sm:$0xff]
        %v905 = vld [vmem:[%s173 + $0x15f8] sm:$0xff]
        %v906 = vld [vmem:[%s173 + $0x1600] sm:$0xff]
        %v907 = vld [vmem:[%s173 + $0x1608] sm:$0xff]
        %v908 = vld [vmem:[%s173 + $0x1610] sm:$0xff]
        %v909 = vld [vmem:[%s173 + $0x1618] sm:$0xff]
        %v910 = vld [vmem:[%s173 + $0x1620] sm:$0xff]
        %v911 = vld [vmem:[%s173 + $0x1628] sm:$0xff]
        %v912 = vld [vmem:[%s173 + $0x1630] sm:$0xff]
        %v913 = vld [vmem:[%s173 + $0x1638] sm:$0xff]
        %v914 = vld [vmem:[%s173 + $0x1640] sm:$0xff]
        %v915 = vld [vmem:[%s173 + $0x1648] sm:$0xff]
        %v916 = vld [vmem:[%s173 + $0x1650] sm:$0xff]
        %v917 = vld [vmem:[%s173 + $0x1658] sm:$0xff]
        %v918 = vld [vmem:[%s173 + $0x1660] sm:$0xff]
        %v919 = vld [vmem:[%s173 + $0x1668] sm:$0xff]
        %v920 = vld [vmem:[%s173 + $0x1670] sm:$0xff]
        %v921 = vld [vmem:[%s173 + $0x1678] sm:$0xff]
        %v922 = vld [vmem:[%s173 + $0x1680] sm:$0xff]
        %v923 = vld [vmem:[%s173 + $0x1688] sm:$0xff]
        %v924 = vld [vmem:[%s173 + $0x1690] sm:$0xff]
        %v925 = vld [vmem:[%s173 + $0x1698] sm:$0xff]
        %v926 = vld [vmem:[%s173 + $0x16a0] sm:$0xff]
        %v927 = vld [vmem:[%s173 + $0x16a8] sm:$0xff]
        %v928 = vld [vmem:[%s173 + $0x16b0] sm:$0xff]
        %v929 = vld [vmem:[%s173 + $0x16b8] sm:$0xff]
        %v930 = vld [vmem:[%s173 + $0x16c0] sm:$0xff]
        %v931 = vld [vmem:[%s173 + $0x16c8] sm:$0xff]
        %v932 = vld [vmem:[%s173 + $0x16d0] sm:$0xff]
        %v933 = vld [vmem:[%s173 + $0x16d8] sm:$0xff]
        %v934 = vld [vmem:[%s173 + $0x16e0] sm:$0xff]
        %v935 = vld [vmem:[%s173 + $0x16e8] sm:$0xff]
        %v936 = vld [vmem:[%s173 + $0x16f0] sm:$0xff]
        %v937 = vld [vmem:[%s173 + $0x16f8] sm:$0xff]
        %v938 = vld [vmem:[%s173 + $0x1700] sm:$0xff]
        %v939 = vld [vmem:[%s173 + $0x1708] sm:$0xff]
        %v940 = vld [vmem:[%s173 + $0x1710] sm:$0xff]
        %v941 = vld [vmem:[%s173 + $0x1718] sm:$0xff]
        %v942 = vld [vmem:[%s173 + $0x1720] sm:$0xff]
        %v943 = vld [vmem:[%s173 + $0x1728] sm:$0xff]
        %v944 = vld [vmem:[%s173 + $0x1730] sm:$0xff]
        %v945 = vld [vmem:[%s173 + $0x1738] sm:$0xff]
        %v946 = vld [vmem:[%s173 + $0x1740] sm:$0xff]
        %v947 = vld [vmem:[%s173 + $0x1748] sm:$0xff]
        %v948 = vld [vmem:[%s173 + $0x1750] sm:$0xff]
        %v949 = vld [vmem:[%s173 + $0x1758] sm:$0xff]
        %v950 = vld [vmem:[%s173 + $0x1760] sm:$0xff]
        %v951 = vld [vmem:[%s173 + $0x1768] sm:$0xff]
        %v952 = vld [vmem:[%s173 + $0x1770] sm:$0xff]
        %v953 = vld [vmem:[%s173 + $0x1778] sm:$0xff]
        %v954 = vld [vmem:[%s173 + $0x1780] sm:$0xff]
        %v955 = vld [vmem:[%s173 + $0x1788] sm:$0xff]
        %v956 = vld [vmem:[%s173 + $0x1790] sm:$0xff]
        %v957 = vld [vmem:[%s173 + $0x1798] sm:$0xff]
        %v958 = vld [vmem:[%s173 + $0x17a0] sm:$0xff]
        %v959 = vld [vmem:[%s173 + $0x17a8] sm:$0xff]
        %v960 = vld [vmem:[%s173 + $0x17b0] sm:$0xff]
        %v961 = vld [vmem:[%s173 + $0x17b8] sm:$0xff]
        %v962 = vld [vmem:[%s173 + $0x17c0] sm:$0xff]
        %v963 = vld [vmem:[%s173 + $0x17c8] sm:$0xff]
        %v964 = vld [vmem:[%s173 + $0x17d0] sm:$0xff]
        %v965 = vld [vmem:[%s173 + $0x17d8] sm:$0xff]
        %v966 = vld [vmem:[%s173 + $0x17e0] sm:$0xff]
        %v967 = vld [vmem:[%s173 + $0x17e8] sm:$0xff]
        %v968 = vld [vmem:[%s173 + $0x17f0] sm:$0xff]
        %v969 = vld [vmem:[%s173 + $0x17f8] sm:$0xff]
        %v970 = vld [vmem:[%s173 + $0x1800] sm:$0xff]
        %v971 = vld [vmem:[%s173 + $0x1808] sm:$0xff]
        %v972 = vld [vmem:[%s173 + $0x1810] sm:$0xff]
        %v973 = vld [vmem:[%s173 + $0x1818] sm:$0xff]
        %v974 = vld [vmem:[%s173 + $0x1820] sm:$0xff]
        %v975 = vld [vmem:[%s173 + $0x1828] sm:$0xff]
        %v976 = vld [vmem:[%s173 + $0x1830] sm:$0xff]
        %v977 = vld [vmem:[%s173 + $0x1838] sm:$0xff]
        %v978 = vld [vmem:[%s173 + $0x1840] sm:$0xff]
        %v979 = vld [vmem:[%s173 + $0x1848] sm:$0xff]
        %v980 = vld [vmem:[%s173 + $0x1850] sm:$0xff]
        %v981 = vld [vmem:[%s173 + $0x1858] sm:$0xff]
        %v982 = vld [vmem:[%s173 + $0x1860] sm:$0xff]
        %v983 = vld [vmem:[%s173 + $0x1868] sm:$0xff]
        %v984 = vld [vmem:[%s173 + $0x1870] sm:$0xff]
        %v985 = vld [vmem:[%s173 + $0x1878] sm:$0xff]
        %v986 = vld [vmem:[%s1] sm:$0xff]
        %v987 = vld [vmem:[%s1 + $0x8] sm:$0xff]
        %v988 = vld [vmem:[%s1 + $0x10] sm:$0xff]
        %v989 = vld [vmem:[%s1 + $0x18] sm:$0xff]
        %v990 = vld [vmem:[%s1 + $0x20] sm:$0xff]
        %v991 = vld [vmem:[%s1 + $0x28] sm:$0xff]
        %v992 = vld [vmem:[%s1 + $0x30] sm:$0xff]
        %v993 = vld [vmem:[%s1 + $0x38] sm:$0xff]
        %v994 = vld [vmem:[%s1 + $0x40] sm:$0xff]
        %v995 = vld [vmem:[%s1 + $0x48] sm:$0xff]
        %v996 = vld [vmem:[%s1 + $0x50] sm:$0xff]
        %v997 = vld [vmem:[%s1 + $0x58] sm:$0xff]
        %v998 = vld [vmem:[%s1 + $0x60] sm:$0xff]
        %v999 = vld [vmem:[%s1 + $0x68] sm:$0xff]
        %v1000 = vld [vmem:[%s1 + $0x70] sm:$0xff]
        %v1001 = vld [vmem:[%s1 + $0x78] sm:$0xff]
        %1002 = vmatprep.subr.mxu0 0.0
        %1003 = vmatpush1.msra.mxu0 %v986
        %1004 = vmatprep.subr.mxu0 0.0
        %1005 = vmatpush1.msra.mxu0 %v987
        %1006 = vmatprep.subr.mxu0 0.0
        %1007 = vmatpush1.msra.mxu0 %v988
        %1008 = vmatprep.subr.mxu0 0.0
        %1009 = vmatpush1.msra.mxu0 %v989
        %1010 = vmatprep.subr.mxu0 0.0
        %1011 = vmatpush1.msra.mxu0 %v990
        %1012 = vmatprep.subr.mxu0 0.0
        %1013 = vmatpush1.msra.mxu0 %v991
        %1014 = vmatprep.subr.mxu0 0.0
        %1015 = vmatpush1.msra.mxu0 %v992
        %1016 = vmatprep.subr.mxu0 0.0
        %1017 = vmatpush1.msra.mxu0 %v993
        %1018 = vmatprep.subr.mxu0 0.0
        %1019 = vmatpush1.msra.mxu0 %v994
        %1020 = vmatprep.subr.mxu0 0.0
        %1021 = vmatpush1.msra.mxu0 %v995
        %1022 = vmatprep.subr.mxu0 0.0
        %1023 = vmatpush1.msra.mxu0 %v996
        %1024 = vmatprep.subr.mxu0 0.0
        %1025 = vmatpush1.msra.mxu0 %v997
        %1026 = vmatprep.subr.mxu0 0.0
        %1027 = vmatpush1.msra.mxu0 %v998
        %1028 = vmatprep.subr.mxu0 0.0
        %1029 = vmatpush1.msra.mxu0 %v999
        %1030 = vmatprep.subr.mxu0 0.0
        %1031 = vmatpush1.msra.mxu0 %v1000
        %1032 = vmatprep.subr.mxu0 0.0
        %1033 = vmatpush1.msra.mxu0 %v1001
        %1034 = vmatprep.subr.mxu0 0.0
        %1035 = vmatpush1.msra.mxu0 0.0
        %1036 = vmatprep.subr.mxu0 0.0
        %1037 = vmatpush1.msra.mxu0 0.0
        %1038 = vmatprep.subr.mxu0 0.0
        %1039 = vmatpush1.msra.mxu0 0.0
        %1040 = vmatprep.subr.mxu0 0.0
        %1041 = vmatpush1.msra.mxu0 0.0
        %1042 = vmatprep.subr.mxu0 0.0
        %1043 = vmatpush1.msra.mxu0 0.0
        %1044 = vmatprep.subr.mxu0 0.0
        %1045 = vmatpush1.msra.mxu0 0.0
        %1046 = vmatprep.subr.mxu0 0.0
        %1047 = vmatpush1.msra.mxu0 0.0
        %1048 = vmatprep.subr.mxu0 0.0
        %1049 = vmatpush1.msra.mxu0 0.0
        %1050 = vmatprep.subr.mxu0 0.0
        %1051 = vmatpush1.msra.mxu0 0.0
        %1052 = vmatprep.subr.mxu0 0.0
        %1053 = vmatpush1.msra.mxu0 0.0
        %1054 = vmatprep.subr.mxu0 0.0
        %1055 = vmatpush1.msra.mxu0 0.0
        %1056 = vmatprep.subr.mxu0 0.0
        %1057 = vmatpush1.msra.mxu0 0.0
        %1058 = vmatprep.subr.mxu0 0.0
        %1059 = vmatpush1.msra.mxu0 0.0
        %1060 = vmatprep.subr.mxu0 0.0
        %1061 = vmatpush1.msra.mxu0 0.0
        %1062 = vmatprep.subr.mxu0 0.0
        %1063 = vmatpush1.msra.mxu0 0.0
        %1064 = vmatprep.subr.mxu0 0.0
        %1065 = vmatpush1.msra.mxu0 0.0
        %1066 = vmatprep.mubr.f32.mxu0 0.0
        %1067 = vmatmul.mubr.f32.gmra.mrb[0].mxu0 %v202
        %v1068 = vpop.f32.mrb[0].mxu0
        %v1069 = vadd.f32 0.0, %v1068
        %v1070 = vpop.f32.mrb[0].mxu0
        %1071 = vmatprep.mubr.f32.mxu0 0.0
        %1072 = vmatmul.mubr.f32.gmra.mrb[0].mxu0 %v203
        %v1073 = vpop.f32.mrb[0].mxu0
        %v1074 = vadd.f32 0.0, %v1073
        %v1075 = vpop.f32.mrb[0].mxu0
        %1076 = vmatprep.mubr.f32.mxu0 0.0
        %1077 = vmatmul.mubr.f32.gmra.mrb[0].mxu0 %v204
        %v1078 = vpop.f32.mrb[0].mxu0
        %v1079 = vadd.f32 0.0, %v1078
        %v1080 = vpop.f32.mrb[0].mxu0
        %1081 = vmatprep.mubr.f32.mxu0 0.0
        %1082 = vmatmul.mubr.f32.gmra.mrb[0].mxu0 %v205
        %v1083 = vpop.f32.mrb[0].mxu0
        %v1084 = vadd.f32 0.0, %v1083
        %v1085 = vpop.f32.mrb[0].mxu0
        %1086 = vmatprep.mubr.f32.mxu0 0.0
        %1087 = vmatmul.mubr.f32.gmra.mrb[0].mxu0 %v206
        %v1088 = vpop.f32.mrb[0].mxu0
        %v1089 = vadd.f32 0.0, %v1088
        %v1090 = vpop.f32.mrb[0].mxu0
        %1091 = vmatprep.mubr.f32.mxu0 0.0
        %1092 = vmatmul.mubr.f32.gmra.mrb[0].mxu0 %v207
        %v1093 = vpop.f32.mrb[0].mxu0
        %v1094 = vadd.f32 0.0, %v1093
        %v1095 = vpop.f32.mrb[0].mxu0
        %1096 = vmatprep.mubr.f32.mxu0 0.0
        %1097 = vmatmul.mubr.f32.gmra.mrb[0].mxu0 %v208
        %v1098 = vpop.f32.mrb[0].mxu0
        %v1099 = vadd.f32 0.0, %v1098
        %v1100 = vpop.f32.mrb[0].mxu0
        %1101 = vmatprep.mubr.f32.mxu0 0.0
        %1102 = vmatmul.mubr.f32.gmra.mrb[0].mxu0 %v209
        %v1103 = vpop.f32.mrb[0].mxu0
        %v1104 = vadd.f32 0.0, %v1103
        %v1105 = vpop.f32.mrb[0].mxu0
        %1106 = vmatprep.mubr.f32.mxu0 0.0
        %1107 = vmatmul.mubr.f32.gmra.mrb[0].mxu0 %v210
        %v1108 = vpop.f32.mrb[0].mxu0
        %v1109 = vadd.f32 0.0, %v1108
        %v1110 = vpop.f32.mrb[0].mxu0
        %1111 = vmatprep.mubr.f32.mxu0 0.0
        %1112 = vmatmul.mubr.f32.gmra.mrb[0].mxu0 %v211
        %v1113 = vpop.f32.mrb[0].mxu0
        %v1114 = vadd.f32 0.0, %v1113
        %v1115 = vpop.f32.mrb[0].mxu0
        %1116 = vmatprep.mubr.f32.mxu0 0.0
        %1117 = vmatmul.mubr.f32.gmra.mrb[0].mxu0 %v212
        %v1118 = vpop.f32.mrb[0].mxu0
        %v1119 = vadd.f32 0.0, %v1118
        %v1120 = vpop.f32.mrb[0].mxu0
        %1121 = vmatprep.mubr.f32.mxu0 0.0
        %1122 = vmatmul.mubr.f32.gmra.mrb[0].mxu0 %v213
        %v1123 = vpop.f32.mrb[0].mxu0
        %v1124 = vadd.f32 0.0, %v1123
        %v1125 = vpop.f32.mrb[0].mxu0
        %1126 = vmatprep.mubr.f32.mxu0 0.0
        %1127 = vmatmul.mubr.f32.gmra.mrb[0].mxu0 %v214
        %v1128 = vpop.f32.mrb[0].mxu0
        %v1129 = vadd.f32 0.0, %v1128
        %v1130 = vpop.f32.mrb[0].mxu0
        %1131 = vmatprep.mubr.f32.mxu0 0.0
        %1132 = vmatmul.mubr.f32.gmra.mrb[0].mxu0 %v215
        %v1133 = vpop.f32.mrb[0].mxu0
        %v1134 = vadd.f32 0.0, %v1133
        %v1135 = vpop.f32.mrb[0].mxu0
        %1136 = vmatprep.mubr.f32.mxu0 0.0
        %1137 = vmatmul.mubr.f32.gmra.mrb[0].mxu0 %v216
        %v1138 = vpop.f32.mrb[0].mxu0
        %v1139 = vadd.f32 0.0, %v1138
        %v1140 = vpop.f32.mrb[0].mxu0
        %1141 = vmatprep.mubr.f32.mxu0 0.0
        %1142 = vmatmul.mubr.f32.gmra.mrb[0].mxu0 %v217
        %v1143 = vpop.f32.mrb[0].mxu0
        %v1144 = vadd.f32 0.0, %v1143
        %v1145 = vpop.f32.mrb[0].mxu0
        %1146 = vmatprep.mubr.f32.mxu0 0.0
        %1147 = vmatmul.mubr.f32.gmra.mrb[0].mxu0 %v218
        %v1148 = vpop.f32.mrb[0].mxu0
        %v1149 = vadd.f32 0.0, %v1148
        %v1150 = vpop.f32.mrb[0].mxu0
        %1151 = vmatprep.mubr.f32.mxu0 0.0
        %1152 = vmatmul.mubr.f32.gmra.mrb[0].mxu0 %v219
        %v1153 = vpop.f32.mrb[0].mxu0
        %v1154 = vadd.f32 0.0, %v1153
        %v1155 = vpop.f32.mrb[0].mxu0
        %1156 = vmatprep.mubr.f32.mxu0 0.0
        %1157 = vmatmul.mubr.f32.gmra.mrb[0].mxu0 %v220
        %v1158 = vpop.f32.mrb[0].mxu0
        %v1159 = vadd.f32 0.0, %v1158
        %v1160 = vpop.f32.mrb[0].mxu0
        %1161 = vmatprep.mubr.f32.mxu0 0.0
        %1162 = vmatmul.mubr.f32.gmra.mrb[0].mxu0 %v221
        %v1163 = vpop.f32.mrb[0].mxu0
        %v1164 = vadd.f32 0.0, %v1163
        %v1165 = vpop.f32.mrb[0].mxu0
        %1166 = vmatprep.mubr.f32.mxu0 0.0
        %1167 = vmatmul.mubr.f32.gmra.mrb[0].mxu0 %v222
        %v1168 = vpop.f32.mrb[0].mxu0
        %v1169 = vadd.f32 0.0, %v1168
        %v1170 = vpop.f32.mrb[0].mxu0
        %1171 = vmatprep.mubr.f32.mxu0 0.0
        %1172 = vmatmul.mubr.f32.gmra.mrb[0].mxu0 %v223
        %v1173 = vpop.f32.mrb[0].mxu0
        %v1174 = vadd.f32 0.0, %v1173
        %v1175 = vpop.f32.mrb[0].mxu0
        %1176 = vmatprep.mubr.f32.mxu0 0.0
        %1177 = vmatmul.mubr.f32.gmra.mrb[0].mxu0 %v224
        %v1178 = vpop.f32.mrb[0].mxu0
        %v1179 = vadd.f32 0.0, %v1178
        %v1180 = vpop.f32.mrb[0].mxu0
        %1181 = vmatprep.mubr.f32.mxu0 0.0
        %1182 = vmatmul.mubr.f32.gmra.mrb[0].mxu0 %v225
        %v1183 = vpop.f32.mrb[0].mxu0
        %v1184 = vadd.f32 0.0, %v1183
        %v1185 = vpop.f32.mrb[0].mxu0
        %1186 = vmatprep.mubr.f32.mxu0 0.0
        %1187 = vmatmul.mubr.f32.gmra.mrb[0].mxu0 %v226
        %v1188 = vpop.f32.mrb[0].mxu0
        %v1189 = vadd.f32 0.0, %v1188
        %v1190 = vpop.f32.mrb[0].mxu0
        %1191 = vmatprep.mubr.f32.mxu0 0.0
        %1192 = vmatmul.mubr.f32.gmra.mrb[0].mxu0 %v227
        %v1193 = vpop.f32.mrb[0].mxu0
        %v1194 = vadd.f32 0.0, %v1193
        %v1195 = vpop.f32.mrb[0].mxu0
        %1196 = vmatprep.mubr.f32.mxu0 0.0
        %1197 = vmatmul.mubr.f32.gmra.mrb[0].mxu0 %v228
        %v1198 = vpop.f32.mrb[0].mxu0
        %v1199 = vadd.f32 0.0, %v1198
        %v1200 = vpop.f32.mrb[0].mxu0
        %1201 = vmatprep.mubr.f32.mxu0 0.0
        %1202 = vmatmul.mubr.f32.gmra.mrb[0].mxu0 %v229
        %v1203 = vpop.f32.mrb[0].mxu0
        %v1204 = vadd.f32 0.0, %v1203
        %v1205 = vpop.f32.mrb[0].mxu0
        %1206 = vmatprep.mubr.f32.mxu0 0.0
        %1207 = vmatmul.mubr.f32.gmra.mrb[0].mxu0 %v230
        %v1208 = vpop.f32.mrb[0].mxu0
        %v1209 = vadd.f32 0.0, %v1208
        %v1210 = vpop.f32.mrb[0].mxu0
        %1211 = vmatprep.mubr.f32.mxu0 0.0
        %1212 = vmatmul.mubr.f32.gmra.mrb[0].mxu0 %v231
        %v1213 = vpop.f32.mrb[0].mxu0
        %v1214 = vadd.f32 0.0, %v1213
        %v1215 = vpop.f32.mrb[0].mxu0
        %1216 = vmatprep.mubr.f32.mxu0 0.0
        %1217 = vmatmul.mubr.f32.gmra.mrb[0].mxu0 %v232
        %v1218 = vpop.f32.mrb[0].mxu0
        %v1219 = vadd.f32 0.0, %v1218
        %v1220 = vpop.f32.mrb[0].mxu0
        %1221 = vmatprep.mubr.f32.mxu0 0.0
        %1222 = vmatmul.mubr.f32.gmra.mrb[0].mxu0 %v233
        %v1223 = vpop.f32.mrb[0].mxu0
        %v1224 = vadd.f32 0.0, %v1223
        %v1225 = vpop.f32.mrb[0].mxu0
        %1226 = vmatprep.mubr.f32.mxu0 0.0
        %1227 = vmatmul.mubr.f32.gmra.mrb[0].mxu0 %v234
        %v1228 = vpop.f32.mrb[0].mxu0
        %v1229 = vadd.f32 0.0, %v1228
        %v1230 = vpop.f32.mrb[0].mxu0
        %1231 = vmatprep.mubr.f32.mxu0 0.0
        %1232 = vmatmul.mubr.f32.gmra.mrb[0].mxu0 %v235
        %v1233 = vpop.f32.mrb[0].mxu0
        %v1234 = vadd.f32 0.0, %v1233
        %v1235 = vpop.f32.mrb[0].mxu0
        %1236 = vmatprep.mubr.f32.mxu0 0.0
        %1237 = vmatmul.mubr.f32.gmra.mrb[0].mxu0 %v236
        %v1238 = vpop.f32.mrb[0].mxu0
        %v1239 = vadd.f32 0.0, %v1238
        %v1240 = vpop.f32.mrb[0].mxu0
        %1241 = vmatprep.mubr.f32.mxu0 0.0
        %1242 = vmatmul.mubr.f32.gmra.mrb[0].mxu0 %v237
        %v1243 = vpop.f32.mrb[0].mxu0
        %v1244 = vadd.f32 0.0, %v1243
        %v1245 = vpop.f32.mrb[0].mxu0
        %1246 = vmatprep.mubr.f32.mxu0 0.0
        %1247 = vmatmul.mubr.f32.gmra.mrb[0].mxu0 %v238
        %v1248 = vpop.f32.mrb[0].mxu0
        %v1249 = vadd.f32 0.0, %v1248
        %v1250 = vpop.f32.mrb[0].mxu0
        %1251 = vmatprep.mubr.f32.mxu0 0.0
        %1252 = vmatmul.mubr.f32.gmra.mrb[0].mxu0 %v239
        %v1253 = vpop.f32.mrb[0].mxu0
        %v1254 = vadd.f32 0.0, %v1253
        %v1255 = vpop.f32.mrb[0].mxu0
        %1256 = vmatprep.mubr.f32.mxu0 0.0
        %1257 = vmatmul.mubr.f32.gmra.mrb[0].mxu0 %v240
        %v1258 = vpop.f32.mrb[0].mxu0
        %v1259 = vadd.f32 0.0, %v1258
        %v1260 = vpop.f32.mrb[0].mxu0
        %1261 = vmatprep.mubr.f32.mxu0 0.0
        %1262 = vmatmul.mubr.f32.gmra.mrb[0].mxu0 %v241
        %v1263 = vpop.f32.mrb[0].mxu0
        %v1264 = vadd.f32 0.0, %v1263
        %v1265 = vpop.f32.mrb[0].mxu0
        %1266 = vmatprep.mubr.f32.mxu0 0.0
        %1267 = vmatmul.mubr.f32.gmra.mrb[0].mxu0 %v242
        %v1268 = vpop.f32.mrb[0].mxu0
        %v1269 = vadd.f32 0.0, %v1268
        %v1270 = vpop.f32.mrb[0].mxu0
        %1271 = vmatprep.mubr.f32.mxu0 0.0
        %1272 = vmatmul.mubr.f32.gmra.mrb[0].mxu0 %v243
        %v1273 = vpop.f32.mrb[0].mxu0
        %v1274 = vadd.f32 0.0, %v1273
        %v1275 = vpop.f32.mrb[0].mxu0
        %1276 = vmatprep.mubr.f32.mxu0 0.0
        %1277 = vmatmul.mubr.f32.gmra.mrb[0].mxu0 %v244
        %v1278 = vpop.f32.mrb[0].mxu0
        %v1279 = vadd.f32 0.0, %v1278
        %v1280 = vpop.f32.mrb[0].mxu0
        %1281 = vmatprep.mubr.f32.mxu0 0.0
        %1282 = vmatmul.mubr.f32.gmra.mrb[0].mxu0 %v245
        %v1283 = vpop.f32.mrb[0].mxu0
        %v1284 = vadd.f32 0.0, %v1283
        %v1285 = vpop.f32.mrb[0].mxu0
        %1286 = vmatprep.mubr.f32.mxu0 0.0
        %1287 = vmatmul.mubr.f32.gmra.mrb[0].mxu0 %v246
        %v1288 = vpop.f32.mrb[0].mxu0
        %v1289 = vadd.f32 0.0, %v1288
        %v1290 = vpop.f32.mrb[0].mxu0
        %1291 = vmatprep.mubr.f32.mxu0 0.0
        %1292 = vmatmul.mubr.f32.gmra.mrb[0].mxu0 %v247
        %v1293 = vpop.f32.mrb[0].mxu0
        %v1294 = vadd.f32 0.0, %v1293
        %v1295 = vpop.f32.mrb[0].mxu0
        %1296 = vmatprep.mubr.f32.mxu0 0.0
        %1297 = vmatmul.mubr.f32.gmra.mrb[0].mxu0 %v248
        %v1298 = vpop.f32.mrb[0].mxu0
        %v1299 = vadd.f32 0.0, %v1298
        %v1300 = vpop.f32.mrb[0].mxu0
        %1301 = vmatprep.mubr.f32.mxu0 0.0
        %1302 = vmatmul.mubr.f32.gmra.mrb[0].mxu0 %v249
        %v1303 = vpop.f32.mrb[0].mxu0
        %v1304 = vadd.f32 0.0, %v1303
        %v1305 = vpop.f32.mrb[0].mxu0
        %1306 = vmatprep.mubr.f32.mxu0 0.0
        %1307 = vmatmul.mubr.f32.gmra.mrb[0].mxu0 %v250
        %v1308 = vpop.f32.mrb[0].mxu0
        %v1309 = vadd.f32 0.0, %v1308
        %v1310 = vpop.f32.mrb[0].mxu0
        %1311 = vmatprep.mubr.f32.mxu0 0.0
        %1312 = vmatmul.mubr.f32.gmra.mrb[0].mxu0 %v251
        %v1313 = vpop.f32.mrb[0].mxu0
        %v1314 = vadd.f32 0.0, %v1313
        %v1315 = vpop.f32.mrb[0].mxu0
        %1316 = vmatprep.mubr.f32.mxu0 0.0
        %1317 = vmatmul.mubr.f32.gmra.mrb[0].mxu0 %v252
        %v1318 = vpop.f32.mrb[0].mxu0
        %v1319 = vadd.f32 0.0, %v1318
        %v1320 = vpop.f32.mrb[0].mxu0
        %1321 = vmatprep.mubr.f32.mxu0 0.0
        %1322 = vmatmul.mubr.f32.gmra.mrb[0].mxu0 %v253
        %v1323 = vpop.f32.mrb[0].mxu0
        %v1324 = vadd.f32 0.0, %v1323
        %v1325 = vpop.f32.mrb[0].mxu0
        %1326 = vmatprep.mubr.f32.mxu0 0.0
        %1327 = vmatmul.mubr.f32.gmra.mrb[0].mxu0 %v254
        %v1328 = vpop.f32.mrb[0].mxu0
        %v1329 = vadd.f32 0.0, %v1328
        %v1330 = vpop.f32.mrb[0].mxu0
        %1331 = vmatprep.mubr.f32.mxu0 0.0
        %1332 = vmatmul.mubr.f32.gmra.mrb[0].mxu0 %v255
        %v1333 = vpop.f32.mrb[0].mxu0
        %v1334 = vadd.f32 0.0, %v1333
        %v1335 = vpop.f32.mrb[0].mxu0
        %1336 = vmatprep.mubr.f32.mxu0 0.0
        %1337 = vmatmul.mubr.f32.gmra.mrb[0].mxu0 %v256
        %v1338 = vpop.f32.mrb[0].mxu0
        %v1339 = vadd.f32 0.0, %v1338
        %v1340 = vpop.f32.mrb[0].mxu0
        %1341 = vmatprep.mubr.f32.mxu0 0.0
        %1342 = vmatmul.mubr.f32.gmra.mrb[0].mxu0 %v257
        %v1343 = vpop.f32.mrb[0].mxu0
        %v1344 = vadd.f32 0.0, %v1343
        %v1345 = vpop.f32.mrb[0].mxu0
        %1346 = vmatprep.mubr.f32.mxu0 0.0
        %1347 = vmatmul.mubr.f32.gmra.mrb[0].mxu0 %v258
        %v1348 = vpop.f32.mrb[0].mxu0
        %v1349 = vadd.f32 0.0, %v1348
        %v1350 = vpop.f32.mrb[0].mxu0
        %1351 = vmatprep.mubr.f32.mxu0 0.0
        %1352 = vmatmul.mubr.f32.gmra.mrb[0].mxu0 %v259
        %v1353 = vpop.f32.mrb[0].mxu0
        %v1354 = vadd.f32 0.0, %v1353
        %v1355 = vpop.f32.mrb[0].mxu0
        %1356 = vmatprep.mubr.f32.mxu0 0.0
        %1357 = vmatmul.mubr.f32.gmra.mrb[0].mxu0 %v260
        %v1358 = vpop.f32.mrb[0].mxu0
        %v1359 = vadd.f32 0.0, %v1358
        %v1360 = vpop.f32.mrb[0].mxu0
        %1361 = vmatprep.mubr.f32.mxu0 0.0
        %1362 = vmatmul.mubr.f32.gmra.mrb[0].mxu0 %v261
        %v1363 = vpop.f32.mrb[0].mxu0
        %v1364 = vadd.f32 0.0, %v1363
        %v1365 = vpop.f32.mrb[0].mxu0
        %1366 = vmatprep.mubr.f32.mxu0 0.0
        %1367 = vmatmul.mubr.f32.gmra.mrb[0].mxu0 %v262
        %v1368 = vpop.f32.mrb[0].mxu0
        %v1369 = vadd.f32 0.0, %v1368
        %v1370 = vpop.f32.mrb[0].mxu0
        %1371 = vmatprep.mubr.f32.mxu0 0.0
        %1372 = vmatmul.mubr.f32.gmra.mrb[0].mxu0 %v263
        %v1373 = vpop.f32.mrb[0].mxu0
        %v1374 = vadd.f32 0.0, %v1373
        %v1375 = vpop.f32.mrb[0].mxu0
        %1376 = vmatprep.mubr.f32.mxu0 0.0
        %1377 = vmatmul.mubr.f32.gmra.mrb[0].mxu0 %v264
        %v1378 = vpop.f32.mrb[0].mxu0
        %v1379 = vadd.f32 0.0, %v1378
        %v1380 = vpop.f32.mrb[0].mxu0
        %1381 = vmatprep.mubr.f32.mxu0 0.0
        %1382 = vmatmul.mubr.f32.gmra.mrb[0].mxu0 %v265
        %v1383 = vpop.f32.mrb[0].mxu0
        %v1384 = vadd.f32 0.0, %v1383
        %v1385 = vpop.f32.mrb[0].mxu0
        %1386 = vmatprep.mubr.f32.mxu0 0.0
        %1387 = vmatmul.mubr.f32.gmra.mrb[0].mxu0 %v266
        %v1388 = vpop.f32.mrb[0].mxu0
        %v1389 = vadd.f32 0.0, %v1388
        %v1390 = vpop.f32.mrb[0].mxu0
        %1391 = vmatprep.mubr.f32.mxu0 0.0
        %1392 = vmatmul.mubr.f32.gmra.mrb[0].mxu0 %v267
        %v1393 = vpop.f32.mrb[0].mxu0
        %v1394 = vadd.f32 0.0, %v1393
        %v1395 = vpop.f32.mrb[0].mxu0
        %1396 = vmatprep.mubr.f32.mxu0 0.0
        %1397 = vmatmul.mubr.f32.gmra.mrb[0].mxu0 %v268
        %v1398 = vpop.f32.mrb[0].mxu0
        %v1399 = vadd.f32 0.0, %v1398
        %v1400 = vpop.f32.mrb[0].mxu0
        %1401 = vmatprep.mubr.f32.mxu0 0.0
        %1402 = vmatmul.mubr.f32.gmra.mrb[0].mxu0 %v269
        %v1403 = vpop.f32.mrb[0].mxu0
        %v1404 = vadd.f32 0.0, %v1403
        %v1405 = vpop.f32.mrb[0].mxu0
        %1406 = vmatprep.mubr.f32.mxu0 0.0
        %1407 = vmatmul.mubr.f32.gmra.mrb[0].mxu0 %v270
        %v1408 = vpop.f32.mrb[0].mxu0
        %v1409 = vadd.f32 0.0, %v1408
        %v1410 = vpop.f32.mrb[0].mxu0
        %1411 = vmatprep.mubr.f32.mxu0 0.0
        %1412 = vmatmul.mubr.f32.gmra.mrb[0].mxu0 %v271
        %v1413 = vpop.f32.mrb[0].mxu0
        %v1414 = vadd.f32 0.0, %v1413
        %v1415 = vpop.f32.mrb[0].mxu0
        %1416 = vmatprep.mubr.f32.mxu0 0.0
        %1417 = vmatmul.mubr.f32.gmra.mrb[0].mxu0 %v272
        %v1418 = vpop.f32.mrb[0].mxu0
        %v1419 = vadd.f32 0.0, %v1418
        %v1420 = vpop.f32.mrb[0].mxu0
        %1421 = vmatprep.mubr.f32.mxu0 0.0
        %1422 = vmatmul.mubr.f32.gmra.mrb[0].mxu0 %v273
        %v1423 = vpop.f32.mrb[0].mxu0
        %v1424 = vadd.f32 0.0, %v1423
        %v1425 = vpop.f32.mrb[0].mxu0
        %1426 = vmatprep.mubr.f32.mxu0 0.0
        %1427 = vmatmul.mubr.f32.gmra.mrb[0].mxu0 %v274
        %v1428 = vpop.f32.mrb[0].mxu0
        %v1429 = vadd.f32 0.0, %v1428
        %v1430 = vpop.f32.mrb[0].mxu0
        %1431 = vmatprep.mubr.f32.mxu0 0.0
        %1432 = vmatmul.mubr.f32.gmra.mrb[0].mxu0 %v275
        %v1433 = vpop.f32.mrb[0].mxu0
        %v1434 = vadd.f32 0.0, %v1433
        %v1435 = vpop.f32.mrb[0].mxu0
        %1436 = vmatprep.mubr.f32.mxu0 0.0
        %1437 = vmatmul.mubr.f32.gmra.mrb[0].mxu0 %v276
        %v1438 = vpop.f32.mrb[0].mxu0
        %v1439 = vadd.f32 0.0, %v1438
        %v1440 = vpop.f32.mrb[0].mxu0
        %1441 = vmatprep.mubr.f32.mxu0 0.0
        %1442 = vmatmul.mubr.f32.gmra.mrb[0].mxu0 %v277
        %v1443 = vpop.f32.mrb[0].mxu0
        %v1444 = vadd.f32 0.0, %v1443
        %v1445 = vpop.f32.mrb[0].mxu0
        %1446 = vmatprep.mubr.f32.mxu0 0.0
        %1447 = vmatmul.mubr.f32.gmra.mrb[0].mxu0 %v278
        %v1448 = vpop.f32.mrb[0].mxu0
        %v1449 = vadd.f32 0.0, %v1448
        %v1450 = vpop.f32.mrb[0].mxu0
        %1451 = vmatprep.mubr.f32.mxu0 0.0
        %1452 = vmatmul.mubr.f32.gmra.mrb[0].mxu0 %v279
        %v1453 = vpop.f32.mrb[0].mxu0
        %v1454 = vadd.f32 0.0, %v1453
        %v1455 = vpop.f32.mrb[0].mxu0
        %1456 = vmatprep.mubr.f32.mxu0 0.0
        %1457 = vmatmul.mubr.f32.gmra.mrb[0].mxu0 %v280
        %v1458 = vpop.f32.mrb[0].mxu0
        %v1459 = vadd.f32 0.0, %v1458
        %v1460 = vpop.f32.mrb[0].mxu0
        %1461 = vmatprep.mubr.f32.mxu0 0.0
        %1462 = vmatmul.mubr.f32.gmra.mrb[0].mxu0 %v281
        %v1463 = vpop.f32.mrb[0].mxu0
        %v1464 = vadd.f32 0.0, %v1463
        %v1465 = vpop.f32.mrb[0].mxu0
        %1466 = vmatprep.mubr.f32.mxu0 0.0
        %1467 = vmatmul.mubr.f32.gmra.mrb[0].mxu0 %v282
        %v1468 = vpop.f32.mrb[0].mxu0
        %v1469 = vadd.f32 0.0, %v1468
        %v1470 = vpop.f32.mrb[0].mxu0
        %1471 = vmatprep.mubr.f32.mxu0 0.0
        %1472 = vmatmul.mubr.f32.gmra.mrb[0].mxu0 %v283
        %v1473 = vpop.f32.mrb[0].mxu0
        %v1474 = vadd.f32 0.0, %v1473
        %v1475 = vpop.f32.mrb[0].mxu0
        %1476 = vmatprep.mubr.f32.mxu0 0.0
        %1477 = vmatmul.mubr.f32.gmra.mrb[0].mxu0 %v284
        %v1478 = vpop.f32.mrb[0].mxu0
        %v1479 = vadd.f32 0.0, %v1478
        %v1480 = vpop.f32.mrb[0].mxu0
        %1481 = vmatprep.mubr.f32.mxu0 0.0
        %1482 = vmatmul.mubr.f32.gmra.mrb[0].mxu0 %v285
        %v1483 = vpop.f32.mrb[0].mxu0
        %v1484 = vadd.f32 0.0, %v1483
        %v1485 = vpop.f32.mrb[0].mxu0
        %1486 = vmatprep.mubr.f32.mxu0 0.0
        %1487 = vmatmul.mubr.f32.gmra.mrb[0].mxu0 %v286
        %v1488 = vpop.f32.mrb[0].mxu0
        %v1489 = vadd.f32 0.0, %v1488
        %v1490 = vpop.f32.mrb[0].mxu0
        %1491 = vmatprep.mubr.f32.mxu0 0.0
        %1492 = vmatmul.mubr.f32.gmra.mrb[0].mxu0 %v287
        %v1493 = vpop.f32.mrb[0].mxu0
        %v1494 = vadd.f32 0.0, %v1493
        %v1495 = vpop.f32.mrb[0].mxu0
        %1496 = vmatprep.mubr.f32.mxu0 0.0
        %1497 = vmatmul.mubr.f32.gmra.mrb[0].mxu0 %v288
        %v1498 = vpop.f32.mrb[0].mxu0
        %v1499 = vadd.f32 0.0, %v1498
        %v1500 = vpop.f32.mrb[0].mxu0
        %1501 = vmatprep.mubr.f32.mxu0 0.0
        %1502 = vmatmul.mubr.f32.gmra.mrb[0].mxu0 %v289
        %v1503 = vpop.f32.mrb[0].mxu0
        %v1504 = vadd.f32 0.0, %v1503
        %v1505 = vpop.f32.mrb[0].mxu0
        %1506 = vmatprep.mubr.f32.mxu0 0.0
        %1507 = vmatmul.mubr.f32.gmra.mrb[0].mxu0 %v290
        %v1508 = vpop.f32.mrb[0].mxu0
        %v1509 = vadd.f32 0.0, %v1508
        %v1510 = vpop.f32.mrb[0].mxu0
        %1511 = vmatprep.mubr.f32.mxu0 0.0
        %1512 = vmatmul.mubr.f32.gmra.mrb[0].mxu0 %v291
        %v1513 = vpop.f32.mrb[0].mxu0
        %v1514 = vadd.f32 0.0, %v1513
        %v1515 = vpop.f32.mrb[0].mxu0
        %1516 = vmatprep.mubr.f32.mxu0 0.0
        %1517 = vmatmul.mubr.f32.gmra.mrb[0].mxu0 %v292
        %v1518 = vpop.f32.mrb[0].mxu0
        %v1519 = vadd.f32 0.0, %v1518
        %v1520 = vpop.f32.mrb[0].mxu0
        %1521 = vmatprep.mubr.f32.mxu0 0.0
        %1522 = vmatmul.mubr.f32.gmra.mrb[0].mxu0 %v293
        %v1523 = vpop.f32.mrb[0].mxu0
        %v1524 = vadd.f32 0.0, %v1523
        %v1525 = vpop.f32.mrb[0].mxu0
        %1526 = vmatprep.mubr.f32.mxu0 0.0
        %1527 = vmatmul.mubr.f32.gmra.mrb[0].mxu0 %v294
        %v1528 = vpop.f32.mrb[0].mxu0
        %v1529 = vadd.f32 0.0, %v1528
        %v1530 = vpop.f32.mrb[0].mxu0
        %1531 = vmatprep.mubr.f32.mxu0 0.0
        %1532 = vmatmul.mubr.f32.gmra.mrb[0].mxu0 %v295
        %v1533 = vpop.f32.mrb[0].mxu0
        %v1534 = vadd.f32 0.0, %v1533
        %v1535 = vpop.f32.mrb[0].mxu0
        %1536 = vmatprep.mubr.f32.mxu0 0.0
        %1537 = vmatmul.mubr.f32.gmra.mrb[0].mxu0 %v296
        %v1538 = vpop.f32.mrb[0].mxu0
        %v1539 = vadd.f32 0.0, %v1538
        %v1540 = vpop.f32.mrb[0].mxu0
        %1541 = vmatprep.mubr.f32.mxu0 0.0
        %1542 = vmatmul.mubr.f32.gmra.mrb[0].mxu0 %v297
        %v1543 = vpop.f32.mrb[0].mxu0
        %v1544 = vadd.f32 0.0, %v1543
        %v1545 = vpop.f32.mrb[0].mxu0
        %1546 = vmatprep.mubr.f32.mxu0 0.0
        %1547 = vmatmul.mubr.f32.gmra.mrb[0].mxu0 %v298
        %v1548 = vpop.f32.mrb[0].mxu0
        %v1549 = vadd.f32 0.0, %v1548
        %v1550 = vpop.f32.mrb[0].mxu0
        %1551 = vmatprep.mubr.f32.mxu0 0.0
        %1552 = vmatmul.mubr.f32.gmra.mrb[0].mxu0 %v299
        %v1553 = vpop.f32.mrb[0].mxu0
        %v1554 = vadd.f32 0.0, %v1553
        %v1555 = vpop.f32.mrb[0].mxu0
        %1556 = vmatprep.mubr.f32.mxu0 0.0
        %1557 = vmatmul.mubr.f32.gmra.mrb[0].mxu0 %v300
        %v1558 = vpop.f32.mrb[0].mxu0
        %v1559 = vadd.f32 0.0, %v1558
        %v1560 = vpop.f32.mrb[0].mxu0
        %1561 = vmatprep.mubr.f32.mxu0 0.0
        %1562 = vmatmul.mubr.f32.gmra.mrb[0].mxu0 %v301
        %v1563 = vpop.f32.mrb[0].mxu0
        %v1564 = vadd.f32 0.0, %v1563
        %v1565 = vpop.f32.mrb[0].mxu0
        %1566 = vmatprep.mubr.f32.mxu0 0.0
        %1567 = vmatmul.mubr.f32.gmra.mrb[0].mxu0 %v302
        %v1568 = vpop.f32.mrb[0].mxu0
        %v1569 = vadd.f32 0.0, %v1568
        %v1570 = vpop.f32.mrb[0].mxu0
        %1571 = vmatprep.mubr.f32.mxu0 0.0
        %1572 = vmatmul.mubr.f32.gmra.mrb[0].mxu0 %v303
        %v1573 = vpop.f32.mrb[0].mxu0
        %v1574 = vadd.f32 0.0, %v1573
        %v1575 = vpop.f32.mrb[0].mxu0
        %1576 = vmatprep.mubr.f32.mxu0 0.0
        %1577 = vmatmul.mubr.f32.gmra.mrb[0].mxu0 %v304
        %v1578 = vpop.f32.mrb[0].mxu0
        %v1579 = vadd.f32 0.0, %v1578
        %v1580 = vpop.f32.mrb[0].mxu0
        %1581 = vmatprep.mubr.f32.mxu0 0.0
        %1582 = vmatmul.mubr.f32.gmra.mrb[0].mxu0 %v305
        %v1583 = vpop.f32.mrb[0].mxu0
        %v1584 = vadd.f32 0.0, %v1583
        %v1585 = vpop.f32.mrb[0].mxu0
        %1586 = vmatprep.mubr.f32.mxu0 0.0
        %1587 = vmatmul.mubr.f32.gmra.mrb[0].mxu0 %v306
        %v1588 = vpop.f32.mrb[0].mxu0
        %v1589 = vadd.f32 0.0, %v1588
        %v1590 = vpop.f32.mrb[0].mxu0
        %1591 = vmatprep.mubr.f32.mxu0 0.0
        %1592 = vmatmul.mubr.f32.gmra.mrb[0].mxu0 %v307
        %v1593 = vpop.f32.mrb[0].mxu0
        %v1594 = vadd.f32 0.0, %v1593
        %v1595 = vpop.f32.mrb[0].mxu0
        %1596 = vmatprep.mubr.f32.mxu0 0.0
        %1597 = vmatmul.mubr.f32.gmra.mrb[0].mxu0 %v308
        %v1598 = vpop.f32.mrb[0].mxu0
        %v1599 = vadd.f32 0.0, %v1598
        %v1600 = vpop.f32.mrb[0].mxu0
        %1601 = vmatprep.mubr.f32.mxu0 0.0
        %1602 = vmatmul.mubr.f32.gmra.mrb[0].mxu0 %v309
        %v1603 = vpop.f32.mrb[0].mxu0
        %v1604 = vadd.f32 0.0, %v1603
        %v1605 = vpop.f32.mrb[0].mxu0
        %1606 = vmatprep.mubr.f32.mxu0 0.0
        %1607 = vmatmul.mubr.f32.gmra.mrb[0].mxu0 %v310
        %v1608 = vpop.f32.mrb[0].mxu0
        %v1609 = vadd.f32 0.0, %v1608
        %v1610 = vpop.f32.mrb[0].mxu0
        %1611 = vmatprep.mubr.f32.mxu0 0.0
        %1612 = vmatmul.mubr.f32.gmra.mrb[0].mxu0 %v311
        %v1613 = vpop.f32.mrb[0].mxu0
        %v1614 = vadd.f32 0.0, %v1613
        %v1615 = vpop.f32.mrb[0].mxu0
        %1616 = vmatprep.mubr.f32.mxu0 0.0
        %1617 = vmatmul.mubr.f32.gmra.mrb[0].mxu0 %v312
        %v1618 = vpop.f32.mrb[0].mxu0
        %v1619 = vadd.f32 0.0, %v1618
        %v1620 = vpop.f32.mrb[0].mxu0
        %1621 = vmatprep.mubr.f32.mxu0 0.0
        %1622 = vmatmul.mubr.f32.gmra.mrb[0].mxu0 %v313
        %v1623 = vpop.f32.mrb[0].mxu0
        %v1624 = vadd.f32 0.0, %v1623
        %v1625 = vpop.f32.mrb[0].mxu0
        %1626 = vmatprep.mubr.f32.mxu0 0.0
        %1627 = vmatmul.mubr.f32.gmra.mrb[0].mxu0 %v314
        %v1628 = vpop.f32.mrb[0].mxu0
        %v1629 = vadd.f32 0.0, %v1628
        %v1630 = vpop.f32.mrb[0].mxu0
        %1631 = vmatprep.mubr.f32.mxu0 0.0
        %1632 = vmatmul.mubr.f32.gmra.mrb[0].mxu0 %v315
        %v1633 = vpop.f32.mrb[0].mxu0
        %v1634 = vadd.f32 0.0, %v1633
        %v1635 = vpop.f32.mrb[0].mxu0
        %1636 = vmatprep.mubr.f32.mxu0 0.0
        %1637 = vmatmul.mubr.f32.gmra.mrb[0].mxu0 %v316
        %v1638 = vpop.f32.mrb[0].mxu0
        %v1639 = vadd.f32 0.0, %v1638
        %v1640 = vpop.f32.mrb[0].mxu0
        %1641 = vmatprep.mubr.f32.mxu0 0.0
        %1642 = vmatmul.mubr.f32.gmra.mrb[0].mxu0 %v317
        %v1643 = vpop.f32.mrb[0].mxu0
        %v1644 = vadd.f32 0.0, %v1643
        %v1645 = vpop.f32.mrb[0].mxu0
        %1646 = vmatprep.mubr.f32.mxu0 0.0
        %1647 = vmatmul.mubr.f32.gmra.mrb[0].mxu0 %v318
        %v1648 = vpop.f32.mrb[0].mxu0
        %v1649 = vadd.f32 0.0, %v1648
        %v1650 = vpop.f32.mrb[0].mxu0
        %1651 = vmatprep.mubr.f32.mxu0 0.0
        %1652 = vmatmul.mubr.f32.gmra.mrb[0].mxu0 %v319
        %v1653 = vpop.f32.mrb[0].mxu0
        %v1654 = vadd.f32 0.0, %v1653
        %v1655 = vpop.f32.mrb[0].mxu0
        %1656 = vmatprep.mubr.f32.mxu0 0.0
        %1657 = vmatmul.mubr.f32.gmra.mrb[0].mxu0 %v320
        %v1658 = vpop.f32.mrb[0].mxu0
        %v1659 = vadd.f32 0.0, %v1658
        %v1660 = vpop.f32.mrb[0].mxu0
        %1661 = vmatprep.mubr.f32.mxu0 0.0
        %1662 = vmatmul.mubr.f32.gmra.mrb[0].mxu0 %v321
        %v1663 = vpop.f32.mrb[0].mxu0
        %v1664 = vadd.f32 0.0, %v1663
        %v1665 = vpop.f32.mrb[0].mxu0
        %1666 = vmatprep.mubr.f32.mxu0 0.0
        %1667 = vmatmul.mubr.f32.gmra.mrb[0].mxu0 %v322
        %v1668 = vpop.f32.mrb[0].mxu0
        %v1669 = vadd.f32 0.0, %v1668
        %v1670 = vpop.f32.mrb[0].mxu0
        %1671 = vmatprep.mubr.f32.mxu0 0.0
        %1672 = vmatmul.mubr.f32.gmra.mrb[0].mxu0 %v323
        %v1673 = vpop.f32.mrb[0].mxu0
        %v1674 = vadd.f32 0.0, %v1673
        %v1675 = vpop.f32.mrb[0].mxu0
        %1676 = vmatprep.mubr.f32.mxu0 0.0
        %1677 = vmatmul.mubr.f32.gmra.mrb[0].mxu0 %v324
        %v1678 = vpop.f32.mrb[0].mxu0
        %v1679 = vadd.f32 0.0, %v1678
        %v1680 = vpop.f32.mrb[0].mxu0
        %1681 = vmatprep.mubr.f32.mxu0 0.0
        %1682 = vmatmul.mubr.f32.gmra.mrb[0].mxu0 %v325
        %v1683 = vpop.f32.mrb[0].mxu0
        %v1684 = vadd.f32 0.0, %v1683
        %v1685 = vpop.f32.mrb[0].mxu0
        %1686 = vmatprep.mubr.f32.mxu0 0.0
        %1687 = vmatmul.mubr.f32.gmra.mrb[0].mxu0 %v326
        %v1688 = vpop.f32.mrb[0].mxu0
        %v1689 = vadd.f32 0.0, %v1688
        %v1690 = vpop.f32.mrb[0].mxu0
        %1691 = vmatprep.mubr.f32.mxu0 0.0
        %1692 = vmatmul.mubr.f32.gmra.mrb[0].mxu0 %v327
        %v1693 = vpop.f32.mrb[0].mxu0
        %v1694 = vadd.f32 0.0, %v1693
        %v1695 = vpop.f32.mrb[0].mxu0
        %1696 = vmatprep.mubr.f32.mxu0 0.0
        %1697 = vmatmul.mubr.f32.gmra.mrb[0].mxu0 %v328
        %v1698 = vpop.f32.mrb[0].mxu0
        %v1699 = vadd.f32 0.0, %v1698
        %v1700 = vpop.f32.mrb[0].mxu0
        %1701 = vmatprep.mubr.f32.mxu0 0.0
        %1702 = vmatmul.mubr.f32.gmra.mrb[0].mxu0 %v329
        %v1703 = vpop.f32.mrb[0].mxu0
        %v1704 = vadd.f32 0.0, %v1703
        %v1705 = vpop.f32.mrb[0].mxu0
        %1706 = vmatprep.mubr.f32.mxu0 0.0
        %1707 = vmatmul.mubr.f32.gmra.mrb[0].mxu0 %v330
        %v1708 = vpop.f32.mrb[0].mxu0
        %v1709 = vadd.f32 0.0, %v1708
        %v1710 = vpop.f32.mrb[0].mxu0
        %1711 = vmatprep.mubr.f32.mxu0 0.0
        %1712 = vmatmul.mubr.f32.gmra.mrb[0].mxu0 %v331
        %v1713 = vpop.f32.mrb[0].mxu0
        %v1714 = vadd.f32 0.0, %v1713
        %v1715 = vpop.f32.mrb[0].mxu0
        %1716 = vmatprep.mubr.f32.mxu0 0.0
        %1717 = vmatmul.mubr.f32.gmra.mrb[0].mxu0 %v332
        %v1718 = vpop.f32.mrb[0].mxu0
        %v1719 = vadd.f32 0.0, %v1718
        %v1720 = vpop.f32.mrb[0].mxu0
        %1721 = vmatprep.mubr.f32.mxu0 0.0
        %1722 = vmatmul.mubr.f32.gmra.mrb[0].mxu0 %v333
        %v1723 = vpop.f32.mrb[0].mxu0
        %v1724 = vadd.f32 0.0, %v1723
        %v1725 = vpop.f32.mrb[0].mxu0
        %1726 = vmatprep.mubr.f32.mxu0 0.0
        %1727 = vmatmul.mubr.f32.gmra.mrb[0].mxu0 %v334
        %v1728 = vpop.f32.mrb[0].mxu0
        %v1729 = vadd.f32 0.0, %v1728
        %v1730 = vpop.f32.mrb[0].mxu0
        %1731 = vmatprep.mubr.f32.mxu0 0.0
        %1732 = vmatmul.mubr.f32.gmra.mrb[0].mxu0 %v335
        %v1733 = vpop.f32.mrb[0].mxu0
        %v1734 = vadd.f32 0.0, %v1733
        %v1735 = vpop.f32.mrb[0].mxu0
        %1736 = vmatprep.mubr.f32.mxu0 0.0
        %1737 = vmatmul.mubr.f32.gmra.mrb[0].mxu0 %v336
        %v1738 = vpop.f32.mrb[0].mxu0
        %v1739 = vadd.f32 0.0, %v1738
        %v1740 = vpop.f32.mrb[0].mxu0
        %1741 = vmatprep.mubr.f32.mxu0 0.0
        %1742 = vmatmul.mubr.f32.gmra.mrb[0].mxu0 %v337
        %v1743 = vpop.f32.mrb[0].mxu0
        %v1744 = vadd.f32 0.0, %v1743
        %v1745 = vpop.f32.mrb[0].mxu0
        %1746 = vmatprep.mubr.f32.mxu0 0.0
        %1747 = vmatmul.mubr.f32.gmra.mrb[0].mxu0 %v338
        %v1748 = vpop.f32.mrb[0].mxu0
        %v1749 = vadd.f32 0.0, %v1748
        %v1750 = vpop.f32.mrb[0].mxu0
        %1751 = vmatprep.mubr.f32.mxu0 0.0
        %1752 = vmatmul.mubr.f32.gmra.mrb[0].mxu0 %v339
        %v1753 = vpop.f32.mrb[0].mxu0
        %v1754 = vadd.f32 0.0, %v1753
        %v1755 = vpop.f32.mrb[0].mxu0
        %1756 = vmatprep.mubr.f32.mxu0 0.0
        %1757 = vmatmul.mubr.f32.gmra.mrb[0].mxu0 %v340
        %v1758 = vpop.f32.mrb[0].mxu0
        %v1759 = vadd.f32 0.0, %v1758
        %v1760 = vpop.f32.mrb[0].mxu0
        %1761 = vmatprep.mubr.f32.mxu0 0.0
        %1762 = vmatmul.mubr.f32.gmra.mrb[0].mxu0 %v341
        %v1763 = vpop.f32.mrb[0].mxu0
        %v1764 = vadd.f32 0.0, %v1763
        %v1765 = vpop.f32.mrb[0].mxu0
        %1766 = vmatprep.mubr.f32.mxu0 0.0
        %1767 = vmatmul.mubr.f32.gmra.mrb[0].mxu0 %v342
        %v1768 = vpop.f32.mrb[0].mxu0
        %v1769 = vadd.f32 0.0, %v1768
        %v1770 = vpop.f32.mrb[0].mxu0
        %1771 = vmatprep.mubr.f32.mxu0 0.0
        %1772 = vmatmul.mubr.f32.gmra.mrb[0].mxu0 %v343
        %v1773 = vpop.f32.mrb[0].mxu0
        %v1774 = vadd.f32 0.0, %v1773
        %v1775 = vpop.f32.mrb[0].mxu0
        %1776 = vmatprep.mubr.f32.mxu0 0.0
        %1777 = vmatmul.mubr.f32.gmra.mrb[0].mxu0 %v344
        %v1778 = vpop.f32.mrb[0].mxu0
        %v1779 = vadd.f32 0.0, %v1778
        %v1780 = vpop.f32.mrb[0].mxu0
        %1781 = vmatprep.mubr.f32.mxu0 0.0
        %1782 = vmatmul.mubr.f32.gmra.mrb[0].mxu0 %v345
        %v1783 = vpop.f32.mrb[0].mxu0
        %v1784 = vadd.f32 0.0, %v1783
        %v1785 = vpop.f32.mrb[0].mxu0
        %1786 = vmatprep.mubr.f32.mxu0 0.0
        %1787 = vmatmul.mubr.f32.gmra.mrb[0].mxu0 %v346
        %v1788 = vpop.f32.mrb[0].mxu0
        %v1789 = vadd.f32 0.0, %v1788
        %v1790 = vpop.f32.mrb[0].mxu0
        %1791 = vmatprep.mubr.f32.mxu0 0.0
        %1792 = vmatmul.mubr.f32.gmra.mrb[0].mxu0 %v347
        %v1793 = vpop.f32.mrb[0].mxu0
        %v1794 = vadd.f32 0.0, %v1793
        %v1795 = vpop.f32.mrb[0].mxu0
        %1796 = vmatprep.mubr.f32.mxu0 0.0
        %1797 = vmatmul.mubr.f32.gmra.mrb[0].mxu0 %v348
        %v1798 = vpop.f32.mrb[0].mxu0
        %v1799 = vadd.f32 0.0, %v1798
        %v1800 = vpop.f32.mrb[0].mxu0
        %1801 = vmatprep.mubr.f32.mxu0 0.0
        %1802 = vmatmul.mubr.f32.gmra.mrb[0].mxu0 %v349
        %v1803 = vpop.f32.mrb[0].mxu0
        %v1804 = vadd.f32 0.0, %v1803
        %v1805 = vpop.f32.mrb[0].mxu0
        %1806 = vmatprep.mubr.f32.mxu0 0.0
        %1807 = vmatmul.mubr.f32.gmra.mrb[0].mxu0 %v350
        %v1808 = vpop.f32.mrb[0].mxu0
        %v1809 = vadd.f32 0.0, %v1808
        %v1810 = vpop.f32.mrb[0].mxu0
        %1811 = vmatprep.mubr.f32.mxu0 0.0
        %1812 = vmatmul.mubr.f32.gmra.mrb[0].mxu0 %v351
        %v1813 = vpop.f32.mrb[0].mxu0
        %v1814 = vadd.f32 0.0, %v1813
        %v1815 = vpop.f32.mrb[0].mxu0
        %1816 = vmatprep.mubr.f32.mxu0 0.0
        %1817 = vmatmul.mubr.f32.gmra.mrb[0].mxu0 %v352
        %v1818 = vpop.f32.mrb[0].mxu0
        %v1819 = vadd.f32 0.0, %v1818
        %v1820 = vpop.f32.mrb[0].mxu0
        %1821 = vmatprep.mubr.f32.mxu0 0.0
        %1822 = vmatmul.mubr.f32.gmra.mrb[0].mxu0 %v353
        %v1823 = vpop.f32.mrb[0].mxu0
        %v1824 = vadd.f32 0.0, %v1823
        %v1825 = vpop.f32.mrb[0].mxu0
        %1826 = vmatprep.mubr.f32.mxu0 0.0
        %1827 = vmatmul.mubr.f32.gmra.mrb[0].mxu0 %v354
        %v1828 = vpop.f32.mrb[0].mxu0
        %v1829 = vadd.f32 0.0, %v1828
        %v1830 = vpop.f32.mrb[0].mxu0
        %1831 = vmatprep.mubr.f32.mxu0 0.0
        %1832 = vmatmul.mubr.f32.gmra.mrb[0].mxu0 %v355
        %v1833 = vpop.f32.mrb[0].mxu0
        %v1834 = vadd.f32 0.0, %v1833
        %v1835 = vpop.f32.mrb[0].mxu0
        %1836 = vmatprep.mubr.f32.mxu0 0.0
        %1837 = vmatmul.mubr.f32.gmra.mrb[0].mxu0 %v356
        %v1838 = vpop.f32.mrb[0].mxu0
        %v1839 = vadd.f32 0.0, %v1838
        %v1840 = vpop.f32.mrb[0].mxu0
        %1841 = vmatprep.mubr.f32.mxu0 0.0
        %1842 = vmatmul.mubr.f32.gmra.mrb[0].mxu0 %v357
        %v1843 = vpop.f32.mrb[0].mxu0
        %v1844 = vadd.f32 0.0, %v1843
        %v1845 = vpop.f32.mrb[0].mxu0
        %1846 = vmatprep.mubr.f32.mxu0 0.0
        %1847 = vmatmul.mubr.f32.gmra.mrb[0].mxu0 %v358
        %v1848 = vpop.f32.mrb[0].mxu0
        %v1849 = vadd.f32 0.0, %v1848
        %v1850 = vpop.f32.mrb[0].mxu0
        %1851 = vmatprep.mubr.f32.mxu0 0.0
        %1852 = vmatmul.mubr.f32.gmra.mrb[0].mxu0 %v359
        %v1853 = vpop.f32.mrb[0].mxu0
        %v1854 = vadd.f32 0.0, %v1853
        %v1855 = vpop.f32.mrb[0].mxu0
        %1856 = vmatprep.mubr.f32.mxu0 0.0
        %1857 = vmatmul.mubr.f32.gmra.mrb[0].mxu0 %v360
        %v1858 = vpop.f32.mrb[0].mxu0
        %v1859 = vadd.f32 0.0, %v1858
        %v1860 = vpop.f32.mrb[0].mxu0
        %1861 = vmatprep.mubr.f32.mxu0 0.0
        %1862 = vmatmul.mubr.f32.gmra.mrb[0].mxu0 %v361
        %v1863 = vpop.f32.mrb[0].mxu0
        %v1864 = vadd.f32 0.0, %v1863
        %v1865 = vpop.f32.mrb[0].mxu0
        %1866 = vmatprep.mubr.f32.mxu0 0.0
        %1867 = vmatmul.mubr.f32.gmra.mrb[0].mxu0 %v362
        %v1868 = vpop.f32.mrb[0].mxu0
        %v1869 = vadd.f32 0.0, %v1868
        %v1870 = vpop.f32.mrb[0].mxu0
        %1871 = vmatprep.mubr.f32.mxu0 0.0
        %1872 = vmatmul.mubr.f32.gmra.mrb[0].mxu0 %v363
        %v1873 = vpop.f32.mrb[0].mxu0
        %v1874 = vadd.f32 0.0, %v1873
        %v1875 = vpop.f32.mrb[0].mxu0
        %1876 = vmatprep.mubr.f32.mxu0 0.0
        %1877 = vmatmul.mubr.f32.gmra.mrb[0].mxu0 %v364
        %v1878 = vpop.f32.mrb[0].mxu0
        %v1879 = vadd.f32 0.0, %v1878
        %v1880 = vpop.f32.mrb[0].mxu0
        %1881 = vmatprep.mubr.f32.mxu0 0.0
        %1882 = vmatmul.mubr.f32.gmra.mrb[0].mxu0 %v365
        %v1883 = vpop.f32.mrb[0].mxu0
        %v1884 = vadd.f32 0.0, %v1883
        %v1885 = vpop.f32.mrb[0].mxu0
        %1886 = vmatprep.mubr.f32.mxu0 0.0
        %1887 = vmatmul.mubr.f32.gmra.mrb[0].mxu0 %v366
        %v1888 = vpop.f32.mrb[0].mxu0
        %v1889 = vadd.f32 0.0, %v1888
        %v1890 = vpop.f32.mrb[0].mxu0
        %1891 = vmatprep.mubr.f32.mxu0 0.0
        %1892 = vmatmul.mubr.f32.gmra.mrb[0].mxu0 %v367
        %v1893 = vpop.f32.mrb[0].mxu0
        %v1894 = vadd.f32 0.0, %v1893
        %v1895 = vpop.f32.mrb[0].mxu0
        %1896 = vmatprep.mubr.f32.mxu0 0.0
        %1897 = vmatmul.mubr.f32.gmra.mrb[0].mxu0 %v368
        %v1898 = vpop.f32.mrb[0].mxu0
        %v1899 = vadd.f32 0.0, %v1898
        %v1900 = vpop.f32.mrb[0].mxu0
        %1901 = vmatprep.mubr.f32.mxu0 0.0
        %1902 = vmatmul.mubr.f32.gmra.mrb[0].mxu0 %v369
        %v1903 = vpop.f32.mrb[0].mxu0
        %v1904 = vadd.f32 0.0, %v1903
        %v1905 = vpop.f32.mrb[0].mxu0
        %1906 = vmatprep.mubr.f32.mxu0 0.0
        %1907 = vmatmul.mubr.f32.gmra.mrb[0].mxu0 %v370
        %v1908 = vpop.f32.mrb[0].mxu0
        %v1909 = vadd.f32 0.0, %v1908
        %v1910 = vpop.f32.mrb[0].mxu0
        %1911 = vmatprep.mubr.f32.mxu0 0.0
        %1912 = vmatmul.mubr.f32.gmra.mrb[0].mxu0 %v371
        %v1913 = vpop.f32.mrb[0].mxu0
        %v1914 = vadd.f32 0.0, %v1913
        %v1915 = vpop.f32.mrb[0].mxu0
        %1916 = vmatprep.mubr.f32.mxu0 0.0
        %1917 = vmatmul.mubr.f32.gmra.mrb[0].mxu0 %v372
        %v1918 = vpop.f32.mrb[0].mxu0
        %v1919 = vadd.f32 0.0, %v1918
        %v1920 = vpop.f32.mrb[0].mxu0
        %1921 = vmatprep.mubr.f32.mxu0 0.0
        %1922 = vmatmul.mubr.f32.gmra.mrb[0].mxu0 %v373
        %v1923 = vpop.f32.mrb[0].mxu0
        %v1924 = vadd.f32 0.0, %v1923
        %v1925 = vpop.f32.mrb[0].mxu0
        %1926 = vmatprep.mubr.f32.mxu0 0.0
        %1927 = vmatmul.mubr.f32.gmra.mrb[0].mxu0 %v374
        %v1928 = vpop.f32.mrb[0].mxu0
        %v1929 = vadd.f32 0.0, %v1928
        %v1930 = vpop.f32.mrb[0].mxu0
        %1931 = vmatprep.mubr.f32.mxu0 0.0
        %1932 = vmatmul.mubr.f32.gmra.mrb[0].mxu0 %v375
        %v1933 = vpop.f32.mrb[0].mxu0
        %v1934 = vadd.f32 0.0, %v1933
        %v1935 = vpop.f32.mrb[0].mxu0
        %1936 = vmatprep.mubr.f32.mxu0 0.0
        %1937 = vmatmul.mubr.f32.gmra.mrb[0].mxu0 %v376
        %v1938 = vpop.f32.mrb[0].mxu0
        %v1939 = vadd.f32 0.0, %v1938
        %v1940 = vpop.f32.mrb[0].mxu0
        %1941 = vmatprep.mubr.f32.mxu0 0.0
        %1942 = vmatmul.mubr.f32.gmra.mrb[0].mxu0 %v377
        %v1943 = vpop.f32.mrb[0].mxu0
        %v1944 = vadd.f32 0.0, %v1943
        %v1945 = vpop.f32.mrb[0].mxu0
        %1946 = vmatprep.mubr.f32.mxu0 0.0
        %1947 = vmatmul.mubr.f32.gmra.mrb[0].mxu0 %v378
        %v1948 = vpop.f32.mrb[0].mxu0
        %v1949 = vadd.f32 0.0, %v1948
        %v1950 = vpop.f32.mrb[0].mxu0
        %1951 = vmatprep.mubr.f32.mxu0 0.0
        %1952 = vmatmul.mubr.f32.gmra.mrb[0].mxu0 %v379
        %v1953 = vpop.f32.mrb[0].mxu0
        %v1954 = vadd.f32 0.0, %v1953
        %v1955 = vpop.f32.mrb[0].mxu0
        %1956 = vmatprep.mubr.f32.mxu0 0.0
        %1957 = vmatmul.mubr.f32.gmra.mrb[0].mxu0 %v380
        %v1958 = vpop.f32.mrb[0].mxu0
        %v1959 = vadd.f32 0.0, %v1958
        %v1960 = vpop.f32.mrb[0].mxu0
        %1961 = vmatprep.mubr.f32.mxu0 0.0
        %1962 = vmatmul.mubr.f32.gmra.mrb[0].mxu0 %v381
        %v1963 = vpop.f32.mrb[0].mxu0
        %v1964 = vadd.f32 0.0, %v1963
        %v1965 = vpop.f32.mrb[0].mxu0
        %1966 = vmatprep.mubr.f32.mxu0 0.0
        %1967 = vmatmul.mubr.f32.gmra.mrb[0].mxu0 %v382
        %v1968 = vpop.f32.mrb[0].mxu0
        %v1969 = vadd.f32 0.0, %v1968
        %v1970 = vpop.f32.mrb[0].mxu0
        %1971 = vmatprep.mubr.f32.mxu0 0.0
        %1972 = vmatmul.mubr.f32.gmra.mrb[0].mxu0 %v383
        %v1973 = vpop.f32.mrb[0].mxu0
        %v1974 = vadd.f32 0.0, %v1973
        %v1975 = vpop.f32.mrb[0].mxu0
        %1976 = vmatprep.mubr.f32.mxu0 0.0
        %1977 = vmatmul.mubr.f32.gmra.mrb[0].mxu0 %v384
        %v1978 = vpop.f32.mrb[0].mxu0
        %v1979 = vadd.f32 0.0, %v1978
        %v1980 = vpop.f32.mrb[0].mxu0
        %1981 = vmatprep.mubr.f32.mxu0 0.0
        %1982 = vmatmul.mubr.f32.gmra.mrb[0].mxu0 %v385
        %v1983 = vpop.f32.mrb[0].mxu0
        %v1984 = vadd.f32 0.0, %v1983
        %v1985 = vpop.f32.mrb[0].mxu0
        %1986 = vmatprep.mubr.f32.mxu0 0.0
        %1987 = vmatmul.mubr.f32.gmra.mrb[0].mxu0 %v386
        %v1988 = vpop.f32.mrb[0].mxu0
        %v1989 = vadd.f32 0.0, %v1988
        %v1990 = vpop.f32.mrb[0].mxu0
        %1991 = vmatprep.mubr.f32.mxu0 0.0
        %1992 = vmatmul.mubr.f32.gmra.mrb[0].mxu0 %v387
        %v1993 = vpop.f32.mrb[0].mxu0
        %v1994 = vadd.f32 0.0, %v1993
        %v1995 = vpop.f32.mrb[0].mxu0
        %1996 = vmatprep.mubr.f32.mxu0 0.0
        %1997 = vmatmul.mubr.f32.gmra.mrb[0].mxu0 %v388
        %v1998 = vpop.f32.mrb[0].mxu0
        %v1999 = vadd.f32 0.0, %v1998
        %v2000 = vpop.f32.mrb[0].mxu0
        %2001 = vmatprep.mubr.f32.mxu0 0.0
        %2002 = vmatmul.mubr.f32.gmra.mrb[0].mxu0 %v389
        %v2003 = vpop.f32.mrb[0].mxu0
        %v2004 = vadd.f32 0.0, %v2003
        %v2005 = vpop.f32.mrb[0].mxu0
        %2006 = vmatprep.mubr.f32.mxu0 0.0
        %2007 = vmatmul.mubr.f32.gmra.mrb[0].mxu0 %v390
        %v2008 = vpop.f32.mrb[0].mxu0
        %v2009 = vadd.f32 0.0, %v2008
        %v2010 = vpop.f32.mrb[0].mxu0
        %2011 = vmatprep.mubr.f32.mxu0 0.0
        %2012 = vmatmul.mubr.f32.gmra.mrb[0].mxu0 %v391
        %v2013 = vpop.f32.mrb[0].mxu0
        %v2014 = vadd.f32 0.0, %v2013
        %v2015 = vpop.f32.mrb[0].mxu0
        %2016 = vmatprep.mubr.f32.mxu0 0.0
        %2017 = vmatmul.mubr.f32.gmra.mrb[0].mxu0 %v392
        %v2018 = vpop.f32.mrb[0].mxu0
        %v2019 = vadd.f32 0.0, %v2018
        %v2020 = vpop.f32.mrb[0].mxu0
        %2021 = vmatprep.mubr.f32.mxu0 0.0
        %2022 = vmatmul.mubr.f32.gmra.mrb[0].mxu0 %v393
        %v2023 = vpop.f32.mrb[0].mxu0
        %v2024 = vadd.f32 0.0, %v2023
        %v2025 = vpop.f32.mrb[0].mxu0
        %2026 = vmatprep.mubr.f32.mxu0 0.0
        %2027 = vmatmul.mubr.f32.gmra.mrb[0].mxu0 %v394
        %v2028 = vpop.f32.mrb[0].mxu0
        %v2029 = vadd.f32 0.0, %v2028
        %v2030 = vpop.f32.mrb[0].mxu0
        %2031 = vmatprep.mubr.f32.mxu0 0.0
        %2032 = vmatmul.mubr.f32.gmra.mrb[0].mxu0 %v395
        %v2033 = vpop.f32.mrb[0].mxu0
        %v2034 = vadd.f32 0.0, %v2033
        %v2035 = vpop.f32.mrb[0].mxu0
        %2036 = vmatprep.mubr.f32.mxu0 0.0
        %2037 = vmatmul.mubr.f32.gmra.mrb[0].mxu0 %v396
        %v2038 = vpop.f32.mrb[0].mxu0
        %v2039 = vadd.f32 0.0, %v2038
        %v2040 = vpop.f32.mrb[0].mxu0
        %2041 = vmatprep.mubr.f32.mxu0 0.0
        %2042 = vmatmul.mubr.f32.gmra.mrb[0].mxu0 %v397
        %v2043 = vpop.f32.mrb[0].mxu0
        %v2044 = vadd.f32 0.0, %v2043
        %v2045 = vpop.f32.mrb[0].mxu0
        %2046 = vmatprep.mubr.f32.mxu0 0.0
        %2047 = vmatmul.mubr.f32.gmra.mrb[0].mxu0 %v398
        %v2048 = vpop.f32.mrb[0].mxu0
        %v2049 = vadd.f32 0.0, %v2048
        %v2050 = vpop.f32.mrb[0].mxu0
        %2051 = vmatprep.mubr.f32.mxu0 0.0
        %2052 = vmatmul.mubr.f32.gmra.mrb[0].mxu0 %v399
        %v2053 = vpop.f32.mrb[0].mxu0
        %v2054 = vadd.f32 0.0, %v2053
        %v2055 = vpop.f32.mrb[0].mxu0
        %2056 = vmatprep.mubr.f32.mxu0 0.0
        %2057 = vmatmul.mubr.f32.gmra.mrb[0].mxu0 %v400
        %v2058 = vpop.f32.mrb[0].mxu0
        %v2059 = vadd.f32 0.0, %v2058
        %v2060 = vpop.f32.mrb[0].mxu0
        %2061 = vmatprep.mubr.f32.mxu0 0.0
        %2062 = vmatmul.mubr.f32.gmra.mrb[0].mxu0 %v401
        %v2063 = vpop.f32.mrb[0].mxu0
        %v2064 = vadd.f32 0.0, %v2063
        %v2065 = vpop.f32.mrb[0].mxu0
        %2066 = vmatprep.mubr.f32.mxu0 0.0
        %2067 = vmatmul.mubr.f32.gmra.mrb[0].mxu0 %v402
        %v2068 = vpop.f32.mrb[0].mxu0
        %v2069 = vadd.f32 0.0, %v2068
        %v2070 = vpop.f32.mrb[0].mxu0
        %2071 = vmatprep.mubr.f32.mxu0 0.0
        %2072 = vmatmul.mubr.f32.gmra.mrb[0].mxu0 %v403
        %v2073 = vpop.f32.mrb[0].mxu0
        %v2074 = vadd.f32 0.0, %v2073
        %v2075 = vpop.f32.mrb[0].mxu0
        %2076 = vmatprep.mubr.f32.mxu0 0.0
        %2077 = vmatmul.mubr.f32.gmra.mrb[0].mxu0 %v404
        %v2078 = vpop.f32.mrb[0].mxu0
        %v2079 = vadd.f32 0.0, %v2078
        %v2080 = vpop.f32.mrb[0].mxu0
        %2081 = vmatprep.mubr.f32.mxu0 0.0
        %2082 = vmatmul.mubr.f32.gmra.mrb[0].mxu0 %v405
        %v2083 = vpop.f32.mrb[0].mxu0
        %v2084 = vadd.f32 0.0, %v2083
        %v2085 = vpop.f32.mrb[0].mxu0
        %2086 = vmatprep.mubr.f32.mxu0 0.0
        %2087 = vmatmul.mubr.f32.gmra.mrb[0].mxu0 %v406
        %v2088 = vpop.f32.mrb[0].mxu0
        %v2089 = vadd.f32 0.0, %v2088
        %v2090 = vpop.f32.mrb[0].mxu0
        %2091 = vmatprep.mubr.f32.mxu0 0.0
        %2092 = vmatmul.mubr.f32.gmra.mrb[0].mxu0 %v407
        %v2093 = vpop.f32.mrb[0].mxu0
        %v2094 = vadd.f32 0.0, %v2093
        %v2095 = vpop.f32.mrb[0].mxu0
        %2096 = vmatprep.mubr.f32.mxu0 0.0
        %2097 = vmatmul.mubr.f32.gmra.mrb[0].mxu0 %v408
        %v2098 = vpop.f32.mrb[0].mxu0
        %v2099 = vadd.f32 0.0, %v2098
        %v2100 = vpop.f32.mrb[0].mxu0
        %2101 = vmatprep.mubr.f32.mxu0 0.0
        %2102 = vmatmul.mubr.f32.gmra.mrb[0].mxu0 %v409
        %v2103 = vpop.f32.mrb[0].mxu0
        %v2104 = vadd.f32 0.0, %v2103
        %v2105 = vpop.f32.mrb[0].mxu0
        %2106 = vmatprep.mubr.f32.mxu0 0.0
        %2107 = vmatmul.mubr.f32.gmra.mrb[0].mxu0 %v410
        %v2108 = vpop.f32.mrb[0].mxu0
        %v2109 = vadd.f32 0.0, %v2108
        %v2110 = vpop.f32.mrb[0].mxu0
        %2111 = vmatprep.mubr.f32.mxu0 0.0
        %2112 = vmatmul.mubr.f32.gmra.mrb[0].mxu0 %v411
        %v2113 = vpop.f32.mrb[0].mxu0
        %v2114 = vadd.f32 0.0, %v2113
        %v2115 = vpop.f32.mrb[0].mxu0
        %2116 = vmatprep.mubr.f32.mxu0 0.0
        %2117 = vmatmul.mubr.f32.gmra.mrb[0].mxu0 %v412
        %v2118 = vpop.f32.mrb[0].mxu0
        %v2119 = vadd.f32 0.0, %v2118
        %v2120 = vpop.f32.mrb[0].mxu0
        %2121 = vmatprep.mubr.f32.mxu0 0.0
        %2122 = vmatmul.mubr.f32.gmra.mrb[0].mxu0 %v413
        %v2123 = vpop.f32.mrb[0].mxu0
        %v2124 = vadd.f32 0.0, %v2123
        %v2125 = vpop.f32.mrb[0].mxu0
        %2126 = vmatprep.mubr.f32.mxu0 0.0
        %2127 = vmatmul.mubr.f32.gmra.mrb[0].mxu0 %v414
        %v2128 = vpop.f32.mrb[0].mxu0
        %v2129 = vadd.f32 0.0, %v2128
        %v2130 = vpop.f32.mrb[0].mxu0
        %2131 = vmatprep.mubr.f32.mxu0 0.0
        %2132 = vmatmul.mubr.f32.gmra.mrb[0].mxu0 %v415
        %v2133 = vpop.f32.mrb[0].mxu0
        %v2134 = vadd.f32 0.0, %v2133
        %v2135 = vpop.f32.mrb[0].mxu0
        %2136 = vmatprep.mubr.f32.mxu0 0.0
        %2137 = vmatmul.mubr.f32.gmra.mrb[0].mxu0 %v416
        %v2138 = vpop.f32.mrb[0].mxu0
        %v2139 = vadd.f32 0.0, %v2138
        %v2140 = vpop.f32.mrb[0].mxu0
        %2141 = vmatprep.mubr.f32.mxu0 0.0
        %2142 = vmatmul.mubr.f32.gmra.mrb[0].mxu0 %v417
        %v2143 = vpop.f32.mrb[0].mxu0
        %v2144 = vadd.f32 0.0, %v2143
        %v2145 = vpop.f32.mrb[0].mxu0
        %2146 = vmatprep.mubr.f32.mxu0 0.0
        %2147 = vmatmul.mubr.f32.gmra.mrb[0].mxu0 %v418
        %v2148 = vpop.f32.mrb[0].mxu0
        %v2149 = vadd.f32 0.0, %v2148
        %v2150 = vpop.f32.mrb[0].mxu0
        %2151 = vmatprep.mubr.f32.mxu0 0.0
        %2152 = vmatmul.mubr.f32.gmra.mrb[0].mxu0 %v419
        %v2153 = vpop.f32.mrb[0].mxu0
        %v2154 = vadd.f32 0.0, %v2153
        %v2155 = vpop.f32.mrb[0].mxu0
        %2156 = vmatprep.mubr.f32.mxu0 0.0
        %2157 = vmatmul.mubr.f32.gmra.mrb[0].mxu0 %v420
        %v2158 = vpop.f32.mrb[0].mxu0
        %v2159 = vadd.f32 0.0, %v2158
        %v2160 = vpop.f32.mrb[0].mxu0
        %2161 = vmatprep.mubr.f32.mxu0 0.0
        %2162 = vmatmul.mubr.f32.gmra.mrb[0].mxu0 %v421
        %v2163 = vpop.f32.mrb[0].mxu0
        %v2164 = vadd.f32 0.0, %v2163
        %v2165 = vpop.f32.mrb[0].mxu0
        %2166 = vmatprep.mubr.f32.mxu0 0.0
        %2167 = vmatmul.mubr.f32.gmra.mrb[0].mxu0 %v422
        %v2168 = vpop.f32.mrb[0].mxu0
        %v2169 = vadd.f32 0.0, %v2168
        %v2170 = vpop.f32.mrb[0].mxu0
        %2171 = vmatprep.mubr.f32.mxu0 0.0
        %2172 = vmatmul.mubr.f32.gmra.mrb[0].mxu0 %v423
        %v2173 = vpop.f32.mrb[0].mxu0
        %v2174 = vadd.f32 0.0, %v2173
        %v2175 = vpop.f32.mrb[0].mxu0
        %2176 = vmatprep.mubr.f32.mxu0 0.0
        %2177 = vmatmul.mubr.f32.gmra.mrb[0].mxu0 %v424
        %v2178 = vpop.f32.mrb[0].mxu0
        %v2179 = vadd.f32 0.0, %v2178
        %v2180 = vpop.f32.mrb[0].mxu0
        %2181 = vmatprep.mubr.f32.mxu0 0.0
        %2182 = vmatmul.mubr.f32.gmra.mrb[0].mxu0 %v425
        %v2183 = vpop.f32.mrb[0].mxu0
        %v2184 = vadd.f32 0.0, %v2183
        %v2185 = vpop.f32.mrb[0].mxu0
        %2186 = vmatprep.mubr.f32.mxu0 0.0
        %2187 = vmatmul.mubr.f32.gmra.mrb[0].mxu0 %v426
        %v2188 = vpop.f32.mrb[0].mxu0
        %v2189 = vadd.f32 0.0, %v2188
        %v2190 = vpop.f32.mrb[0].mxu0
        %2191 = vmatprep.mubr.f32.mxu0 0.0
        %2192 = vmatmul.mubr.f32.gmra.mrb[0].mxu0 %v427
        %v2193 = vpop.f32.mrb[0].mxu0
        %v2194 = vadd.f32 0.0, %v2193
        %v2195 = vpop.f32.mrb[0].mxu0
        %2196 = vmatprep.mubr.f32.mxu0 0.0
        %2197 = vmatmul.mubr.f32.gmra.mrb[0].mxu0 %v428
        %v2198 = vpop.f32.mrb[0].mxu0
        %v2199 = vadd.f32 0.0, %v2198
        %v2200 = vpop.f32.mrb[0].mxu0
        %2201 = vmatprep.mubr.f32.mxu0 0.0
        %2202 = vmatmul.mubr.f32.gmra.mrb[0].mxu0 %v429
        %v2203 = vpop.f32.mrb[0].mxu0
        %v2204 = vadd.f32 0.0, %v2203
        %v2205 = vpop.f32.mrb[0].mxu0
        %2206 = vmatprep.mubr.f32.mxu0 0.0
        %2207 = vmatmul.mubr.f32.gmra.mrb[0].mxu0 %v430
        %v2208 = vpop.f32.mrb[0].mxu0
        %v2209 = vadd.f32 0.0, %v2208
        %v2210 = vpop.f32.mrb[0].mxu0
        %2211 = vmatprep.mubr.f32.mxu0 0.0
        %2212 = vmatmul.mubr.f32.gmra.mrb[0].mxu0 %v431
        %v2213 = vpop.f32.mrb[0].mxu0
        %v2214 = vadd.f32 0.0, %v2213
        %v2215 = vpop.f32.mrb[0].mxu0
        %2216 = vmatprep.mubr.f32.mxu0 0.0
        %2217 = vmatmul.mubr.f32.gmra.mrb[0].mxu0 %v432
        %v2218 = vpop.f32.mrb[0].mxu0
        %v2219 = vadd.f32 0.0, %v2218
        %v2220 = vpop.f32.mrb[0].mxu0
        %2221 = vmatprep.mubr.f32.mxu0 0.0
        %2222 = vmatmul.mubr.f32.gmra.mrb[0].mxu0 %v433
        %v2223 = vpop.f32.mrb[0].mxu0
        %v2224 = vadd.f32 0.0, %v2223
        %v2225 = vpop.f32.mrb[0].mxu0
        %2226 = vmatprep.mubr.f32.mxu0 0.0
        %2227 = vmatmul.mubr.f32.gmra.mrb[0].mxu0 %v434
        %v2228 = vpop.f32.mrb[0].mxu0
        %v2229 = vadd.f32 0.0, %v2228
        %v2230 = vpop.f32.mrb[0].mxu0
        %2231 = vmatprep.mubr.f32.mxu0 0.0
        %2232 = vmatmul.mubr.f32.gmra.mrb[0].mxu0 %v435
        %v2233 = vpop.f32.mrb[0].mxu0
        %v2234 = vadd.f32 0.0, %v2233
        %v2235 = vpop.f32.mrb[0].mxu0
        %2236 = vmatprep.mubr.f32.mxu0 0.0
        %2237 = vmatmul.mubr.f32.gmra.mrb[0].mxu0 %v436
        %v2238 = vpop.f32.mrb[0].mxu0
        %v2239 = vadd.f32 0.0, %v2238
        %v2240 = vpop.f32.mrb[0].mxu0
        %2241 = vmatprep.mubr.f32.mxu0 0.0
        %2242 = vmatmul.mubr.f32.gmra.mrb[0].mxu0 %v437
        %v2243 = vpop.f32.mrb[0].mxu0
        %v2244 = vadd.f32 0.0, %v2243
        %v2245 = vpop.f32.mrb[0].mxu0
        %2246 = vmatprep.mubr.f32.mxu0 0.0
        %2247 = vmatmul.mubr.f32.gmra.mrb[0].mxu0 %v438
        %v2248 = vpop.f32.mrb[0].mxu0
        %v2249 = vadd.f32 0.0, %v2248
        %v2250 = vpop.f32.mrb[0].mxu0
        %2251 = vmatprep.mubr.f32.mxu0 0.0
        %2252 = vmatmul.mubr.f32.gmra.mrb[0].mxu0 %v439
        %v2253 = vpop.f32.mrb[0].mxu0
        %v2254 = vadd.f32 0.0, %v2253
        %v2255 = vpop.f32.mrb[0].mxu0
        %2256 = vmatprep.mubr.f32.mxu0 0.0
        %2257 = vmatmul.mubr.f32.gmra.mrb[0].mxu0 %v440
        %v2258 = vpop.f32.mrb[0].mxu0
        %v2259 = vadd.f32 0.0, %v2258
        %v2260 = vpop.f32.mrb[0].mxu0
        %2261 = vmatprep.mubr.f32.mxu0 0.0
        %2262 = vmatmul.mubr.f32.gmra.mrb[0].mxu0 %v441
        %v2263 = vpop.f32.mrb[0].mxu0
        %v2264 = vadd.f32 0.0, %v2263
        %v2265 = vpop.f32.mrb[0].mxu0
        %2266 = vmatprep.mubr.f32.mxu0 0.0
        %2267 = vmatmul.mubr.f32.gmra.mrb[0].mxu0 %v442
        %v2268 = vpop.f32.mrb[0].mxu0
        %v2269 = vadd.f32 0.0, %v2268
        %v2270 = vpop.f32.mrb[0].mxu0
        %2271 = vmatprep.mubr.f32.mxu0 0.0
        %2272 = vmatmul.mubr.f32.gmra.mrb[0].mxu0 %v443
        %v2273 = vpop.f32.mrb[0].mxu0
        %v2274 = vadd.f32 0.0, %v2273
        %v2275 = vpop.f32.mrb[0].mxu0
        %2276 = vmatprep.mubr.f32.mxu0 0.0
        %2277 = vmatmul.mubr.f32.gmra.mrb[0].mxu0 %v444
        %v2278 = vpop.f32.mrb[0].mxu0
        %v2279 = vadd.f32 0.0, %v2278
        %v2280 = vpop.f32.mrb[0].mxu0
        %2281 = vmatprep.mubr.f32.mxu0 0.0
        %2282 = vmatmul.mubr.f32.gmra.mrb[0].mxu0 %v445
        %v2283 = vpop.f32.mrb[0].mxu0
        %v2284 = vadd.f32 0.0, %v2283
        %v2285 = vpop.f32.mrb[0].mxu0
        %2286 = vmatprep.mubr.f32.mxu0 0.0
        %2287 = vmatmul.mubr.f32.gmra.mrb[0].mxu0 %v446
        %v2288 = vpop.f32.mrb[0].mxu0
        %v2289 = vadd.f32 0.0, %v2288
        %v2290 = vpop.f32.mrb[0].mxu0
        %2291 = vmatprep.mubr.f32.mxu0 0.0
        %2292 = vmatmul.mubr.f32.gmra.mrb[0].mxu0 %v447
        %v2293 = vpop.f32.mrb[0].mxu0
        %v2294 = vadd.f32 0.0, %v2293
        %v2295 = vpop.f32.mrb[0].mxu0
        %2296 = vmatprep.mubr.f32.mxu0 0.0
        %2297 = vmatmul.mubr.f32.gmra.mrb[0].mxu0 %v448
        %v2298 = vpop.f32.mrb[0].mxu0
        %v2299 = vadd.f32 0.0, %v2298
        %v2300 = vpop.f32.mrb[0].mxu0
        %2301 = vmatprep.mubr.f32.mxu0 0.0
        %2302 = vmatmul.mubr.f32.gmra.mrb[0].mxu0 %v449
        %v2303 = vpop.f32.mrb[0].mxu0
        %v2304 = vadd.f32 0.0, %v2303
        %v2305 = vpop.f32.mrb[0].mxu0
        %2306 = vmatprep.mubr.f32.mxu0 0.0
        %2307 = vmatmul.mubr.f32.gmra.mrb[0].mxu0 %v450
        %v2308 = vpop.f32.mrb[0].mxu0
        %v2309 = vadd.f32 0.0, %v2308
        %v2310 = vpop.f32.mrb[0].mxu0
        %2311 = vmatprep.mubr.f32.mxu0 0.0
        %2312 = vmatmul.mubr.f32.gmra.mrb[0].mxu0 %v451
        %v2313 = vpop.f32.mrb[0].mxu0
        %v2314 = vadd.f32 0.0, %v2313
        %v2315 = vpop.f32.mrb[0].mxu0
        %2316 = vmatprep.mubr.f32.mxu0 0.0
        %2317 = vmatmul.mubr.f32.gmra.mrb[0].mxu0 %v452
        %v2318 = vpop.f32.mrb[0].mxu0
        %v2319 = vadd.f32 0.0, %v2318
        %v2320 = vpop.f32.mrb[0].mxu0
        %2321 = vmatprep.mubr.f32.mxu0 0.0
        %2322 = vmatmul.mubr.f32.gmra.mrb[0].mxu0 %v453
        %v2323 = vpop.f32.mrb[0].mxu0
        %v2324 = vadd.f32 0.0, %v2323
        %v2325 = vpop.f32.mrb[0].mxu0
        %2326 = vmatprep.mubr.f32.mxu0 0.0
        %2327 = vmatmul.mubr.f32.gmra.mrb[0].mxu0 %v454
        %v2328 = vpop.f32.mrb[0].mxu0
        %v2329 = vadd.f32 0.0, %v2328
        %v2330 = vpop.f32.mrb[0].mxu0
        %2331 = vmatprep.mubr.f32.mxu0 0.0
        %2332 = vmatmul.mubr.f32.gmra.mrb[0].mxu0 %v455
        %v2333 = vpop.f32.mrb[0].mxu0
        %v2334 = vadd.f32 0.0, %v2333
        %v2335 = vpop.f32.mrb[0].mxu0
        %2336 = vmatprep.mubr.f32.mxu0 0.0
        %2337 = vmatmul.mubr.f32.gmra.mrb[0].mxu0 %v456
        %v2338 = vpop.f32.mrb[0].mxu0
        %v2339 = vadd.f32 0.0, %v2338
        %v2340 = vpop.f32.mrb[0].mxu0
        %2341 = vmatprep.mubr.f32.mxu0 0.0
        %2342 = vmatmul.mubr.f32.gmra.mrb[0].mxu0 %v457
        %v2343 = vpop.f32.mrb[0].mxu0
        %v2344 = vadd.f32 0.0, %v2343
        %v2345 = vpop.f32.mrb[0].mxu0
        %2346 = vmatprep.mubr.f32.mxu0 0.0
        %2347 = vmatmul.mubr.f32.gmra.mrb[0].mxu0 %v458
        %v2348 = vpop.f32.mrb[0].mxu0
        %v2349 = vadd.f32 0.0, %v2348
        %v2350 = vpop.f32.mrb[0].mxu0
        %2351 = vmatprep.mubr.f32.mxu0 0.0
        %2352 = vmatmul.mubr.f32.gmra.mrb[0].mxu0 %v459
        %v2353 = vpop.f32.mrb[0].mxu0
        %v2354 = vadd.f32 0.0, %v2353
        %v2355 = vpop.f32.mrb[0].mxu0
        %2356 = vmatprep.mubr.f32.mxu0 0.0
        %2357 = vmatmul.mubr.f32.gmra.mrb[0].mxu0 %v460
        %v2358 = vpop.f32.mrb[0].mxu0
        %v2359 = vadd.f32 0.0, %v2358
        %v2360 = vpop.f32.mrb[0].mxu0
        %2361 = vmatprep.mubr.f32.mxu0 0.0
        %2362 = vmatmul.mubr.f32.gmra.mrb[0].mxu0 %v461
        %v2363 = vpop.f32.mrb[0].mxu0
        %v2364 = vadd.f32 0.0, %v2363
        %v2365 = vpop.f32.mrb[0].mxu0
        %2366 = vmatprep.mubr.f32.mxu0 0.0
        %2367 = vmatmul.mubr.f32.gmra.mrb[0].mxu0 %v462
        %v2368 = vpop.f32.mrb[0].mxu0
        %v2369 = vadd.f32 0.0, %v2368
        %v2370 = vpop.f32.mrb[0].mxu0
        %2371 = vmatprep.mubr.f32.mxu0 0.0
        %2372 = vmatmul.mubr.f32.gmra.mrb[0].mxu0 %v463
        %v2373 = vpop.f32.mrb[0].mxu0
        %v2374 = vadd.f32 0.0, %v2373
        %v2375 = vpop.f32.mrb[0].mxu0
        %2376 = vmatprep.mubr.f32.mxu0 0.0
        %2377 = vmatmul.mubr.f32.gmra.mrb[0].mxu0 %v464
        %v2378 = vpop.f32.mrb[0].mxu0
        %v2379 = vadd.f32 0.0, %v2378
        %v2380 = vpop.f32.mrb[0].mxu0
        %2381 = vmatprep.mubr.f32.mxu0 0.0
        %2382 = vmatmul.mubr.f32.gmra.mrb[0].mxu0 %v465
        %v2383 = vpop.f32.mrb[0].mxu0
        %v2384 = vadd.f32 0.0, %v2383
        %v2385 = vpop.f32.mrb[0].mxu0
        %2386 = vmatprep.mubr.f32.mxu0 0.0
        %2387 = vmatmul.mubr.f32.gmra.mrb[0].mxu0 %v466
        %v2388 = vpop.f32.mrb[0].mxu0
        %v2389 = vadd.f32 0.0, %v2388
        %v2390 = vpop.f32.mrb[0].mxu0
        %2391 = vmatprep.mubr.f32.mxu0 0.0
        %2392 = vmatmul.mubr.f32.gmra.mrb[0].mxu0 %v467
        %v2393 = vpop.f32.mrb[0].mxu0
        %v2394 = vadd.f32 0.0, %v2393
        %v2395 = vpop.f32.mrb[0].mxu0
        %2396 = vmatprep.mubr.f32.mxu0 0.0
        %2397 = vmatmul.mubr.f32.gmra.mrb[0].mxu0 %v468
        %v2398 = vpop.f32.mrb[0].mxu0
        %v2399 = vadd.f32 0.0, %v2398
        %v2400 = vpop.f32.mrb[0].mxu0
        %2401 = vmatprep.mubr.f32.mxu0 0.0
        %2402 = vmatmul.mubr.f32.gmra.mrb[0].mxu0 %v469
        %v2403 = vpop.f32.mrb[0].mxu0
        %v2404 = vadd.f32 0.0, %v2403
        %v2405 = vpop.f32.mrb[0].mxu0
        %2406 = vmatprep.mubr.f32.mxu0 0.0
        %2407 = vmatmul.mubr.f32.gmra.mrb[0].mxu0 %v470
        %v2408 = vpop.f32.mrb[0].mxu0
        %v2409 = vadd.f32 0.0, %v2408
        %v2410 = vpop.f32.mrb[0].mxu0
        %2411 = vmatprep.mubr.f32.mxu0 0.0
        %2412 = vmatmul.mubr.f32.gmra.mrb[0].mxu0 %v471
        %v2413 = vpop.f32.mrb[0].mxu0
        %v2414 = vadd.f32 0.0, %v2413
        %v2415 = vpop.f32.mrb[0].mxu0
        %2416 = vmatprep.mubr.f32.mxu0 0.0
        %2417 = vmatmul.mubr.f32.gmra.mrb[0].mxu0 %v472
        %v2418 = vpop.f32.mrb[0].mxu0
        %v2419 = vadd.f32 0.0, %v2418
        %v2420 = vpop.f32.mrb[0].mxu0
        %2421 = vmatprep.mubr.f32.mxu0 0.0
        %2422 = vmatmul.mubr.f32.gmra.mrb[0].mxu0 %v473
        %v2423 = vpop.f32.mrb[0].mxu0
        %v2424 = vadd.f32 0.0, %v2423
        %v2425 = vpop.f32.mrb[0].mxu0
        %2426 = vmatprep.mubr.f32.mxu0 0.0
        %2427 = vmatmul.mubr.f32.gmra.mrb[0].mxu0 %v474
        %v2428 = vpop.f32.mrb[0].mxu0
        %v2429 = vadd.f32 0.0, %v2428
        %v2430 = vpop.f32.mrb[0].mxu0
        %2431 = vmatprep.mubr.f32.mxu0 0.0
        %2432 = vmatmul.mubr.f32.gmra.mrb[0].mxu0 %v475
        %v2433 = vpop.f32.mrb[0].mxu0
        %v2434 = vadd.f32 0.0, %v2433
        %v2435 = vpop.f32.mrb[0].mxu0
        %2436 = vmatprep.mubr.f32.mxu0 0.0
        %2437 = vmatmul.mubr.f32.gmra.mrb[0].mxu0 %v476
        %v2438 = vpop.f32.mrb[0].mxu0
        %v2439 = vadd.f32 0.0, %v2438
        %v2440 = vpop.f32.mrb[0].mxu0
        %2441 = vmatprep.mubr.f32.mxu0 0.0
        %2442 = vmatmul.mubr.f32.gmra.mrb[0].mxu0 %v477
        %v2443 = vpop.f32.mrb[0].mxu0
        %v2444 = vadd.f32 0.0, %v2443
        %v2445 = vpop.f32.mrb[0].mxu0
        %2446 = vmatprep.mubr.f32.mxu0 0.0
        %2447 = vmatmul.mubr.f32.gmra.mrb[0].mxu0 %v478
        %v2448 = vpop.f32.mrb[0].mxu0
        %v2449 = vadd.f32 0.0, %v2448
        %v2450 = vpop.f32.mrb[0].mxu0
        %2451 = vmatprep.mubr.f32.mxu0 0.0
        %2452 = vmatmul.mubr.f32.gmra.mrb[0].mxu0 %v479
        %v2453 = vpop.f32.mrb[0].mxu0
        %v2454 = vadd.f32 0.0, %v2453
        %v2455 = vpop.f32.mrb[0].mxu0
        %2456 = vmatprep.mubr.f32.mxu0 0.0
        %2457 = vmatmul.mubr.f32.gmra.mrb[0].mxu0 %v480
        %v2458 = vpop.f32.mrb[0].mxu0
        %v2459 = vadd.f32 0.0, %v2458
        %v2460 = vpop.f32.mrb[0].mxu0
        %2461 = vmatprep.mubr.f32.mxu0 0.0
        %2462 = vmatmul.mubr.f32.gmra.mrb[0].mxu0 %v481
        %v2463 = vpop.f32.mrb[0].mxu0
        %v2464 = vadd.f32 0.0, %v2463
        %v2465 = vpop.f32.mrb[0].mxu0
        %2466 = vmatprep.mubr.f32.mxu0 0.0
        %2467 = vmatmul.mubr.f32.gmra.mrb[0].mxu0 %v482
        %v2468 = vpop.f32.mrb[0].mxu0
        %v2469 = vadd.f32 0.0, %v2468
        %v2470 = vpop.f32.mrb[0].mxu0
        %2471 = vmatprep.mubr.f32.mxu0 0.0
        %2472 = vmatmul.mubr.f32.gmra.mrb[0].mxu0 %v483
        %v2473 = vpop.f32.mrb[0].mxu0
        %v2474 = vadd.f32 0.0, %v2473
        %v2475 = vpop.f32.mrb[0].mxu0
        %2476 = vmatprep.mubr.f32.mxu0 0.0
        %2477 = vmatmul.mubr.f32.gmra.mrb[0].mxu0 %v484
        %v2478 = vpop.f32.mrb[0].mxu0
        %v2479 = vadd.f32 0.0, %v2478
        %v2480 = vpop.f32.mrb[0].mxu0
        %2481 = vmatprep.mubr.f32.mxu0 0.0
        %2482 = vmatmul.mubr.f32.gmra.mrb[0].mxu0 %v485
        %v2483 = vpop.f32.mrb[0].mxu0
        %v2484 = vadd.f32 0.0, %v2483
        %v2485 = vpop.f32.mrb[0].mxu0
        %2486 = vmatprep.mubr.f32.mxu0 0.0
        %2487 = vmatmul.mubr.f32.gmra.mrb[0].mxu0 %v486
        %v2488 = vpop.f32.mrb[0].mxu0
        %v2489 = vadd.f32 0.0, %v2488
        %v2490 = vpop.f32.mrb[0].mxu0
        %2491 = vmatprep.mubr.f32.mxu0 0.0
        %2492 = vmatmul.mubr.f32.gmra.mrb[0].mxu0 %v487
        %v2493 = vpop.f32.mrb[0].mxu0
        %v2494 = vadd.f32 0.0, %v2493
        %v2495 = vpop.f32.mrb[0].mxu0
        %2496 = vmatprep.mubr.f32.mxu0 0.0
        %2497 = vmatmul.mubr.f32.gmra.mrb[0].mxu0 %v488
        %v2498 = vpop.f32.mrb[0].mxu0
        %v2499 = vadd.f32 0.0, %v2498
        %v2500 = vpop.f32.mrb[0].mxu0
        %2501 = vmatprep.mubr.f32.mxu0 0.0
        %2502 = vmatmul.mubr.f32.gmra.mrb[0].mxu0 %v489
        %v2503 = vpop.f32.mrb[0].mxu0
        %v2504 = vadd.f32 0.0, %v2503
        %v2505 = vpop.f32.mrb[0].mxu0
        %2506 = vmatprep.mubr.f32.mxu0 0.0
        %2507 = vmatmul.mubr.f32.gmra.mrb[0].mxu0 %v490
        %v2508 = vpop.f32.mrb[0].mxu0
        %v2509 = vadd.f32 0.0, %v2508
        %v2510 = vpop.f32.mrb[0].mxu0
        %2511 = vmatprep.mubr.f32.mxu0 0.0
        %2512 = vmatmul.mubr.f32.gmra.mrb[0].mxu0 %v491
        %v2513 = vpop.f32.mrb[0].mxu0
        %v2514 = vadd.f32 0.0, %v2513
        %v2515 = vpop.f32.mrb[0].mxu0
        %2516 = vmatprep.mubr.f32.mxu0 0.0
        %2517 = vmatmul.mubr.f32.gmra.mrb[0].mxu0 %v492
        %v2518 = vpop.f32.mrb[0].mxu0
        %v2519 = vadd.f32 0.0, %v2518
        %v2520 = vpop.f32.mrb[0].mxu0
        %2521 = vmatprep.mubr.f32.mxu0 0.0
        %2522 = vmatmul.mubr.f32.gmra.mrb[0].mxu0 %v493
        %v2523 = vpop.f32.mrb[0].mxu0
        %v2524 = vadd.f32 0.0, %v2523
        %v2525 = vpop.f32.mrb[0].mxu0
        %2526 = vmatprep.mubr.f32.mxu0 0.0
        %2527 = vmatmul.mubr.f32.gmra.mrb[0].mxu0 %v494
        %v2528 = vpop.f32.mrb[0].mxu0
        %v2529 = vadd.f32 0.0, %v2528
        %v2530 = vpop.f32.mrb[0].mxu0
        %2531 = vmatprep.mubr.f32.mxu0 0.0
        %2532 = vmatmul.mubr.f32.gmra.mrb[0].mxu0 %v495
        %v2533 = vpop.f32.mrb[0].mxu0
        %v2534 = vadd.f32 0.0, %v2533
        %v2535 = vpop.f32.mrb[0].mxu0
        %2536 = vmatprep.mubr.f32.mxu0 0.0
        %2537 = vmatmul.mubr.f32.gmra.mrb[0].mxu0 %v496
        %v2538 = vpop.f32.mrb[0].mxu0
        %v2539 = vadd.f32 0.0, %v2538
        %v2540 = vpop.f32.mrb[0].mxu0
        %2541 = vmatprep.mubr.f32.mxu0 0.0
        %2542 = vmatmul.mubr.f32.gmra.mrb[0].mxu0 %v497
        %v2543 = vpop.f32.mrb[0].mxu0
        %v2544 = vadd.f32 0.0, %v2543
        %v2545 = vpop.f32.mrb[0].mxu0
        %2546 = vmatprep.mubr.f32.mxu0 0.0
        %2547 = vmatmul.mubr.f32.gmra.mrb[0].mxu0 %v498
        %v2548 = vpop.f32.mrb[0].mxu0
        %v2549 = vadd.f32 0.0, %v2548
        %v2550 = vpop.f32.mrb[0].mxu0
        %2551 = vmatprep.mubr.f32.mxu0 0.0
        %2552 = vmatmul.mubr.f32.gmra.mrb[0].mxu0 %v499
        %v2553 = vpop.f32.mrb[0].mxu0
        %v2554 = vadd.f32 0.0, %v2553
        %v2555 = vpop.f32.mrb[0].mxu0
        %2556 = vmatprep.mubr.f32.mxu0 0.0
        %2557 = vmatmul.mubr.f32.gmra.mrb[0].mxu0 %v500
        %v2558 = vpop.f32.mrb[0].mxu0
        %v2559 = vadd.f32 0.0, %v2558
        %v2560 = vpop.f32.mrb[0].mxu0
        %2561 = vmatprep.mubr.f32.mxu0 0.0
        %2562 = vmatmul.mubr.f32.gmra.mrb[0].mxu0 %v501
        %v2563 = vpop.f32.mrb[0].mxu0
        %v2564 = vadd.f32 0.0, %v2563
        %v2565 = vpop.f32.mrb[0].mxu0
        %2566 = vmatprep.mubr.f32.mxu0 0.0
        %2567 = vmatmul.mubr.f32.gmra.mrb[0].mxu0 %v502
        %v2568 = vpop.f32.mrb[0].mxu0
        %v2569 = vadd.f32 0.0, %v2568
        %v2570 = vpop.f32.mrb[0].mxu0
        %2571 = vmatprep.mubr.f32.mxu0 0.0
        %2572 = vmatmul.mubr.f32.gmra.mrb[0].mxu0 %v503
        %v2573 = vpop.f32.mrb[0].mxu0
        %v2574 = vadd.f32 0.0, %v2573
        %v2575 = vpop.f32.mrb[0].mxu0
        %2576 = vmatprep.mubr.f32.mxu0 0.0
        %2577 = vmatmul.mubr.f32.gmra.mrb[0].mxu0 %v504
        %v2578 = vpop.f32.mrb[0].mxu0
        %v2579 = vadd.f32 0.0, %v2578
        %v2580 = vpop.f32.mrb[0].mxu0
        %2581 = vmatprep.mubr.f32.mxu0 0.0
        %2582 = vmatmul.mubr.f32.gmra.mrb[0].mxu0 %v505
        %v2583 = vpop.f32.mrb[0].mxu0
        %v2584 = vadd.f32 0.0, %v2583
        %v2585 = vpop.f32.mrb[0].mxu0
        %2586 = vmatprep.mubr.f32.mxu0 0.0
        %2587 = vmatmul.mubr.f32.gmra.mrb[0].mxu0 %v506
        %v2588 = vpop.f32.mrb[0].mxu0
        %v2589 = vadd.f32 0.0, %v2588
        %v2590 = vpop.f32.mrb[0].mxu0
        %2591 = vmatprep.mubr.f32.mxu0 0.0
        %2592 = vmatmul.mubr.f32.gmra.mrb[0].mxu0 %v507
        %v2593 = vpop.f32.mrb[0].mxu0
        %v2594 = vadd.f32 0.0, %v2593
        %v2595 = vpop.f32.mrb[0].mxu0
        %2596 = vmatprep.mubr.f32.mxu0 0.0
        %2597 = vmatmul.mubr.f32.gmra.mrb[0].mxu0 %v508
        %v2598 = vpop.f32.mrb[0].mxu0
        %v2599 = vadd.f32 0.0, %v2598
        %v2600 = vpop.f32.mrb[0].mxu0
        %2601 = vmatprep.mubr.f32.mxu0 0.0
        %2602 = vmatmul.mubr.f32.gmra.mrb[0].mxu0 %v509
        %v2603 = vpop.f32.mrb[0].mxu0
        %v2604 = vadd.f32 0.0, %v2603
        %v2605 = vpop.f32.mrb[0].mxu0
        %2606 = vmatprep.mubr.f32.mxu0 0.0
        %2607 = vmatmul.mubr.f32.gmra.mrb[0].mxu0 %v510
        %v2608 = vpop.f32.mrb[0].mxu0
        %v2609 = vadd.f32 0.0, %v2608
        %v2610 = vpop.f32.mrb[0].mxu0
        %2611 = vmatprep.mubr.f32.mxu0 0.0
        %2612 = vmatmul.mubr.f32.gmra.mrb[0].mxu0 %v511
        %v2613 = vpop.f32.mrb[0].mxu0
        %v2614 = vadd.f32 0.0, %v2613
        %v2615 = vpop.f32.mrb[0].mxu0
        %2616 = vmatprep.mubr.f32.mxu0 0.0
        %2617 = vmatmul.mubr.f32.gmra.mrb[0].mxu0 %v512
        %v2618 = vpop.f32.mrb[0].mxu0
        %v2619 = vadd.f32 0.0, %v2618
        %v2620 = vpop.f32.mrb[0].mxu0
        %2621 = vmatprep.mubr.f32.mxu0 0.0
        %2622 = vmatmul.mubr.f32.gmra.mrb[0].mxu0 %v513
        %v2623 = vpop.f32.mrb[0].mxu0
        %v2624 = vadd.f32 0.0, %v2623
        %v2625 = vpop.f32.mrb[0].mxu0
        %2626 = vmatprep.mubr.f32.mxu0 0.0
        %2627 = vmatmul.mubr.f32.gmra.mrb[0].mxu0 %v514
        %v2628 = vpop.f32.mrb[0].mxu0
        %v2629 = vadd.f32 0.0, %v2628
        %v2630 = vpop.f32.mrb[0].mxu0
        %2631 = vmatprep.mubr.f32.mxu0 0.0
        %2632 = vmatmul.mubr.f32.gmra.mrb[0].mxu0 %v515
        %v2633 = vpop.f32.mrb[0].mxu0
        %v2634 = vadd.f32 0.0, %v2633
        %v2635 = vpop.f32.mrb[0].mxu0
        %2636 = vmatprep.mubr.f32.mxu0 0.0
        %2637 = vmatmul.mubr.f32.gmra.mrb[0].mxu0 %v516
        %v2638 = vpop.f32.mrb[0].mxu0
        %v2639 = vadd.f32 0.0, %v2638
        %v2640 = vpop.f32.mrb[0].mxu0
        %2641 = vmatprep.mubr.f32.mxu0 0.0
        %2642 = vmatmul.mubr.f32.gmra.mrb[0].mxu0 %v517
        %v2643 = vpop.f32.mrb[0].mxu0
        %v2644 = vadd.f32 0.0, %v2643
        %v2645 = vpop.f32.mrb[0].mxu0
        %2646 = vmatprep.mubr.f32.mxu0 0.0
        %2647 = vmatmul.mubr.f32.gmra.mrb[0].mxu0 %v518
        %v2648 = vpop.f32.mrb[0].mxu0
        %v2649 = vadd.f32 0.0, %v2648
        %v2650 = vpop.f32.mrb[0].mxu0
        %2651 = vmatprep.mubr.f32.mxu0 0.0
        %2652 = vmatmul.mubr.f32.gmra.mrb[0].mxu0 %v519
        %v2653 = vpop.f32.mrb[0].mxu0
        %v2654 = vadd.f32 0.0, %v2653
        %v2655 = vpop.f32.mrb[0].mxu0
        %2656 = vmatprep.mubr.f32.mxu0 0.0
        %2657 = vmatmul.mubr.f32.gmra.mrb[0].mxu0 %v520
        %v2658 = vpop.f32.mrb[0].mxu0
        %v2659 = vadd.f32 0.0, %v2658
        %v2660 = vpop.f32.mrb[0].mxu0
        %2661 = vmatprep.mubr.f32.mxu0 0.0
        %2662 = vmatmul.mubr.f32.gmra.mrb[0].mxu0 %v521
        %v2663 = vpop.f32.mrb[0].mxu0
        %v2664 = vadd.f32 0.0, %v2663
        %v2665 = vpop.f32.mrb[0].mxu0
        %2666 = vmatprep.mubr.f32.mxu0 0.0
        %2667 = vmatmul.mubr.f32.gmra.mrb[0].mxu0 %v522
        %v2668 = vpop.f32.mrb[0].mxu0
        %v2669 = vadd.f32 0.0, %v2668
        %v2670 = vpop.f32.mrb[0].mxu0
        %2671 = vmatprep.mubr.f32.mxu0 0.0
        %2672 = vmatmul.mubr.f32.gmra.mrb[0].mxu0 %v523
        %v2673 = vpop.f32.mrb[0].mxu0
        %v2674 = vadd.f32 0.0, %v2673
        %v2675 = vpop.f32.mrb[0].mxu0
        %2676 = vmatprep.mubr.f32.mxu0 0.0
        %2677 = vmatmul.mubr.f32.gmra.mrb[0].mxu0 %v524
        %v2678 = vpop.f32.mrb[0].mxu0
        %v2679 = vadd.f32 0.0, %v2678
        %v2680 = vpop.f32.mrb[0].mxu0
        %2681 = vmatprep.mubr.f32.mxu0 0.0
        %2682 = vmatmul.mubr.f32.gmra.mrb[0].mxu0 %v525
        %v2683 = vpop.f32.mrb[0].mxu0
        %v2684 = vadd.f32 0.0, %v2683
        %v2685 = vpop.f32.mrb[0].mxu0
        %2686 = vmatprep.mubr.f32.mxu0 0.0
        %2687 = vmatmul.mubr.f32.gmra.mrb[0].mxu0 %v526
        %v2688 = vpop.f32.mrb[0].mxu0
        %v2689 = vadd.f32 0.0, %v2688
        %v2690 = vpop.f32.mrb[0].mxu0
        %2691 = vmatprep.mubr.f32.mxu0 0.0
        %2692 = vmatmul.mubr.f32.gmra.mrb[0].mxu0 %v527
        %v2693 = vpop.f32.mrb[0].mxu0
        %v2694 = vadd.f32 0.0, %v2693
        %v2695 = vpop.f32.mrb[0].mxu0
        %2696 = vmatprep.mubr.f32.mxu0 0.0
        %2697 = vmatmul.mubr.f32.gmra.mrb[0].mxu0 %v528
        %v2698 = vpop.f32.mrb[0].mxu0
        %v2699 = vadd.f32 0.0, %v2698
        %v2700 = vpop.f32.mrb[0].mxu0
        %2701 = vmatprep.mubr.f32.mxu0 0.0
        %2702 = vmatmul.mubr.f32.gmra.mrb[0].mxu0 %v529
        %v2703 = vpop.f32.mrb[0].mxu0
        %v2704 = vadd.f32 0.0, %v2703
        %v2705 = vpop.f32.mrb[0].mxu0
        %2706 = vmatprep.mubr.f32.mxu0 0.0
        %2707 = vmatmul.mubr.f32.gmra.mrb[0].mxu0 %v530
        %v2708 = vpop.f32.mrb[0].mxu0
        %v2709 = vadd.f32 0.0, %v2708
        %v2710 = vpop.f32.mrb[0].mxu0
        %2711 = vmatprep.mubr.f32.mxu0 0.0
        %2712 = vmatmul.mubr.f32.gmra.mrb[0].mxu0 %v531
        %v2713 = vpop.f32.mrb[0].mxu0
        %v2714 = vadd.f32 0.0, %v2713
        %v2715 = vpop.f32.mrb[0].mxu0
        %2716 = vmatprep.mubr.f32.mxu0 0.0
        %2717 = vmatmul.mubr.f32.gmra.mrb[0].mxu0 %v532
        %v2718 = vpop.f32.mrb[0].mxu0
        %v2719 = vadd.f32 0.0, %v2718
        %v2720 = vpop.f32.mrb[0].mxu0
        %2721 = vmatprep.mubr.f32.mxu0 0.0
        %2722 = vmatmul.mubr.f32.gmra.mrb[0].mxu0 %v533
        %v2723 = vpop.f32.mrb[0].mxu0
        %v2724 = vadd.f32 0.0, %v2723
        %v2725 = vpop.f32.mrb[0].mxu0
        %2726 = vmatprep.mubr.f32.mxu0 0.0
        %2727 = vmatmul.mubr.f32.gmra.mrb[0].mxu0 %v534
        %v2728 = vpop.f32.mrb[0].mxu0
        %v2729 = vadd.f32 0.0, %v2728
        %v2730 = vpop.f32.mrb[0].mxu0
        %2731 = vmatprep.mubr.f32.mxu0 0.0
        %2732 = vmatmul.mubr.f32.gmra.mrb[0].mxu0 %v535
        %v2733 = vpop.f32.mrb[0].mxu0
        %v2734 = vadd.f32 0.0, %v2733
        %v2735 = vpop.f32.mrb[0].mxu0
        %2736 = vmatprep.mubr.f32.mxu0 0.0
        %2737 = vmatmul.mubr.f32.gmra.mrb[0].mxu0 %v536
        %v2738 = vpop.f32.mrb[0].mxu0
        %v2739 = vadd.f32 0.0, %v2738
        %v2740 = vpop.f32.mrb[0].mxu0
        %2741 = vmatprep.mubr.f32.mxu0 0.0
        %2742 = vmatmul.mubr.f32.gmra.mrb[0].mxu0 %v537
        %v2743 = vpop.f32.mrb[0].mxu0
        %v2744 = vadd.f32 0.0, %v2743
        %v2745 = vpop.f32.mrb[0].mxu0
        %2746 = vmatprep.mubr.f32.mxu0 0.0
        %2747 = vmatmul.mubr.f32.gmra.mrb[0].mxu0 %v538
        %v2748 = vpop.f32.mrb[0].mxu0
        %v2749 = vadd.f32 0.0, %v2748
        %v2750 = vpop.f32.mrb[0].mxu0
        %2751 = vmatprep.mubr.f32.mxu0 0.0
        %2752 = vmatmul.mubr.f32.gmra.mrb[0].mxu0 %v539
        %v2753 = vpop.f32.mrb[0].mxu0
        %v2754 = vadd.f32 0.0, %v2753
        %v2755 = vpop.f32.mrb[0].mxu0
        %2756 = vmatprep.mubr.f32.mxu0 0.0
        %2757 = vmatmul.mubr.f32.gmra.mrb[0].mxu0 %v540
        %v2758 = vpop.f32.mrb[0].mxu0
        %v2759 = vadd.f32 0.0, %v2758
        %v2760 = vpop.f32.mrb[0].mxu0
        %2761 = vmatprep.mubr.f32.mxu0 0.0
        %2762 = vmatmul.mubr.f32.gmra.mrb[0].mxu0 %v541
        %v2763 = vpop.f32.mrb[0].mxu0
        %v2764 = vadd.f32 0.0, %v2763
        %v2765 = vpop.f32.mrb[0].mxu0
        %2766 = vmatprep.mubr.f32.mxu0 0.0
        %2767 = vmatmul.mubr.f32.gmra.mrb[0].mxu0 %v542
        %v2768 = vpop.f32.mrb[0].mxu0
        %v2769 = vadd.f32 0.0, %v2768
        %v2770 = vpop.f32.mrb[0].mxu0
        %2771 = vmatprep.mubr.f32.mxu0 0.0
        %2772 = vmatmul.mubr.f32.gmra.mrb[0].mxu0 %v543
        %v2773 = vpop.f32.mrb[0].mxu0
        %v2774 = vadd.f32 0.0, %v2773
        %v2775 = vpop.f32.mrb[0].mxu0
        %2776 = vmatprep.mubr.f32.mxu0 0.0
        %2777 = vmatmul.mubr.f32.gmra.mrb[0].mxu0 %v544
        %v2778 = vpop.f32.mrb[0].mxu0
        %v2779 = vadd.f32 0.0, %v2778
        %v2780 = vpop.f32.mrb[0].mxu0
        %2781 = vmatprep.mubr.f32.mxu0 0.0
        %2782 = vmatmul.mubr.f32.gmra.mrb[0].mxu0 %v545
        %v2783 = vpop.f32.mrb[0].mxu0
        %v2784 = vadd.f32 0.0, %v2783
        %v2785 = vpop.f32.mrb[0].mxu0
        %2786 = vmatprep.mubr.f32.mxu0 0.0
        %2787 = vmatmul.mubr.f32.gmra.mrb[0].mxu0 %v546
        %v2788 = vpop.f32.mrb[0].mxu0
        %v2789 = vadd.f32 0.0, %v2788
        %v2790 = vpop.f32.mrb[0].mxu0
        %2791 = vmatprep.mubr.f32.mxu0 0.0
        %2792 = vmatmul.mubr.f32.gmra.mrb[0].mxu0 %v547
        %v2793 = vpop.f32.mrb[0].mxu0
        %v2794 = vadd.f32 0.0, %v2793
        %v2795 = vpop.f32.mrb[0].mxu0
        %2796 = vmatprep.mubr.f32.mxu0 0.0
        %2797 = vmatmul.mubr.f32.gmra.mrb[0].mxu0 %v548
        %v2798 = vpop.f32.mrb[0].mxu0
        %v2799 = vadd.f32 0.0, %v2798
        %v2800 = vpop.f32.mrb[0].mxu0
        %2801 = vmatprep.mubr.f32.mxu0 0.0
        %2802 = vmatmul.mubr.f32.gmra.mrb[0].mxu0 %v549
        %v2803 = vpop.f32.mrb[0].mxu0
        %v2804 = vadd.f32 0.0, %v2803
        %v2805 = vpop.f32.mrb[0].mxu0
        %2806 = vmatprep.mubr.f32.mxu0 0.0
        %2807 = vmatmul.mubr.f32.gmra.mrb[0].mxu0 %v550
        %v2808 = vpop.f32.mrb[0].mxu0
        %v2809 = vadd.f32 0.0, %v2808
        %v2810 = vpop.f32.mrb[0].mxu0
        %2811 = vmatprep.mubr.f32.mxu0 0.0
        %2812 = vmatmul.mubr.f32.gmra.mrb[0].mxu0 %v551
        %v2813 = vpop.f32.mrb[0].mxu0
        %v2814 = vadd.f32 0.0, %v2813
        %v2815 = vpop.f32.mrb[0].mxu0
        %2816 = vmatprep.mubr.f32.mxu0 0.0
        %2817 = vmatmul.mubr.f32.gmra.mrb[0].mxu0 %v552
        %v2818 = vpop.f32.mrb[0].mxu0
        %v2819 = vadd.f32 0.0, %v2818
        %v2820 = vpop.f32.mrb[0].mxu0
        %2821 = vmatprep.mubr.f32.mxu0 0.0
        %2822 = vmatmul.mubr.f32.gmra.mrb[0].mxu0 %v553
        %v2823 = vpop.f32.mrb[0].mxu0
        %v2824 = vadd.f32 0.0, %v2823
        %v2825 = vpop.f32.mrb[0].mxu0
        %2826 = vmatprep.mubr.f32.mxu0 0.0
        %2827 = vmatmul.mubr.f32.gmra.mrb[0].mxu0 %v554
        %v2828 = vpop.f32.mrb[0].mxu0
        %v2829 = vadd.f32 0.0, %v2828
        %v2830 = vpop.f32.mrb[0].mxu0
        %2831 = vmatprep.mubr.f32.mxu0 0.0
        %2832 = vmatmul.mubr.f32.gmra.mrb[0].mxu0 %v555
        %v2833 = vpop.f32.mrb[0].mxu0
        %v2834 = vadd.f32 0.0, %v2833
        %v2835 = vpop.f32.mrb[0].mxu0
        %2836 = vmatprep.mubr.f32.mxu0 0.0
        %2837 = vmatmul.mubr.f32.gmra.mrb[0].mxu0 %v556
        %v2838 = vpop.f32.mrb[0].mxu0
        %v2839 = vadd.f32 0.0, %v2838
        %v2840 = vpop.f32.mrb[0].mxu0
        %2841 = vmatprep.mubr.f32.mxu0 0.0
        %2842 = vmatmul.mubr.f32.gmra.mrb[0].mxu0 %v557
        %v2843 = vpop.f32.mrb[0].mxu0
        %v2844 = vadd.f32 0.0, %v2843
        %v2845 = vpop.f32.mrb[0].mxu0
        %2846 = vmatprep.mubr.f32.mxu0 0.0
        %2847 = vmatmul.mubr.f32.gmra.mrb[0].mxu0 %v558
        %v2848 = vpop.f32.mrb[0].mxu0
        %v2849 = vadd.f32 0.0, %v2848
        %v2850 = vpop.f32.mrb[0].mxu0
        %2851 = vmatprep.mubr.f32.mxu0 0.0
        %2852 = vmatmul.mubr.f32.gmra.mrb[0].mxu0 %v559
        %v2853 = vpop.f32.mrb[0].mxu0
        %v2854 = vadd.f32 0.0, %v2853
        %v2855 = vpop.f32.mrb[0].mxu0
        %2856 = vmatprep.mubr.f32.mxu0 0.0
        %2857 = vmatmul.mubr.f32.gmra.mrb[0].mxu0 %v560
        %v2858 = vpop.f32.mrb[0].mxu0
        %v2859 = vadd.f32 0.0, %v2858
        %v2860 = vpop.f32.mrb[0].mxu0
        %2861 = vmatprep.mubr.f32.mxu0 0.0
        %2862 = vmatmul.mubr.f32.gmra.mrb[0].mxu0 %v561
        %v2863 = vpop.f32.mrb[0].mxu0
        %v2864 = vadd.f32 0.0, %v2863
        %v2865 = vpop.f32.mrb[0].mxu0
        %2866 = vmatprep.mubr.f32.mxu0 0.0
        %2867 = vmatmul.mubr.f32.gmra.mrb[0].mxu0 %v562
        %v2868 = vpop.f32.mrb[0].mxu0
        %v2869 = vadd.f32 0.0, %v2868
        %v2870 = vpop.f32.mrb[0].mxu0
        %2871 = vmatprep.mubr.f32.mxu0 0.0
        %2872 = vmatmul.mubr.f32.gmra.mrb[0].mxu0 %v563
        %v2873 = vpop.f32.mrb[0].mxu0
        %v2874 = vadd.f32 0.0, %v2873
        %v2875 = vpop.f32.mrb[0].mxu0
        %2876 = vmatprep.mubr.f32.mxu0 0.0
        %2877 = vmatmul.mubr.f32.gmra.mrb[0].mxu0 %v564
        %v2878 = vpop.f32.mrb[0].mxu0
        %v2879 = vadd.f32 0.0, %v2878
        %v2880 = vpop.f32.mrb[0].mxu0
        %2881 = vmatprep.mubr.f32.mxu0 0.0
        %2882 = vmatmul.mubr.f32.gmra.mrb[0].mxu0 %v565
        %v2883 = vpop.f32.mrb[0].mxu0
        %v2884 = vadd.f32 0.0, %v2883
        %v2885 = vpop.f32.mrb[0].mxu0
        %2886 = vmatprep.mubr.f32.mxu0 0.0
        %2887 = vmatmul.mubr.f32.gmra.mrb[0].mxu0 %v566
        %v2888 = vpop.f32.mrb[0].mxu0
        %v2889 = vadd.f32 0.0, %v2888
        %v2890 = vpop.f32.mrb[0].mxu0
        %2891 = vmatprep.mubr.f32.mxu0 0.0
        %2892 = vmatmul.mubr.f32.gmra.mrb[0].mxu0 %v567
        %v2893 = vpop.f32.mrb[0].mxu0
        %v2894 = vadd.f32 0.0, %v2893
        %v2895 = vpop.f32.mrb[0].mxu0
        %2896 = vmatprep.mubr.f32.mxu0 0.0
        %2897 = vmatmul.mubr.f32.gmra.mrb[0].mxu0 %v568
        %v2898 = vpop.f32.mrb[0].mxu0
        %v2899 = vadd.f32 0.0, %v2898
        %v2900 = vpop.f32.mrb[0].mxu0
        %2901 = vmatprep.mubr.f32.mxu0 0.0
        %2902 = vmatmul.mubr.f32.gmra.mrb[0].mxu0 %v569
        %v2903 = vpop.f32.mrb[0].mxu0
        %v2904 = vadd.f32 0.0, %v2903
        %v2905 = vpop.f32.mrb[0].mxu0
        %2906 = vmatprep.mubr.f32.mxu0 0.0
        %2907 = vmatmul.mubr.f32.gmra.mrb[0].mxu0 %v570
        %v2908 = vpop.f32.mrb[0].mxu0
        %v2909 = vadd.f32 0.0, %v2908
        %v2910 = vpop.f32.mrb[0].mxu0
        %2911 = vmatprep.mubr.f32.mxu0 0.0
        %2912 = vmatmul.mubr.f32.gmra.mrb[0].mxu0 %v571
        %v2913 = vpop.f32.mrb[0].mxu0
        %v2914 = vadd.f32 0.0, %v2913
        %v2915 = vpop.f32.mrb[0].mxu0
        %2916 = vmatprep.mubr.f32.mxu0 0.0
        %2917 = vmatmul.mubr.f32.gmra.mrb[0].mxu0 %v572
        %v2918 = vpop.f32.mrb[0].mxu0
        %v2919 = vadd.f32 0.0, %v2918
        %v2920 = vpop.f32.mrb[0].mxu0
        %2921 = vmatprep.mubr.f32.mxu0 0.0
        %2922 = vmatmul.mubr.f32.gmra.mrb[0].mxu0 %v573
        %v2923 = vpop.f32.mrb[0].mxu0
        %v2924 = vadd.f32 0.0, %v2923
        %v2925 = vpop.f32.mrb[0].mxu0
        %2926 = vmatprep.mubr.f32.mxu0 0.0
        %2927 = vmatmul.mubr.f32.gmra.mrb[0].mxu0 %v574
        %v2928 = vpop.f32.mrb[0].mxu0
        %v2929 = vadd.f32 0.0, %v2928
        %v2930 = vpop.f32.mrb[0].mxu0
        %2931 = vmatprep.mubr.f32.mxu0 0.0
        %2932 = vmatmul.mubr.f32.gmra.mrb[0].mxu0 %v575
        %v2933 = vpop.f32.mrb[0].mxu0
        %v2934 = vadd.f32 0.0, %v2933
        %v2935 = vpop.f32.mrb[0].mxu0
        %2936 = vmatprep.mubr.f32.mxu0 0.0
        %2937 = vmatmul.mubr.f32.gmra.mrb[0].mxu0 %v576
        %v2938 = vpop.f32.mrb[0].mxu0
        %v2939 = vadd.f32 0.0, %v2938
        %v2940 = vpop.f32.mrb[0].mxu0
        %2941 = vmatprep.mubr.f32.mxu0 0.0
        %2942 = vmatmul.mubr.f32.gmra.mrb[0].mxu0 %v577
        %v2943 = vpop.f32.mrb[0].mxu0
        %v2944 = vadd.f32 0.0, %v2943
        %v2945 = vpop.f32.mrb[0].mxu0
        %2946 = vmatprep.mubr.f32.mxu0 0.0
        %2947 = vmatmul.mubr.f32.gmra.mrb[0].mxu0 %v578
        %v2948 = vpop.f32.mrb[0].mxu0
        %v2949 = vadd.f32 0.0, %v2948
        %v2950 = vpop.f32.mrb[0].mxu0
        %2951 = vmatprep.mubr.f32.mxu0 0.0
        %2952 = vmatmul.mubr.f32.gmra.mrb[0].mxu0 %v579
        %v2953 = vpop.f32.mrb[0].mxu0
        %v2954 = vadd.f32 0.0, %v2953
        %v2955 = vpop.f32.mrb[0].mxu0
        %2956 = vmatprep.mubr.f32.mxu0 0.0
        %2957 = vmatmul.mubr.f32.gmra.mrb[0].mxu0 %v580
        %v2958 = vpop.f32.mrb[0].mxu0
        %v2959 = vadd.f32 0.0, %v2958
        %v2960 = vpop.f32.mrb[0].mxu0
        %2961 = vmatprep.mubr.f32.mxu0 0.0
        %2962 = vmatmul.mubr.f32.gmra.mrb[0].mxu0 %v581
        %v2963 = vpop.f32.mrb[0].mxu0
        %v2964 = vadd.f32 0.0, %v2963
        %v2965 = vpop.f32.mrb[0].mxu0
        %2966 = vmatprep.mubr.f32.mxu0 0.0
        %2967 = vmatmul.mubr.f32.gmra.mrb[0].mxu0 %v582
        %v2968 = vpop.f32.mrb[0].mxu0
        %v2969 = vadd.f32 0.0, %v2968
        %v2970 = vpop.f32.mrb[0].mxu0
        %2971 = vmatprep.mubr.f32.mxu0 0.0
        %2972 = vmatmul.mubr.f32.gmra.mrb[0].mxu0 %v583
        %v2973 = vpop.f32.mrb[0].mxu0
        %v2974 = vadd.f32 0.0, %v2973
        %v2975 = vpop.f32.mrb[0].mxu0
        %2976 = vmatprep.mubr.f32.mxu0 0.0
        %2977 = vmatmul.mubr.f32.gmra.mrb[0].mxu0 %v584
        %v2978 = vpop.f32.mrb[0].mxu0
        %v2979 = vadd.f32 0.0, %v2978
        %v2980 = vpop.f32.mrb[0].mxu0
        %2981 = vmatprep.mubr.f32.mxu0 0.0
        %2982 = vmatmul.mubr.f32.gmra.mrb[0].mxu0 %v585
        %v2983 = vpop.f32.mrb[0].mxu0
        %v2984 = vadd.f32 0.0, %v2983
        %v2985 = vpop.f32.mrb[0].mxu0
        %2986 = vmatprep.mubr.f32.mxu0 0.0
        %2987 = vmatmul.mubr.f32.gmra.mrb[0].mxu0 %v586
        %v2988 = vpop.f32.mrb[0].mxu0
        %v2989 = vadd.f32 0.0, %v2988
        %v2990 = vpop.f32.mrb[0].mxu0
        %2991 = vmatprep.mubr.f32.mxu0 0.0
        %2992 = vmatmul.mubr.f32.gmra.mrb[0].mxu0 %v587
        %v2993 = vpop.f32.mrb[0].mxu0
        %v2994 = vadd.f32 0.0, %v2993
        %v2995 = vpop.f32.mrb[0].mxu0
        %2996 = vmatprep.mubr.f32.mxu0 0.0
        %2997 = vmatmul.mubr.f32.gmra.mrb[0].mxu0 %v588
        %v2998 = vpop.f32.mrb[0].mxu0
        %v2999 = vadd.f32 0.0, %v2998
        %v3000 = vpop.f32.mrb[0].mxu0
        %3001 = vmatprep.mubr.f32.mxu0 0.0
        %3002 = vmatmul.mubr.f32.gmra.mrb[0].mxu0 %v589
        %v3003 = vpop.f32.mrb[0].mxu0
        %v3004 = vadd.f32 0.0, %v3003
        %v3005 = vpop.f32.mrb[0].mxu0
        %3006 = vmatprep.mubr.f32.mxu0 0.0
        %3007 = vmatmul.mubr.f32.gmra.mrb[0].mxu0 %v590
        %v3008 = vpop.f32.mrb[0].mxu0
        %v3009 = vadd.f32 0.0, %v3008
        %v3010 = vpop.f32.mrb[0].mxu0
        %3011 = vmatprep.mubr.f32.mxu0 0.0
        %3012 = vmatmul.mubr.f32.gmra.mrb[0].mxu0 %v591
        %v3013 = vpop.f32.mrb[0].mxu0
        %v3014 = vadd.f32 0.0, %v3013
        %v3015 = vpop.f32.mrb[0].mxu0
        %3016 = vmatprep.mubr.f32.mxu0 0.0
        %3017 = vmatmul.mubr.f32.gmra.mrb[0].mxu0 %v592
        %v3018 = vpop.f32.mrb[0].mxu0
        %v3019 = vadd.f32 0.0, %v3018
        %v3020 = vpop.f32.mrb[0].mxu0
        %3021 = vmatprep.mubr.f32.mxu0 0.0
        %3022 = vmatmul.mubr.f32.gmra.mrb[0].mxu0 %v593
        %v3023 = vpop.f32.mrb[0].mxu0
        %v3024 = vadd.f32 0.0, %v3023
        %v3025 = vpop.f32.mrb[0].mxu0
        %3026 = vmatprep.mubr.f32.mxu0 0.0
        %3027 = vmatmul.mubr.f32.gmra.mrb[0].mxu0 %v594
        %v3028 = vpop.f32.mrb[0].mxu0
        %v3029 = vadd.f32 0.0, %v3028
        %v3030 = vpop.f32.mrb[0].mxu0
        %3031 = vmatprep.mubr.f32.mxu0 0.0
        %3032 = vmatmul.mubr.f32.gmra.mrb[0].mxu0 %v595
        %v3033 = vpop.f32.mrb[0].mxu0
        %v3034 = vadd.f32 0.0, %v3033
        %v3035 = vpop.f32.mrb[0].mxu0
        %3036 = vmatprep.mubr.f32.mxu0 0.0
        %3037 = vmatmul.mubr.f32.gmra.mrb[0].mxu0 %v596
        %v3038 = vpop.f32.mrb[0].mxu0
        %v3039 = vadd.f32 0.0, %v3038
        %v3040 = vpop.f32.mrb[0].mxu0
        %3041 = vmatprep.mubr.f32.mxu0 0.0
        %3042 = vmatmul.mubr.f32.gmra.mrb[0].mxu0 %v597
        %v3043 = vpop.f32.mrb[0].mxu0
        %v3044 = vadd.f32 0.0, %v3043
        %v3045 = vpop.f32.mrb[0].mxu0
        %3046 = vmatprep.mubr.f32.mxu0 0.0
        %3047 = vmatmul.mubr.f32.gmra.mrb[0].mxu0 %v598
        %v3048 = vpop.f32.mrb[0].mxu0
        %v3049 = vadd.f32 0.0, %v3048
        %v3050 = vpop.f32.mrb[0].mxu0
        %3051 = vmatprep.mubr.f32.mxu0 0.0
        %3052 = vmatmul.mubr.f32.gmra.mrb[0].mxu0 %v599
        %v3053 = vpop.f32.mrb[0].mxu0
        %v3054 = vadd.f32 0.0, %v3053
        %v3055 = vpop.f32.mrb[0].mxu0
        %3056 = vmatprep.mubr.f32.mxu0 0.0
        %3057 = vmatmul.mubr.f32.gmra.mrb[0].mxu0 %v600
        %v3058 = vpop.f32.mrb[0].mxu0
        %v3059 = vadd.f32 0.0, %v3058
        %v3060 = vpop.f32.mrb[0].mxu0
        %3061 = vmatprep.mubr.f32.mxu0 0.0
        %3062 = vmatmul.mubr.f32.gmra.mrb[0].mxu0 %v601
        %v3063 = vpop.f32.mrb[0].mxu0
        %v3064 = vadd.f32 0.0, %v3063
        %v3065 = vpop.f32.mrb[0].mxu0
        %3066 = vmatprep.mubr.f32.mxu0 0.0
        %3067 = vmatmul.mubr.f32.gmra.mrb[0].mxu0 %v602
        %v3068 = vpop.f32.mrb[0].mxu0
        %v3069 = vadd.f32 0.0, %v3068
        %v3070 = vpop.f32.mrb[0].mxu0
        %3071 = vmatprep.mubr.f32.mxu0 0.0
        %3072 = vmatmul.mubr.f32.gmra.mrb[0].mxu0 %v603
        %v3073 = vpop.f32.mrb[0].mxu0
        %v3074 = vadd.f32 0.0, %v3073
        %v3075 = vpop.f32.mrb[0].mxu0
        %3076 = vmatprep.mubr.f32.mxu0 0.0
        %3077 = vmatmul.mubr.f32.gmra.mrb[0].mxu0 %v604
        %v3078 = vpop.f32.mrb[0].mxu0
        %v3079 = vadd.f32 0.0, %v3078
        %v3080 = vpop.f32.mrb[0].mxu0
        %3081 = vmatprep.mubr.f32.mxu0 0.0
        %3082 = vmatmul.mubr.f32.gmra.mrb[0].mxu0 %v605
        %v3083 = vpop.f32.mrb[0].mxu0
        %v3084 = vadd.f32 0.0, %v3083
        %v3085 = vpop.f32.mrb[0].mxu0
        %3086 = vmatprep.mubr.f32.mxu0 0.0
        %3087 = vmatmul.mubr.f32.gmra.mrb[0].mxu0 %v606
        %v3088 = vpop.f32.mrb[0].mxu0
        %v3089 = vadd.f32 0.0, %v3088
        %v3090 = vpop.f32.mrb[0].mxu0
        %3091 = vmatprep.mubr.f32.mxu0 0.0
        %3092 = vmatmul.mubr.f32.gmra.mrb[0].mxu0 %v607
        %v3093 = vpop.f32.mrb[0].mxu0
        %v3094 = vadd.f32 0.0, %v3093
        %v3095 = vpop.f32.mrb[0].mxu0
        %3096 = vmatprep.mubr.f32.mxu0 0.0
        %3097 = vmatmul.mubr.f32.gmra.mrb[0].mxu0 %v608
        %v3098 = vpop.f32.mrb[0].mxu0
        %v3099 = vadd.f32 0.0, %v3098
        %v3100 = vpop.f32.mrb[0].mxu0
        %3101 = vmatprep.mubr.f32.mxu0 0.0
        %3102 = vmatmul.mubr.f32.gmra.mrb[0].mxu0 %v609
        %v3103 = vpop.f32.mrb[0].mxu0
        %v3104 = vadd.f32 0.0, %v3103
        %v3105 = vpop.f32.mrb[0].mxu0
        %3106 = vmatprep.mubr.f32.mxu0 0.0
        %3107 = vmatmul.mubr.f32.gmra.mrb[0].mxu0 %v610
        %v3108 = vpop.f32.mrb[0].mxu0
        %v3109 = vadd.f32 0.0, %v3108
        %v3110 = vpop.f32.mrb[0].mxu0
        %3111 = vmatprep.mubr.f32.mxu0 0.0
        %3112 = vmatmul.mubr.f32.gmra.mrb[0].mxu0 %v611
        %v3113 = vpop.f32.mrb[0].mxu0
        %v3114 = vadd.f32 0.0, %v3113
        %v3115 = vpop.f32.mrb[0].mxu0
        %3116 = vmatprep.mubr.f32.mxu0 0.0
        %3117 = vmatmul.mubr.f32.gmra.mrb[0].mxu0 %v612
        %v3118 = vpop.f32.mrb[0].mxu0
        %v3119 = vadd.f32 0.0, %v3118
        %v3120 = vpop.f32.mrb[0].mxu0
        %3121 = vmatprep.mubr.f32.mxu0 0.0
        %3122 = vmatmul.mubr.f32.gmra.mrb[0].mxu0 %v613
        %v3123 = vpop.f32.mrb[0].mxu0
        %v3124 = vadd.f32 0.0, %v3123
        %v3125 = vpop.f32.mrb[0].mxu0
        %3126 = vmatprep.mubr.f32.mxu0 0.0
        %3127 = vmatmul.mubr.f32.gmra.mrb[0].mxu0 %v614
        %v3128 = vpop.f32.mrb[0].mxu0
        %v3129 = vadd.f32 0.0, %v3128
        %v3130 = vpop.f32.mrb[0].mxu0
        %3131 = vmatprep.mubr.f32.mxu0 0.0
        %3132 = vmatmul.mubr.f32.gmra.mrb[0].mxu0 %v615
        %v3133 = vpop.f32.mrb[0].mxu0
        %v3134 = vadd.f32 0.0, %v3133
        %v3135 = vpop.f32.mrb[0].mxu0
        %3136 = vmatprep.mubr.f32.mxu0 0.0
        %3137 = vmatmul.mubr.f32.gmra.mrb[0].mxu0 %v616
        %v3138 = vpop.f32.mrb[0].mxu0
        %v3139 = vadd.f32 0.0, %v3138
        %v3140 = vpop.f32.mrb[0].mxu0
        %3141 = vmatprep.mubr.f32.mxu0 0.0
        %3142 = vmatmul.mubr.f32.gmra.mrb[0].mxu0 %v617
        %v3143 = vpop.f32.mrb[0].mxu0
        %v3144 = vadd.f32 0.0, %v3143
        %v3145 = vpop.f32.mrb[0].mxu0
        %3146 = vmatprep.mubr.f32.mxu0 0.0
        %3147 = vmatmul.mubr.f32.gmra.mrb[0].mxu0 %v618
        %v3148 = vpop.f32.mrb[0].mxu0
        %v3149 = vadd.f32 0.0, %v3148
        %v3150 = vpop.f32.mrb[0].mxu0
        %3151 = vmatprep.mubr.f32.mxu0 0.0
        %3152 = vmatmul.mubr.f32.gmra.mrb[0].mxu0 %v619
        %v3153 = vpop.f32.mrb[0].mxu0
        %v3154 = vadd.f32 0.0, %v3153
        %v3155 = vpop.f32.mrb[0].mxu0
        %3156 = vmatprep.mubr.f32.mxu0 0.0
        %3157 = vmatmul.mubr.f32.gmra.mrb[0].mxu0 %v620
        %v3158 = vpop.f32.mrb[0].mxu0
        %v3159 = vadd.f32 0.0, %v3158
        %v3160 = vpop.f32.mrb[0].mxu0
        %3161 = vmatprep.mubr.f32.mxu0 0.0
        %3162 = vmatmul.mubr.f32.gmra.mrb[0].mxu0 %v621
        %v3163 = vpop.f32.mrb[0].mxu0
        %v3164 = vadd.f32 0.0, %v3163
        %v3165 = vpop.f32.mrb[0].mxu0
        %3166 = vmatprep.mubr.f32.mxu0 0.0
        %3167 = vmatmul.mubr.f32.gmra.mrb[0].mxu0 %v622
        %v3168 = vpop.f32.mrb[0].mxu0
        %v3169 = vadd.f32 0.0, %v3168
        %v3170 = vpop.f32.mrb[0].mxu0
        %3171 = vmatprep.mubr.f32.mxu0 0.0
        %3172 = vmatmul.mubr.f32.gmra.mrb[0].mxu0 %v623
        %v3173 = vpop.f32.mrb[0].mxu0
        %v3174 = vadd.f32 0.0, %v3173
        %v3175 = vpop.f32.mrb[0].mxu0
        %3176 = vmatprep.mubr.f32.mxu0 0.0
        %3177 = vmatmul.mubr.f32.gmra.mrb[0].mxu0 %v624
        %v3178 = vpop.f32.mrb[0].mxu0
        %v3179 = vadd.f32 0.0, %v3178
        %v3180 = vpop.f32.mrb[0].mxu0
        %3181 = vmatprep.mubr.f32.mxu0 0.0
        %3182 = vmatmul.mubr.f32.gmra.mrb[0].mxu0 %v625
        %v3183 = vpop.f32.mrb[0].mxu0
        %v3184 = vadd.f32 0.0, %v3183
        %v3185 = vpop.f32.mrb[0].mxu0
        %3186 = vmatprep.mubr.f32.mxu0 0.0
        %3187 = vmatmul.mubr.f32.gmra.mrb[0].mxu0 %v626
        %v3188 = vpop.f32.mrb[0].mxu0
        %v3189 = vadd.f32 0.0, %v3188
        %v3190 = vpop.f32.mrb[0].mxu0
        %3191 = vmatprep.mubr.f32.mxu0 0.0
        %3192 = vmatmul.mubr.f32.gmra.mrb[0].mxu0 %v627
        %v3193 = vpop.f32.mrb[0].mxu0
        %v3194 = vadd.f32 0.0, %v3193
        %v3195 = vpop.f32.mrb[0].mxu0
        %3196 = vmatprep.mubr.f32.mxu0 0.0
        %3197 = vmatmul.mubr.f32.gmra.mrb[0].mxu0 %v628
        %v3198 = vpop.f32.mrb[0].mxu0
        %v3199 = vadd.f32 0.0, %v3198
        %v3200 = vpop.f32.mrb[0].mxu0
        %3201 = vmatprep.mubr.f32.mxu0 0.0
        %3202 = vmatmul.mubr.f32.gmra.mrb[0].mxu0 %v629
        %v3203 = vpop.f32.mrb[0].mxu0
        %v3204 = vadd.f32 0.0, %v3203
        %v3205 = vpop.f32.mrb[0].mxu0
        %3206 = vmatprep.mubr.f32.mxu0 0.0
        %3207 = vmatmul.mubr.f32.gmra.mrb[0].mxu0 %v630
        %v3208 = vpop.f32.mrb[0].mxu0
        %v3209 = vadd.f32 0.0, %v3208
        %v3210 = vpop.f32.mrb[0].mxu0
        %3211 = vmatprep.mubr.f32.mxu0 0.0
        %3212 = vmatmul.mubr.f32.gmra.mrb[0].mxu0 %v631
        %v3213 = vpop.f32.mrb[0].mxu0
        %v3214 = vadd.f32 0.0, %v3213
        %v3215 = vpop.f32.mrb[0].mxu0
        %3216 = vmatprep.mubr.f32.mxu0 0.0
        %3217 = vmatmul.mubr.f32.gmra.mrb[0].mxu0 %v632
        %v3218 = vpop.f32.mrb[0].mxu0
        %v3219 = vadd.f32 0.0, %v3218
        %v3220 = vpop.f32.mrb[0].mxu0
        %3221 = vmatprep.mubr.f32.mxu0 0.0
        %3222 = vmatmul.mubr.f32.gmra.mrb[0].mxu0 %v633
        %v3223 = vpop.f32.mrb[0].mxu0
        %v3224 = vadd.f32 0.0, %v3223
        %v3225 = vpop.f32.mrb[0].mxu0
        %3226 = vmatprep.mubr.f32.mxu0 0.0
        %3227 = vmatmul.mubr.f32.gmra.mrb[0].mxu0 %v634
        %v3228 = vpop.f32.mrb[0].mxu0
        %v3229 = vadd.f32 0.0, %v3228
        %v3230 = vpop.f32.mrb[0].mxu0
        %3231 = vmatprep.mubr.f32.mxu0 0.0
        %3232 = vmatmul.mubr.f32.gmra.mrb[0].mxu0 %v635
        %v3233 = vpop.f32.mrb[0].mxu0
        %v3234 = vadd.f32 0.0, %v3233
        %v3235 = vpop.f32.mrb[0].mxu0
        %3236 = vmatprep.mubr.f32.mxu0 0.0
        %3237 = vmatmul.mubr.f32.gmra.mrb[0].mxu0 %v636
        %v3238 = vpop.f32.mrb[0].mxu0
        %v3239 = vadd.f32 0.0, %v3238
        %v3240 = vpop.f32.mrb[0].mxu0
        %3241 = vmatprep.mubr.f32.mxu0 0.0
        %3242 = vmatmul.mubr.f32.gmra.mrb[0].mxu0 %v637
        %v3243 = vpop.f32.mrb[0].mxu0
        %v3244 = vadd.f32 0.0, %v3243
        %v3245 = vpop.f32.mrb[0].mxu0
        %3246 = vmatprep.mubr.f32.mxu0 0.0
        %3247 = vmatmul.mubr.f32.gmra.mrb[0].mxu0 %v638
        %v3248 = vpop.f32.mrb[0].mxu0
        %v3249 = vadd.f32 0.0, %v3248
        %v3250 = vpop.f32.mrb[0].mxu0
        %3251 = vmatprep.mubr.f32.mxu0 0.0
        %3252 = vmatmul.mubr.f32.gmra.mrb[0].mxu0 %v639
        %v3253 = vpop.f32.mrb[0].mxu0
        %v3254 = vadd.f32 0.0, %v3253
        %v3255 = vpop.f32.mrb[0].mxu0
        %3256 = vmatprep.mubr.f32.mxu0 0.0
        %3257 = vmatmul.mubr.f32.gmra.mrb[0].mxu0 %v640
        %v3258 = vpop.f32.mrb[0].mxu0
        %v3259 = vadd.f32 0.0, %v3258
        %v3260 = vpop.f32.mrb[0].mxu0
        %3261 = vmatprep.mubr.f32.mxu0 0.0
        %3262 = vmatmul.mubr.f32.gmra.mrb[0].mxu0 %v641
        %v3263 = vpop.f32.mrb[0].mxu0
        %v3264 = vadd.f32 0.0, %v3263
        %v3265 = vpop.f32.mrb[0].mxu0
        %3266 = vmatprep.mubr.f32.mxu0 0.0
        %3267 = vmatmul.mubr.f32.gmra.mrb[0].mxu0 %v642
        %v3268 = vpop.f32.mrb[0].mxu0
        %v3269 = vadd.f32 0.0, %v3268
        %v3270 = vpop.f32.mrb[0].mxu0
        %3271 = vmatprep.mubr.f32.mxu0 0.0
        %3272 = vmatmul.mubr.f32.gmra.mrb[0].mxu0 %v643
        %v3273 = vpop.f32.mrb[0].mxu0
        %v3274 = vadd.f32 0.0, %v3273
        %v3275 = vpop.f32.mrb[0].mxu0
        %3276 = vmatprep.mubr.f32.mxu0 0.0
        %3277 = vmatmul.mubr.f32.gmra.mrb[0].mxu0 %v644
        %v3278 = vpop.f32.mrb[0].mxu0
        %v3279 = vadd.f32 0.0, %v3278
        %v3280 = vpop.f32.mrb[0].mxu0
        %3281 = vmatprep.mubr.f32.mxu0 0.0
        %3282 = vmatmul.mubr.f32.gmra.mrb[0].mxu0 %v645
        %v3283 = vpop.f32.mrb[0].mxu0
        %v3284 = vadd.f32 0.0, %v3283
        %v3285 = vpop.f32.mrb[0].mxu0
        %3286 = vmatprep.mubr.f32.mxu0 0.0
        %3287 = vmatmul.mubr.f32.gmra.mrb[0].mxu0 %v646
        %v3288 = vpop.f32.mrb[0].mxu0
        %v3289 = vadd.f32 0.0, %v3288
        %v3290 = vpop.f32.mrb[0].mxu0
        %3291 = vmatprep.mubr.f32.mxu0 0.0
        %3292 = vmatmul.mubr.f32.gmra.mrb[0].mxu0 %v647
        %v3293 = vpop.f32.mrb[0].mxu0
        %v3294 = vadd.f32 0.0, %v3293
        %v3295 = vpop.f32.mrb[0].mxu0
        %3296 = vmatprep.mubr.f32.mxu0 0.0
        %3297 = vmatmul.mubr.f32.gmra.mrb[0].mxu0 %v648
        %v3298 = vpop.f32.mrb[0].mxu0
        %v3299 = vadd.f32 0.0, %v3298
        %v3300 = vpop.f32.mrb[0].mxu0
        %3301 = vmatprep.mubr.f32.mxu0 0.0
        %3302 = vmatmul.mubr.f32.gmra.mrb[0].mxu0 %v649
        %v3303 = vpop.f32.mrb[0].mxu0
        %v3304 = vadd.f32 0.0, %v3303
        %v3305 = vpop.f32.mrb[0].mxu0
        %3306 = vmatprep.mubr.f32.mxu0 0.0
        %3307 = vmatmul.mubr.f32.gmra.mrb[0].mxu0 %v650
        %v3308 = vpop.f32.mrb[0].mxu0
        %v3309 = vadd.f32 0.0, %v3308
        %v3310 = vpop.f32.mrb[0].mxu0
        %3311 = vmatprep.mubr.f32.mxu0 0.0
        %3312 = vmatmul.mubr.f32.gmra.mrb[0].mxu0 %v651
        %v3313 = vpop.f32.mrb[0].mxu0
        %v3314 = vadd.f32 0.0, %v3313
        %v3315 = vpop.f32.mrb[0].mxu0
        %3316 = vmatprep.mubr.f32.mxu0 0.0
        %3317 = vmatmul.mubr.f32.gmra.mrb[0].mxu0 %v652
        %v3318 = vpop.f32.mrb[0].mxu0
        %v3319 = vadd.f32 0.0, %v3318
        %v3320 = vpop.f32.mrb[0].mxu0
        %3321 = vmatprep.mubr.f32.mxu0 0.0
        %3322 = vmatmul.mubr.f32.gmra.mrb[0].mxu0 %v653
        %v3323 = vpop.f32.mrb[0].mxu0
        %v3324 = vadd.f32 0.0, %v3323
        %v3325 = vpop.f32.mrb[0].mxu0
        %3326 = vmatprep.mubr.f32.mxu0 0.0
        %3327 = vmatmul.mubr.f32.gmra.mrb[0].mxu0 %v654
        %v3328 = vpop.f32.mrb[0].mxu0
        %v3329 = vadd.f32 0.0, %v3328
        %v3330 = vpop.f32.mrb[0].mxu0
        %3331 = vmatprep.mubr.f32.mxu0 0.0
        %3332 = vmatmul.mubr.f32.gmra.mrb[0].mxu0 %v655
        %v3333 = vpop.f32.mrb[0].mxu0
        %v3334 = vadd.f32 0.0, %v3333
        %v3335 = vpop.f32.mrb[0].mxu0
        %3336 = vmatprep.mubr.f32.mxu0 0.0
        %3337 = vmatmul.mubr.f32.gmra.mrb[0].mxu0 %v656
        %v3338 = vpop.f32.mrb[0].mxu0
        %v3339 = vadd.f32 0.0, %v3338
        %v3340 = vpop.f32.mrb[0].mxu0
        %3341 = vmatprep.mubr.f32.mxu0 0.0
        %3342 = vmatmul.mubr.f32.gmra.mrb[0].mxu0 %v657
        %v3343 = vpop.f32.mrb[0].mxu0
        %v3344 = vadd.f32 0.0, %v3343
        %v3345 = vpop.f32.mrb[0].mxu0
        %3346 = vmatprep.mubr.f32.mxu0 0.0
        %3347 = vmatmul.mubr.f32.gmra.mrb[0].mxu0 %v658
        %v3348 = vpop.f32.mrb[0].mxu0
        %v3349 = vadd.f32 0.0, %v3348
        %v3350 = vpop.f32.mrb[0].mxu0
        %3351 = vmatprep.mubr.f32.mxu0 0.0
        %3352 = vmatmul.mubr.f32.gmra.mrb[0].mxu0 %v659
        %v3353 = vpop.f32.mrb[0].mxu0
        %v3354 = vadd.f32 0.0, %v3353
        %v3355 = vpop.f32.mrb[0].mxu0
        %3356 = vmatprep.mubr.f32.mxu0 0.0
        %3357 = vmatmul.mubr.f32.gmra.mrb[0].mxu0 %v660
        %v3358 = vpop.f32.mrb[0].mxu0
        %v3359 = vadd.f32 0.0, %v3358
        %v3360 = vpop.f32.mrb[0].mxu0
        %3361 = vmatprep.mubr.f32.mxu0 0.0
        %3362 = vmatmul.mubr.f32.gmra.mrb[0].mxu0 %v661
        %v3363 = vpop.f32.mrb[0].mxu0
        %v3364 = vadd.f32 0.0, %v3363
        %v3365 = vpop.f32.mrb[0].mxu0
        %3366 = vmatprep.mubr.f32.mxu0 0.0
        %3367 = vmatmul.mubr.f32.gmra.mrb[0].mxu0 %v662
        %v3368 = vpop.f32.mrb[0].mxu0
        %v3369 = vadd.f32 0.0, %v3368
        %v3370 = vpop.f32.mrb[0].mxu0
        %3371 = vmatprep.mubr.f32.mxu0 0.0
        %3372 = vmatmul.mubr.f32.gmra.mrb[0].mxu0 %v663
        %v3373 = vpop.f32.mrb[0].mxu0
        %v3374 = vadd.f32 0.0, %v3373
        %v3375 = vpop.f32.mrb[0].mxu0
        %3376 = vmatprep.mubr.f32.mxu0 0.0
        %3377 = vmatmul.mubr.f32.gmra.mrb[0].mxu0 %v664
        %v3378 = vpop.f32.mrb[0].mxu0
        %v3379 = vadd.f32 0.0, %v3378
        %v3380 = vpop.f32.mrb[0].mxu0
        %3381 = vmatprep.mubr.f32.mxu0 0.0
        %3382 = vmatmul.mubr.f32.gmra.mrb[0].mxu0 %v665
        %v3383 = vpop.f32.mrb[0].mxu0
        %v3384 = vadd.f32 0.0, %v3383
        %v3385 = vpop.f32.mrb[0].mxu0
        %3386 = vmatprep.mubr.f32.mxu0 0.0
        %3387 = vmatmul.mubr.f32.gmra.mrb[0].mxu0 %v666
        %v3388 = vpop.f32.mrb[0].mxu0
        %v3389 = vadd.f32 0.0, %v3388
        %v3390 = vpop.f32.mrb[0].mxu0
        %3391 = vmatprep.mubr.f32.mxu0 0.0
        %3392 = vmatmul.mubr.f32.gmra.mrb[0].mxu0 %v667
        %v3393 = vpop.f32.mrb[0].mxu0
        %v3394 = vadd.f32 0.0, %v3393
        %v3395 = vpop.f32.mrb[0].mxu0
        %3396 = vmatprep.mubr.f32.mxu0 0.0
        %3397 = vmatmul.mubr.f32.gmra.mrb[0].mxu0 %v668
        %v3398 = vpop.f32.mrb[0].mxu0
        %v3399 = vadd.f32 0.0, %v3398
        %v3400 = vpop.f32.mrb[0].mxu0
        %3401 = vmatprep.mubr.f32.mxu0 0.0
        %3402 = vmatmul.mubr.f32.gmra.mrb[0].mxu0 %v669
        %v3403 = vpop.f32.mrb[0].mxu0
        %v3404 = vadd.f32 0.0, %v3403
        %v3405 = vpop.f32.mrb[0].mxu0
        %3406 = vmatprep.mubr.f32.mxu0 0.0
        %3407 = vmatmul.mubr.f32.gmra.mrb[0].mxu0 %v670
        %v3408 = vpop.f32.mrb[0].mxu0
        %v3409 = vadd.f32 0.0, %v3408
        %v3410 = vpop.f32.mrb[0].mxu0
        %3411 = vmatprep.mubr.f32.mxu0 0.0
        %3412 = vmatmul.mubr.f32.gmra.mrb[0].mxu0 %v671
        %v3413 = vpop.f32.mrb[0].mxu0
        %v3414 = vadd.f32 0.0, %v3413
        %v3415 = vpop.f32.mrb[0].mxu0
        %3416 = vmatprep.mubr.f32.mxu0 0.0
        %3417 = vmatmul.mubr.f32.gmra.mrb[0].mxu0 %v672
        %v3418 = vpop.f32.mrb[0].mxu0
        %v3419 = vadd.f32 0.0, %v3418
        %v3420 = vpop.f32.mrb[0].mxu0
        %3421 = vmatprep.mubr.f32.mxu0 0.0
        %3422 = vmatmul.mubr.f32.gmra.mrb[0].mxu0 %v673
        %v3423 = vpop.f32.mrb[0].mxu0
        %v3424 = vadd.f32 0.0, %v3423
        %v3425 = vpop.f32.mrb[0].mxu0
        %3426 = vmatprep.mubr.f32.mxu0 0.0
        %3427 = vmatmul.mubr.f32.gmra.mrb[0].mxu0 %v674
        %v3428 = vpop.f32.mrb[0].mxu0
        %v3429 = vadd.f32 0.0, %v3428
        %v3430 = vpop.f32.mrb[0].mxu0
        %3431 = vmatprep.mubr.f32.mxu0 0.0
        %3432 = vmatmul.mubr.f32.gmra.mrb[0].mxu0 %v675
        %v3433 = vpop.f32.mrb[0].mxu0
        %v3434 = vadd.f32 0.0, %v3433
        %v3435 = vpop.f32.mrb[0].mxu0
        %3436 = vmatprep.mubr.f32.mxu0 0.0
        %3437 = vmatmul.mubr.f32.gmra.mrb[0].mxu0 %v676
        %v3438 = vpop.f32.mrb[0].mxu0
        %v3439 = vadd.f32 0.0, %v3438
        %v3440 = vpop.f32.mrb[0].mxu0
        %3441 = vmatprep.mubr.f32.mxu0 0.0
        %3442 = vmatmul.mubr.f32.gmra.mrb[0].mxu0 %v677
        %v3443 = vpop.f32.mrb[0].mxu0
        %v3444 = vadd.f32 0.0, %v3443
        %v3445 = vpop.f32.mrb[0].mxu0
        %3446 = vmatprep.mubr.f32.mxu0 0.0
        %3447 = vmatmul.mubr.f32.gmra.mrb[0].mxu0 %v678
        %v3448 = vpop.f32.mrb[0].mxu0
        %v3449 = vadd.f32 0.0, %v3448
        %v3450 = vpop.f32.mrb[0].mxu0
        %3451 = vmatprep.mubr.f32.mxu0 0.0
        %3452 = vmatmul.mubr.f32.gmra.mrb[0].mxu0 %v679
        %v3453 = vpop.f32.mrb[0].mxu0
        %v3454 = vadd.f32 0.0, %v3453
        %v3455 = vpop.f32.mrb[0].mxu0
        %3456 = vmatprep.mubr.f32.mxu0 0.0
        %3457 = vmatmul.mubr.f32.gmra.mrb[0].mxu0 %v680
        %v3458 = vpop.f32.mrb[0].mxu0
        %v3459 = vadd.f32 0.0, %v3458
        %v3460 = vpop.f32.mrb[0].mxu0
        %3461 = vmatprep.mubr.f32.mxu0 0.0
        %3462 = vmatmul.mubr.f32.gmra.mrb[0].mxu0 %v681
        %v3463 = vpop.f32.mrb[0].mxu0
        %v3464 = vadd.f32 0.0, %v3463
        %v3465 = vpop.f32.mrb[0].mxu0
        %3466 = vmatprep.mubr.f32.mxu0 0.0
        %3467 = vmatmul.mubr.f32.gmra.mrb[0].mxu0 %v682
        %v3468 = vpop.f32.mrb[0].mxu0
        %v3469 = vadd.f32 0.0, %v3468
        %v3470 = vpop.f32.mrb[0].mxu0
        %3471 = vmatprep.mubr.f32.mxu0 0.0
        %3472 = vmatmul.mubr.f32.gmra.mrb[0].mxu0 %v683
        %v3473 = vpop.f32.mrb[0].mxu0
        %v3474 = vadd.f32 0.0, %v3473
        %v3475 = vpop.f32.mrb[0].mxu0
        %3476 = vmatprep.mubr.f32.mxu0 0.0
        %3477 = vmatmul.mubr.f32.gmra.mrb[0].mxu0 %v684
        %v3478 = vpop.f32.mrb[0].mxu0
        %v3479 = vadd.f32 0.0, %v3478
        %v3480 = vpop.f32.mrb[0].mxu0
        %3481 = vmatprep.mubr.f32.mxu0 0.0
        %3482 = vmatmul.mubr.f32.gmra.mrb[0].mxu0 %v685
        %v3483 = vpop.f32.mrb[0].mxu0
        %v3484 = vadd.f32 0.0, %v3483
        %v3485 = vpop.f32.mrb[0].mxu0
        %3486 = vmatprep.mubr.f32.mxu0 0.0
        %3487 = vmatmul.mubr.f32.gmra.mrb[0].mxu0 %v686
        %v3488 = vpop.f32.mrb[0].mxu0
        %v3489 = vadd.f32 0.0, %v3488
        %v3490 = vpop.f32.mrb[0].mxu0
        %3491 = vmatprep.mubr.f32.mxu0 0.0
        %3492 = vmatmul.mubr.f32.gmra.mrb[0].mxu0 %v687
        %v3493 = vpop.f32.mrb[0].mxu0
        %v3494 = vadd.f32 0.0, %v3493
        %v3495 = vpop.f32.mrb[0].mxu0
        %3496 = vmatprep.mubr.f32.mxu0 0.0
        %3497 = vmatmul.mubr.f32.gmra.mrb[0].mxu0 %v688
        %v3498 = vpop.f32.mrb[0].mxu0
        %v3499 = vadd.f32 0.0, %v3498
        %v3500 = vpop.f32.mrb[0].mxu0
        %3501 = vmatprep.mubr.f32.mxu0 0.0
        %3502 = vmatmul.mubr.f32.gmra.mrb[0].mxu0 %v689
        %v3503 = vpop.f32.mrb[0].mxu0
        %v3504 = vadd.f32 0.0, %v3503
        %v3505 = vpop.f32.mrb[0].mxu0
        %3506 = vmatprep.mubr.f32.mxu0 0.0
        %3507 = vmatmul.mubr.f32.gmra.mrb[0].mxu0 %v690
        %v3508 = vpop.f32.mrb[0].mxu0
        %v3509 = vadd.f32 0.0, %v3508
        %v3510 = vpop.f32.mrb[0].mxu0
        %3511 = vmatprep.mubr.f32.mxu0 0.0
        %3512 = vmatmul.mubr.f32.gmra.mrb[0].mxu0 %v691
        %v3513 = vpop.f32.mrb[0].mxu0
        %v3514 = vadd.f32 0.0, %v3513
        %v3515 = vpop.f32.mrb[0].mxu0
        %3516 = vmatprep.mubr.f32.mxu0 0.0
        %3517 = vmatmul.mubr.f32.gmra.mrb[0].mxu0 %v692
        %v3518 = vpop.f32.mrb[0].mxu0
        %v3519 = vadd.f32 0.0, %v3518
        %v3520 = vpop.f32.mrb[0].mxu0
        %3521 = vmatprep.mubr.f32.mxu0 0.0
        %3522 = vmatmul.mubr.f32.gmra.mrb[0].mxu0 %v693
        %v3523 = vpop.f32.mrb[0].mxu0
        %v3524 = vadd.f32 0.0, %v3523
        %v3525 = vpop.f32.mrb[0].mxu0
        %3526 = vmatprep.mubr.f32.mxu0 0.0
        %3527 = vmatmul.mubr.f32.gmra.mrb[0].mxu0 %v694
        %v3528 = vpop.f32.mrb[0].mxu0
        %v3529 = vadd.f32 0.0, %v3528
        %v3530 = vpop.f32.mrb[0].mxu0
        %3531 = vmatprep.mubr.f32.mxu0 0.0
        %3532 = vmatmul.mubr.f32.gmra.mrb[0].mxu0 %v695
        %v3533 = vpop.f32.mrb[0].mxu0
        %v3534 = vadd.f32 0.0, %v3533
        %v3535 = vpop.f32.mrb[0].mxu0
        %3536 = vmatprep.mubr.f32.mxu0 0.0
        %3537 = vmatmul.mubr.f32.gmra.mrb[0].mxu0 %v696
        %v3538 = vpop.f32.mrb[0].mxu0
        %v3539 = vadd.f32 0.0, %v3538
        %v3540 = vpop.f32.mrb[0].mxu0
        %3541 = vmatprep.mubr.f32.mxu0 0.0
        %3542 = vmatmul.mubr.f32.gmra.mrb[0].mxu0 %v697
        %v3543 = vpop.f32.mrb[0].mxu0
        %v3544 = vadd.f32 0.0, %v3543
        %v3545 = vpop.f32.mrb[0].mxu0
        %3546 = vmatprep.mubr.f32.mxu0 0.0
        %3547 = vmatmul.mubr.f32.gmra.mrb[0].mxu0 %v698
        %v3548 = vpop.f32.mrb[0].mxu0
        %v3549 = vadd.f32 0.0, %v3548
        %v3550 = vpop.f32.mrb[0].mxu0
        %3551 = vmatprep.mubr.f32.mxu0 0.0
        %3552 = vmatmul.mubr.f32.gmra.mrb[0].mxu0 %v699
        %v3553 = vpop.f32.mrb[0].mxu0
        %v3554 = vadd.f32 0.0, %v3553
        %v3555 = vpop.f32.mrb[0].mxu0
        %3556 = vmatprep.mubr.f32.mxu0 0.0
        %3557 = vmatmul.mubr.f32.gmra.mrb[0].mxu0 %v700
        %v3558 = vpop.f32.mrb[0].mxu0
        %v3559 = vadd.f32 0.0, %v3558
        %v3560 = vpop.f32.mrb[0].mxu0
        %3561 = vmatprep.mubr.f32.mxu0 0.0
        %3562 = vmatmul.mubr.f32.gmra.mrb[0].mxu0 %v701
        %v3563 = vpop.f32.mrb[0].mxu0
        %v3564 = vadd.f32 0.0, %v3563
        %v3565 = vpop.f32.mrb[0].mxu0
        %3566 = vmatprep.mubr.f32.mxu0 0.0
        %3567 = vmatmul.mubr.f32.gmra.mrb[0].mxu0 %v702
        %v3568 = vpop.f32.mrb[0].mxu0
        %v3569 = vadd.f32 0.0, %v3568
        %v3570 = vpop.f32.mrb[0].mxu0
        %3571 = vmatprep.mubr.f32.mxu0 0.0
        %3572 = vmatmul.mubr.f32.gmra.mrb[0].mxu0 %v703
        %v3573 = vpop.f32.mrb[0].mxu0
        %v3574 = vadd.f32 0.0, %v3573
        %v3575 = vpop.f32.mrb[0].mxu0
        %3576 = vmatprep.mubr.f32.mxu0 0.0
        %3577 = vmatmul.mubr.f32.gmra.mrb[0].mxu0 %v704
        %v3578 = vpop.f32.mrb[0].mxu0
        %v3579 = vadd.f32 0.0, %v3578
        %v3580 = vpop.f32.mrb[0].mxu0
        %3581 = vmatprep.mubr.f32.mxu0 0.0
        %3582 = vmatmul.mubr.f32.gmra.mrb[0].mxu0 %v705
        %v3583 = vpop.f32.mrb[0].mxu0
        %v3584 = vadd.f32 0.0, %v3583
        %v3585 = vpop.f32.mrb[0].mxu0
        %3586 = vmatprep.mubr.f32.mxu0 0.0
        %3587 = vmatmul.mubr.f32.gmra.mrb[0].mxu0 %v706
        %v3588 = vpop.f32.mrb[0].mxu0
        %v3589 = vadd.f32 0.0, %v3588
        %v3590 = vpop.f32.mrb[0].mxu0
        %3591 = vmatprep.mubr.f32.mxu0 0.0
        %3592 = vmatmul.mubr.f32.gmra.mrb[0].mxu0 %v707
        %v3593 = vpop.f32.mrb[0].mxu0
        %v3594 = vadd.f32 0.0, %v3593
        %v3595 = vpop.f32.mrb[0].mxu0
        %3596 = vmatprep.mubr.f32.mxu0 0.0
        %3597 = vmatmul.mubr.f32.gmra.mrb[0].mxu0 %v708
        %v3598 = vpop.f32.mrb[0].mxu0
        %v3599 = vadd.f32 0.0, %v3598
        %v3600 = vpop.f32.mrb[0].mxu0
        %3601 = vmatprep.mubr.f32.mxu0 0.0
        %3602 = vmatmul.mubr.f32.gmra.mrb[0].mxu0 %v709
        %v3603 = vpop.f32.mrb[0].mxu0
        %v3604 = vadd.f32 0.0, %v3603
        %v3605 = vpop.f32.mrb[0].mxu0
        %3606 = vmatprep.mubr.f32.mxu0 0.0
        %3607 = vmatmul.mubr.f32.gmra.mrb[0].mxu0 %v710
        %v3608 = vpop.f32.mrb[0].mxu0
        %v3609 = vadd.f32 0.0, %v3608
        %v3610 = vpop.f32.mrb[0].mxu0
        %3611 = vmatprep.mubr.f32.mxu0 0.0
        %3612 = vmatmul.mubr.f32.gmra.mrb[0].mxu0 %v711
        %v3613 = vpop.f32.mrb[0].mxu0
        %v3614 = vadd.f32 0.0, %v3613
        %v3615 = vpop.f32.mrb[0].mxu0
        %3616 = vmatprep.mubr.f32.mxu0 0.0
        %3617 = vmatmul.mubr.f32.gmra.mrb[0].mxu0 %v712
        %v3618 = vpop.f32.mrb[0].mxu0
        %v3619 = vadd.f32 0.0, %v3618
        %v3620 = vpop.f32.mrb[0].mxu0
        %3621 = vmatprep.mubr.f32.mxu0 0.0
        %3622 = vmatmul.mubr.f32.gmra.mrb[0].mxu0 %v713
        %v3623 = vpop.f32.mrb[0].mxu0
        %v3624 = vadd.f32 0.0, %v3623
        %v3625 = vpop.f32.mrb[0].mxu0
        %3626 = vmatprep.mubr.f32.mxu0 0.0
        %3627 = vmatmul.mubr.f32.gmra.mrb[0].mxu0 %v714
        %v3628 = vpop.f32.mrb[0].mxu0
        %v3629 = vadd.f32 0.0, %v3628
        %v3630 = vpop.f32.mrb[0].mxu0
        %3631 = vmatprep.mubr.f32.mxu0 0.0
        %3632 = vmatmul.mubr.f32.gmra.mrb[0].mxu0 %v715
        %v3633 = vpop.f32.mrb[0].mxu0
        %v3634 = vadd.f32 0.0, %v3633
        %v3635 = vpop.f32.mrb[0].mxu0
        %3636 = vmatprep.mubr.f32.mxu0 0.0
        %3637 = vmatmul.mubr.f32.gmra.mrb[0].mxu0 %v716
        %v3638 = vpop.f32.mrb[0].mxu0
        %v3639 = vadd.f32 0.0, %v3638
        %v3640 = vpop.f32.mrb[0].mxu0
        %3641 = vmatprep.mubr.f32.mxu0 0.0
        %3642 = vmatmul.mubr.f32.gmra.mrb[0].mxu0 %v717
        %v3643 = vpop.f32.mrb[0].mxu0
        %v3644 = vadd.f32 0.0, %v3643
        %v3645 = vpop.f32.mrb[0].mxu0
        %3646 = vmatprep.mubr.f32.mxu0 0.0
        %3647 = vmatmul.mubr.f32.gmra.mrb[0].mxu0 %v718
        %v3648 = vpop.f32.mrb[0].mxu0
        %v3649 = vadd.f32 0.0, %v3648
        %v3650 = vpop.f32.mrb[0].mxu0
        %3651 = vmatprep.mubr.f32.mxu0 0.0
        %3652 = vmatmul.mubr.f32.gmra.mrb[0].mxu0 %v719
        %v3653 = vpop.f32.mrb[0].mxu0
        %v3654 = vadd.f32 0.0, %v3653
        %v3655 = vpop.f32.mrb[0].mxu0
        %3656 = vmatprep.mubr.f32.mxu0 0.0
        %3657 = vmatmul.mubr.f32.gmra.mrb[0].mxu0 %v720
        %v3658 = vpop.f32.mrb[0].mxu0
        %v3659 = vadd.f32 0.0, %v3658
        %v3660 = vpop.f32.mrb[0].mxu0
        %3661 = vmatprep.mubr.f32.mxu0 0.0
        %3662 = vmatmul.mubr.f32.gmra.mrb[0].mxu0 %v721
        %v3663 = vpop.f32.mrb[0].mxu0
        %v3664 = vadd.f32 0.0, %v3663
        %v3665 = vpop.f32.mrb[0].mxu0
        %3666 = vmatprep.mubr.f32.mxu0 0.0
        %3667 = vmatmul.mubr.f32.gmra.mrb[0].mxu0 %v722
        %v3668 = vpop.f32.mrb[0].mxu0
        %v3669 = vadd.f32 0.0, %v3668
        %v3670 = vpop.f32.mrb[0].mxu0
        %3671 = vmatprep.mubr.f32.mxu0 0.0
        %3672 = vmatmul.mubr.f32.gmra.mrb[0].mxu0 %v723
        %v3673 = vpop.f32.mrb[0].mxu0
        %v3674 = vadd.f32 0.0, %v3673
        %v3675 = vpop.f32.mrb[0].mxu0
        %3676 = vmatprep.mubr.f32.mxu0 0.0
        %3677 = vmatmul.mubr.f32.gmra.mrb[0].mxu0 %v724
        %v3678 = vpop.f32.mrb[0].mxu0
        %v3679 = vadd.f32 0.0, %v3678
        %v3680 = vpop.f32.mrb[0].mxu0
        %3681 = vmatprep.mubr.f32.mxu0 0.0
        %3682 = vmatmul.mubr.f32.gmra.mrb[0].mxu0 %v725
        %v3683 = vpop.f32.mrb[0].mxu0
        %v3684 = vadd.f32 0.0, %v3683
        %v3685 = vpop.f32.mrb[0].mxu0
        %3686 = vmatprep.mubr.f32.mxu0 0.0
        %3687 = vmatmul.mubr.f32.gmra.mrb[0].mxu0 %v726
        %v3688 = vpop.f32.mrb[0].mxu0
        %v3689 = vadd.f32 0.0, %v3688
        %v3690 = vpop.f32.mrb[0].mxu0
        %3691 = vmatprep.mubr.f32.mxu0 0.0
        %3692 = vmatmul.mubr.f32.gmra.mrb[0].mxu0 %v727
        %v3693 = vpop.f32.mrb[0].mxu0
        %v3694 = vadd.f32 0.0, %v3693
        %v3695 = vpop.f32.mrb[0].mxu0
        %3696 = vmatprep.mubr.f32.mxu0 0.0
        %3697 = vmatmul.mubr.f32.gmra.mrb[0].mxu0 %v728
        %v3698 = vpop.f32.mrb[0].mxu0
        %v3699 = vadd.f32 0.0, %v3698
        %v3700 = vpop.f32.mrb[0].mxu0
        %3701 = vmatprep.mubr.f32.mxu0 0.0
        %3702 = vmatmul.mubr.f32.gmra.mrb[0].mxu0 %v729
        %v3703 = vpop.f32.mrb[0].mxu0
        %v3704 = vadd.f32 0.0, %v3703
        %v3705 = vpop.f32.mrb[0].mxu0
        %3706 = vmatprep.mubr.f32.mxu0 0.0
        %3707 = vmatmul.mubr.f32.gmra.mrb[0].mxu0 %v730
        %v3708 = vpop.f32.mrb[0].mxu0
        %v3709 = vadd.f32 0.0, %v3708
        %v3710 = vpop.f32.mrb[0].mxu0
        %3711 = vmatprep.mubr.f32.mxu0 0.0
        %3712 = vmatmul.mubr.f32.gmra.mrb[0].mxu0 %v731
        %v3713 = vpop.f32.mrb[0].mxu0
        %v3714 = vadd.f32 0.0, %v3713
        %v3715 = vpop.f32.mrb[0].mxu0
        %3716 = vmatprep.mubr.f32.mxu0 0.0
        %3717 = vmatmul.mubr.f32.gmra.mrb[0].mxu0 %v732
        %v3718 = vpop.f32.mrb[0].mxu0
        %v3719 = vadd.f32 0.0, %v3718
        %v3720 = vpop.f32.mrb[0].mxu0
        %3721 = vmatprep.mubr.f32.mxu0 0.0
        %3722 = vmatmul.mubr.f32.gmra.mrb[0].mxu0 %v733
        %v3723 = vpop.f32.mrb[0].mxu0
        %v3724 = vadd.f32 0.0, %v3723
        %v3725 = vpop.f32.mrb[0].mxu0
        %3726 = vmatprep.mubr.f32.mxu0 0.0
        %3727 = vmatmul.mubr.f32.gmra.mrb[0].mxu0 %v734
        %v3728 = vpop.f32.mrb[0].mxu0
        %v3729 = vadd.f32 0.0, %v3728
        %v3730 = vpop.f32.mrb[0].mxu0
        %3731 = vmatprep.mubr.f32.mxu0 0.0
        %3732 = vmatmul.mubr.f32.gmra.mrb[0].mxu0 %v735
        %v3733 = vpop.f32.mrb[0].mxu0
        %v3734 = vadd.f32 0.0, %v3733
        %v3735 = vpop.f32.mrb[0].mxu0
        %3736 = vmatprep.mubr.f32.mxu0 0.0
        %3737 = vmatmul.mubr.f32.gmra.mrb[0].mxu0 %v736
        %v3738 = vpop.f32.mrb[0].mxu0
        %v3739 = vadd.f32 0.0, %v3738
        %v3740 = vpop.f32.mrb[0].mxu0
        %3741 = vmatprep.mubr.f32.mxu0 0.0
        %3742 = vmatmul.mubr.f32.gmra.mrb[0].mxu0 %v737
        %v3743 = vpop.f32.mrb[0].mxu0
        %v3744 = vadd.f32 0.0, %v3743
        %v3745 = vpop.f32.mrb[0].mxu0
        %3746 = vmatprep.mubr.f32.mxu0 0.0
        %3747 = vmatmul.mubr.f32.gmra.mrb[0].mxu0 %v738
        %v3748 = vpop.f32.mrb[0].mxu0
        %v3749 = vadd.f32 0.0, %v3748
        %v3750 = vpop.f32.mrb[0].mxu0
        %3751 = vmatprep.mubr.f32.mxu0 0.0
        %3752 = vmatmul.mubr.f32.gmra.mrb[0].mxu0 %v739
        %v3753 = vpop.f32.mrb[0].mxu0
        %v3754 = vadd.f32 0.0, %v3753
        %v3755 = vpop.f32.mrb[0].mxu0
        %3756 = vmatprep.mubr.f32.mxu0 0.0
        %3757 = vmatmul.mubr.f32.gmra.mrb[0].mxu0 %v740
        %v3758 = vpop.f32.mrb[0].mxu0
        %v3759 = vadd.f32 0.0, %v3758
        %v3760 = vpop.f32.mrb[0].mxu0
        %3761 = vmatprep.mubr.f32.mxu0 0.0
        %3762 = vmatmul.mubr.f32.gmra.mrb[0].mxu0 %v741
        %v3763 = vpop.f32.mrb[0].mxu0
        %v3764 = vadd.f32 0.0, %v3763
        %v3765 = vpop.f32.mrb[0].mxu0
        %3766 = vmatprep.mubr.f32.mxu0 0.0
        %3767 = vmatmul.mubr.f32.gmra.mrb[0].mxu0 %v742
        %v3768 = vpop.f32.mrb[0].mxu0
        %v3769 = vadd.f32 0.0, %v3768
        %v3770 = vpop.f32.mrb[0].mxu0
        %3771 = vmatprep.mubr.f32.mxu0 0.0
        %3772 = vmatmul.mubr.f32.gmra.mrb[0].mxu0 %v743
        %v3773 = vpop.f32.mrb[0].mxu0
        %v3774 = vadd.f32 0.0, %v3773
        %v3775 = vpop.f32.mrb[0].mxu0
        %3776 = vmatprep.mubr.f32.mxu0 0.0
        %3777 = vmatmul.mubr.f32.gmra.mrb[0].mxu0 %v744
        %v3778 = vpop.f32.mrb[0].mxu0
        %v3779 = vadd.f32 0.0, %v3778
        %v3780 = vpop.f32.mrb[0].mxu0
        %3781 = vmatprep.mubr.f32.mxu0 0.0
        %3782 = vmatmul.mubr.f32.gmra.mrb[0].mxu0 %v745
        %v3783 = vpop.f32.mrb[0].mxu0
        %v3784 = vadd.f32 0.0, %v3783
        %v3785 = vpop.f32.mrb[0].mxu0
        %3786 = vmatprep.mubr.f32.mxu0 0.0
        %3787 = vmatmul.mubr.f32.gmra.mrb[0].mxu0 %v746
        %v3788 = vpop.f32.mrb[0].mxu0
        %v3789 = vadd.f32 0.0, %v3788
        %v3790 = vpop.f32.mrb[0].mxu0
        %3791 = vmatprep.mubr.f32.mxu0 0.0
        %3792 = vmatmul.mubr.f32.gmra.mrb[0].mxu0 %v747
        %v3793 = vpop.f32.mrb[0].mxu0
        %v3794 = vadd.f32 0.0, %v3793
        %v3795 = vpop.f32.mrb[0].mxu0
        %3796 = vmatprep.mubr.f32.mxu0 0.0
        %3797 = vmatmul.mubr.f32.gmra.mrb[0].mxu0 %v748
        %v3798 = vpop.f32.mrb[0].mxu0
        %v3799 = vadd.f32 0.0, %v3798
        %v3800 = vpop.f32.mrb[0].mxu0
        %3801 = vmatprep.mubr.f32.mxu0 0.0
        %3802 = vmatmul.mubr.f32.gmra.mrb[0].mxu0 %v749
        %v3803 = vpop.f32.mrb[0].mxu0
        %v3804 = vadd.f32 0.0, %v3803
        %v3805 = vpop.f32.mrb[0].mxu0
        %3806 = vmatprep.mubr.f32.mxu0 0.0
        %3807 = vmatmul.mubr.f32.gmra.mrb[0].mxu0 %v750
        %v3808 = vpop.f32.mrb[0].mxu0
        %v3809 = vadd.f32 0.0, %v3808
        %v3810 = vpop.f32.mrb[0].mxu0
        %3811 = vmatprep.mubr.f32.mxu0 0.0
        %3812 = vmatmul.mubr.f32.gmra.mrb[0].mxu0 %v751
        %v3813 = vpop.f32.mrb[0].mxu0
        %v3814 = vadd.f32 0.0, %v3813
        %v3815 = vpop.f32.mrb[0].mxu0
        %3816 = vmatprep.mubr.f32.mxu0 0.0
        %3817 = vmatmul.mubr.f32.gmra.mrb[0].mxu0 %v752
        %v3818 = vpop.f32.mrb[0].mxu0
        %v3819 = vadd.f32 0.0, %v3818
        %v3820 = vpop.f32.mrb[0].mxu0
        %3821 = vmatprep.mubr.f32.mxu0 0.0
        %3822 = vmatmul.mubr.f32.gmra.mrb[0].mxu0 %v753
        %v3823 = vpop.f32.mrb[0].mxu0
        %v3824 = vadd.f32 0.0, %v3823
        %v3825 = vpop.f32.mrb[0].mxu0
        %3826 = vmatprep.mubr.f32.mxu0 0.0
        %3827 = vmatmul.mubr.f32.gmra.mrb[0].mxu0 %v754
        %v3828 = vpop.f32.mrb[0].mxu0
        %v3829 = vadd.f32 0.0, %v3828
        %v3830 = vpop.f32.mrb[0].mxu0
        %3831 = vmatprep.mubr.f32.mxu0 0.0
        %3832 = vmatmul.mubr.f32.gmra.mrb[0].mxu0 %v755
        %v3833 = vpop.f32.mrb[0].mxu0
        %v3834 = vadd.f32 0.0, %v3833
        %v3835 = vpop.f32.mrb[0].mxu0
        %3836 = vmatprep.mubr.f32.mxu0 0.0
        %3837 = vmatmul.mubr.f32.gmra.mrb[0].mxu0 %v756
        %v3838 = vpop.f32.mrb[0].mxu0
        %v3839 = vadd.f32 0.0, %v3838
        %v3840 = vpop.f32.mrb[0].mxu0
        %3841 = vmatprep.mubr.f32.mxu0 0.0
        %3842 = vmatmul.mubr.f32.gmra.mrb[0].mxu0 %v757
        %v3843 = vpop.f32.mrb[0].mxu0
        %v3844 = vadd.f32 0.0, %v3843
        %v3845 = vpop.f32.mrb[0].mxu0
        %3846 = vmatprep.mubr.f32.mxu0 0.0
        %3847 = vmatmul.mubr.f32.gmra.mrb[0].mxu0 %v758
        %v3848 = vpop.f32.mrb[0].mxu0
        %v3849 = vadd.f32 0.0, %v3848
        %v3850 = vpop.f32.mrb[0].mxu0
        %3851 = vmatprep.mubr.f32.mxu0 0.0
        %3852 = vmatmul.mubr.f32.gmra.mrb[0].mxu0 %v759
        %v3853 = vpop.f32.mrb[0].mxu0
        %v3854 = vadd.f32 0.0, %v3853
        %v3855 = vpop.f32.mrb[0].mxu0
        %3856 = vmatprep.mubr.f32.mxu0 0.0
        %3857 = vmatmul.mubr.f32.gmra.mrb[0].mxu0 %v760
        %v3858 = vpop.f32.mrb[0].mxu0
        %v3859 = vadd.f32 0.0, %v3858
        %v3860 = vpop.f32.mrb[0].mxu0
        %3861 = vmatprep.mubr.f32.mxu0 0.0
        %3862 = vmatmul.mubr.f32.gmra.mrb[0].mxu0 %v761
        %v3863 = vpop.f32.mrb[0].mxu0
        %v3864 = vadd.f32 0.0, %v3863
        %v3865 = vpop.f32.mrb[0].mxu0
        %3866 = vmatprep.mubr.f32.mxu0 0.0
        %3867 = vmatmul.mubr.f32.gmra.mrb[0].mxu0 %v762
        %v3868 = vpop.f32.mrb[0].mxu0
        %v3869 = vadd.f32 0.0, %v3868
        %v3870 = vpop.f32.mrb[0].mxu0
        %3871 = vmatprep.mubr.f32.mxu0 0.0
        %3872 = vmatmul.mubr.f32.gmra.mrb[0].mxu0 %v763
        %v3873 = vpop.f32.mrb[0].mxu0
        %v3874 = vadd.f32 0.0, %v3873
        %v3875 = vpop.f32.mrb[0].mxu0
        %3876 = vmatprep.mubr.f32.mxu0 0.0
        %3877 = vmatmul.mubr.f32.gmra.mrb[0].mxu0 %v764
        %v3878 = vpop.f32.mrb[0].mxu0
        %v3879 = vadd.f32 0.0, %v3878
        %v3880 = vpop.f32.mrb[0].mxu0
        %3881 = vmatprep.mubr.f32.mxu0 0.0
        %3882 = vmatmul.mubr.f32.gmra.mrb[0].mxu0 %v765
        %v3883 = vpop.f32.mrb[0].mxu0
        %v3884 = vadd.f32 0.0, %v3883
        %v3885 = vpop.f32.mrb[0].mxu0
        %3886 = vmatprep.mubr.f32.mxu0 0.0
        %3887 = vmatmul.mubr.f32.gmra.mrb[0].mxu0 %v766
        %v3888 = vpop.f32.mrb[0].mxu0
        %v3889 = vadd.f32 0.0, %v3888
        %v3890 = vpop.f32.mrb[0].mxu0
        %3891 = vmatprep.mubr.f32.mxu0 0.0
        %3892 = vmatmul.mubr.f32.gmra.mrb[0].mxu0 %v767
        %v3893 = vpop.f32.mrb[0].mxu0
        %v3894 = vadd.f32 0.0, %v3893
        %v3895 = vpop.f32.mrb[0].mxu0
        %3896 = vmatprep.mubr.f32.mxu0 0.0
        %3897 = vmatmul.mubr.f32.gmra.mrb[0].mxu0 %v768
        %v3898 = vpop.f32.mrb[0].mxu0
        %v3899 = vadd.f32 0.0, %v3898
        %v3900 = vpop.f32.mrb[0].mxu0
        %3901 = vmatprep.mubr.f32.mxu0 0.0
        %3902 = vmatmul.mubr.f32.gmra.mrb[0].mxu0 %v769
        %v3903 = vpop.f32.mrb[0].mxu0
        %v3904 = vadd.f32 0.0, %v3903
        %v3905 = vpop.f32.mrb[0].mxu0
        %3906 = vmatprep.mubr.f32.mxu0 0.0
        %3907 = vmatmul.mubr.f32.gmra.mrb[0].mxu0 %v770
        %v3908 = vpop.f32.mrb[0].mxu0
        %v3909 = vadd.f32 0.0, %v3908
        %v3910 = vpop.f32.mrb[0].mxu0
        %3911 = vmatprep.mubr.f32.mxu0 0.0
        %3912 = vmatmul.mubr.f32.gmra.mrb[0].mxu0 %v771
        %v3913 = vpop.f32.mrb[0].mxu0
        %v3914 = vadd.f32 0.0, %v3913
        %v3915 = vpop.f32.mrb[0].mxu0
        %3916 = vmatprep.mubr.f32.mxu0 0.0
        %3917 = vmatmul.mubr.f32.gmra.mrb[0].mxu0 %v772
        %v3918 = vpop.f32.mrb[0].mxu0
        %v3919 = vadd.f32 0.0, %v3918
        %v3920 = vpop.f32.mrb[0].mxu0
        %3921 = vmatprep.mubr.f32.mxu0 0.0
        %3922 = vmatmul.mubr.f32.gmra.mrb[0].mxu0 %v773
        %v3923 = vpop.f32.mrb[0].mxu0
        %v3924 = vadd.f32 0.0, %v3923
        %v3925 = vpop.f32.mrb[0].mxu0
        %3926 = vmatprep.mubr.f32.mxu0 0.0
        %3927 = vmatmul.mubr.f32.gmra.mrb[0].mxu0 %v774
        %v3928 = vpop.f32.mrb[0].mxu0
        %v3929 = vadd.f32 0.0, %v3928
        %v3930 = vpop.f32.mrb[0].mxu0
        %3931 = vmatprep.mubr.f32.mxu0 0.0
        %3932 = vmatmul.mubr.f32.gmra.mrb[0].mxu0 %v775
        %v3933 = vpop.f32.mrb[0].mxu0
        %v3934 = vadd.f32 0.0, %v3933
        %v3935 = vpop.f32.mrb[0].mxu0
        %3936 = vmatprep.mubr.f32.mxu0 0.0
        %3937 = vmatmul.mubr.f32.gmra.mrb[0].mxu0 %v776
        %v3938 = vpop.f32.mrb[0].mxu0
        %v3939 = vadd.f32 0.0, %v3938
        %v3940 = vpop.f32.mrb[0].mxu0
        %3941 = vmatprep.mubr.f32.mxu0 0.0
        %3942 = vmatmul.mubr.f32.gmra.mrb[0].mxu0 %v777
        %v3943 = vpop.f32.mrb[0].mxu0
        %v3944 = vadd.f32 0.0, %v3943
        %v3945 = vpop.f32.mrb[0].mxu0
        %3946 = vmatprep.mubr.f32.mxu0 0.0
        %3947 = vmatmul.mubr.f32.gmra.mrb[0].mxu0 %v778
        %v3948 = vpop.f32.mrb[0].mxu0
        %v3949 = vadd.f32 0.0, %v3948
        %v3950 = vpop.f32.mrb[0].mxu0
        %3951 = vmatprep.mubr.f32.mxu0 0.0
        %3952 = vmatmul.mubr.f32.gmra.mrb[0].mxu0 %v779
        %v3953 = vpop.f32.mrb[0].mxu0
        %v3954 = vadd.f32 0.0, %v3953
        %v3955 = vpop.f32.mrb[0].mxu0
        %3956 = vmatprep.mubr.f32.mxu0 0.0
        %3957 = vmatmul.mubr.f32.gmra.mrb[0].mxu0 %v780
        %v3958 = vpop.f32.mrb[0].mxu0
        %v3959 = vadd.f32 0.0, %v3958
        %v3960 = vpop.f32.mrb[0].mxu0
        %3961 = vmatprep.mubr.f32.mxu0 0.0
        %3962 = vmatmul.mubr.f32.gmra.mrb[0].mxu0 %v781
        %v3963 = vpop.f32.mrb[0].mxu0
        %v3964 = vadd.f32 0.0, %v3963
        %v3965 = vpop.f32.mrb[0].mxu0
        %3966 = vmatprep.mubr.f32.mxu0 0.0
        %3967 = vmatmul.mubr.f32.gmra.mrb[0].mxu0 %v782
        %v3968 = vpop.f32.mrb[0].mxu0
        %v3969 = vadd.f32 0.0, %v3968
        %v3970 = vpop.f32.mrb[0].mxu0
        %3971 = vmatprep.mubr.f32.mxu0 0.0
        %3972 = vmatmul.mubr.f32.gmra.mrb[0].mxu0 %v783
        %v3973 = vpop.f32.mrb[0].mxu0
        %v3974 = vadd.f32 0.0, %v3973
        %v3975 = vpop.f32.mrb[0].mxu0
        %3976 = vmatprep.mubr.f32.mxu0 0.0
        %3977 = vmatmul.mubr.f32.gmra.mrb[0].mxu0 %v784
        %v3978 = vpop.f32.mrb[0].mxu0
        %v3979 = vadd.f32 0.0, %v3978
        %v3980 = vpop.f32.mrb[0].mxu0
        %3981 = vmatprep.mubr.f32.mxu0 0.0
        %3982 = vmatmul.mubr.f32.gmra.mrb[0].mxu0 %v785
        %v3983 = vpop.f32.mrb[0].mxu0
        %v3984 = vadd.f32 0.0, %v3983
        %v3985 = vpop.f32.mrb[0].mxu0
        %3986 = vmatprep.mubr.f32.mxu0 0.0
        %3987 = vmatmul.mubr.f32.gmra.mrb[0].mxu0 %v786
        %v3988 = vpop.f32.mrb[0].mxu0
        %v3989 = vadd.f32 0.0, %v3988
        %v3990 = vpop.f32.mrb[0].mxu0
        %3991 = vmatprep.mubr.f32.mxu0 0.0
        %3992 = vmatmul.mubr.f32.gmra.mrb[0].mxu0 %v787
        %v3993 = vpop.f32.mrb[0].mxu0
        %v3994 = vadd.f32 0.0, %v3993
        %v3995 = vpop.f32.mrb[0].mxu0
        %3996 = vmatprep.mubr.f32.mxu0 0.0
        %3997 = vmatmul.mubr.f32.gmra.mrb[0].mxu0 %v788
        %v3998 = vpop.f32.mrb[0].mxu0
        %v3999 = vadd.f32 0.0, %v3998
        %v4000 = vpop.f32.mrb[0].mxu0
        %4001 = vmatprep.mubr.f32.mxu0 0.0
        %4002 = vmatmul.mubr.f32.gmra.mrb[0].mxu0 %v789
        %v4003 = vpop.f32.mrb[0].mxu0
        %v4004 = vadd.f32 0.0, %v4003
        %v4005 = vpop.f32.mrb[0].mxu0
        %4006 = vmatprep.mubr.f32.mxu0 0.0
        %4007 = vmatmul.mubr.f32.gmra.mrb[0].mxu0 %v790
        %v4008 = vpop.f32.mrb[0].mxu0
        %v4009 = vadd.f32 0.0, %v4008
        %v4010 = vpop.f32.mrb[0].mxu0
        %4011 = vmatprep.mubr.f32.mxu0 0.0
        %4012 = vmatmul.mubr.f32.gmra.mrb[0].mxu0 %v791
        %v4013 = vpop.f32.mrb[0].mxu0
        %v4014 = vadd.f32 0.0, %v4013
        %v4015 = vpop.f32.mrb[0].mxu0
        %4016 = vmatprep.mubr.f32.mxu0 0.0
        %4017 = vmatmul.mubr.f32.gmra.mrb[0].mxu0 %v792
        %v4018 = vpop.f32.mrb[0].mxu0
        %v4019 = vadd.f32 0.0, %v4018
        %v4020 = vpop.f32.mrb[0].mxu0
        %4021 = vmatprep.mubr.f32.mxu0 0.0
        %4022 = vmatmul.mubr.f32.gmra.mrb[0].mxu0 %v793
        %v4023 = vpop.f32.mrb[0].mxu0
        %v4024 = vadd.f32 0.0, %v4023
        %v4025 = vpop.f32.mrb[0].mxu0
        %4026 = vmatprep.mubr.f32.mxu0 0.0
        %4027 = vmatmul.mubr.f32.gmra.mrb[0].mxu0 %v794
        %v4028 = vpop.f32.mrb[0].mxu0
        %v4029 = vadd.f32 0.0, %v4028
        %v4030 = vpop.f32.mrb[0].mxu0
        %4031 = vmatprep.mubr.f32.mxu0 0.0
        %4032 = vmatmul.mubr.f32.gmra.mrb[0].mxu0 %v795
        %v4033 = vpop.f32.mrb[0].mxu0
        %v4034 = vadd.f32 0.0, %v4033
        %v4035 = vpop.f32.mrb[0].mxu0
        %4036 = vmatprep.mubr.f32.mxu0 0.0
        %4037 = vmatmul.mubr.f32.gmra.mrb[0].mxu0 %v796
        %v4038 = vpop.f32.mrb[0].mxu0
        %v4039 = vadd.f32 0.0, %v4038
        %v4040 = vpop.f32.mrb[0].mxu0
        %4041 = vmatprep.mubr.f32.mxu0 0.0
        %4042 = vmatmul.mubr.f32.gmra.mrb[0].mxu0 %v797
        %v4043 = vpop.f32.mrb[0].mxu0
        %v4044 = vadd.f32 0.0, %v4043
        %v4045 = vpop.f32.mrb[0].mxu0
        %4046 = vmatprep.mubr.f32.mxu0 0.0
        %4047 = vmatmul.mubr.f32.gmra.mrb[0].mxu0 %v798
        %v4048 = vpop.f32.mrb[0].mxu0
        %v4049 = vadd.f32 0.0, %v4048
        %v4050 = vpop.f32.mrb[0].mxu0
        %4051 = vmatprep.mubr.f32.mxu0 0.0
        %4052 = vmatmul.mubr.f32.gmra.mrb[0].mxu0 %v799
        %v4053 = vpop.f32.mrb[0].mxu0
        %v4054 = vadd.f32 0.0, %v4053
        %v4055 = vpop.f32.mrb[0].mxu0
        %4056 = vmatprep.mubr.f32.mxu0 0.0
        %4057 = vmatmul.mubr.f32.gmra.mrb[0].mxu0 %v800
        %v4058 = vpop.f32.mrb[0].mxu0
        %v4059 = vadd.f32 0.0, %v4058
        %v4060 = vpop.f32.mrb[0].mxu0
        %4061 = vmatprep.mubr.f32.mxu0 0.0
        %4062 = vmatmul.mubr.f32.gmra.mrb[0].mxu0 %v801
        %v4063 = vpop.f32.mrb[0].mxu0
        %v4064 = vadd.f32 0.0, %v4063
        %v4065 = vpop.f32.mrb[0].mxu0
        %4066 = vmatprep.mubr.f32.mxu0 0.0
        %4067 = vmatmul.mubr.f32.gmra.mrb[0].mxu0 %v802
        %v4068 = vpop.f32.mrb[0].mxu0
        %v4069 = vadd.f32 0.0, %v4068
        %v4070 = vpop.f32.mrb[0].mxu0
        %4071 = vmatprep.mubr.f32.mxu0 0.0
        %4072 = vmatmul.mubr.f32.gmra.mrb[0].mxu0 %v803
        %v4073 = vpop.f32.mrb[0].mxu0
        %v4074 = vadd.f32 0.0, %v4073
        %v4075 = vpop.f32.mrb[0].mxu0
        %4076 = vmatprep.mubr.f32.mxu0 0.0
        %4077 = vmatmul.mubr.f32.gmra.mrb[0].mxu0 %v804
        %v4078 = vpop.f32.mrb[0].mxu0
        %v4079 = vadd.f32 0.0, %v4078
        %v4080 = vpop.f32.mrb[0].mxu0
        %4081 = vmatprep.mubr.f32.mxu0 0.0
        %4082 = vmatmul.mubr.f32.gmra.mrb[0].mxu0 %v805
        %v4083 = vpop.f32.mrb[0].mxu0
        %v4084 = vadd.f32 0.0, %v4083
        %v4085 = vpop.f32.mrb[0].mxu0
        %4086 = vmatprep.mubr.f32.mxu0 0.0
        %4087 = vmatmul.mubr.f32.gmra.mrb[0].mxu0 %v806
        %v4088 = vpop.f32.mrb[0].mxu0
        %v4089 = vadd.f32 0.0, %v4088
        %v4090 = vpop.f32.mrb[0].mxu0
        %4091 = vmatprep.mubr.f32.mxu0 0.0
        %4092 = vmatmul.mubr.f32.gmra.mrb[0].mxu0 %v807
        %v4093 = vpop.f32.mrb[0].mxu0
        %v4094 = vadd.f32 0.0, %v4093
        %v4095 = vpop.f32.mrb[0].mxu0
        %4096 = vmatprep.mubr.f32.mxu0 0.0
        %4097 = vmatmul.mubr.f32.gmra.mrb[0].mxu0 %v808
        %v4098 = vpop.f32.mrb[0].mxu0
        %v4099 = vadd.f32 0.0, %v4098
        %v4100 = vpop.f32.mrb[0].mxu0
        %4101 = vmatprep.mubr.f32.mxu0 0.0
        %4102 = vmatmul.mubr.f32.gmra.mrb[0].mxu0 %v809
        %v4103 = vpop.f32.mrb[0].mxu0
        %v4104 = vadd.f32 0.0, %v4103
        %v4105 = vpop.f32.mrb[0].mxu0
        %4106 = vmatprep.mubr.f32.mxu0 0.0
        %4107 = vmatmul.mubr.f32.gmra.mrb[0].mxu0 %v810
        %v4108 = vpop.f32.mrb[0].mxu0
        %v4109 = vadd.f32 0.0, %v4108
        %v4110 = vpop.f32.mrb[0].mxu0
        %4111 = vmatprep.mubr.f32.mxu0 0.0
        %4112 = vmatmul.mubr.f32.gmra.mrb[0].mxu0 %v811
        %v4113 = vpop.f32.mrb[0].mxu0
        %v4114 = vadd.f32 0.0, %v4113
        %v4115 = vpop.f32.mrb[0].mxu0
        %4116 = vmatprep.mubr.f32.mxu0 0.0
        %4117 = vmatmul.mubr.f32.gmra.mrb[0].mxu0 %v812
        %v4118 = vpop.f32.mrb[0].mxu0
        %v4119 = vadd.f32 0.0, %v4118
        %v4120 = vpop.f32.mrb[0].mxu0
        %4121 = vmatprep.mubr.f32.mxu0 0.0
        %4122 = vmatmul.mubr.f32.gmra.mrb[0].mxu0 %v813
        %v4123 = vpop.f32.mrb[0].mxu0
        %v4124 = vadd.f32 0.0, %v4123
        %v4125 = vpop.f32.mrb[0].mxu0
        %4126 = vmatprep.mubr.f32.mxu0 0.0
        %4127 = vmatmul.mubr.f32.gmra.mrb[0].mxu0 %v814
        %v4128 = vpop.f32.mrb[0].mxu0
        %v4129 = vadd.f32 0.0, %v4128
        %v4130 = vpop.f32.mrb[0].mxu0
        %4131 = vmatprep.mubr.f32.mxu0 0.0
        %4132 = vmatmul.mubr.f32.gmra.mrb[0].mxu0 %v815
        %v4133 = vpop.f32.mrb[0].mxu0
        %v4134 = vadd.f32 0.0, %v4133
        %v4135 = vpop.f32.mrb[0].mxu0
        %4136 = vmatprep.mubr.f32.mxu0 0.0
        %4137 = vmatmul.mubr.f32.gmra.mrb[0].mxu0 %v816
        %v4138 = vpop.f32.mrb[0].mxu0
        %v4139 = vadd.f32 0.0, %v4138
        %v4140 = vpop.f32.mrb[0].mxu0
        %4141 = vmatprep.mubr.f32.mxu0 0.0
        %4142 = vmatmul.mubr.f32.gmra.mrb[0].mxu0 %v817
        %v4143 = vpop.f32.mrb[0].mxu0
        %v4144 = vadd.f32 0.0, %v4143
        %v4145 = vpop.f32.mrb[0].mxu0
        %4146 = vmatprep.mubr.f32.mxu0 0.0
        %4147 = vmatmul.mubr.f32.gmra.mrb[0].mxu0 %v818
        %v4148 = vpop.f32.mrb[0].mxu0
        %v4149 = vadd.f32 0.0, %v4148
        %v4150 = vpop.f32.mrb[0].mxu0
        %4151 = vmatprep.mubr.f32.mxu0 0.0
        %4152 = vmatmul.mubr.f32.gmra.mrb[0].mxu0 %v819
        %v4153 = vpop.f32.mrb[0].mxu0
        %v4154 = vadd.f32 0.0, %v4153
        %v4155 = vpop.f32.mrb[0].mxu0
        %4156 = vmatprep.mubr.f32.mxu0 0.0
        %4157 = vmatmul.mubr.f32.gmra.mrb[0].mxu0 %v820
        %v4158 = vpop.f32.mrb[0].mxu0
        %v4159 = vadd.f32 0.0, %v4158
        %v4160 = vpop.f32.mrb[0].mxu0
        %4161 = vmatprep.mubr.f32.mxu0 0.0
        %4162 = vmatmul.mubr.f32.gmra.mrb[0].mxu0 %v821
        %v4163 = vpop.f32.mrb[0].mxu0
        %v4164 = vadd.f32 0.0, %v4163
        %v4165 = vpop.f32.mrb[0].mxu0
        %4166 = vmatprep.mubr.f32.mxu0 0.0
        %4167 = vmatmul.mubr.f32.gmra.mrb[0].mxu0 %v822
        %v4168 = vpop.f32.mrb[0].mxu0
        %v4169 = vadd.f32 0.0, %v4168
        %v4170 = vpop.f32.mrb[0].mxu0
        %4171 = vmatprep.mubr.f32.mxu0 0.0
        %4172 = vmatmul.mubr.f32.gmra.mrb[0].mxu0 %v823
        %v4173 = vpop.f32.mrb[0].mxu0
        %v4174 = vadd.f32 0.0, %v4173
        %v4175 = vpop.f32.mrb[0].mxu0
        %4176 = vmatprep.mubr.f32.mxu0 0.0
        %4177 = vmatmul.mubr.f32.gmra.mrb[0].mxu0 %v824
        %v4178 = vpop.f32.mrb[0].mxu0
        %v4179 = vadd.f32 0.0, %v4178
        %v4180 = vpop.f32.mrb[0].mxu0
        %4181 = vmatprep.mubr.f32.mxu0 0.0
        %4182 = vmatmul.mubr.f32.gmra.mrb[0].mxu0 %v825
        %v4183 = vpop.f32.mrb[0].mxu0
        %v4184 = vadd.f32 0.0, %v4183
        %v4185 = vpop.f32.mrb[0].mxu0
        %4186 = vmatprep.mubr.f32.mxu0 0.0
        %4187 = vmatmul.mubr.f32.gmra.mrb[0].mxu0 %v826
        %v4188 = vpop.f32.mrb[0].mxu0
        %v4189 = vadd.f32 0.0, %v4188
        %v4190 = vpop.f32.mrb[0].mxu0
        %4191 = vmatprep.mubr.f32.mxu0 0.0
        %4192 = vmatmul.mubr.f32.gmra.mrb[0].mxu0 %v827
        %v4193 = vpop.f32.mrb[0].mxu0
        %v4194 = vadd.f32 0.0, %v4193
        %v4195 = vpop.f32.mrb[0].mxu0
        %4196 = vmatprep.mubr.f32.mxu0 0.0
        %4197 = vmatmul.mubr.f32.gmra.mrb[0].mxu0 %v828
        %v4198 = vpop.f32.mrb[0].mxu0
        %v4199 = vadd.f32 0.0, %v4198
        %v4200 = vpop.f32.mrb[0].mxu0
        %4201 = vmatprep.mubr.f32.mxu0 0.0
        %4202 = vmatmul.mubr.f32.gmra.mrb[0].mxu0 %v829
        %v4203 = vpop.f32.mrb[0].mxu0
        %v4204 = vadd.f32 0.0, %v4203
        %v4205 = vpop.f32.mrb[0].mxu0
        %4206 = vmatprep.mubr.f32.mxu0 0.0
        %4207 = vmatmul.mubr.f32.gmra.mrb[0].mxu0 %v830
        %v4208 = vpop.f32.mrb[0].mxu0
        %v4209 = vadd.f32 0.0, %v4208
        %v4210 = vpop.f32.mrb[0].mxu0
        %4211 = vmatprep.mubr.f32.mxu0 0.0
        %4212 = vmatmul.mubr.f32.gmra.mrb[0].mxu0 %v831
        %v4213 = vpop.f32.mrb[0].mxu0
        %v4214 = vadd.f32 0.0, %v4213
        %v4215 = vpop.f32.mrb[0].mxu0
        %4216 = vmatprep.mubr.f32.mxu0 0.0
        %4217 = vmatmul.mubr.f32.gmra.mrb[0].mxu0 %v832
        %v4218 = vpop.f32.mrb[0].mxu0
        %v4219 = vadd.f32 0.0, %v4218
        %v4220 = vpop.f32.mrb[0].mxu0
        %4221 = vmatprep.mubr.f32.mxu0 0.0
        %4222 = vmatmul.mubr.f32.gmra.mrb[0].mxu0 %v833
        %v4223 = vpop.f32.mrb[0].mxu0
        %v4224 = vadd.f32 0.0, %v4223
        %v4225 = vpop.f32.mrb[0].mxu0
        %4226 = vmatprep.mubr.f32.mxu0 0.0
        %4227 = vmatmul.mubr.f32.gmra.mrb[0].mxu0 %v834
        %v4228 = vpop.f32.mrb[0].mxu0
        %v4229 = vadd.f32 0.0, %v4228
        %v4230 = vpop.f32.mrb[0].mxu0
        %4231 = vmatprep.mubr.f32.mxu0 0.0
        %4232 = vmatmul.mubr.f32.gmra.mrb[0].mxu0 %v835
        %v4233 = vpop.f32.mrb[0].mxu0
        %v4234 = vadd.f32 0.0, %v4233
        %v4235 = vpop.f32.mrb[0].mxu0
        %4236 = vmatprep.mubr.f32.mxu0 0.0
        %4237 = vmatmul.mubr.f32.gmra.mrb[0].mxu0 %v836
        %v4238 = vpop.f32.mrb[0].mxu0
        %v4239 = vadd.f32 0.0, %v4238
        %v4240 = vpop.f32.mrb[0].mxu0
        %4241 = vmatprep.mubr.f32.mxu0 0.0
        %4242 = vmatmul.mubr.f32.gmra.mrb[0].mxu0 %v837
        %v4243 = vpop.f32.mrb[0].mxu0
        %v4244 = vadd.f32 0.0, %v4243
        %v4245 = vpop.f32.mrb[0].mxu0
        %4246 = vmatprep.mubr.f32.mxu0 0.0
        %4247 = vmatmul.mubr.f32.gmra.mrb[0].mxu0 %v838
        %v4248 = vpop.f32.mrb[0].mxu0
        %v4249 = vadd.f32 0.0, %v4248
        %v4250 = vpop.f32.mrb[0].mxu0
        %4251 = vmatprep.mubr.f32.mxu0 0.0
        %4252 = vmatmul.mubr.f32.gmra.mrb[0].mxu0 %v839
        %v4253 = vpop.f32.mrb[0].mxu0
        %v4254 = vadd.f32 0.0, %v4253
        %v4255 = vpop.f32.mrb[0].mxu0
        %4256 = vmatprep.mubr.f32.mxu0 0.0
        %4257 = vmatmul.mubr.f32.gmra.mrb[0].mxu0 %v840
        %v4258 = vpop.f32.mrb[0].mxu0
        %v4259 = vadd.f32 0.0, %v4258
        %v4260 = vpop.f32.mrb[0].mxu0
        %4261 = vmatprep.mubr.f32.mxu0 0.0
        %4262 = vmatmul.mubr.f32.gmra.mrb[0].mxu0 %v841
        %v4263 = vpop.f32.mrb[0].mxu0
        %v4264 = vadd.f32 0.0, %v4263
        %v4265 = vpop.f32.mrb[0].mxu0
        %4266 = vmatprep.mubr.f32.mxu0 0.0
        %4267 = vmatmul.mubr.f32.gmra.mrb[0].mxu0 %v842
        %v4268 = vpop.f32.mrb[0].mxu0
        %v4269 = vadd.f32 0.0, %v4268
        %v4270 = vpop.f32.mrb[0].mxu0
        %4271 = vmatprep.mubr.f32.mxu0 0.0
        %4272 = vmatmul.mubr.f32.gmra.mrb[0].mxu0 %v843
        %v4273 = vpop.f32.mrb[0].mxu0
        %v4274 = vadd.f32 0.0, %v4273
        %v4275 = vpop.f32.mrb[0].mxu0
        %4276 = vmatprep.mubr.f32.mxu0 0.0
        %4277 = vmatmul.mubr.f32.gmra.mrb[0].mxu0 %v844
        %v4278 = vpop.f32.mrb[0].mxu0
        %v4279 = vadd.f32 0.0, %v4278
        %v4280 = vpop.f32.mrb[0].mxu0
        %4281 = vmatprep.mubr.f32.mxu0 0.0
        %4282 = vmatmul.mubr.f32.gmra.mrb[0].mxu0 %v845
        %v4283 = vpop.f32.mrb[0].mxu0
        %v4284 = vadd.f32 0.0, %v4283
        %v4285 = vpop.f32.mrb[0].mxu0
        %4286 = vmatprep.mubr.f32.mxu0 0.0
        %4287 = vmatmul.mubr.f32.gmra.mrb[0].mxu0 %v846
        %v4288 = vpop.f32.mrb[0].mxu0
        %v4289 = vadd.f32 0.0, %v4288
        %v4290 = vpop.f32.mrb[0].mxu0
        %4291 = vmatprep.mubr.f32.mxu0 0.0
        %4292 = vmatmul.mubr.f32.gmra.mrb[0].mxu0 %v847
        %v4293 = vpop.f32.mrb[0].mxu0
        %v4294 = vadd.f32 0.0, %v4293
        %v4295 = vpop.f32.mrb[0].mxu0
        %4296 = vmatprep.mubr.f32.mxu0 0.0
        %4297 = vmatmul.mubr.f32.gmra.mrb[0].mxu0 %v848
        %v4298 = vpop.f32.mrb[0].mxu0
        %v4299 = vadd.f32 0.0, %v4298
        %v4300 = vpop.f32.mrb[0].mxu0
        %4301 = vmatprep.mubr.f32.mxu0 0.0
        %4302 = vmatmul.mubr.f32.gmra.mrb[0].mxu0 %v849
        %v4303 = vpop.f32.mrb[0].mxu0
        %v4304 = vadd.f32 0.0, %v4303
        %v4305 = vpop.f32.mrb[0].mxu0
        %4306 = vmatprep.mubr.f32.mxu0 0.0
        %4307 = vmatmul.mubr.f32.gmra.mrb[0].mxu0 %v850
        %v4308 = vpop.f32.mrb[0].mxu0
        %v4309 = vadd.f32 0.0, %v4308
        %v4310 = vpop.f32.mrb[0].mxu0
        %4311 = vmatprep.mubr.f32.mxu0 0.0
        %4312 = vmatmul.mubr.f32.gmra.mrb[0].mxu0 %v851
        %v4313 = vpop.f32.mrb[0].mxu0
        %v4314 = vadd.f32 0.0, %v4313
        %v4315 = vpop.f32.mrb[0].mxu0
        %4316 = vmatprep.mubr.f32.mxu0 0.0
        %4317 = vmatmul.mubr.f32.gmra.mrb[0].mxu0 %v852
        %v4318 = vpop.f32.mrb[0].mxu0
        %v4319 = vadd.f32 0.0, %v4318
        %v4320 = vpop.f32.mrb[0].mxu0
        %4321 = vmatprep.mubr.f32.mxu0 0.0
        %4322 = vmatmul.mubr.f32.gmra.mrb[0].mxu0 %v853
        %v4323 = vpop.f32.mrb[0].mxu0
        %v4324 = vadd.f32 0.0, %v4323
        %v4325 = vpop.f32.mrb[0].mxu0
        %4326 = vmatprep.mubr.f32.mxu0 0.0
        %4327 = vmatmul.mubr.f32.gmra.mrb[0].mxu0 %v854
        %v4328 = vpop.f32.mrb[0].mxu0
        %v4329 = vadd.f32 0.0, %v4328
        %v4330 = vpop.f32.mrb[0].mxu0
        %4331 = vmatprep.mubr.f32.mxu0 0.0
        %4332 = vmatmul.mubr.f32.gmra.mrb[0].mxu0 %v855
        %v4333 = vpop.f32.mrb[0].mxu0
        %v4334 = vadd.f32 0.0, %v4333
        %v4335 = vpop.f32.mrb[0].mxu0
        %4336 = vmatprep.mubr.f32.mxu0 0.0
        %4337 = vmatmul.mubr.f32.gmra.mrb[0].mxu0 %v856
        %v4338 = vpop.f32.mrb[0].mxu0
        %v4339 = vadd.f32 0.0, %v4338
        %v4340 = vpop.f32.mrb[0].mxu0
        %4341 = vmatprep.mubr.f32.mxu0 0.0
        %4342 = vmatmul.mubr.f32.gmra.mrb[0].mxu0 %v857
        %v4343 = vpop.f32.mrb[0].mxu0
        %v4344 = vadd.f32 0.0, %v4343
        %v4345 = vpop.f32.mrb[0].mxu0
        %4346 = vmatprep.mubr.f32.mxu0 0.0
        %4347 = vmatmul.mubr.f32.gmra.mrb[0].mxu0 %v858
        %v4348 = vpop.f32.mrb[0].mxu0
        %v4349 = vadd.f32 0.0, %v4348
        %v4350 = vpop.f32.mrb[0].mxu0
        %4351 = vmatprep.mubr.f32.mxu0 0.0
        %4352 = vmatmul.mubr.f32.gmra.mrb[0].mxu0 %v859
        %v4353 = vpop.f32.mrb[0].mxu0
        %v4354 = vadd.f32 0.0, %v4353
        %v4355 = vpop.f32.mrb[0].mxu0
        %4356 = vmatprep.mubr.f32.mxu0 0.0
        %4357 = vmatmul.mubr.f32.gmra.mrb[0].mxu0 %v860
        %v4358 = vpop.f32.mrb[0].mxu0
        %v4359 = vadd.f32 0.0, %v4358
        %v4360 = vpop.f32.mrb[0].mxu0
        %4361 = vmatprep.mubr.f32.mxu0 0.0
        %4362 = vmatmul.mubr.f32.gmra.mrb[0].mxu0 %v861
        %v4363 = vpop.f32.mrb[0].mxu0
        %v4364 = vadd.f32 0.0, %v4363
        %v4365 = vpop.f32.mrb[0].mxu0
        %4366 = vmatprep.mubr.f32.mxu0 0.0
        %4367 = vmatmul.mubr.f32.gmra.mrb[0].mxu0 %v862
        %v4368 = vpop.f32.mrb[0].mxu0
        %v4369 = vadd.f32 0.0, %v4368
        %v4370 = vpop.f32.mrb[0].mxu0
        %4371 = vmatprep.mubr.f32.mxu0 0.0
        %4372 = vmatmul.mubr.f32.gmra.mrb[0].mxu0 %v863
        %v4373 = vpop.f32.mrb[0].mxu0
        %v4374 = vadd.f32 0.0, %v4373
        %v4375 = vpop.f32.mrb[0].mxu0
        %4376 = vmatprep.mubr.f32.mxu0 0.0
        %4377 = vmatmul.mubr.f32.gmra.mrb[0].mxu0 %v864
        %v4378 = vpop.f32.mrb[0].mxu0
        %v4379 = vadd.f32 0.0, %v4378
        %v4380 = vpop.f32.mrb[0].mxu0
        %4381 = vmatprep.mubr.f32.mxu0 0.0
        %4382 = vmatmul.mubr.f32.gmra.mrb[0].mxu0 %v865
        %v4383 = vpop.f32.mrb[0].mxu0
        %v4384 = vadd.f32 0.0, %v4383
        %v4385 = vpop.f32.mrb[0].mxu0
        %4386 = vmatprep.mubr.f32.mxu0 0.0
        %4387 = vmatmul.mubr.f32.gmra.mrb[0].mxu0 %v866
        %v4388 = vpop.f32.mrb[0].mxu0
        %v4389 = vadd.f32 0.0, %v4388
        %v4390 = vpop.f32.mrb[0].mxu0
        %4391 = vmatprep.mubr.f32.mxu0 0.0
        %4392 = vmatmul.mubr.f32.gmra.mrb[0].mxu0 %v867
        %v4393 = vpop.f32.mrb[0].mxu0
        %v4394 = vadd.f32 0.0, %v4393
        %v4395 = vpop.f32.mrb[0].mxu0
        %4396 = vmatprep.mubr.f32.mxu0 0.0
        %4397 = vmatmul.mubr.f32.gmra.mrb[0].mxu0 %v868
        %v4398 = vpop.f32.mrb[0].mxu0
        %v4399 = vadd.f32 0.0, %v4398
        %v4400 = vpop.f32.mrb[0].mxu0
        %4401 = vmatprep.mubr.f32.mxu0 0.0
        %4402 = vmatmul.mubr.f32.gmra.mrb[0].mxu0 %v869
        %v4403 = vpop.f32.mrb[0].mxu0
        %v4404 = vadd.f32 0.0, %v4403
        %v4405 = vpop.f32.mrb[0].mxu0
        %4406 = vmatprep.mubr.f32.mxu0 0.0
        %4407 = vmatmul.mubr.f32.gmra.mrb[0].mxu0 %v870
        %v4408 = vpop.f32.mrb[0].mxu0
        %v4409 = vadd.f32 0.0, %v4408
        %v4410 = vpop.f32.mrb[0].mxu0
        %4411 = vmatprep.mubr.f32.mxu0 0.0
        %4412 = vmatmul.mubr.f32.gmra.mrb[0].mxu0 %v871
        %v4413 = vpop.f32.mrb[0].mxu0
        %v4414 = vadd.f32 0.0, %v4413
        %v4415 = vpop.f32.mrb[0].mxu0
        %4416 = vmatprep.mubr.f32.mxu0 0.0
        %4417 = vmatmul.mubr.f32.gmra.mrb[0].mxu0 %v872
        %v4418 = vpop.f32.mrb[0].mxu0
        %v4419 = vadd.f32 0.0, %v4418
        %v4420 = vpop.f32.mrb[0].mxu0
        %4421 = vmatprep.mubr.f32.mxu0 0.0
        %4422 = vmatmul.mubr.f32.gmra.mrb[0].mxu0 %v873
        %v4423 = vpop.f32.mrb[0].mxu0
        %v4424 = vadd.f32 0.0, %v4423
        %v4425 = vpop.f32.mrb[0].mxu0
        %4426 = vmatprep.mubr.f32.mxu0 0.0
        %4427 = vmatmul.mubr.f32.gmra.mrb[0].mxu0 %v874
        %v4428 = vpop.f32.mrb[0].mxu0
        %v4429 = vadd.f32 0.0, %v4428
        %v4430 = vpop.f32.mrb[0].mxu0
        %4431 = vmatprep.mubr.f32.mxu0 0.0
        %4432 = vmatmul.mubr.f32.gmra.mrb[0].mxu0 %v875
        %v4433 = vpop.f32.mrb[0].mxu0
        %v4434 = vadd.f32 0.0, %v4433
        %v4435 = vpop.f32.mrb[0].mxu0
        %4436 = vmatprep.mubr.f32.mxu0 0.0
        %4437 = vmatmul.mubr.f32.gmra.mrb[0].mxu0 %v876
        %v4438 = vpop.f32.mrb[0].mxu0
        %v4439 = vadd.f32 0.0, %v4438
        %v4440 = vpop.f32.mrb[0].mxu0
        %4441 = vmatprep.mubr.f32.mxu0 0.0
        %4442 = vmatmul.mubr.f32.gmra.mrb[0].mxu0 %v877
        %v4443 = vpop.f32.mrb[0].mxu0
        %v4444 = vadd.f32 0.0, %v4443
        %v4445 = vpop.f32.mrb[0].mxu0
        %4446 = vmatprep.mubr.f32.mxu0 0.0
        %4447 = vmatmul.mubr.f32.gmra.mrb[0].mxu0 %v878
        %v4448 = vpop.f32.mrb[0].mxu0
        %v4449 = vadd.f32 0.0, %v4448
        %v4450 = vpop.f32.mrb[0].mxu0
        %4451 = vmatprep.mubr.f32.mxu0 0.0
        %4452 = vmatmul.mubr.f32.gmra.mrb[0].mxu0 %v879
        %v4453 = vpop.f32.mrb[0].mxu0
        %v4454 = vadd.f32 0.0, %v4453
        %v4455 = vpop.f32.mrb[0].mxu0
        %4456 = vmatprep.mubr.f32.mxu0 0.0
        %4457 = vmatmul.mubr.f32.gmra.mrb[0].mxu0 %v880
        %v4458 = vpop.f32.mrb[0].mxu0
        %v4459 = vadd.f32 0.0, %v4458
        %v4460 = vpop.f32.mrb[0].mxu0
        %4461 = vmatprep.mubr.f32.mxu0 0.0
        %4462 = vmatmul.mubr.f32.gmra.mrb[0].mxu0 %v881
        %v4463 = vpop.f32.mrb[0].mxu0
        %v4464 = vadd.f32 0.0, %v4463
        %v4465 = vpop.f32.mrb[0].mxu0
        %4466 = vmatprep.mubr.f32.mxu0 0.0
        %4467 = vmatmul.mubr.f32.gmra.mrb[0].mxu0 %v882
        %v4468 = vpop.f32.mrb[0].mxu0
        %v4469 = vadd.f32 0.0, %v4468
        %v4470 = vpop.f32.mrb[0].mxu0
        %4471 = vmatprep.mubr.f32.mxu0 0.0
        %4472 = vmatmul.mubr.f32.gmra.mrb[0].mxu0 %v883
        %v4473 = vpop.f32.mrb[0].mxu0
        %v4474 = vadd.f32 0.0, %v4473
        %v4475 = vpop.f32.mrb[0].mxu0
        %4476 = vmatprep.mubr.f32.mxu0 0.0
        %4477 = vmatmul.mubr.f32.gmra.mrb[0].mxu0 %v884
        %v4478 = vpop.f32.mrb[0].mxu0
        %v4479 = vadd.f32 0.0, %v4478
        %v4480 = vpop.f32.mrb[0].mxu0
        %4481 = vmatprep.mubr.f32.mxu0 0.0
        %4482 = vmatmul.mubr.f32.gmra.mrb[0].mxu0 %v885
        %v4483 = vpop.f32.mrb[0].mxu0
        %v4484 = vadd.f32 0.0, %v4483
        %v4485 = vpop.f32.mrb[0].mxu0
        %4486 = vmatprep.mubr.f32.mxu0 0.0
        %4487 = vmatmul.mubr.f32.gmra.mrb[0].mxu0 %v886
        %v4488 = vpop.f32.mrb[0].mxu0
        %v4489 = vadd.f32 0.0, %v4488
        %v4490 = vpop.f32.mrb[0].mxu0
        %4491 = vmatprep.mubr.f32.mxu0 0.0
        %4492 = vmatmul.mubr.f32.gmra.mrb[0].mxu0 %v887
        %v4493 = vpop.f32.mrb[0].mxu0
        %v4494 = vadd.f32 0.0, %v4493
        %v4495 = vpop.f32.mrb[0].mxu0
        %4496 = vmatprep.mubr.f32.mxu0 0.0
        %4497 = vmatmul.mubr.f32.gmra.mrb[0].mxu0 %v888
        %v4498 = vpop.f32.mrb[0].mxu0
        %v4499 = vadd.f32 0.0, %v4498
        %v4500 = vpop.f32.mrb[0].mxu0
        %4501 = vmatprep.mubr.f32.mxu0 0.0
        %4502 = vmatmul.mubr.f32.gmra.mrb[0].mxu0 %v889
        %v4503 = vpop.f32.mrb[0].mxu0
        %v4504 = vadd.f32 0.0, %v4503
        %v4505 = vpop.f32.mrb[0].mxu0
        %4506 = vmatprep.mubr.f32.mxu0 0.0
        %4507 = vmatmul.mubr.f32.gmra.mrb[0].mxu0 %v890
        %v4508 = vpop.f32.mrb[0].mxu0
        %v4509 = vadd.f32 0.0, %v4508
        %v4510 = vpop.f32.mrb[0].mxu0
        %4511 = vmatprep.mubr.f32.mxu0 0.0
        %4512 = vmatmul.mubr.f32.gmra.mrb[0].mxu0 %v891
        %v4513 = vpop.f32.mrb[0].mxu0
        %v4514 = vadd.f32 0.0, %v4513
        %v4515 = vpop.f32.mrb[0].mxu0
        %4516 = vmatprep.mubr.f32.mxu0 0.0
        %4517 = vmatmul.mubr.f32.gmra.mrb[0].mxu0 %v892
        %v4518 = vpop.f32.mrb[0].mxu0
        %v4519 = vadd.f32 0.0, %v4518
        %v4520 = vpop.f32.mrb[0].mxu0
        %4521 = vmatprep.mubr.f32.mxu0 0.0
        %4522 = vmatmul.mubr.f32.gmra.mrb[0].mxu0 %v893
        %v4523 = vpop.f32.mrb[0].mxu0
        %v4524 = vadd.f32 0.0, %v4523
        %v4525 = vpop.f32.mrb[0].mxu0
        %4526 = vmatprep.mubr.f32.mxu0 0.0
        %4527 = vmatmul.mubr.f32.gmra.mrb[0].mxu0 %v894
        %v4528 = vpop.f32.mrb[0].mxu0
        %v4529 = vadd.f32 0.0, %v4528
        %v4530 = vpop.f32.mrb[0].mxu0
        %4531 = vmatprep.mubr.f32.mxu0 0.0
        %4532 = vmatmul.mubr.f32.gmra.mrb[0].mxu0 %v895
        %v4533 = vpop.f32.mrb[0].mxu0
        %v4534 = vadd.f32 0.0, %v4533
        %v4535 = vpop.f32.mrb[0].mxu0
        %4536 = vmatprep.mubr.f32.mxu0 0.0
        %4537 = vmatmul.mubr.f32.gmra.mrb[0].mxu0 %v896
        %v4538 = vpop.f32.mrb[0].mxu0
        %v4539 = vadd.f32 0.0, %v4538
        %v4540 = vpop.f32.mrb[0].mxu0
        %4541 = vmatprep.mubr.f32.mxu0 0.0
        %4542 = vmatmul.mubr.f32.gmra.mrb[0].mxu0 %v897
        %v4543 = vpop.f32.mrb[0].mxu0
        %v4544 = vadd.f32 0.0, %v4543
        %v4545 = vpop.f32.mrb[0].mxu0
        %4546 = vmatprep.mubr.f32.mxu0 0.0
        %4547 = vmatmul.mubr.f32.gmra.mrb[0].mxu0 %v898
        %v4548 = vpop.f32.mrb[0].mxu0
        %v4549 = vadd.f32 0.0, %v4548
        %v4550 = vpop.f32.mrb[0].mxu0
        %4551 = vmatprep.mubr.f32.mxu0 0.0
        %4552 = vmatmul.mubr.f32.gmra.mrb[0].mxu0 %v899
        %v4553 = vpop.f32.mrb[0].mxu0
        %v4554 = vadd.f32 0.0, %v4553
        %v4555 = vpop.f32.mrb[0].mxu0
        %4556 = vmatprep.mubr.f32.mxu0 0.0
        %4557 = vmatmul.mubr.f32.gmra.mrb[0].mxu0 %v900
        %v4558 = vpop.f32.mrb[0].mxu0
        %v4559 = vadd.f32 0.0, %v4558
        %v4560 = vpop.f32.mrb[0].mxu0
        %4561 = vmatprep.mubr.f32.mxu0 0.0
        %4562 = vmatmul.mubr.f32.gmra.mrb[0].mxu0 %v901
        %v4563 = vpop.f32.mrb[0].mxu0
        %v4564 = vadd.f32 0.0, %v4563
        %v4565 = vpop.f32.mrb[0].mxu0
        %4566 = vmatprep.mubr.f32.mxu0 0.0
        %4567 = vmatmul.mubr.f32.gmra.mrb[0].mxu0 %v902
        %v4568 = vpop.f32.mrb[0].mxu0
        %v4569 = vadd.f32 0.0, %v4568
        %v4570 = vpop.f32.mrb[0].mxu0
        %4571 = vmatprep.mubr.f32.mxu0 0.0
        %4572 = vmatmul.mubr.f32.gmra.mrb[0].mxu0 %v903
        %v4573 = vpop.f32.mrb[0].mxu0
        %v4574 = vadd.f32 0.0, %v4573
        %v4575 = vpop.f32.mrb[0].mxu0
        %4576 = vmatprep.mubr.f32.mxu0 0.0
        %4577 = vmatmul.mubr.f32.gmra.mrb[0].mxu0 %v904
        %v4578 = vpop.f32.mrb[0].mxu0
        %v4579 = vadd.f32 0.0, %v4578
        %v4580 = vpop.f32.mrb[0].mxu0
        %4581 = vmatprep.mubr.f32.mxu0 0.0
        %4582 = vmatmul.mubr.f32.gmra.mrb[0].mxu0 %v905
        %v4583 = vpop.f32.mrb[0].mxu0
        %v4584 = vadd.f32 0.0, %v4583
        %v4585 = vpop.f32.mrb[0].mxu0
        %4586 = vmatprep.mubr.f32.mxu0 0.0
        %4587 = vmatmul.mubr.f32.gmra.mrb[0].mxu0 %v906
        %v4588 = vpop.f32.mrb[0].mxu0
        %v4589 = vadd.f32 0.0, %v4588
        %v4590 = vpop.f32.mrb[0].mxu0
        %4591 = vmatprep.mubr.f32.mxu0 0.0
        %4592 = vmatmul.mubr.f32.gmra.mrb[0].mxu0 %v907
        %v4593 = vpop.f32.mrb[0].mxu0
        %v4594 = vadd.f32 0.0, %v4593
        %v4595 = vpop.f32.mrb[0].mxu0
        %4596 = vmatprep.mubr.f32.mxu0 0.0
        %4597 = vmatmul.mubr.f32.gmra.mrb[0].mxu0 %v908
        %v4598 = vpop.f32.mrb[0].mxu0
        %v4599 = vadd.f32 0.0, %v4598
        %v4600 = vpop.f32.mrb[0].mxu0
        %4601 = vmatprep.mubr.f32.mxu0 0.0
        %4602 = vmatmul.mubr.f32.gmra.mrb[0].mxu0 %v909
        %v4603 = vpop.f32.mrb[0].mxu0
        %v4604 = vadd.f32 0.0, %v4603
        %v4605 = vpop.f32.mrb[0].mxu0
        %4606 = vmatprep.mubr.f32.mxu0 0.0
        %4607 = vmatmul.mubr.f32.gmra.mrb[0].mxu0 %v910
        %v4608 = vpop.f32.mrb[0].mxu0
        %v4609 = vadd.f32 0.0, %v4608
        %v4610 = vpop.f32.mrb[0].mxu0
        %4611 = vmatprep.mubr.f32.mxu0 0.0
        %4612 = vmatmul.mubr.f32.gmra.mrb[0].mxu0 %v911
        %v4613 = vpop.f32.mrb[0].mxu0
        %v4614 = vadd.f32 0.0, %v4613
        %v4615 = vpop.f32.mrb[0].mxu0
        %4616 = vmatprep.mubr.f32.mxu0 0.0
        %4617 = vmatmul.mubr.f32.gmra.mrb[0].mxu0 %v912
        %v4618 = vpop.f32.mrb[0].mxu0
        %v4619 = vadd.f32 0.0, %v4618
        %v4620 = vpop.f32.mrb[0].mxu0
        %4621 = vmatprep.mubr.f32.mxu0 0.0
        %4622 = vmatmul.mubr.f32.gmra.mrb[0].mxu0 %v913
        %v4623 = vpop.f32.mrb[0].mxu0
        %v4624 = vadd.f32 0.0, %v4623
        %v4625 = vpop.f32.mrb[0].mxu0
        %4626 = vmatprep.mubr.f32.mxu0 0.0
        %4627 = vmatmul.mubr.f32.gmra.mrb[0].mxu0 %v914
        %v4628 = vpop.f32.mrb[0].mxu0
        %v4629 = vadd.f32 0.0, %v4628
        %v4630 = vpop.f32.mrb[0].mxu0
        %4631 = vmatprep.mubr.f32.mxu0 0.0
        %4632 = vmatmul.mubr.f32.gmra.mrb[0].mxu0 %v915
        %v4633 = vpop.f32.mrb[0].mxu0
        %v4634 = vadd.f32 0.0, %v4633
        %v4635 = vpop.f32.mrb[0].mxu0
        %4636 = vmatprep.mubr.f32.mxu0 0.0
        %4637 = vmatmul.mubr.f32.gmra.mrb[0].mxu0 %v916
        %v4638 = vpop.f32.mrb[0].mxu0
        %v4639 = vadd.f32 0.0, %v4638
        %v4640 = vpop.f32.mrb[0].mxu0
        %4641 = vmatprep.mubr.f32.mxu0 0.0
        %4642 = vmatmul.mubr.f32.gmra.mrb[0].mxu0 %v917
        %v4643 = vpop.f32.mrb[0].mxu0
        %v4644 = vadd.f32 0.0, %v4643
        %v4645 = vpop.f32.mrb[0].mxu0
        %4646 = vmatprep.mubr.f32.mxu0 0.0
        %4647 = vmatmul.mubr.f32.gmra.mrb[0].mxu0 %v918
        %v4648 = vpop.f32.mrb[0].mxu0
        %v4649 = vadd.f32 0.0, %v4648
        %v4650 = vpop.f32.mrb[0].mxu0
        %4651 = vmatprep.mubr.f32.mxu0 0.0
        %4652 = vmatmul.mubr.f32.gmra.mrb[0].mxu0 %v919
        %v4653 = vpop.f32.mrb[0].mxu0
        %v4654 = vadd.f32 0.0, %v4653
        %v4655 = vpop.f32.mrb[0].mxu0
        %4656 = vmatprep.mubr.f32.mxu0 0.0
        %4657 = vmatmul.mubr.f32.gmra.mrb[0].mxu0 %v920
        %v4658 = vpop.f32.mrb[0].mxu0
        %v4659 = vadd.f32 0.0, %v4658
        %v4660 = vpop.f32.mrb[0].mxu0
        %4661 = vmatprep.mubr.f32.mxu0 0.0
        %4662 = vmatmul.mubr.f32.gmra.mrb[0].mxu0 %v921
        %v4663 = vpop.f32.mrb[0].mxu0
        %v4664 = vadd.f32 0.0, %v4663
        %v4665 = vpop.f32.mrb[0].mxu0
        %4666 = vmatprep.mubr.f32.mxu0 0.0
        %4667 = vmatmul.mubr.f32.gmra.mrb[0].mxu0 %v922
        %v4668 = vpop.f32.mrb[0].mxu0
        %v4669 = vadd.f32 0.0, %v4668
        %v4670 = vpop.f32.mrb[0].mxu0
        %4671 = vmatprep.mubr.f32.mxu0 0.0
        %4672 = vmatmul.mubr.f32.gmra.mrb[0].mxu0 %v923
        %v4673 = vpop.f32.mrb[0].mxu0
        %v4674 = vadd.f32 0.0, %v4673
        %v4675 = vpop.f32.mrb[0].mxu0
        %4676 = vmatprep.mubr.f32.mxu0 0.0
        %4677 = vmatmul.mubr.f32.gmra.mrb[0].mxu0 %v924
        %v4678 = vpop.f32.mrb[0].mxu0
        %v4679 = vadd.f32 0.0, %v4678
        %v4680 = vpop.f32.mrb[0].mxu0
        %4681 = vmatprep.mubr.f32.mxu0 0.0
        %4682 = vmatmul.mubr.f32.gmra.mrb[0].mxu0 %v925
        %v4683 = vpop.f32.mrb[0].mxu0
        %v4684 = vadd.f32 0.0, %v4683
        %v4685 = vpop.f32.mrb[0].mxu0
        %4686 = vmatprep.mubr.f32.mxu0 0.0
        %4687 = vmatmul.mubr.f32.gmra.mrb[0].mxu0 %v926
        %v4688 = vpop.f32.mrb[0].mxu0
        %v4689 = vadd.f32 0.0, %v4688
        %v4690 = vpop.f32.mrb[0].mxu0
        %4691 = vmatprep.mubr.f32.mxu0 0.0
        %4692 = vmatmul.mubr.f32.gmra.mrb[0].mxu0 %v927
        %v4693 = vpop.f32.mrb[0].mxu0
        %v4694 = vadd.f32 0.0, %v4693
        %v4695 = vpop.f32.mrb[0].mxu0
        %4696 = vmatprep.mubr.f32.mxu0 0.0
        %4697 = vmatmul.mubr.f32.gmra.mrb[0].mxu0 %v928
        %v4698 = vpop.f32.mrb[0].mxu0
        %v4699 = vadd.f32 0.0, %v4698
        %v4700 = vpop.f32.mrb[0].mxu0
        %4701 = vmatprep.mubr.f32.mxu0 0.0
        %4702 = vmatmul.mubr.f32.gmra.mrb[0].mxu0 %v929
        %v4703 = vpop.f32.mrb[0].mxu0
        %v4704 = vadd.f32 0.0, %v4703
        %v4705 = vpop.f32.mrb[0].mxu0
        %4706 = vmatprep.mubr.f32.mxu0 0.0
        %4707 = vmatmul.mubr.f32.gmra.mrb[0].mxu0 %v930
        %v4708 = vpop.f32.mrb[0].mxu0
        %v4709 = vadd.f32 0.0, %v4708
        %v4710 = vpop.f32.mrb[0].mxu0
        %4711 = vmatprep.mubr.f32.mxu0 0.0
        %4712 = vmatmul.mubr.f32.gmra.mrb[0].mxu0 %v931
        %v4713 = vpop.f32.mrb[0].mxu0
        %v4714 = vadd.f32 0.0, %v4713
        %v4715 = vpop.f32.mrb[0].mxu0
        %4716 = vmatprep.mubr.f32.mxu0 0.0
        %4717 = vmatmul.mubr.f32.gmra.mrb[0].mxu0 %v932
        %v4718 = vpop.f32.mrb[0].mxu0
        %v4719 = vadd.f32 0.0, %v4718
        %v4720 = vpop.f32.mrb[0].mxu0
        %4721 = vmatprep.mubr.f32.mxu0 0.0
        %4722 = vmatmul.mubr.f32.gmra.mrb[0].mxu0 %v933
        %v4723 = vpop.f32.mrb[0].mxu0
        %v4724 = vadd.f32 0.0, %v4723
        %v4725 = vpop.f32.mrb[0].mxu0
        %4726 = vmatprep.mubr.f32.mxu0 0.0
        %4727 = vmatmul.mubr.f32.gmra.mrb[0].mxu0 %v934
        %v4728 = vpop.f32.mrb[0].mxu0
        %v4729 = vadd.f32 0.0, %v4728
        %v4730 = vpop.f32.mrb[0].mxu0
        %4731 = vmatprep.mubr.f32.mxu0 0.0
        %4732 = vmatmul.mubr.f32.gmra.mrb[0].mxu0 %v935
        %v4733 = vpop.f32.mrb[0].mxu0
        %v4734 = vadd.f32 0.0, %v4733
        %v4735 = vpop.f32.mrb[0].mxu0
        %4736 = vmatprep.mubr.f32.mxu0 0.0
        %4737 = vmatmul.mubr.f32.gmra.mrb[0].mxu0 %v936
        %v4738 = vpop.f32.mrb[0].mxu0
        %v4739 = vadd.f32 0.0, %v4738
        %v4740 = vpop.f32.mrb[0].mxu0
        %4741 = vmatprep.mubr.f32.mxu0 0.0
        %4742 = vmatmul.mubr.f32.gmra.mrb[0].mxu0 %v937
        %v4743 = vpop.f32.mrb[0].mxu0
        %v4744 = vadd.f32 0.0, %v4743
        %v4745 = vpop.f32.mrb[0].mxu0
        %4746 = vmatprep.mubr.f32.mxu0 0.0
        %4747 = vmatmul.mubr.f32.gmra.mrb[0].mxu0 %v938
        %v4748 = vpop.f32.mrb[0].mxu0
        %v4749 = vadd.f32 0.0, %v4748
        %v4750 = vpop.f32.mrb[0].mxu0
        %4751 = vmatprep.mubr.f32.mxu0 0.0
        %4752 = vmatmul.mubr.f32.gmra.mrb[0].mxu0 %v939
        %v4753 = vpop.f32.mrb[0].mxu0
        %v4754 = vadd.f32 0.0, %v4753
        %v4755 = vpop.f32.mrb[0].mxu0
        %4756 = vmatprep.mubr.f32.mxu0 0.0
        %4757 = vmatmul.mubr.f32.gmra.mrb[0].mxu0 %v940
        %v4758 = vpop.f32.mrb[0].mxu0
        %v4759 = vadd.f32 0.0, %v4758
        %v4760 = vpop.f32.mrb[0].mxu0
        %4761 = vmatprep.mubr.f32.mxu0 0.0
        %4762 = vmatmul.mubr.f32.gmra.mrb[0].mxu0 %v941
        %v4763 = vpop.f32.mrb[0].mxu0
        %v4764 = vadd.f32 0.0, %v4763
        %v4765 = vpop.f32.mrb[0].mxu0
        %4766 = vmatprep.mubr.f32.mxu0 0.0
        %4767 = vmatmul.mubr.f32.gmra.mrb[0].mxu0 %v942
        %v4768 = vpop.f32.mrb[0].mxu0
        %v4769 = vadd.f32 0.0, %v4768
        %v4770 = vpop.f32.mrb[0].mxu0
        %4771 = vmatprep.mubr.f32.mxu0 0.0
        %4772 = vmatmul.mubr.f32.gmra.mrb[0].mxu0 %v943
        %v4773 = vpop.f32.mrb[0].mxu0
        %v4774 = vadd.f32 0.0, %v4773
        %v4775 = vpop.f32.mrb[0].mxu0
        %4776 = vmatprep.mubr.f32.mxu0 0.0
        %4777 = vmatmul.mubr.f32.gmra.mrb[0].mxu0 %v944
        %v4778 = vpop.f32.mrb[0].mxu0
        %v4779 = vadd.f32 0.0, %v4778
        %v4780 = vpop.f32.mrb[0].mxu0
        %4781 = vmatprep.mubr.f32.mxu0 0.0
        %4782 = vmatmul.mubr.f32.gmra.mrb[0].mxu0 %v945
        %v4783 = vpop.f32.mrb[0].mxu0
        %v4784 = vadd.f32 0.0, %v4783
        %v4785 = vpop.f32.mrb[0].mxu0
        %4786 = vmatprep.mubr.f32.mxu0 0.0
        %4787 = vmatmul.mubr.f32.gmra.mrb[0].mxu0 %v946
        %v4788 = vpop.f32.mrb[0].mxu0
        %v4789 = vadd.f32 0.0, %v4788
        %v4790 = vpop.f32.mrb[0].mxu0
        %4791 = vmatprep.mubr.f32.mxu0 0.0
        %4792 = vmatmul.mubr.f32.gmra.mrb[0].mxu0 %v947
        %v4793 = vpop.f32.mrb[0].mxu0
        %v4794 = vadd.f32 0.0, %v4793
        %v4795 = vpop.f32.mrb[0].mxu0
        %4796 = vmatprep.mubr.f32.mxu0 0.0
        %4797 = vmatmul.mubr.f32.gmra.mrb[0].mxu0 %v948
        %v4798 = vpop.f32.mrb[0].mxu0
        %v4799 = vadd.f32 0.0, %v4798
        %v4800 = vpop.f32.mrb[0].mxu0
        %4801 = vmatprep.mubr.f32.mxu0 0.0
        %4802 = vmatmul.mubr.f32.gmra.mrb[0].mxu0 %v949
        %v4803 = vpop.f32.mrb[0].mxu0
        %v4804 = vadd.f32 0.0, %v4803
        %v4805 = vpop.f32.mrb[0].mxu0
        %4806 = vmatprep.mubr.f32.mxu0 0.0
        %4807 = vmatmul.mubr.f32.gmra.mrb[0].mxu0 %v950
        %v4808 = vpop.f32.mrb[0].mxu0
        %v4809 = vadd.f32 0.0, %v4808
        %v4810 = vpop.f32.mrb[0].mxu0
        %4811 = vmatprep.mubr.f32.mxu0 0.0
        %4812 = vmatmul.mubr.f32.gmra.mrb[0].mxu0 %v951
        %v4813 = vpop.f32.mrb[0].mxu0
        %v4814 = vadd.f32 0.0, %v4813
        %v4815 = vpop.f32.mrb[0].mxu0
        %4816 = vmatprep.mubr.f32.mxu0 0.0
        %4817 = vmatmul.mubr.f32.gmra.mrb[0].mxu0 %v952
        %v4818 = vpop.f32.mrb[0].mxu0
        %v4819 = vadd.f32 0.0, %v4818
        %v4820 = vpop.f32.mrb[0].mxu0
        %4821 = vmatprep.mubr.f32.mxu0 0.0
        %4822 = vmatmul.mubr.f32.gmra.mrb[0].mxu0 %v953
        %v4823 = vpop.f32.mrb[0].mxu0
        %v4824 = vadd.f32 0.0, %v4823
        %v4825 = vpop.f32.mrb[0].mxu0
        %4826 = vmatprep.mubr.f32.mxu0 0.0
        %4827 = vmatmul.mubr.f32.gmra.mrb[0].mxu0 %v954
        %v4828 = vpop.f32.mrb[0].mxu0
        %v4829 = vadd.f32 0.0, %v4828
        %v4830 = vpop.f32.mrb[0].mxu0
        %4831 = vmatprep.mubr.f32.mxu0 0.0
        %4832 = vmatmul.mubr.f32.gmra.mrb[0].mxu0 %v955
        %v4833 = vpop.f32.mrb[0].mxu0
        %v4834 = vadd.f32 0.0, %v4833
        %v4835 = vpop.f32.mrb[0].mxu0
        %4836 = vmatprep.mubr.f32.mxu0 0.0
        %4837 = vmatmul.mubr.f32.gmra.mrb[0].mxu0 %v956
        %v4838 = vpop.f32.mrb[0].mxu0
        %v4839 = vadd.f32 0.0, %v4838
        %v4840 = vpop.f32.mrb[0].mxu0
        %4841 = vmatprep.mubr.f32.mxu0 0.0
        %4842 = vmatmul.mubr.f32.gmra.mrb[0].mxu0 %v957
        %v4843 = vpop.f32.mrb[0].mxu0
        %v4844 = vadd.f32 0.0, %v4843
        %v4845 = vpop.f32.mrb[0].mxu0
        %4846 = vmatprep.mubr.f32.mxu0 0.0
        %4847 = vmatmul.mubr.f32.gmra.mrb[0].mxu0 %v958
        %v4848 = vpop.f32.mrb[0].mxu0
        %v4849 = vadd.f32 0.0, %v4848
        %v4850 = vpop.f32.mrb[0].mxu0
        %4851 = vmatprep.mubr.f32.mxu0 0.0
        %4852 = vmatmul.mubr.f32.gmra.mrb[0].mxu0 %v959
        %v4853 = vpop.f32.mrb[0].mxu0
        %v4854 = vadd.f32 0.0, %v4853
        %v4855 = vpop.f32.mrb[0].mxu0
        %4856 = vmatprep.mubr.f32.mxu0 0.0
        %4857 = vmatmul.mubr.f32.gmra.mrb[0].mxu0 %v960
        %v4858 = vpop.f32.mrb[0].mxu0
        %v4859 = vadd.f32 0.0, %v4858
        %v4860 = vpop.f32.mrb[0].mxu0
        %4861 = vmatprep.mubr.f32.mxu0 0.0
        %4862 = vmatmul.mubr.f32.gmra.mrb[0].mxu0 %v961
        %v4863 = vpop.f32.mrb[0].mxu0
        %v4864 = vadd.f32 0.0, %v4863
        %v4865 = vpop.f32.mrb[0].mxu0
        %4866 = vmatprep.mubr.f32.mxu0 0.0
        %4867 = vmatmul.mubr.f32.gmra.mrb[0].mxu0 %v962
        %v4868 = vpop.f32.mrb[0].mxu0
        %v4869 = vadd.f32 0.0, %v4868
        %v4870 = vpop.f32.mrb[0].mxu0
        %4871 = vmatprep.mubr.f32.mxu0 0.0
        %4872 = vmatmul.mubr.f32.gmra.mrb[0].mxu0 %v963
        %v4873 = vpop.f32.mrb[0].mxu0
        %v4874 = vadd.f32 0.0, %v4873
        %v4875 = vpop.f32.mrb[0].mxu0
        %4876 = vmatprep.mubr.f32.mxu0 0.0
        %4877 = vmatmul.mubr.f32.gmra.mrb[0].mxu0 %v964
        %v4878 = vpop.f32.mrb[0].mxu0
        %v4879 = vadd.f32 0.0, %v4878
        %v4880 = vpop.f32.mrb[0].mxu0
        %4881 = vmatprep.mubr.f32.mxu0 0.0
        %4882 = vmatmul.mubr.f32.gmra.mrb[0].mxu0 %v965
        %v4883 = vpop.f32.mrb[0].mxu0
        %v4884 = vadd.f32 0.0, %v4883
        %v4885 = vpop.f32.mrb[0].mxu0
        %4886 = vmatprep.mubr.f32.mxu0 0.0
        %4887 = vmatmul.mubr.f32.gmra.mrb[0].mxu0 %v966
        %v4888 = vpop.f32.mrb[0].mxu0
        %v4889 = vadd.f32 0.0, %v4888
        %v4890 = vpop.f32.mrb[0].mxu0
        %4891 = vmatprep.mubr.f32.mxu0 0.0
        %4892 = vmatmul.mubr.f32.gmra.mrb[0].mxu0 %v967
        %v4893 = vpop.f32.mrb[0].mxu0
        %v4894 = vadd.f32 0.0, %v4893
        %v4895 = vpop.f32.mrb[0].mxu0
        %4896 = vmatprep.mubr.f32.mxu0 0.0
        %4897 = vmatmul.mubr.f32.gmra.mrb[0].mxu0 %v968
        %v4898 = vpop.f32.mrb[0].mxu0
        %v4899 = vadd.f32 0.0, %v4898
        %v4900 = vpop.f32.mrb[0].mxu0
        %4901 = vmatprep.mubr.f32.mxu0 0.0
        %4902 = vmatmul.mubr.f32.gmra.mrb[0].mxu0 %v969
        %v4903 = vpop.f32.mrb[0].mxu0
        %v4904 = vadd.f32 0.0, %v4903
        %v4905 = vpop.f32.mrb[0].mxu0
        %4906 = vmatprep.mubr.f32.mxu0 0.0
        %4907 = vmatmul.mubr.f32.gmra.mrb[0].mxu0 %v970
        %v4908 = vpop.f32.mrb[0].mxu0
        %v4909 = vadd.f32 0.0, %v4908
        %v4910 = vpop.f32.mrb[0].mxu0
        %4911 = vmatprep.mubr.f32.mxu0 0.0
        %4912 = vmatmul.mubr.f32.gmra.mrb[0].mxu0 %v971
        %v4913 = vpop.f32.mrb[0].mxu0
        %v4914 = vadd.f32 0.0, %v4913
        %v4915 = vpop.f32.mrb[0].mxu0
        %4916 = vmatprep.mubr.f32.mxu0 0.0
        %4917 = vmatmul.mubr.f32.gmra.mrb[0].mxu0 %v972
        %v4918 = vpop.f32.mrb[0].mxu0
        %v4919 = vadd.f32 0.0, %v4918
        %v4920 = vpop.f32.mrb[0].mxu0
        %4921 = vmatprep.mubr.f32.mxu0 0.0
        %4922 = vmatmul.mubr.f32.gmra.mrb[0].mxu0 %v973
        %v4923 = vpop.f32.mrb[0].mxu0
        %v4924 = vadd.f32 0.0, %v4923
        %v4925 = vpop.f32.mrb[0].mxu0
        %4926 = vmatprep.mubr.f32.mxu0 0.0
        %4927 = vmatmul.mubr.f32.gmra.mrb[0].mxu0 %v974
        %v4928 = vpop.f32.mrb[0].mxu0
        %v4929 = vadd.f32 0.0, %v4928
        %v4930 = vpop.f32.mrb[0].mxu0
        %4931 = vmatprep.mubr.f32.mxu0 0.0
        %4932 = vmatmul.mubr.f32.gmra.mrb[0].mxu0 %v975
        %v4933 = vpop.f32.mrb[0].mxu0
        %v4934 = vadd.f32 0.0, %v4933
        %v4935 = vpop.f32.mrb[0].mxu0
        %4936 = vmatprep.mubr.f32.mxu0 0.0
        %4937 = vmatmul.mubr.f32.gmra.mrb[0].mxu0 %v976
        %v4938 = vpop.f32.mrb[0].mxu0
        %v4939 = vadd.f32 0.0, %v4938
        %v4940 = vpop.f32.mrb[0].mxu0
        %4941 = vmatprep.mubr.f32.mxu0 0.0
        %4942 = vmatmul.mubr.f32.gmra.mrb[0].mxu0 %v977
        %v4943 = vpop.f32.mrb[0].mxu0
        %v4944 = vadd.f32 0.0, %v4943
        %v4945 = vpop.f32.mrb[0].mxu0
        %4946 = vmatprep.mubr.f32.mxu0 0.0
        %4947 = vmatmul.mubr.f32.gmra.mrb[0].mxu0 %v978
        %v4948 = vpop.f32.mrb[0].mxu0
        %v4949 = vadd.f32 0.0, %v4948
        %v4950 = vpop.f32.mrb[0].mxu0
        %4951 = vmatprep.mubr.f32.mxu0 0.0
        %4952 = vmatmul.mubr.f32.gmra.mrb[0].mxu0 %v979
        %v4953 = vpop.f32.mrb[0].mxu0
        %v4954 = vadd.f32 0.0, %v4953
        %v4955 = vpop.f32.mrb[0].mxu0
        %4956 = vmatprep.mubr.f32.mxu0 0.0
        %4957 = vmatmul.mubr.f32.gmra.mrb[0].mxu0 %v980
        %v4958 = vpop.f32.mrb[0].mxu0
        %v4959 = vadd.f32 0.0, %v4958
        %v4960 = vpop.f32.mrb[0].mxu0
        %4961 = vmatprep.mubr.f32.mxu0 0.0
        %4962 = vmatmul.mubr.f32.gmra.mrb[0].mxu0 %v981
        %v4963 = vpop.f32.mrb[0].mxu0
        %v4964 = vadd.f32 0.0, %v4963
        %v4965 = vpop.f32.mrb[0].mxu0
        %4966 = vmatprep.mubr.f32.mxu0 0.0
        %4967 = vmatmul.mubr.f32.gmra.mrb[0].mxu0 %v982
        %v4968 = vpop.f32.mrb[0].mxu0
        %v4969 = vadd.f32 0.0, %v4968
        %v4970 = vpop.f32.mrb[0].mxu0
        %4971 = vmatprep.mubr.f32.mxu0 0.0
        %4972 = vmatmul.mubr.f32.gmra.mrb[0].mxu0 %v983
        %v4973 = vpop.f32.mrb[0].mxu0
        %v4974 = vadd.f32 0.0, %v4973
        %v4975 = vpop.f32.mrb[0].mxu0
        %4976 = vmatprep.mubr.f32.mxu0 0.0
        %4977 = vmatmul.mubr.f32.gmra.mrb[0].mxu0 %v984
        %v4978 = vpop.f32.mrb[0].mxu0
        %v4979 = vadd.f32 0.0, %v4978
        %v4980 = vpop.f32.mrb[0].mxu0
        %4981 = vmatprep.mubr.f32.mxu0 0.0
        %4982 = vmatmul.mubr.f32.gmra.mrb[0].mxu0 %v985
        %v4983 = vpop.f32.mrb[0].mxu0
        %v4984 = vadd.f32 0.0, %v4983
        %v4985 = vpop.f32.mrb[0].mxu0
        %4986 = vdwg.mxu0
        %4987 = vxpose.xlu0.b32.start [1/16] %v1069, 128
        %4988 = vxpose.xlu0.b32.cont [2/16] %v1074, 128
        %4989 = vxpose.xlu0.b32.cont [3/16] %v1079, 128
        %4990 = vxpose.xlu0.b32.cont [4/16] %v1084, 128
        %4991 = vxpose.xlu0.b32.cont [5/16] %v1089, 128
        %4992 = vxpose.xlu0.b32.cont [6/16] %v1094, 128
        %4993 = vxpose.xlu0.b32.cont [7/16] %v1099, 128
        %4994 = vxpose.xlu0.b32.cont [8/16] %v1104, 128
        %4995 = vxpose.xlu0.b32.cont [9/16] %v1109, 128
        %4996 = vxpose.xlu0.b32.cont [10/16] %v1114, 128
        %4997 = vxpose.xlu0.b32.cont [11/16] %v1119, 128
        %4998 = vxpose.xlu0.b32.cont [12/16] %v1124, 128
        %4999 = vxpose.xlu0.b32.cont [13/16] %v1129, 128
        %5000 = vxpose.xlu0.b32.cont [14/16] %v1134, 128
        %5001 = vxpose.xlu0.b32.cont [15/16] %v1139, 128
        %5002 = vxpose.xlu0.b32.end [16/16] %v1144, 128
        %v5003 = vpop.trf.xlu0
        %v5004 = vpop.trf.xlu0
        %v5005 = vpop.trf.xlu0
        %v5006 = vpop.trf.xlu0
        %v5007 = vpop.trf.xlu0
        %v5008 = vpop.trf.xlu0
        %v5009 = vpop.trf.xlu0
        %v5010 = vpop.trf.xlu0
        %v5011 = vpop.trf.xlu0
        %v5012 = vpop.trf.xlu0
        %v5013 = vpop.trf.xlu0
        %v5014 = vpop.trf.xlu0
        %v5015 = vpop.trf.xlu0
        %v5016 = vpop.trf.xlu0
        %v5017 = vpop.trf.xlu0
        %v5018 = vpop.trf.xlu0
        %5019 = vxpose.xlu0.b32.start [1/16] %v1149, 128
        %5020 = vxpose.xlu0.b32.cont [2/16] %v1154, 128
        %5021 = vxpose.xlu0.b32.cont [3/16] %v1159, 128
        %5022 = vxpose.xlu0.b32.cont [4/16] %v1164, 128
        %5023 = vxpose.xlu0.b32.cont [5/16] %v1169, 128
        %5024 = vxpose.xlu0.b32.cont [6/16] %v1174, 128
        %5025 = vxpose.xlu0.b32.cont [7/16] %v1179, 128
        %5026 = vxpose.xlu0.b32.cont [8/16] %v1184, 128
        %5027 = vxpose.xlu0.b32.cont [9/16] %v1189, 128
        %5028 = vxpose.xlu0.b32.cont [10/16] %v1194, 128
        %5029 = vxpose.xlu0.b32.cont [11/16] %v1199, 128
        %5030 = vxpose.xlu0.b32.cont [12/16] %v1204, 128
        %5031 = vxpose.xlu0.b32.cont [13/16] %v1209, 128
        %5032 = vxpose.xlu0.b32.cont [14/16] %v1214, 128
        %5033 = vxpose.xlu0.b32.cont [15/16] %v1219, 128
        %5034 = vxpose.xlu0.b32.end [16/16] %v1224, 128
        %v5035 = vpop.trf.xlu0
        %v5036 = vpop.trf.xlu0
        %v5037 = vpop.trf.xlu0
        %v5038 = vpop.trf.xlu0
        %v5039 = vpop.trf.xlu0
        %v5040 = vpop.trf.xlu0
        %v5041 = vpop.trf.xlu0
        %v5042 = vpop.trf.xlu0
        %v5043 = vpop.trf.xlu0
        %v5044 = vpop.trf.xlu0
        %v5045 = vpop.trf.xlu0
        %v5046 = vpop.trf.xlu0
        %v5047 = vpop.trf.xlu0
        %v5048 = vpop.trf.xlu0
        %v5049 = vpop.trf.xlu0
        %v5050 = vpop.trf.xlu0
        %5051 = vxpose.xlu0.b32.start [1/16] %v1229, 128
        %5052 = vxpose.xlu0.b32.cont [2/16] %v1234, 128
        %5053 = vxpose.xlu0.b32.cont [3/16] %v1239, 128
        %5054 = vxpose.xlu0.b32.cont [4/16] %v1244, 128
        %5055 = vxpose.xlu0.b32.cont [5/16] %v1249, 128
        %5056 = vxpose.xlu0.b32.cont [6/16] %v1254, 128
        %5057 = vxpose.xlu0.b32.cont [7/16] %v1259, 128
        %5058 = vxpose.xlu0.b32.cont [8/16] %v1264, 128
        %5059 = vxpose.xlu0.b32.cont [9/16] %v1269, 128
        %5060 = vxpose.xlu0.b32.cont [10/16] %v1274, 128
        %5061 = vxpose.xlu0.b32.cont [11/16] %v1279, 128
        %5062 = vxpose.xlu0.b32.cont [12/16] %v1284, 128
        %5063 = vxpose.xlu0.b32.cont [13/16] %v1289, 128
        %5064 = vxpose.xlu0.b32.cont [14/16] %v1294, 128
        %5065 = vxpose.xlu0.b32.cont [15/16] %v1299, 128
        %5066 = vxpose.xlu0.b32.end [16/16] %v1304, 128
        %v5067 = vpop.trf.xlu0
        %v5068 = vpop.trf.xlu0
        %v5069 = vpop.trf.xlu0
        %v5070 = vpop.trf.xlu0
        %v5071 = vpop.trf.xlu0
        %v5072 = vpop.trf.xlu0
        %v5073 = vpop.trf.xlu0
        %v5074 = vpop.trf.xlu0
        %v5075 = vpop.trf.xlu0
        %v5076 = vpop.trf.xlu0
        %v5077 = vpop.trf.xlu0
        %v5078 = vpop.trf.xlu0
        %v5079 = vpop.trf.xlu0
        %v5080 = vpop.trf.xlu0
        %v5081 = vpop.trf.xlu0
        %v5082 = vpop.trf.xlu0
        %5083 = vxpose.xlu0.b32.start [1/16] %v1309, 128
        %5084 = vxpose.xlu0.b32.cont [2/16] %v1314, 128
        %5085 = vxpose.xlu0.b32.cont [3/16] %v1319, 128
        %5086 = vxpose.xlu0.b32.cont [4/16] %v1324, 128
        %5087 = vxpose.xlu0.b32.cont [5/16] %v1329, 128
        %5088 = vxpose.xlu0.b32.cont [6/16] %v1334, 128
        %5089 = vxpose.xlu0.b32.cont [7/16] %v1339, 128
        %5090 = vxpose.xlu0.b32.cont [8/16] %v1344, 128
        %5091 = vxpose.xlu0.b32.cont [9/16] %v1349, 128
        %5092 = vxpose.xlu0.b32.cont [10/16] %v1354, 128
        %5093 = vxpose.xlu0.b32.cont [11/16] %v1359, 128
        %5094 = vxpose.xlu0.b32.cont [12/16] %v1364, 128
        %5095 = vxpose.xlu0.b32.cont [13/16] %v1369, 128
        %5096 = vxpose.xlu0.b32.cont [14/16] %v1374, 128
        %5097 = vxpose.xlu0.b32.cont [15/16] %v1379, 128
        %5098 = vxpose.xlu0.b32.end [16/16] %v1384, 128
        %v5099 = vpop.trf.xlu0
        %v5100 = vpop.trf.xlu0
        %v5101 = vpop.trf.xlu0
        %v5102 = vpop.trf.xlu0
        %v5103 = vpop.trf.xlu0
        %v5104 = vpop.trf.xlu0
        %v5105 = vpop.trf.xlu0
        %v5106 = vpop.trf.xlu0
        %v5107 = vpop.trf.xlu0
        %v5108 = vpop.trf.xlu0
        %v5109 = vpop.trf.xlu0
        %v5110 = vpop.trf.xlu0
        %v5111 = vpop.trf.xlu0
        %v5112 = vpop.trf.xlu0
        %v5113 = vpop.trf.xlu0
        %v5114 = vpop.trf.xlu0
        %5115 = vxpose.xlu0.b32.start [1/16] %v1389, 128
        %5116 = vxpose.xlu0.b32.cont [2/16] %v1394, 128
        %5117 = vxpose.xlu0.b32.cont [3/16] %v1399, 128
        %5118 = vxpose.xlu0.b32.cont [4/16] %v1404, 128
        %5119 = vxpose.xlu0.b32.cont [5/16] %v1409, 128
        %5120 = vxpose.xlu0.b32.cont [6/16] %v1414, 128
        %5121 = vxpose.xlu0.b32.cont [7/16] %v1419, 128
        %5122 = vxpose.xlu0.b32.cont [8/16] %v1424, 128
        %5123 = vxpose.xlu0.b32.cont [9/16] %v1429, 128
        %5124 = vxpose.xlu0.b32.cont [10/16] %v1434, 128
        %5125 = vxpose.xlu0.b32.cont [11/16] %v1439, 128
        %5126 = vxpose.xlu0.b32.cont [12/16] %v1444, 128
        %5127 = vxpose.xlu0.b32.cont [13/16] %v1449, 128
        %5128 = vxpose.xlu0.b32.cont [14/16] %v1454, 128
        %5129 = vxpose.xlu0.b32.cont [15/16] %v1459, 128
        %5130 = vxpose.xlu0.b32.end [16/16] %v1464, 128
        %v5131 = vpop.trf.xlu0
        %v5132 = vpop.trf.xlu0
        %v5133 = vpop.trf.xlu0
        %v5134 = vpop.trf.xlu0
        %v5135 = vpop.trf.xlu0
        %v5136 = vpop.trf.xlu0
        %v5137 = vpop.trf.xlu0
        %v5138 = vpop.trf.xlu0
        %v5139 = vpop.trf.xlu0
        %v5140 = vpop.trf.xlu0
        %v5141 = vpop.trf.xlu0
        %v5142 = vpop.trf.xlu0
        %v5143 = vpop.trf.xlu0
        %v5144 = vpop.trf.xlu0
        %v5145 = vpop.trf.xlu0
        %v5146 = vpop.trf.xlu0
        %5147 = vxpose.xlu0.b32.start [1/16] %v1469, 128
        %5148 = vxpose.xlu0.b32.cont [2/16] %v1474, 128
        %5149 = vxpose.xlu0.b32.cont [3/16] %v1479, 128
        %5150 = vxpose.xlu0.b32.cont [4/16] %v1484, 128
        %5151 = vxpose.xlu0.b32.cont [5/16] %v1489, 128
        %5152 = vxpose.xlu0.b32.cont [6/16] %v1494, 128
        %5153 = vxpose.xlu0.b32.cont [7/16] %v1499, 128
        %5154 = vxpose.xlu0.b32.cont [8/16] %v1504, 128
        %5155 = vxpose.xlu0.b32.cont [9/16] %v1509, 128
        %5156 = vxpose.xlu0.b32.cont [10/16] %v1514, 128
        %5157 = vxpose.xlu0.b32.cont [11/16] %v1519, 128
        %5158 = vxpose.xlu0.b32.cont [12/16] %v1524, 128
        %5159 = vxpose.xlu0.b32.cont [13/16] %v1529, 128
        %5160 = vxpose.xlu0.b32.cont [14/16] %v1534, 128
        %5161 = vxpose.xlu0.b32.cont [15/16] %v1539, 128
        %5162 = vxpose.xlu0.b32.end [16/16] %v1544, 128
        %v5163 = vpop.trf.xlu0
        %v5164 = vpop.trf.xlu0
        %v5165 = vpop.trf.xlu0
        %v5166 = vpop.trf.xlu0
        %v5167 = vpop.trf.xlu0
        %v5168 = vpop.trf.xlu0
        %v5169 = vpop.trf.xlu0
        %v5170 = vpop.trf.xlu0
        %v5171 = vpop.trf.xlu0
        %v5172 = vpop.trf.xlu0
        %v5173 = vpop.trf.xlu0
        %v5174 = vpop.trf.xlu0
        %v5175 = vpop.trf.xlu0
        %v5176 = vpop.trf.xlu0
        %v5177 = vpop.trf.xlu0
        %v5178 = vpop.trf.xlu0
        %5179 = vxpose.xlu0.b32.start [1/16] %v1549, 128
        %5180 = vxpose.xlu0.b32.cont [2/16] %v1554, 128
        %5181 = vxpose.xlu0.b32.cont [3/16] %v1559, 128
        %5182 = vxpose.xlu0.b32.cont [4/16] %v1564, 128
        %5183 = vxpose.xlu0.b32.cont [5/16] %v1569, 128
        %5184 = vxpose.xlu0.b32.cont [6/16] %v1574, 128
        %5185 = vxpose.xlu0.b32.cont [7/16] %v1579, 128
        %5186 = vxpose.xlu0.b32.cont [8/16] %v1584, 128
        %5187 = vxpose.xlu0.b32.cont [9/16] %v1589, 128
        %5188 = vxpose.xlu0.b32.cont [10/16] %v1594, 128
        %5189 = vxpose.xlu0.b32.cont [11/16] %v1599, 128
        %5190 = vxpose.xlu0.b32.cont [12/16] %v1604, 128
        %5191 = vxpose.xlu0.b32.cont [13/16] %v1609, 128
        %5192 = vxpose.xlu0.b32.cont [14/16] %v1614, 128
        %5193 = vxpose.xlu0.b32.cont [15/16] %v1619, 128
        %5194 = vxpose.xlu0.b32.end [16/16] %v1624, 128
        %v5195 = vpop.trf.xlu0
        %v5196 = vpop.trf.xlu0
        %v5197 = vpop.trf.xlu0
        %v5198 = vpop.trf.xlu0
        %v5199 = vpop.trf.xlu0
        %v5200 = vpop.trf.xlu0
        %v5201 = vpop.trf.xlu0
        %v5202 = vpop.trf.xlu0
        %v5203 = vpop.trf.xlu0
        %v5204 = vpop.trf.xlu0
        %v5205 = vpop.trf.xlu0
        %v5206 = vpop.trf.xlu0
        %v5207 = vpop.trf.xlu0
        %v5208 = vpop.trf.xlu0
        %v5209 = vpop.trf.xlu0
        %v5210 = vpop.trf.xlu0
        %5211 = vxpose.xlu0.b32.start [1/16] %v1629, 128
        %5212 = vxpose.xlu0.b32.cont [2/16] %v1634, 128
        %5213 = vxpose.xlu0.b32.cont [3/16] %v1639, 128
        %5214 = vxpose.xlu0.b32.cont [4/16] %v1644, 128
        %5215 = vxpose.xlu0.b32.cont [5/16] %v1649, 128
        %5216 = vxpose.xlu0.b32.cont [6/16] %v1654, 128
        %5217 = vxpose.xlu0.b32.cont [7/16] %v1659, 128
        %5218 = vxpose.xlu0.b32.cont [8/16] %v1664, 128
        %5219 = vxpose.xlu0.b32.cont [9/16] %v1669, 128
        %5220 = vxpose.xlu0.b32.cont [10/16] %v1674, 128
        %5221 = vxpose.xlu0.b32.cont [11/16] %v1679, 128
        %5222 = vxpose.xlu0.b32.cont [12/16] %v1684, 128
        %5223 = vxpose.xlu0.b32.cont [13/16] %v1689, 128
        %5224 = vxpose.xlu0.b32.cont [14/16] %v1694, 128
        %5225 = vxpose.xlu0.b32.cont [15/16] %v1699, 128
        %5226 = vxpose.xlu0.b32.end [16/16] %v1704, 128
        %v5227 = vpop.trf.xlu0
        %v5228 = vpop.trf.xlu0
        %v5229 = vpop.trf.xlu0
        %v5230 = vpop.trf.xlu0
        %v5231 = vpop.trf.xlu0
        %v5232 = vpop.trf.xlu0
        %v5233 = vpop.trf.xlu0
        %v5234 = vpop.trf.xlu0
        %v5235 = vpop.trf.xlu0
        %v5236 = vpop.trf.xlu0
        %v5237 = vpop.trf.xlu0
        %v5238 = vpop.trf.xlu0
        %v5239 = vpop.trf.xlu0
        %v5240 = vpop.trf.xlu0
        %v5241 = vpop.trf.xlu0
        %v5242 = vpop.trf.xlu0
        %5243 = vxpose.xlu0.b32.start [1/16] %v1709, 128
        %5244 = vxpose.xlu0.b32.cont [2/16] %v1714, 128
        %5245 = vxpose.xlu0.b32.cont [3/16] %v1719, 128
        %5246 = vxpose.xlu0.b32.cont [4/16] %v1724, 128
        %5247 = vxpose.xlu0.b32.cont [5/16] %v1729, 128
        %5248 = vxpose.xlu0.b32.cont [6/16] %v1734, 128
        %5249 = vxpose.xlu0.b32.cont [7/16] %v1739, 128
        %5250 = vxpose.xlu0.b32.cont [8/16] %v1744, 128
        %5251 = vxpose.xlu0.b32.cont [9/16] %v1749, 128
        %5252 = vxpose.xlu0.b32.cont [10/16] %v1754, 128
        %5253 = vxpose.xlu0.b32.cont [11/16] %v1759, 128
        %5254 = vxpose.xlu0.b32.cont [12/16] %v1764, 128
        %5255 = vxpose.xlu0.b32.cont [13/16] %v1769, 128
        %5256 = vxpose.xlu0.b32.cont [14/16] %v1774, 128
        %5257 = vxpose.xlu0.b32.cont [15/16] %v1779, 128
        %5258 = vxpose.xlu0.b32.end [16/16] %v1784, 128
        %v5259 = vpop.trf.xlu0
        %v5260 = vpop.trf.xlu0
        %v5261 = vpop.trf.xlu0
        %v5262 = vpop.trf.xlu0
        %v5263 = vpop.trf.xlu0
        %v5264 = vpop.trf.xlu0
        %v5265 = vpop.trf.xlu0
        %v5266 = vpop.trf.xlu0
        %v5267 = vpop.trf.xlu0
        %v5268 = vpop.trf.xlu0
        %v5269 = vpop.trf.xlu0
        %v5270 = vpop.trf.xlu0
        %v5271 = vpop.trf.xlu0
        %v5272 = vpop.trf.xlu0
        %v5273 = vpop.trf.xlu0
        %v5274 = vpop.trf.xlu0
        %5275 = vxpose.xlu0.b32.start [1/16] %v1789, 128
        %5276 = vxpose.xlu0.b32.cont [2/16] %v1794, 128
        %5277 = vxpose.xlu0.b32.cont [3/16] %v1799, 128
        %5278 = vxpose.xlu0.b32.cont [4/16] %v1804, 128
        %5279 = vxpose.xlu0.b32.cont [5/16] %v1809, 128
        %5280 = vxpose.xlu0.b32.cont [6/16] %v1814, 128
        %5281 = vxpose.xlu0.b32.cont [7/16] %v1819, 128
        %5282 = vxpose.xlu0.b32.cont [8/16] %v1824, 128
        %5283 = vxpose.xlu0.b32.cont [9/16] %v1829, 128
        %5284 = vxpose.xlu0.b32.cont [10/16] %v1834, 128
        %5285 = vxpose.xlu0.b32.cont [11/16] %v1839, 128
        %5286 = vxpose.xlu0.b32.cont [12/16] %v1844, 128
        %5287 = vxpose.xlu0.b32.cont [13/16] %v1849, 128
        %5288 = vxpose.xlu0.b32.cont [14/16] %v1854, 128
        %5289 = vxpose.xlu0.b32.cont [15/16] %v1859, 128
        %5290 = vxpose.xlu0.b32.end [16/16] %v1864, 128
        %v5291 = vpop.trf.xlu0
        %v5292 = vpop.trf.xlu0
        %v5293 = vpop.trf.xlu0
        %v5294 = vpop.trf.xlu0
        %v5295 = vpop.trf.xlu0
        %v5296 = vpop.trf.xlu0
        %v5297 = vpop.trf.xlu0
        %v5298 = vpop.trf.xlu0
        %v5299 = vpop.trf.xlu0
        %v5300 = vpop.trf.xlu0
        %v5301 = vpop.trf.xlu0
        %v5302 = vpop.trf.xlu0
        %v5303 = vpop.trf.xlu0
        %v5304 = vpop.trf.xlu0
        %v5305 = vpop.trf.xlu0
        %v5306 = vpop.trf.xlu0
        %5307 = vxpose.xlu0.b32.start [1/16] %v1869, 128
        %5308 = vxpose.xlu0.b32.cont [2/16] %v1874, 128
        %5309 = vxpose.xlu0.b32.cont [3/16] %v1879, 128
        %5310 = vxpose.xlu0.b32.cont [4/16] %v1884, 128
        %5311 = vxpose.xlu0.b32.cont [5/16] %v1889, 128
        %5312 = vxpose.xlu0.b32.cont [6/16] %v1894, 128
        %5313 = vxpose.xlu0.b32.cont [7/16] %v1899, 128
        %5314 = vxpose.xlu0.b32.cont [8/16] %v1904, 128
        %5315 = vxpose.xlu0.b32.cont [9/16] %v1909, 128
        %5316 = vxpose.xlu0.b32.cont [10/16] %v1914, 128
        %5317 = vxpose.xlu0.b32.cont [11/16] %v1919, 128
        %5318 = vxpose.xlu0.b32.cont [12/16] %v1924, 128
        %5319 = vxpose.xlu0.b32.cont [13/16] %v1929, 128
        %5320 = vxpose.xlu0.b32.cont [14/16] %v1934, 128
        %5321 = vxpose.xlu0.b32.cont [15/16] %v1939, 128
        %5322 = vxpose.xlu0.b32.end [16/16] %v1944, 128
        %v5323 = vpop.trf.xlu0
        %v5324 = vpop.trf.xlu0
        %v5325 = vpop.trf.xlu0
        %v5326 = vpop.trf.xlu0
        %v5327 = vpop.trf.xlu0
        %v5328 = vpop.trf.xlu0
        %v5329 = vpop.trf.xlu0
        %v5330 = vpop.trf.xlu0
        %v5331 = vpop.trf.xlu0
        %v5332 = vpop.trf.xlu0
        %v5333 = vpop.trf.xlu0
        %v5334 = vpop.trf.xlu0
        %v5335 = vpop.trf.xlu0
        %v5336 = vpop.trf.xlu0
        %v5337 = vpop.trf.xlu0
        %v5338 = vpop.trf.xlu0
        %5339 = vxpose.xlu0.b32.start [1/16] %v1949, 128
        %5340 = vxpose.xlu0.b32.cont [2/16] %v1954, 128
        %5341 = vxpose.xlu0.b32.cont [3/16] %v1959, 128
        %5342 = vxpose.xlu0.b32.cont [4/16] %v1964, 128
        %5343 = vxpose.xlu0.b32.cont [5/16] %v1969, 128
        %5344 = vxpose.xlu0.b32.cont [6/16] %v1974, 128
        %5345 = vxpose.xlu0.b32.cont [7/16] %v1979, 128
        %5346 = vxpose.xlu0.b32.cont [8/16] %v1984, 128
        %5347 = vxpose.xlu0.b32.cont [9/16] %v1989, 128
        %5348 = vxpose.xlu0.b32.cont [10/16] %v1994, 128
        %5349 = vxpose.xlu0.b32.cont [11/16] %v1999, 128
        %5350 = vxpose.xlu0.b32.cont [12/16] %v2004, 128
        %5351 = vxpose.xlu0.b32.cont [13/16] %v2009, 128
        %5352 = vxpose.xlu0.b32.cont [14/16] %v2014, 128
        %5353 = vxpose.xlu0.b32.cont [15/16] %v2019, 128
        %5354 = vxpose.xlu0.b32.end [16/16] %v2024, 128
        %v5355 = vpop.trf.xlu0
        %v5356 = vpop.trf.xlu0
        %v5357 = vpop.trf.xlu0
        %v5358 = vpop.trf.xlu0
        %v5359 = vpop.trf.xlu0
        %v5360 = vpop.trf.xlu0
        %v5361 = vpop.trf.xlu0
        %v5362 = vpop.trf.xlu0
        %v5363 = vpop.trf.xlu0
        %v5364 = vpop.trf.xlu0
        %v5365 = vpop.trf.xlu0
        %v5366 = vpop.trf.xlu0
        %v5367 = vpop.trf.xlu0
        %v5368 = vpop.trf.xlu0
        %v5369 = vpop.trf.xlu0
        %v5370 = vpop.trf.xlu0
        %5371 = vxpose.xlu0.b32.start [1/16] %v2029, 128
        %5372 = vxpose.xlu0.b32.cont [2/16] %v2034, 128
        %5373 = vxpose.xlu0.b32.cont [3/16] %v2039, 128
        %5374 = vxpose.xlu0.b32.cont [4/16] %v2044, 128
        %5375 = vxpose.xlu0.b32.cont [5/16] %v2049, 128
        %5376 = vxpose.xlu0.b32.cont [6/16] %v2054, 128
        %5377 = vxpose.xlu0.b32.cont [7/16] %v2059, 128
        %5378 = vxpose.xlu0.b32.cont [8/16] %v2064, 128
        %5379 = vxpose.xlu0.b32.cont [9/16] %v2069, 128
        %5380 = vxpose.xlu0.b32.cont [10/16] %v2074, 128
        %5381 = vxpose.xlu0.b32.cont [11/16] %v2079, 128
        %5382 = vxpose.xlu0.b32.cont [12/16] %v2084, 128
        %5383 = vxpose.xlu0.b32.cont [13/16] %v2089, 128
        %5384 = vxpose.xlu0.b32.cont [14/16] %v2094, 128
        %5385 = vxpose.xlu0.b32.cont [15/16] %v2099, 128
        %5386 = vxpose.xlu0.b32.end [16/16] %v2104, 128
        %v5387 = vpop.trf.xlu0
        %v5388 = vpop.trf.xlu0
        %v5389 = vpop.trf.xlu0
        %v5390 = vpop.trf.xlu0
        %v5391 = vpop.trf.xlu0
        %v5392 = vpop.trf.xlu0
        %v5393 = vpop.trf.xlu0
        %v5394 = vpop.trf.xlu0
        %v5395 = vpop.trf.xlu0
        %v5396 = vpop.trf.xlu0
        %v5397 = vpop.trf.xlu0
        %v5398 = vpop.trf.xlu0
        %v5399 = vpop.trf.xlu0
        %v5400 = vpop.trf.xlu0
        %v5401 = vpop.trf.xlu0
        %v5402 = vpop.trf.xlu0
        %5403 = vxpose.xlu0.b32.start [1/16] %v2109, 128
        %5404 = vxpose.xlu0.b32.cont [2/16] %v2114, 128
        %5405 = vxpose.xlu0.b32.cont [3/16] %v2119, 128
        %5406 = vxpose.xlu0.b32.cont [4/16] %v2124, 128
        %5407 = vxpose.xlu0.b32.cont [5/16] %v2129, 128
        %5408 = vxpose.xlu0.b32.cont [6/16] %v2134, 128
        %5409 = vxpose.xlu0.b32.cont [7/16] %v2139, 128
        %5410 = vxpose.xlu0.b32.cont [8/16] %v2144, 128
        %5411 = vxpose.xlu0.b32.cont [9/16] %v2149, 128
        %5412 = vxpose.xlu0.b32.cont [10/16] %v2154, 128
        %5413 = vxpose.xlu0.b32.cont [11/16] %v2159, 128
        %5414 = vxpose.xlu0.b32.cont [12/16] %v2164, 128
        %5415 = vxpose.xlu0.b32.cont [13/16] %v2169, 128
        %5416 = vxpose.xlu0.b32.cont [14/16] %v2174, 128
        %5417 = vxpose.xlu0.b32.cont [15/16] %v2179, 128
        %5418 = vxpose.xlu0.b32.end [16/16] %v2184, 128
        %v5419 = vpop.trf.xlu0
        %v5420 = vpop.trf.xlu0
        %v5421 = vpop.trf.xlu0
        %v5422 = vpop.trf.xlu0
        %v5423 = vpop.trf.xlu0
        %v5424 = vpop.trf.xlu0
        %v5425 = vpop.trf.xlu0
        %v5426 = vpop.trf.xlu0
        %v5427 = vpop.trf.xlu0
        %v5428 = vpop.trf.xlu0
        %v5429 = vpop.trf.xlu0
        %v5430 = vpop.trf.xlu0
        %v5431 = vpop.trf.xlu0
        %v5432 = vpop.trf.xlu0
        %v5433 = vpop.trf.xlu0
        %v5434 = vpop.trf.xlu0
        %5435 = vxpose.xlu0.b32.start [1/16] %v2189, 128
        %5436 = vxpose.xlu0.b32.cont [2/16] %v2194, 128
        %5437 = vxpose.xlu0.b32.cont [3/16] %v2199, 128
        %5438 = vxpose.xlu0.b32.cont [4/16] %v2204, 128
        %5439 = vxpose.xlu0.b32.cont [5/16] %v2209, 128
        %5440 = vxpose.xlu0.b32.cont [6/16] %v2214, 128
        %5441 = vxpose.xlu0.b32.cont [7/16] %v2219, 128
        %5442 = vxpose.xlu0.b32.cont [8/16] %v2224, 128
        %5443 = vxpose.xlu0.b32.cont [9/16] %v2229, 128
        %5444 = vxpose.xlu0.b32.cont [10/16] %v2234, 128
        %5445 = vxpose.xlu0.b32.cont [11/16] %v2239, 128
        %5446 = vxpose.xlu0.b32.cont [12/16] %v2244, 128
        %5447 = vxpose.xlu0.b32.cont [13/16] %v2249, 128
        %5448 = vxpose.xlu0.b32.cont [14/16] %v2254, 128
        %5449 = vxpose.xlu0.b32.cont [15/16] %v2259, 128
        %5450 = vxpose.xlu0.b32.end [16/16] %v2264, 128
        %v5451 = vpop.trf.xlu0
        %v5452 = vpop.trf.xlu0
        %v5453 = vpop.trf.xlu0
        %v5454 = vpop.trf.xlu0
        %v5455 = vpop.trf.xlu0
        %v5456 = vpop.trf.xlu0
        %v5457 = vpop.trf.xlu0
        %v5458 = vpop.trf.xlu0
        %v5459 = vpop.trf.xlu0
        %v5460 = vpop.trf.xlu0
        %v5461 = vpop.trf.xlu0
        %v5462 = vpop.trf.xlu0
        %v5463 = vpop.trf.xlu0
        %v5464 = vpop.trf.xlu0
        %v5465 = vpop.trf.xlu0
        %v5466 = vpop.trf.xlu0
        %5467 = vxpose.xlu0.b32.start [1/16] %v2269, 128
        %5468 = vxpose.xlu0.b32.cont [2/16] %v2274, 128
        %5469 = vxpose.xlu0.b32.cont [3/16] %v2279, 128
        %5470 = vxpose.xlu0.b32.cont [4/16] %v2284, 128
        %5471 = vxpose.xlu0.b32.cont [5/16] %v2289, 128
        %5472 = vxpose.xlu0.b32.cont [6/16] %v2294, 128
        %5473 = vxpose.xlu0.b32.cont [7/16] %v2299, 128
        %5474 = vxpose.xlu0.b32.cont [8/16] %v2304, 128
        %5475 = vxpose.xlu0.b32.cont [9/16] %v2309, 128
        %5476 = vxpose.xlu0.b32.cont [10/16] %v2314, 128
        %5477 = vxpose.xlu0.b32.cont [11/16] %v2319, 128
        %5478 = vxpose.xlu0.b32.cont [12/16] %v2324, 128
        %5479 = vxpose.xlu0.b32.cont [13/16] %v2329, 128
        %5480 = vxpose.xlu0.b32.cont [14/16] %v2334, 128
        %5481 = vxpose.xlu0.b32.cont [15/16] %v2339, 128
        %5482 = vxpose.xlu0.b32.end [16/16] %v2344, 128
        %v5483 = vpop.trf.xlu0
        %v5484 = vpop.trf.xlu0
        %v5485 = vpop.trf.xlu0
        %v5486 = vpop.trf.xlu0
        %v5487 = vpop.trf.xlu0
        %v5488 = vpop.trf.xlu0
        %v5489 = vpop.trf.xlu0
        %v5490 = vpop.trf.xlu0
        %v5491 = vpop.trf.xlu0
        %v5492 = vpop.trf.xlu0
        %v5493 = vpop.trf.xlu0
        %v5494 = vpop.trf.xlu0
        %v5495 = vpop.trf.xlu0
        %v5496 = vpop.trf.xlu0
        %v5497 = vpop.trf.xlu0
        %v5498 = vpop.trf.xlu0
        %5499 = vxpose.xlu0.b32.start [1/16] %v2349, 128
        %5500 = vxpose.xlu0.b32.cont [2/16] %v2354, 128
        %5501 = vxpose.xlu0.b32.cont [3/16] %v2359, 128
        %5502 = vxpose.xlu0.b32.cont [4/16] %v2364, 128
        %5503 = vxpose.xlu0.b32.cont [5/16] %v2369, 128
        %5504 = vxpose.xlu0.b32.cont [6/16] %v2374, 128
        %5505 = vxpose.xlu0.b32.cont [7/16] %v2379, 128
        %5506 = vxpose.xlu0.b32.cont [8/16] %v2384, 128
        %5507 = vxpose.xlu0.b32.cont [9/16] %v2389, 128
        %5508 = vxpose.xlu0.b32.cont [10/16] %v2394, 128
        %5509 = vxpose.xlu0.b32.cont [11/16] %v2399, 128
        %5510 = vxpose.xlu0.b32.cont [12/16] %v2404, 128
        %5511 = vxpose.xlu0.b32.cont [13/16] %v2409, 128
        %5512 = vxpose.xlu0.b32.cont [14/16] %v2414, 128
        %5513 = vxpose.xlu0.b32.cont [15/16] %v2419, 128
        %5514 = vxpose.xlu0.b32.end [16/16] %v2424, 128
        %v5515 = vpop.trf.xlu0
        %v5516 = vpop.trf.xlu0
        %v5517 = vpop.trf.xlu0
        %v5518 = vpop.trf.xlu0
        %v5519 = vpop.trf.xlu0
        %v5520 = vpop.trf.xlu0
        %v5521 = vpop.trf.xlu0
        %v5522 = vpop.trf.xlu0
        %v5523 = vpop.trf.xlu0
        %v5524 = vpop.trf.xlu0
        %v5525 = vpop.trf.xlu0
        %v5526 = vpop.trf.xlu0
        %v5527 = vpop.trf.xlu0
        %v5528 = vpop.trf.xlu0
        %v5529 = vpop.trf.xlu0
        %v5530 = vpop.trf.xlu0
        %5531 = vxpose.xlu0.b32.start [1/16] %v2429, 128
        %5532 = vxpose.xlu0.b32.cont [2/16] %v2434, 128
        %5533 = vxpose.xlu0.b32.cont [3/16] %v2439, 128
        %5534 = vxpose.xlu0.b32.cont [4/16] %v2444, 128
        %5535 = vxpose.xlu0.b32.cont [5/16] %v2449, 128
        %5536 = vxpose.xlu0.b32.cont [6/16] %v2454, 128
        %5537 = vxpose.xlu0.b32.cont [7/16] %v2459, 128
        %5538 = vxpose.xlu0.b32.cont [8/16] %v2464, 128
        %5539 = vxpose.xlu0.b32.cont [9/16] %v2469, 128
        %5540 = vxpose.xlu0.b32.cont [10/16] %v2474, 128
        %5541 = vxpose.xlu0.b32.cont [11/16] %v2479, 128
        %5542 = vxpose.xlu0.b32.cont [12/16] %v2484, 128
        %5543 = vxpose.xlu0.b32.cont [13/16] %v2489, 128
        %5544 = vxpose.xlu0.b32.cont [14/16] %v2494, 128
        %5545 = vxpose.xlu0.b32.cont [15/16] %v2499, 128
        %5546 = vxpose.xlu0.b32.end [16/16] %v2504, 128
        %v5547 = vpop.trf.xlu0
        %v5548 = vpop.trf.xlu0
        %v5549 = vpop.trf.xlu0
        %v5550 = vpop.trf.xlu0
        %v5551 = vpop.trf.xlu0
        %v5552 = vpop.trf.xlu0
        %v5553 = vpop.trf.xlu0
        %v5554 = vpop.trf.xlu0
        %v5555 = vpop.trf.xlu0
        %v5556 = vpop.trf.xlu0
        %v5557 = vpop.trf.xlu0
        %v5558 = vpop.trf.xlu0
        %v5559 = vpop.trf.xlu0
        %v5560 = vpop.trf.xlu0
        %v5561 = vpop.trf.xlu0
        %v5562 = vpop.trf.xlu0
        %5563 = vxpose.xlu0.b32.start [1/16] %v2509, 128
        %5564 = vxpose.xlu0.b32.cont [2/16] %v2514, 128
        %5565 = vxpose.xlu0.b32.cont [3/16] %v2519, 128
        %5566 = vxpose.xlu0.b32.cont [4/16] %v2524, 128
        %5567 = vxpose.xlu0.b32.cont [5/16] %v2529, 128
        %5568 = vxpose.xlu0.b32.cont [6/16] %v2534, 128
        %5569 = vxpose.xlu0.b32.cont [7/16] %v2539, 128
        %5570 = vxpose.xlu0.b32.cont [8/16] %v2544, 128
        %5571 = vxpose.xlu0.b32.cont [9/16] %v2549, 128
        %5572 = vxpose.xlu0.b32.cont [10/16] %v2554, 128
        %5573 = vxpose.xlu0.b32.cont [11/16] %v2559, 128
        %5574 = vxpose.xlu0.b32.cont [12/16] %v2564, 128
        %5575 = vxpose.xlu0.b32.cont [13/16] %v2569, 128
        %5576 = vxpose.xlu0.b32.cont [14/16] %v2574, 128
        %5577 = vxpose.xlu0.b32.cont [15/16] %v2579, 128
        %5578 = vxpose.xlu0.b32.end [16/16] %v2584, 128
        %v5579 = vpop.trf.xlu0
        %v5580 = vpop.trf.xlu0
        %v5581 = vpop.trf.xlu0
        %v5582 = vpop.trf.xlu0
        %v5583 = vpop.trf.xlu0
        %v5584 = vpop.trf.xlu0
        %v5585 = vpop.trf.xlu0
        %v5586 = vpop.trf.xlu0
        %v5587 = vpop.trf.xlu0
        %v5588 = vpop.trf.xlu0
        %v5589 = vpop.trf.xlu0
        %v5590 = vpop.trf.xlu0
        %v5591 = vpop.trf.xlu0
        %v5592 = vpop.trf.xlu0
        %v5593 = vpop.trf.xlu0
        %v5594 = vpop.trf.xlu0
        %5595 = vxpose.xlu0.b32.start [1/16] %v2589, 128
        %5596 = vxpose.xlu0.b32.cont [2/16] %v2594, 128
        %5597 = vxpose.xlu0.b32.cont [3/16] %v2599, 128
        %5598 = vxpose.xlu0.b32.cont [4/16] %v2604, 128
        %5599 = vxpose.xlu0.b32.cont [5/16] %v2609, 128
        %5600 = vxpose.xlu0.b32.cont [6/16] %v2614, 128
        %5601 = vxpose.xlu0.b32.cont [7/16] %v2619, 128
        %5602 = vxpose.xlu0.b32.cont [8/16] %v2624, 128
        %5603 = vxpose.xlu0.b32.cont [9/16] %v2629, 128
        %5604 = vxpose.xlu0.b32.cont [10/16] %v2634, 128
        %5605 = vxpose.xlu0.b32.cont [11/16] %v2639, 128
        %5606 = vxpose.xlu0.b32.cont [12/16] %v2644, 128
        %5607 = vxpose.xlu0.b32.cont [13/16] %v2649, 128
        %5608 = vxpose.xlu0.b32.cont [14/16] %v2654, 128
        %5609 = vxpose.xlu0.b32.cont [15/16] %v2659, 128
        %5610 = vxpose.xlu0.b32.end [16/16] %v2664, 128
        %v5611 = vpop.trf.xlu0
        %v5612 = vpop.trf.xlu0
        %v5613 = vpop.trf.xlu0
        %v5614 = vpop.trf.xlu0
        %v5615 = vpop.trf.xlu0
        %v5616 = vpop.trf.xlu0
        %v5617 = vpop.trf.xlu0
        %v5618 = vpop.trf.xlu0
        %v5619 = vpop.trf.xlu0
        %v5620 = vpop.trf.xlu0
        %v5621 = vpop.trf.xlu0
        %v5622 = vpop.trf.xlu0
        %v5623 = vpop.trf.xlu0
        %v5624 = vpop.trf.xlu0
        %v5625 = vpop.trf.xlu0
        %v5626 = vpop.trf.xlu0
        %5627 = vxpose.xlu0.b32.start [1/16] %v2669, 128
        %5628 = vxpose.xlu0.b32.cont [2/16] %v2674, 128
        %5629 = vxpose.xlu0.b32.cont [3/16] %v2679, 128
        %5630 = vxpose.xlu0.b32.cont [4/16] %v2684, 128
        %5631 = vxpose.xlu0.b32.cont [5/16] %v2689, 128
        %5632 = vxpose.xlu0.b32.cont [6/16] %v2694, 128
        %5633 = vxpose.xlu0.b32.cont [7/16] %v2699, 128
        %5634 = vxpose.xlu0.b32.cont [8/16] %v2704, 128
        %5635 = vxpose.xlu0.b32.cont [9/16] %v2709, 128
        %5636 = vxpose.xlu0.b32.cont [10/16] %v2714, 128
        %5637 = vxpose.xlu0.b32.cont [11/16] %v2719, 128
        %5638 = vxpose.xlu0.b32.cont [12/16] %v2724, 128
        %5639 = vxpose.xlu0.b32.cont [13/16] %v2729, 128
        %5640 = vxpose.xlu0.b32.cont [14/16] %v2734, 128
        %5641 = vxpose.xlu0.b32.cont [15/16] %v2739, 128
        %5642 = vxpose.xlu0.b32.end [16/16] %v2744, 128
        %v5643 = vpop.trf.xlu0
        %v5644 = vpop.trf.xlu0
        %v5645 = vpop.trf.xlu0
        %v5646 = vpop.trf.xlu0
        %v5647 = vpop.trf.xlu0
        %v5648 = vpop.trf.xlu0
        %v5649 = vpop.trf.xlu0
        %v5650 = vpop.trf.xlu0
        %v5651 = vpop.trf.xlu0
        %v5652 = vpop.trf.xlu0
        %v5653 = vpop.trf.xlu0
        %v5654 = vpop.trf.xlu0
        %v5655 = vpop.trf.xlu0
        %v5656 = vpop.trf.xlu0
        %v5657 = vpop.trf.xlu0
        %v5658 = vpop.trf.xlu0
        %5659 = vxpose.xlu0.b32.start [1/16] %v2749, 128
        %5660 = vxpose.xlu0.b32.cont [2/16] %v2754, 128
        %5661 = vxpose.xlu0.b32.cont [3/16] %v2759, 128
        %5662 = vxpose.xlu0.b32.cont [4/16] %v2764, 128
        %5663 = vxpose.xlu0.b32.cont [5/16] %v2769, 128
        %5664 = vxpose.xlu0.b32.cont [6/16] %v2774, 128
        %5665 = vxpose.xlu0.b32.cont [7/16] %v2779, 128
        %5666 = vxpose.xlu0.b32.cont [8/16] %v2784, 128
        %5667 = vxpose.xlu0.b32.cont [9/16] %v2789, 128
        %5668 = vxpose.xlu0.b32.cont [10/16] %v2794, 128
        %5669 = vxpose.xlu0.b32.cont [11/16] %v2799, 128
        %5670 = vxpose.xlu0.b32.cont [12/16] %v2804, 128
        %5671 = vxpose.xlu0.b32.cont [13/16] %v2809, 128
        %5672 = vxpose.xlu0.b32.cont [14/16] %v2814, 128
        %5673 = vxpose.xlu0.b32.cont [15/16] %v2819, 128
        %5674 = vxpose.xlu0.b32.end [16/16] %v2824, 128
        %v5675 = vpop.trf.xlu0
        %v5676 = vpop.trf.xlu0
        %v5677 = vpop.trf.xlu0
        %v5678 = vpop.trf.xlu0
        %v5679 = vpop.trf.xlu0
        %v5680 = vpop.trf.xlu0
        %v5681 = vpop.trf.xlu0
        %v5682 = vpop.trf.xlu0
        %v5683 = vpop.trf.xlu0
        %v5684 = vpop.trf.xlu0
        %v5685 = vpop.trf.xlu0
        %v5686 = vpop.trf.xlu0
        %v5687 = vpop.trf.xlu0
        %v5688 = vpop.trf.xlu0
        %v5689 = vpop.trf.xlu0
        %v5690 = vpop.trf.xlu0
        %5691 = vxpose.xlu0.b32.start [1/16] %v2829, 128
        %5692 = vxpose.xlu0.b32.cont [2/16] %v2834, 128
        %5693 = vxpose.xlu0.b32.cont [3/16] %v2839, 128
        %5694 = vxpose.xlu0.b32.cont [4/16] %v2844, 128
        %5695 = vxpose.xlu0.b32.cont [5/16] %v2849, 128
        %5696 = vxpose.xlu0.b32.cont [6/16] %v2854, 128
        %5697 = vxpose.xlu0.b32.cont [7/16] %v2859, 128
        %5698 = vxpose.xlu0.b32.cont [8/16] %v2864, 128
        %5699 = vxpose.xlu0.b32.cont [9/16] %v2869, 128
        %5700 = vxpose.xlu0.b32.cont [10/16] %v2874, 128
        %5701 = vxpose.xlu0.b32.cont [11/16] %v2879, 128
        %5702 = vxpose.xlu0.b32.cont [12/16] %v2884, 128
        %5703 = vxpose.xlu0.b32.cont [13/16] %v2889, 128
        %5704 = vxpose.xlu0.b32.cont [14/16] %v2894, 128
        %5705 = vxpose.xlu0.b32.cont [15/16] %v2899, 128
        %5706 = vxpose.xlu0.b32.end [16/16] %v2904, 128
        %v5707 = vpop.trf.xlu0
        %v5708 = vpop.trf.xlu0
        %v5709 = vpop.trf.xlu0
        %v5710 = vpop.trf.xlu0
        %v5711 = vpop.trf.xlu0
        %v5712 = vpop.trf.xlu0
        %v5713 = vpop.trf.xlu0
        %v5714 = vpop.trf.xlu0
        %v5715 = vpop.trf.xlu0
        %v5716 = vpop.trf.xlu0
        %v5717 = vpop.trf.xlu0
        %v5718 = vpop.trf.xlu0
        %v5719 = vpop.trf.xlu0
        %v5720 = vpop.trf.xlu0
        %v5721 = vpop.trf.xlu0
        %v5722 = vpop.trf.xlu0
        %5723 = vxpose.xlu0.b32.start [1/16] %v2909, 128
        %5724 = vxpose.xlu0.b32.cont [2/16] %v2914, 128
        %5725 = vxpose.xlu0.b32.cont [3/16] %v2919, 128
        %5726 = vxpose.xlu0.b32.cont [4/16] %v2924, 128
        %5727 = vxpose.xlu0.b32.cont [5/16] %v2929, 128
        %5728 = vxpose.xlu0.b32.cont [6/16] %v2934, 128
        %5729 = vxpose.xlu0.b32.cont [7/16] %v2939, 128
        %5730 = vxpose.xlu0.b32.cont [8/16] %v2944, 128
        %5731 = vxpose.xlu0.b32.cont [9/16] %v2949, 128
        %5732 = vxpose.xlu0.b32.cont [10/16] %v2954, 128
        %5733 = vxpose.xlu0.b32.cont [11/16] %v2959, 128
        %5734 = vxpose.xlu0.b32.cont [12/16] %v2964, 128
        %5735 = vxpose.xlu0.b32.cont [13/16] %v2969, 128
        %5736 = vxpose.xlu0.b32.cont [14/16] %v2974, 128
        %5737 = vxpose.xlu0.b32.cont [15/16] %v2979, 128
        %5738 = vxpose.xlu0.b32.end [16/16] %v2984, 128
        %v5739 = vpop.trf.xlu0
        %v5740 = vpop.trf.xlu0
        %v5741 = vpop.trf.xlu0
        %v5742 = vpop.trf.xlu0
        %v5743 = vpop.trf.xlu0
        %v5744 = vpop.trf.xlu0
        %v5745 = vpop.trf.xlu0
        %v5746 = vpop.trf.xlu0
        %v5747 = vpop.trf.xlu0
        %v5748 = vpop.trf.xlu0
        %v5749 = vpop.trf.xlu0
        %v5750 = vpop.trf.xlu0
        %v5751 = vpop.trf.xlu0
        %v5752 = vpop.trf.xlu0
        %v5753 = vpop.trf.xlu0
        %v5754 = vpop.trf.xlu0
        %5755 = vxpose.xlu0.b32.start [1/16] %v2989, 128
        %5756 = vxpose.xlu0.b32.cont [2/16] %v2994, 128
        %5757 = vxpose.xlu0.b32.cont [3/16] %v2999, 128
        %5758 = vxpose.xlu0.b32.cont [4/16] %v3004, 128
        %5759 = vxpose.xlu0.b32.cont [5/16] %v3009, 128
        %5760 = vxpose.xlu0.b32.cont [6/16] %v3014, 128
        %5761 = vxpose.xlu0.b32.cont [7/16] %v3019, 128
        %5762 = vxpose.xlu0.b32.cont [8/16] %v3024, 128
        %5763 = vxpose.xlu0.b32.cont [9/16] %v3029, 128
        %5764 = vxpose.xlu0.b32.cont [10/16] %v3034, 128
        %5765 = vxpose.xlu0.b32.cont [11/16] %v3039, 128
        %5766 = vxpose.xlu0.b32.cont [12/16] %v3044, 128
        %5767 = vxpose.xlu0.b32.cont [13/16] %v3049, 128
        %5768 = vxpose.xlu0.b32.cont [14/16] %v3054, 128
        %5769 = vxpose.xlu0.b32.cont [15/16] %v3059, 128
        %5770 = vxpose.xlu0.b32.end [16/16] %v3064, 128
        %v5771 = vpop.trf.xlu0
        %v5772 = vpop.trf.xlu0
        %v5773 = vpop.trf.xlu0
        %v5774 = vpop.trf.xlu0
        %v5775 = vpop.trf.xlu0
        %v5776 = vpop.trf.xlu0
        %v5777 = vpop.trf.xlu0
        %v5778 = vpop.trf.xlu0
        %v5779 = vpop.trf.xlu0
        %v5780 = vpop.trf.xlu0
        %v5781 = vpop.trf.xlu0
        %v5782 = vpop.trf.xlu0
        %v5783 = vpop.trf.xlu0
        %v5784 = vpop.trf.xlu0
        %v5785 = vpop.trf.xlu0
        %v5786 = vpop.trf.xlu0
        %5787 = vxpose.xlu0.b32.start [1/16] %v3069, 128
        %5788 = vxpose.xlu0.b32.cont [2/16] %v3074, 128
        %5789 = vxpose.xlu0.b32.cont [3/16] %v3079, 128
        %5790 = vxpose.xlu0.b32.cont [4/16] %v3084, 128
        %5791 = vxpose.xlu0.b32.cont [5/16] %v3089, 128
        %5792 = vxpose.xlu0.b32.cont [6/16] %v3094, 128
        %5793 = vxpose.xlu0.b32.cont [7/16] %v3099, 128
        %5794 = vxpose.xlu0.b32.cont [8/16] %v3104, 128
        %5795 = vxpose.xlu0.b32.cont [9/16] %v3109, 128
        %5796 = vxpose.xlu0.b32.cont [10/16] %v3114, 128
        %5797 = vxpose.xlu0.b32.cont [11/16] %v3119, 128
        %5798 = vxpose.xlu0.b32.cont [12/16] %v3124, 128
        %5799 = vxpose.xlu0.b32.cont [13/16] %v3129, 128
        %5800 = vxpose.xlu0.b32.cont [14/16] %v3134, 128
        %5801 = vxpose.xlu0.b32.cont [15/16] %v3139, 128
        %5802 = vxpose.xlu0.b32.end [16/16] %v3144, 128
        %v5803 = vpop.trf.xlu0
        %v5804 = vpop.trf.xlu0
        %v5805 = vpop.trf.xlu0
        %v5806 = vpop.trf.xlu0
        %v5807 = vpop.trf.xlu0
        %v5808 = vpop.trf.xlu0
        %v5809 = vpop.trf.xlu0
        %v5810 = vpop.trf.xlu0
        %v5811 = vpop.trf.xlu0
        %v5812 = vpop.trf.xlu0
        %v5813 = vpop.trf.xlu0
        %v5814 = vpop.trf.xlu0
        %v5815 = vpop.trf.xlu0
        %v5816 = vpop.trf.xlu0
        %v5817 = vpop.trf.xlu0
        %v5818 = vpop.trf.xlu0
        %5819 = vxpose.xlu0.b32.start [1/16] %v3149, 128
        %5820 = vxpose.xlu0.b32.cont [2/16] %v3154, 128
        %5821 = vxpose.xlu0.b32.cont [3/16] %v3159, 128
        %5822 = vxpose.xlu0.b32.cont [4/16] %v3164, 128
        %5823 = vxpose.xlu0.b32.cont [5/16] %v3169, 128
        %5824 = vxpose.xlu0.b32.cont [6/16] %v3174, 128
        %5825 = vxpose.xlu0.b32.cont [7/16] %v3179, 128
        %5826 = vxpose.xlu0.b32.cont [8/16] %v3184, 128
        %5827 = vxpose.xlu0.b32.cont [9/16] %v3189, 128
        %5828 = vxpose.xlu0.b32.cont [10/16] %v3194, 128
        %5829 = vxpose.xlu0.b32.cont [11/16] %v3199, 128
        %5830 = vxpose.xlu0.b32.cont [12/16] %v3204, 128
        %5831 = vxpose.xlu0.b32.cont [13/16] %v3209, 128
        %5832 = vxpose.xlu0.b32.cont [14/16] %v3214, 128
        %5833 = vxpose.xlu0.b32.cont [15/16] %v3219, 128
        %5834 = vxpose.xlu0.b32.end [16/16] %v3224, 128
        %v5835 = vpop.trf.xlu0
        %v5836 = vpop.trf.xlu0
        %v5837 = vpop.trf.xlu0
        %v5838 = vpop.trf.xlu0
        %v5839 = vpop.trf.xlu0
        %v5840 = vpop.trf.xlu0
        %v5841 = vpop.trf.xlu0
        %v5842 = vpop.trf.xlu0
        %v5843 = vpop.trf.xlu0
        %v5844 = vpop.trf.xlu0
        %v5845 = vpop.trf.xlu0
        %v5846 = vpop.trf.xlu0
        %v5847 = vpop.trf.xlu0
        %v5848 = vpop.trf.xlu0
        %v5849 = vpop.trf.xlu0
        %v5850 = vpop.trf.xlu0
        %5851 = vxpose.xlu0.b32.start [1/16] %v3229, 128
        %5852 = vxpose.xlu0.b32.cont [2/16] %v3234, 128
        %5853 = vxpose.xlu0.b32.cont [3/16] %v3239, 128
        %5854 = vxpose.xlu0.b32.cont [4/16] %v3244, 128
        %5855 = vxpose.xlu0.b32.cont [5/16] %v3249, 128
        %5856 = vxpose.xlu0.b32.cont [6/16] %v3254, 128
        %5857 = vxpose.xlu0.b32.cont [7/16] %v3259, 128
        %5858 = vxpose.xlu0.b32.cont [8/16] %v3264, 128
        %5859 = vxpose.xlu0.b32.cont [9/16] %v3269, 128
        %5860 = vxpose.xlu0.b32.cont [10/16] %v3274, 128
        %5861 = vxpose.xlu0.b32.cont [11/16] %v3279, 128
        %5862 = vxpose.xlu0.b32.cont [12/16] %v3284, 128
        %5863 = vxpose.xlu0.b32.cont [13/16] %v3289, 128
        %5864 = vxpose.xlu0.b32.cont [14/16] %v3294, 128
        %5865 = vxpose.xlu0.b32.cont [15/16] %v3299, 128
        %5866 = vxpose.xlu0.b32.end [16/16] %v3304, 128
        %v5867 = vpop.trf.xlu0
        %v5868 = vpop.trf.xlu0
        %v5869 = vpop.trf.xlu0
        %v5870 = vpop.trf.xlu0
        %v5871 = vpop.trf.xlu0
        %v5872 = vpop.trf.xlu0
        %v5873 = vpop.trf.xlu0
        %v5874 = vpop.trf.xlu0
        %v5875 = vpop.trf.xlu0
        %v5876 = vpop.trf.xlu0
        %v5877 = vpop.trf.xlu0
        %v5878 = vpop.trf.xlu0
        %v5879 = vpop.trf.xlu0
        %v5880 = vpop.trf.xlu0
        %v5881 = vpop.trf.xlu0
        %v5882 = vpop.trf.xlu0
        %5883 = vxpose.xlu0.b32.start [1/16] %v3309, 128
        %5884 = vxpose.xlu0.b32.cont [2/16] %v3314, 128
        %5885 = vxpose.xlu0.b32.cont [3/16] %v3319, 128
        %5886 = vxpose.xlu0.b32.cont [4/16] %v3324, 128
        %5887 = vxpose.xlu0.b32.cont [5/16] %v3329, 128
        %5888 = vxpose.xlu0.b32.cont [6/16] %v3334, 128
        %5889 = vxpose.xlu0.b32.cont [7/16] %v3339, 128
        %5890 = vxpose.xlu0.b32.cont [8/16] %v3344, 128
        %5891 = vxpose.xlu0.b32.cont [9/16] %v3349, 128
        %5892 = vxpose.xlu0.b32.cont [10/16] %v3354, 128
        %5893 = vxpose.xlu0.b32.cont [11/16] %v3359, 128
        %5894 = vxpose.xlu0.b32.cont [12/16] %v3364, 128
        %5895 = vxpose.xlu0.b32.cont [13/16] %v3369, 128
        %5896 = vxpose.xlu0.b32.cont [14/16] %v3374, 128
        %5897 = vxpose.xlu0.b32.cont [15/16] %v3379, 128
        %5898 = vxpose.xlu0.b32.end [16/16] %v3384, 128
        %v5899 = vpop.trf.xlu0
        %v5900 = vpop.trf.xlu0
        %v5901 = vpop.trf.xlu0
        %v5902 = vpop.trf.xlu0
        %v5903 = vpop.trf.xlu0
        %v5904 = vpop.trf.xlu0
        %v5905 = vpop.trf.xlu0
        %v5906 = vpop.trf.xlu0
        %v5907 = vpop.trf.xlu0
        %v5908 = vpop.trf.xlu0
        %v5909 = vpop.trf.xlu0
        %v5910 = vpop.trf.xlu0
        %v5911 = vpop.trf.xlu0
        %v5912 = vpop.trf.xlu0
        %v5913 = vpop.trf.xlu0
        %v5914 = vpop.trf.xlu0
        %5915 = vxpose.xlu0.b32.start [1/16] %v3389, 128
        %5916 = vxpose.xlu0.b32.cont [2/16] %v3394, 128
        %5917 = vxpose.xlu0.b32.cont [3/16] %v3399, 128
        %5918 = vxpose.xlu0.b32.cont [4/16] %v3404, 128
        %5919 = vxpose.xlu0.b32.cont [5/16] %v3409, 128
        %5920 = vxpose.xlu0.b32.cont [6/16] %v3414, 128
        %5921 = vxpose.xlu0.b32.cont [7/16] %v3419, 128
        %5922 = vxpose.xlu0.b32.cont [8/16] %v3424, 128
        %5923 = vxpose.xlu0.b32.cont [9/16] %v3429, 128
        %5924 = vxpose.xlu0.b32.cont [10/16] %v3434, 128
        %5925 = vxpose.xlu0.b32.cont [11/16] %v3439, 128
        %5926 = vxpose.xlu0.b32.cont [12/16] %v3444, 128
        %5927 = vxpose.xlu0.b32.cont [13/16] %v3449, 128
        %5928 = vxpose.xlu0.b32.cont [14/16] %v3454, 128
        %5929 = vxpose.xlu0.b32.cont [15/16] %v3459, 128
        %5930 = vxpose.xlu0.b32.end [16/16] %v3464, 128
        %v5931 = vpop.trf.xlu0
        %v5932 = vpop.trf.xlu0
        %v5933 = vpop.trf.xlu0
        %v5934 = vpop.trf.xlu0
        %v5935 = vpop.trf.xlu0
        %v5936 = vpop.trf.xlu0
        %v5937 = vpop.trf.xlu0
        %v5938 = vpop.trf.xlu0
        %v5939 = vpop.trf.xlu0
        %v5940 = vpop.trf.xlu0
        %v5941 = vpop.trf.xlu0
        %v5942 = vpop.trf.xlu0
        %v5943 = vpop.trf.xlu0
        %v5944 = vpop.trf.xlu0
        %v5945 = vpop.trf.xlu0
        %v5946 = vpop.trf.xlu0
        %5947 = vxpose.xlu0.b32.start [1/16] %v3469, 128
        %5948 = vxpose.xlu0.b32.cont [2/16] %v3474, 128
        %5949 = vxpose.xlu0.b32.cont [3/16] %v3479, 128
        %5950 = vxpose.xlu0.b32.cont [4/16] %v3484, 128
        %5951 = vxpose.xlu0.b32.cont [5/16] %v3489, 128
        %5952 = vxpose.xlu0.b32.cont [6/16] %v3494, 128
        %5953 = vxpose.xlu0.b32.cont [7/16] %v3499, 128
        %5954 = vxpose.xlu0.b32.cont [8/16] %v3504, 128
        %5955 = vxpose.xlu0.b32.cont [9/16] %v3509, 128
        %5956 = vxpose.xlu0.b32.cont [10/16] %v3514, 128
        %5957 = vxpose.xlu0.b32.cont [11/16] %v3519, 128
        %5958 = vxpose.xlu0.b32.cont [12/16] %v3524, 128
        %5959 = vxpose.xlu0.b32.cont [13/16] %v3529, 128
        %5960 = vxpose.xlu0.b32.cont [14/16] %v3534, 128
        %5961 = vxpose.xlu0.b32.cont [15/16] %v3539, 128
        %5962 = vxpose.xlu0.b32.end [16/16] %v3544, 128
        %v5963 = vpop.trf.xlu0
        %v5964 = vpop.trf.xlu0
        %v5965 = vpop.trf.xlu0
        %v5966 = vpop.trf.xlu0
        %v5967 = vpop.trf.xlu0
        %v5968 = vpop.trf.xlu0
        %v5969 = vpop.trf.xlu0
        %v5970 = vpop.trf.xlu0
        %v5971 = vpop.trf.xlu0
        %v5972 = vpop.trf.xlu0
        %v5973 = vpop.trf.xlu0
        %v5974 = vpop.trf.xlu0
        %v5975 = vpop.trf.xlu0
        %v5976 = vpop.trf.xlu0
        %v5977 = vpop.trf.xlu0
        %v5978 = vpop.trf.xlu0
        %5979 = vxpose.xlu0.b32.start [1/16] %v3549, 128
        %5980 = vxpose.xlu0.b32.cont [2/16] %v3554, 128
        %5981 = vxpose.xlu0.b32.cont [3/16] %v3559, 128
        %5982 = vxpose.xlu0.b32.cont [4/16] %v3564, 128
        %5983 = vxpose.xlu0.b32.cont [5/16] %v3569, 128
        %5984 = vxpose.xlu0.b32.cont [6/16] %v3574, 128
        %5985 = vxpose.xlu0.b32.cont [7/16] %v3579, 128
        %5986 = vxpose.xlu0.b32.cont [8/16] %v3584, 128
        %5987 = vxpose.xlu0.b32.cont [9/16] %v3589, 128
        %5988 = vxpose.xlu0.b32.cont [10/16] %v3594, 128
        %5989 = vxpose.xlu0.b32.cont [11/16] %v3599, 128
        %5990 = vxpose.xlu0.b32.cont [12/16] %v3604, 128
        %5991 = vxpose.xlu0.b32.cont [13/16] %v3609, 128
        %5992 = vxpose.xlu0.b32.cont [14/16] %v3614, 128
        %5993 = vxpose.xlu0.b32.cont [15/16] %v3619, 128
        %5994 = vxpose.xlu0.b32.end [16/16] %v3624, 128
        %v5995 = vpop.trf.xlu0
        %v5996 = vpop.trf.xlu0
        %v5997 = vpop.trf.xlu0
        %v5998 = vpop.trf.xlu0
        %v5999 = vpop.trf.xlu0
        %v6000 = vpop.trf.xlu0
        %v6001 = vpop.trf.xlu0
        %v6002 = vpop.trf.xlu0
        %v6003 = vpop.trf.xlu0
        %v6004 = vpop.trf.xlu0
        %v6005 = vpop.trf.xlu0
        %v6006 = vpop.trf.xlu0
        %v6007 = vpop.trf.xlu0
        %v6008 = vpop.trf.xlu0
        %v6009 = vpop.trf.xlu0
        %v6010 = vpop.trf.xlu0
        %6011 = vxpose.xlu0.b32.start [1/16] %v3629, 128
        %6012 = vxpose.xlu0.b32.cont [2/16] %v3634, 128
        %6013 = vxpose.xlu0.b32.cont [3/16] %v3639, 128
        %6014 = vxpose.xlu0.b32.cont [4/16] %v3644, 128
        %6015 = vxpose.xlu0.b32.cont [5/16] %v3649, 128
        %6016 = vxpose.xlu0.b32.cont [6/16] %v3654, 128
        %6017 = vxpose.xlu0.b32.cont [7/16] %v3659, 128
        %6018 = vxpose.xlu0.b32.cont [8/16] %v3664, 128
        %6019 = vxpose.xlu0.b32.cont [9/16] %v3669, 128
        %6020 = vxpose.xlu0.b32.cont [10/16] %v3674, 128
        %6021 = vxpose.xlu0.b32.cont [11/16] %v3679, 128
        %6022 = vxpose.xlu0.b32.cont [12/16] %v3684, 128
        %6023 = vxpose.xlu0.b32.cont [13/16] %v3689, 128
        %6024 = vxpose.xlu0.b32.cont [14/16] %v3694, 128
        %6025 = vxpose.xlu0.b32.cont [15/16] %v3699, 128
        %6026 = vxpose.xlu0.b32.end [16/16] %v3704, 128
        %v6027 = vpop.trf.xlu0
        %v6028 = vpop.trf.xlu0
        %v6029 = vpop.trf.xlu0
        %v6030 = vpop.trf.xlu0
        %v6031 = vpop.trf.xlu0
        %v6032 = vpop.trf.xlu0
        %v6033 = vpop.trf.xlu0
        %v6034 = vpop.trf.xlu0
        %v6035 = vpop.trf.xlu0
        %v6036 = vpop.trf.xlu0
        %v6037 = vpop.trf.xlu0
        %v6038 = vpop.trf.xlu0
        %v6039 = vpop.trf.xlu0
        %v6040 = vpop.trf.xlu0
        %v6041 = vpop.trf.xlu0
        %v6042 = vpop.trf.xlu0
        %6043 = vxpose.xlu0.b32.start [1/16] %v3709, 128
        %6044 = vxpose.xlu0.b32.cont [2/16] %v3714, 128
        %6045 = vxpose.xlu0.b32.cont [3/16] %v3719, 128
        %6046 = vxpose.xlu0.b32.cont [4/16] %v3724, 128
        %6047 = vxpose.xlu0.b32.cont [5/16] %v3729, 128
        %6048 = vxpose.xlu0.b32.cont [6/16] %v3734, 128
        %6049 = vxpose.xlu0.b32.cont [7/16] %v3739, 128
        %6050 = vxpose.xlu0.b32.cont [8/16] %v3744, 128
        %6051 = vxpose.xlu0.b32.cont [9/16] %v3749, 128
        %6052 = vxpose.xlu0.b32.cont [10/16] %v3754, 128
        %6053 = vxpose.xlu0.b32.cont [11/16] %v3759, 128
        %6054 = vxpose.xlu0.b32.cont [12/16] %v3764, 128
        %6055 = vxpose.xlu0.b32.cont [13/16] %v3769, 128
        %6056 = vxpose.xlu0.b32.cont [14/16] %v3774, 128
        %6057 = vxpose.xlu0.b32.cont [15/16] %v3779, 128
        %6058 = vxpose.xlu0.b32.end [16/16] %v3784, 128
        %v6059 = vpop.trf.xlu0
        %v6060 = vpop.trf.xlu0
        %v6061 = vpop.trf.xlu0
        %v6062 = vpop.trf.xlu0
        %v6063 = vpop.trf.xlu0
        %v6064 = vpop.trf.xlu0
        %v6065 = vpop.trf.xlu0
        %v6066 = vpop.trf.xlu0
        %v6067 = vpop.trf.xlu0
        %v6068 = vpop.trf.xlu0
        %v6069 = vpop.trf.xlu0
        %v6070 = vpop.trf.xlu0
        %v6071 = vpop.trf.xlu0
        %v6072 = vpop.trf.xlu0
        %v6073 = vpop.trf.xlu0
        %v6074 = vpop.trf.xlu0
        %6075 = vxpose.xlu0.b32.start [1/16] %v3789, 128
        %6076 = vxpose.xlu0.b32.cont [2/16] %v3794, 128
        %6077 = vxpose.xlu0.b32.cont [3/16] %v3799, 128
        %6078 = vxpose.xlu0.b32.cont [4/16] %v3804, 128
        %6079 = vxpose.xlu0.b32.cont [5/16] %v3809, 128
        %6080 = vxpose.xlu0.b32.cont [6/16] %v3814, 128
        %6081 = vxpose.xlu0.b32.cont [7/16] %v3819, 128
        %6082 = vxpose.xlu0.b32.cont [8/16] %v3824, 128
        %6083 = vxpose.xlu0.b32.cont [9/16] %v3829, 128
        %6084 = vxpose.xlu0.b32.cont [10/16] %v3834, 128
        %6085 = vxpose.xlu0.b32.cont [11/16] %v3839, 128
        %6086 = vxpose.xlu0.b32.cont [12/16] %v3844, 128
        %6087 = vxpose.xlu0.b32.cont [13/16] %v3849, 128
        %6088 = vxpose.xlu0.b32.cont [14/16] %v3854, 128
        %6089 = vxpose.xlu0.b32.cont [15/16] %v3859, 128
        %6090 = vxpose.xlu0.b32.end [16/16] %v3864, 128
        %v6091 = vpop.trf.xlu0
        %v6092 = vpop.trf.xlu0
        %v6093 = vpop.trf.xlu0
        %v6094 = vpop.trf.xlu0
        %v6095 = vpop.trf.xlu0
        %v6096 = vpop.trf.xlu0
        %v6097 = vpop.trf.xlu0
        %v6098 = vpop.trf.xlu0
        %v6099 = vpop.trf.xlu0
        %v6100 = vpop.trf.xlu0
        %v6101 = vpop.trf.xlu0
        %v6102 = vpop.trf.xlu0
        %v6103 = vpop.trf.xlu0
        %v6104 = vpop.trf.xlu0
        %v6105 = vpop.trf.xlu0
        %v6106 = vpop.trf.xlu0
        %6107 = vxpose.xlu0.b32.start [1/16] %v3869, 128
        %6108 = vxpose.xlu0.b32.cont [2/16] %v3874, 128
        %6109 = vxpose.xlu0.b32.cont [3/16] %v3879, 128
        %6110 = vxpose.xlu0.b32.cont [4/16] %v3884, 128
        %6111 = vxpose.xlu0.b32.cont [5/16] %v3889, 128
        %6112 = vxpose.xlu0.b32.cont [6/16] %v3894, 128
        %6113 = vxpose.xlu0.b32.cont [7/16] %v3899, 128
        %6114 = vxpose.xlu0.b32.cont [8/16] %v3904, 128
        %6115 = vxpose.xlu0.b32.cont [9/16] %v3909, 128
        %6116 = vxpose.xlu0.b32.cont [10/16] %v3914, 128
        %6117 = vxpose.xlu0.b32.cont [11/16] %v3919, 128
        %6118 = vxpose.xlu0.b32.cont [12/16] %v3924, 128
        %6119 = vxpose.xlu0.b32.cont [13/16] %v3929, 128
        %6120 = vxpose.xlu0.b32.cont [14/16] %v3934, 128
        %6121 = vxpose.xlu0.b32.cont [15/16] %v3939, 128
        %6122 = vxpose.xlu0.b32.end [16/16] %v3944, 128
        %v6123 = vpop.trf.xlu0
        %v6124 = vpop.trf.xlu0
        %v6125 = vpop.trf.xlu0
        %v6126 = vpop.trf.xlu0
        %v6127 = vpop.trf.xlu0
        %v6128 = vpop.trf.xlu0
        %v6129 = vpop.trf.xlu0
        %v6130 = vpop.trf.xlu0
        %v6131 = vpop.trf.xlu0
        %v6132 = vpop.trf.xlu0
        %v6133 = vpop.trf.xlu0
        %v6134 = vpop.trf.xlu0
        %v6135 = vpop.trf.xlu0
        %v6136 = vpop.trf.xlu0
        %v6137 = vpop.trf.xlu0
        %v6138 = vpop.trf.xlu0
        %6139 = vxpose.xlu0.b32.start [1/16] %v3949, 128
        %6140 = vxpose.xlu0.b32.cont [2/16] %v3954, 128
        %6141 = vxpose.xlu0.b32.cont [3/16] %v3959, 128
        %6142 = vxpose.xlu0.b32.cont [4/16] %v3964, 128
        %6143 = vxpose.xlu0.b32.cont [5/16] %v3969, 128
        %6144 = vxpose.xlu0.b32.cont [6/16] %v3974, 128
        %6145 = vxpose.xlu0.b32.cont [7/16] %v3979, 128
        %6146 = vxpose.xlu0.b32.cont [8/16] %v3984, 128
        %6147 = vxpose.xlu0.b32.cont [9/16] %v3989, 128
        %6148 = vxpose.xlu0.b32.cont [10/16] %v3994, 128
        %6149 = vxpose.xlu0.b32.cont [11/16] %v3999, 128
        %6150 = vxpose.xlu0.b32.cont [12/16] %v4004, 128
        %6151 = vxpose.xlu0.b32.cont [13/16] %v4009, 128
        %6152 = vxpose.xlu0.b32.cont [14/16] %v4014, 128
        %6153 = vxpose.xlu0.b32.cont [15/16] %v4019, 128
        %6154 = vxpose.xlu0.b32.end [16/16] %v4024, 128
        %v6155 = vpop.trf.xlu0
        %v6156 = vpop.trf.xlu0
        %v6157 = vpop.trf.xlu0
        %v6158 = vpop.trf.xlu0
        %v6159 = vpop.trf.xlu0
        %v6160 = vpop.trf.xlu0
        %v6161 = vpop.trf.xlu0
        %v6162 = vpop.trf.xlu0
        %v6163 = vpop.trf.xlu0
        %v6164 = vpop.trf.xlu0
        %v6165 = vpop.trf.xlu0
        %v6166 = vpop.trf.xlu0
        %v6167 = vpop.trf.xlu0
        %v6168 = vpop.trf.xlu0
        %v6169 = vpop.trf.xlu0
        %v6170 = vpop.trf.xlu0
        %6171 = vxpose.xlu0.b32.start [1/16] %v4029, 128
        %6172 = vxpose.xlu0.b32.cont [2/16] %v4034, 128
        %6173 = vxpose.xlu0.b32.cont [3/16] %v4039, 128
        %6174 = vxpose.xlu0.b32.cont [4/16] %v4044, 128
        %6175 = vxpose.xlu0.b32.cont [5/16] %v4049, 128
        %6176 = vxpose.xlu0.b32.cont [6/16] %v4054, 128
        %6177 = vxpose.xlu0.b32.cont [7/16] %v4059, 128
        %6178 = vxpose.xlu0.b32.cont [8/16] %v4064, 128
        %6179 = vxpose.xlu0.b32.cont [9/16] %v4069, 128
        %6180 = vxpose.xlu0.b32.cont [10/16] %v4074, 128
        %6181 = vxpose.xlu0.b32.cont [11/16] %v4079, 128
        %6182 = vxpose.xlu0.b32.cont [12/16] %v4084, 128
        %6183 = vxpose.xlu0.b32.cont [13/16] %v4089, 128
        %6184 = vxpose.xlu0.b32.cont [14/16] %v4094, 128
        %6185 = vxpose.xlu0.b32.cont [15/16] %v4099, 128
        %6186 = vxpose.xlu0.b32.end [16/16] %v4104, 128
        %v6187 = vpop.trf.xlu0
        %v6188 = vpop.trf.xlu0
        %v6189 = vpop.trf.xlu0
        %v6190 = vpop.trf.xlu0
        %v6191 = vpop.trf.xlu0
        %v6192 = vpop.trf.xlu0
        %v6193 = vpop.trf.xlu0
        %v6194 = vpop.trf.xlu0
        %v6195 = vpop.trf.xlu0
        %v6196 = vpop.trf.xlu0
        %v6197 = vpop.trf.xlu0
        %v6198 = vpop.trf.xlu0
        %v6199 = vpop.trf.xlu0
        %v6200 = vpop.trf.xlu0
        %v6201 = vpop.trf.xlu0
        %v6202 = vpop.trf.xlu0
        %6203 = vxpose.xlu0.b32.start [1/16] %v4109, 128
        %6204 = vxpose.xlu0.b32.cont [2/16] %v4114, 128
        %6205 = vxpose.xlu0.b32.cont [3/16] %v4119, 128
        %6206 = vxpose.xlu0.b32.cont [4/16] %v4124, 128
        %6207 = vxpose.xlu0.b32.cont [5/16] %v4129, 128
        %6208 = vxpose.xlu0.b32.cont [6/16] %v4134, 128
        %6209 = vxpose.xlu0.b32.cont [7/16] %v4139, 128
        %6210 = vxpose.xlu0.b32.cont [8/16] %v4144, 128
        %6211 = vxpose.xlu0.b32.cont [9/16] %v4149, 128
        %6212 = vxpose.xlu0.b32.cont [10/16] %v4154, 128
        %6213 = vxpose.xlu0.b32.cont [11/16] %v4159, 128
        %6214 = vxpose.xlu0.b32.cont [12/16] %v4164, 128
        %6215 = vxpose.xlu0.b32.cont [13/16] %v4169, 128
        %6216 = vxpose.xlu0.b32.cont [14/16] %v4174, 128
        %6217 = vxpose.xlu0.b32.cont [15/16] %v4179, 128
        %6218 = vxpose.xlu0.b32.end [16/16] %v4184, 128
        %v6219 = vpop.trf.xlu0
        %v6220 = vpop.trf.xlu0
        %v6221 = vpop.trf.xlu0
        %v6222 = vpop.trf.xlu0
        %v6223 = vpop.trf.xlu0
        %v6224 = vpop.trf.xlu0
        %v6225 = vpop.trf.xlu0
        %v6226 = vpop.trf.xlu0
        %v6227 = vpop.trf.xlu0
        %v6228 = vpop.trf.xlu0
        %v6229 = vpop.trf.xlu0
        %v6230 = vpop.trf.xlu0
        %v6231 = vpop.trf.xlu0
        %v6232 = vpop.trf.xlu0
        %v6233 = vpop.trf.xlu0
        %v6234 = vpop.trf.xlu0
        %6235 = vxpose.xlu0.b32.start [1/16] %v4189, 128
        %6236 = vxpose.xlu0.b32.cont [2/16] %v4194, 128
        %6237 = vxpose.xlu0.b32.cont [3/16] %v4199, 128
        %6238 = vxpose.xlu0.b32.cont [4/16] %v4204, 128
        %6239 = vxpose.xlu0.b32.cont [5/16] %v4209, 128
        %6240 = vxpose.xlu0.b32.cont [6/16] %v4214, 128
        %6241 = vxpose.xlu0.b32.cont [7/16] %v4219, 128
        %6242 = vxpose.xlu0.b32.cont [8/16] %v4224, 128
        %6243 = vxpose.xlu0.b32.cont [9/16] %v4229, 128
        %6244 = vxpose.xlu0.b32.cont [10/16] %v4234, 128
        %6245 = vxpose.xlu0.b32.cont [11/16] %v4239, 128
        %6246 = vxpose.xlu0.b32.cont [12/16] %v4244, 128
        %6247 = vxpose.xlu0.b32.cont [13/16] %v4249, 128
        %6248 = vxpose.xlu0.b32.cont [14/16] %v4254, 128
        %6249 = vxpose.xlu0.b32.cont [15/16] %v4259, 128
        %6250 = vxpose.xlu0.b32.end [16/16] %v4264, 128
        %v6251 = vpop.trf.xlu0
        %v6252 = vpop.trf.xlu0
        %v6253 = vpop.trf.xlu0
        %v6254 = vpop.trf.xlu0
        %v6255 = vpop.trf.xlu0
        %v6256 = vpop.trf.xlu0
        %v6257 = vpop.trf.xlu0
        %v6258 = vpop.trf.xlu0
        %v6259 = vpop.trf.xlu0
        %v6260 = vpop.trf.xlu0
        %v6261 = vpop.trf.xlu0
        %v6262 = vpop.trf.xlu0
        %v6263 = vpop.trf.xlu0
        %v6264 = vpop.trf.xlu0
        %v6265 = vpop.trf.xlu0
        %v6266 = vpop.trf.xlu0
        %6267 = vxpose.xlu0.b32.start [1/16] %v4269, 128
        %6268 = vxpose.xlu0.b32.cont [2/16] %v4274, 128
        %6269 = vxpose.xlu0.b32.cont [3/16] %v4279, 128
        %6270 = vxpose.xlu0.b32.cont [4/16] %v4284, 128
        %6271 = vxpose.xlu0.b32.cont [5/16] %v4289, 128
        %6272 = vxpose.xlu0.b32.cont [6/16] %v4294, 128
        %6273 = vxpose.xlu0.b32.cont [7/16] %v4299, 128
        %6274 = vxpose.xlu0.b32.cont [8/16] %v4304, 128
        %6275 = vxpose.xlu0.b32.cont [9/16] %v4309, 128
        %6276 = vxpose.xlu0.b32.cont [10/16] %v4314, 128
        %6277 = vxpose.xlu0.b32.cont [11/16] %v4319, 128
        %6278 = vxpose.xlu0.b32.cont [12/16] %v4324, 128
        %6279 = vxpose.xlu0.b32.cont [13/16] %v4329, 128
        %6280 = vxpose.xlu0.b32.cont [14/16] %v4334, 128
        %6281 = vxpose.xlu0.b32.cont [15/16] %v4339, 128
        %6282 = vxpose.xlu0.b32.end [16/16] %v4344, 128
        %v6283 = vpop.trf.xlu0
        %v6284 = vpop.trf.xlu0
        %v6285 = vpop.trf.xlu0
        %v6286 = vpop.trf.xlu0
        %v6287 = vpop.trf.xlu0
        %v6288 = vpop.trf.xlu0
        %v6289 = vpop.trf.xlu0
        %v6290 = vpop.trf.xlu0
        %v6291 = vpop.trf.xlu0
        %v6292 = vpop.trf.xlu0
        %v6293 = vpop.trf.xlu0
        %v6294 = vpop.trf.xlu0
        %v6295 = vpop.trf.xlu0
        %v6296 = vpop.trf.xlu0
        %v6297 = vpop.trf.xlu0
        %v6298 = vpop.trf.xlu0
        %6299 = vxpose.xlu0.b32.start [1/16] %v4349, 128
        %6300 = vxpose.xlu0.b32.cont [2/16] %v4354, 128
        %6301 = vxpose.xlu0.b32.cont [3/16] %v4359, 128
        %6302 = vxpose.xlu0.b32.cont [4/16] %v4364, 128
        %6303 = vxpose.xlu0.b32.cont [5/16] %v4369, 128
        %6304 = vxpose.xlu0.b32.cont [6/16] %v4374, 128
        %6305 = vxpose.xlu0.b32.cont [7/16] %v4379, 128
        %6306 = vxpose.xlu0.b32.cont [8/16] %v4384, 128
        %6307 = vxpose.xlu0.b32.cont [9/16] %v4389, 128
        %6308 = vxpose.xlu0.b32.cont [10/16] %v4394, 128
        %6309 = vxpose.xlu0.b32.cont [11/16] %v4399, 128
        %6310 = vxpose.xlu0.b32.cont [12/16] %v4404, 128
        %6311 = vxpose.xlu0.b32.cont [13/16] %v4409, 128
        %6312 = vxpose.xlu0.b32.cont [14/16] %v4414, 128
        %6313 = vxpose.xlu0.b32.cont [15/16] %v4419, 128
        %6314 = vxpose.xlu0.b32.end [16/16] %v4424, 128
        %v6315 = vpop.trf.xlu0
        %v6316 = vpop.trf.xlu0
        %v6317 = vpop.trf.xlu0
        %v6318 = vpop.trf.xlu0
        %v6319 = vpop.trf.xlu0
        %v6320 = vpop.trf.xlu0
        %v6321 = vpop.trf.xlu0
        %v6322 = vpop.trf.xlu0
        %v6323 = vpop.trf.xlu0
        %v6324 = vpop.trf.xlu0
        %v6325 = vpop.trf.xlu0
        %v6326 = vpop.trf.xlu0
        %v6327 = vpop.trf.xlu0
        %v6328 = vpop.trf.xlu0
        %v6329 = vpop.trf.xlu0
        %v6330 = vpop.trf.xlu0
        %6331 = vxpose.xlu0.b32.start [1/16] %v4429, 128
        %6332 = vxpose.xlu0.b32.cont [2/16] %v4434, 128
        %6333 = vxpose.xlu0.b32.cont [3/16] %v4439, 128
        %6334 = vxpose.xlu0.b32.cont [4/16] %v4444, 128
        %6335 = vxpose.xlu0.b32.cont [5/16] %v4449, 128
        %6336 = vxpose.xlu0.b32.cont [6/16] %v4454, 128
        %6337 = vxpose.xlu0.b32.cont [7/16] %v4459, 128
        %6338 = vxpose.xlu0.b32.cont [8/16] %v4464, 128
        %6339 = vxpose.xlu0.b32.cont [9/16] %v4469, 128
        %6340 = vxpose.xlu0.b32.cont [10/16] %v4474, 128
        %6341 = vxpose.xlu0.b32.cont [11/16] %v4479, 128
        %6342 = vxpose.xlu0.b32.cont [12/16] %v4484, 128
        %6343 = vxpose.xlu0.b32.cont [13/16] %v4489, 128
        %6344 = vxpose.xlu0.b32.cont [14/16] %v4494, 128
        %6345 = vxpose.xlu0.b32.cont [15/16] %v4499, 128
        %6346 = vxpose.xlu0.b32.end [16/16] %v4504, 128
        %v6347 = vpop.trf.xlu0
        %v6348 = vpop.trf.xlu0
        %v6349 = vpop.trf.xlu0
        %v6350 = vpop.trf.xlu0
        %v6351 = vpop.trf.xlu0
        %v6352 = vpop.trf.xlu0
        %v6353 = vpop.trf.xlu0
        %v6354 = vpop.trf.xlu0
        %v6355 = vpop.trf.xlu0
        %v6356 = vpop.trf.xlu0
        %v6357 = vpop.trf.xlu0
        %v6358 = vpop.trf.xlu0
        %v6359 = vpop.trf.xlu0
        %v6360 = vpop.trf.xlu0
        %v6361 = vpop.trf.xlu0
        %v6362 = vpop.trf.xlu0
        %6363 = vxpose.xlu0.b32.start [1/16] %v4509, 128
        %6364 = vxpose.xlu0.b32.cont [2/16] %v4514, 128
        %6365 = vxpose.xlu0.b32.cont [3/16] %v4519, 128
        %6366 = vxpose.xlu0.b32.cont [4/16] %v4524, 128
        %6367 = vxpose.xlu0.b32.cont [5/16] %v4529, 128
        %6368 = vxpose.xlu0.b32.cont [6/16] %v4534, 128
        %6369 = vxpose.xlu0.b32.cont [7/16] %v4539, 128
        %6370 = vxpose.xlu0.b32.cont [8/16] %v4544, 128
        %6371 = vxpose.xlu0.b32.cont [9/16] %v4549, 128
        %6372 = vxpose.xlu0.b32.cont [10/16] %v4554, 128
        %6373 = vxpose.xlu0.b32.cont [11/16] %v4559, 128
        %6374 = vxpose.xlu0.b32.cont [12/16] %v4564, 128
        %6375 = vxpose.xlu0.b32.cont [13/16] %v4569, 128
        %6376 = vxpose.xlu0.b32.cont [14/16] %v4574, 128
        %6377 = vxpose.xlu0.b32.cont [15/16] %v4579, 128
        %6378 = vxpose.xlu0.b32.end [16/16] %v4584, 128
        %v6379 = vpop.trf.xlu0
        %v6380 = vpop.trf.xlu0
        %v6381 = vpop.trf.xlu0
        %v6382 = vpop.trf.xlu0
        %v6383 = vpop.trf.xlu0
        %v6384 = vpop.trf.xlu0
        %v6385 = vpop.trf.xlu0
        %v6386 = vpop.trf.xlu0
        %v6387 = vpop.trf.xlu0
        %v6388 = vpop.trf.xlu0
        %v6389 = vpop.trf.xlu0
        %v6390 = vpop.trf.xlu0
        %v6391 = vpop.trf.xlu0
        %v6392 = vpop.trf.xlu0
        %v6393 = vpop.trf.xlu0
        %v6394 = vpop.trf.xlu0
        %6395 = vxpose.xlu0.b32.start [1/16] %v4589, 128
        %6396 = vxpose.xlu0.b32.cont [2/16] %v4594, 128
        %6397 = vxpose.xlu0.b32.cont [3/16] %v4599, 128
        %6398 = vxpose.xlu0.b32.cont [4/16] %v4604, 128
        %6399 = vxpose.xlu0.b32.cont [5/16] %v4609, 128
        %6400 = vxpose.xlu0.b32.cont [6/16] %v4614, 128
        %6401 = vxpose.xlu0.b32.cont [7/16] %v4619, 128
        %6402 = vxpose.xlu0.b32.cont [8/16] %v4624, 128
        %6403 = vxpose.xlu0.b32.cont [9/16] %v4629, 128
        %6404 = vxpose.xlu0.b32.cont [10/16] %v4634, 128
        %6405 = vxpose.xlu0.b32.cont [11/16] %v4639, 128
        %6406 = vxpose.xlu0.b32.cont [12/16] %v4644, 128
        %6407 = vxpose.xlu0.b32.cont [13/16] %v4649, 128
        %6408 = vxpose.xlu0.b32.cont [14/16] %v4654, 128
        %6409 = vxpose.xlu0.b32.cont [15/16] %v4659, 128
        %6410 = vxpose.xlu0.b32.end [16/16] %v4664, 128
        %v6411 = vpop.trf.xlu0
        %v6412 = vpop.trf.xlu0
        %v6413 = vpop.trf.xlu0
        %v6414 = vpop.trf.xlu0
        %v6415 = vpop.trf.xlu0
        %v6416 = vpop.trf.xlu0
        %v6417 = vpop.trf.xlu0
        %v6418 = vpop.trf.xlu0
        %v6419 = vpop.trf.xlu0
        %v6420 = vpop.trf.xlu0
        %v6421 = vpop.trf.xlu0
        %v6422 = vpop.trf.xlu0
        %v6423 = vpop.trf.xlu0
        %v6424 = vpop.trf.xlu0
        %v6425 = vpop.trf.xlu0
        %v6426 = vpop.trf.xlu0
        %6427 = vxpose.xlu0.b32.start [1/16] %v4669, 128
        %6428 = vxpose.xlu0.b32.cont [2/16] %v4674, 128
        %6429 = vxpose.xlu0.b32.cont [3/16] %v4679, 128
        %6430 = vxpose.xlu0.b32.cont [4/16] %v4684, 128
        %6431 = vxpose.xlu0.b32.cont [5/16] %v4689, 128
        %6432 = vxpose.xlu0.b32.cont [6/16] %v4694, 128
        %6433 = vxpose.xlu0.b32.cont [7/16] %v4699, 128
        %6434 = vxpose.xlu0.b32.cont [8/16] %v4704, 128
        %6435 = vxpose.xlu0.b32.cont [9/16] %v4709, 128
        %6436 = vxpose.xlu0.b32.cont [10/16] %v4714, 128
        %6437 = vxpose.xlu0.b32.cont [11/16] %v4719, 128
        %6438 = vxpose.xlu0.b32.cont [12/16] %v4724, 128
        %6439 = vxpose.xlu0.b32.cont [13/16] %v4729, 128
        %6440 = vxpose.xlu0.b32.cont [14/16] %v4734, 128
        %6441 = vxpose.xlu0.b32.cont [15/16] %v4739, 128
        %6442 = vxpose.xlu0.b32.end [16/16] %v4744, 128
        %v6443 = vpop.trf.xlu0
        %v6444 = vpop.trf.xlu0
        %v6445 = vpop.trf.xlu0
        %v6446 = vpop.trf.xlu0
        %v6447 = vpop.trf.xlu0
        %v6448 = vpop.trf.xlu0
        %v6449 = vpop.trf.xlu0
        %v6450 = vpop.trf.xlu0
        %v6451 = vpop.trf.xlu0
        %v6452 = vpop.trf.xlu0
        %v6453 = vpop.trf.xlu0
        %v6454 = vpop.trf.xlu0
        %v6455 = vpop.trf.xlu0
        %v6456 = vpop.trf.xlu0
        %v6457 = vpop.trf.xlu0
        %v6458 = vpop.trf.xlu0
        %6459 = vxpose.xlu0.b32.start [1/16] %v4749, 128
        %6460 = vxpose.xlu0.b32.cont [2/16] %v4754, 128
        %6461 = vxpose.xlu0.b32.cont [3/16] %v4759, 128
        %6462 = vxpose.xlu0.b32.cont [4/16] %v4764, 128
        %6463 = vxpose.xlu0.b32.cont [5/16] %v4769, 128
        %6464 = vxpose.xlu0.b32.cont [6/16] %v4774, 128
        %6465 = vxpose.xlu0.b32.cont [7/16] %v4779, 128
        %6466 = vxpose.xlu0.b32.cont [8/16] %v4784, 128
        %6467 = vxpose.xlu0.b32.cont [9/16] %v4789, 128
        %6468 = vxpose.xlu0.b32.cont [10/16] %v4794, 128
        %6469 = vxpose.xlu0.b32.cont [11/16] %v4799, 128
        %6470 = vxpose.xlu0.b32.cont [12/16] %v4804, 128
        %6471 = vxpose.xlu0.b32.cont [13/16] %v4809, 128
        %6472 = vxpose.xlu0.b32.cont [14/16] %v4814, 128
        %6473 = vxpose.xlu0.b32.cont [15/16] %v4819, 128
        %6474 = vxpose.xlu0.b32.end [16/16] %v4824, 128
        %v6475 = vpop.trf.xlu0
        %v6476 = vpop.trf.xlu0
        %v6477 = vpop.trf.xlu0
        %v6478 = vpop.trf.xlu0
        %v6479 = vpop.trf.xlu0
        %v6480 = vpop.trf.xlu0
        %v6481 = vpop.trf.xlu0
        %v6482 = vpop.trf.xlu0
        %v6483 = vpop.trf.xlu0
        %v6484 = vpop.trf.xlu0
        %v6485 = vpop.trf.xlu0
        %v6486 = vpop.trf.xlu0
        %v6487 = vpop.trf.xlu0
        %v6488 = vpop.trf.xlu0
        %v6489 = vpop.trf.xlu0
        %v6490 = vpop.trf.xlu0
        %6491 = vxpose.xlu0.b32.start [1/16] %v4829, 128
        %6492 = vxpose.xlu0.b32.cont [2/16] %v4834, 128
        %6493 = vxpose.xlu0.b32.cont [3/16] %v4839, 128
        %6494 = vxpose.xlu0.b32.cont [4/16] %v4844, 128
        %6495 = vxpose.xlu0.b32.cont [5/16] %v4849, 128
        %6496 = vxpose.xlu0.b32.cont [6/16] %v4854, 128
        %6497 = vxpose.xlu0.b32.cont [7/16] %v4859, 128
        %6498 = vxpose.xlu0.b32.cont [8/16] %v4864, 128
        %6499 = vxpose.xlu0.b32.cont [9/16] %v4869, 128
        %6500 = vxpose.xlu0.b32.cont [10/16] %v4874, 128
        %6501 = vxpose.xlu0.b32.cont [11/16] %v4879, 128
        %6502 = vxpose.xlu0.b32.cont [12/16] %v4884, 128
        %6503 = vxpose.xlu0.b32.cont [13/16] %v4889, 128
        %6504 = vxpose.xlu0.b32.cont [14/16] %v4894, 128
        %6505 = vxpose.xlu0.b32.cont [15/16] %v4899, 128
        %6506 = vxpose.xlu0.b32.end [16/16] %v4904, 128
        %v6507 = vpop.trf.xlu0
        %v6508 = vpop.trf.xlu0
        %v6509 = vpop.trf.xlu0
        %v6510 = vpop.trf.xlu0
        %v6511 = vpop.trf.xlu0
        %v6512 = vpop.trf.xlu0
        %v6513 = vpop.trf.xlu0
        %v6514 = vpop.trf.xlu0
        %v6515 = vpop.trf.xlu0
        %v6516 = vpop.trf.xlu0
        %v6517 = vpop.trf.xlu0
        %v6518 = vpop.trf.xlu0
        %v6519 = vpop.trf.xlu0
        %v6520 = vpop.trf.xlu0
        %v6521 = vpop.trf.xlu0
        %v6522 = vpop.trf.xlu0
        %6523 = vxpose.xlu0.b32.start [1/16] %v4909, 128
        %6524 = vxpose.xlu0.b32.cont [2/16] %v4914, 128
        %6525 = vxpose.xlu0.b32.cont [3/16] %v4919, 128
        %6526 = vxpose.xlu0.b32.cont [4/16] %v4924, 128
        %6527 = vxpose.xlu0.b32.cont [5/16] %v4929, 128
        %6528 = vxpose.xlu0.b32.cont [6/16] %v4934, 128
        %6529 = vxpose.xlu0.b32.cont [7/16] %v4939, 128
        %6530 = vxpose.xlu0.b32.cont [8/16] %v4944, 128
        %6531 = vxpose.xlu0.b32.cont [9/16] %v4949, 128
        %6532 = vxpose.xlu0.b32.cont [10/16] %v4954, 128
        %6533 = vxpose.xlu0.b32.cont [11/16] %v4959, 128
        %6534 = vxpose.xlu0.b32.cont [12/16] %v4964, 128
        %6535 = vxpose.xlu0.b32.cont [13/16] %v4969, 128
        %6536 = vxpose.xlu0.b32.cont [14/16] %v4974, 128
        %6537 = vxpose.xlu0.b32.cont [15/16] %v4979, 128
        %6538 = vxpose.xlu0.b32.end [16/16] %v4984, 128
        %v6539 = vpop.trf.xlu0
        %v6540 = vpop.trf.xlu0
        %v6541 = vpop.trf.xlu0
        %v6542 = vpop.trf.xlu0
        %v6543 = vpop.trf.xlu0
        %v6544 = vpop.trf.xlu0
        %v6545 = vpop.trf.xlu0
        %v6546 = vpop.trf.xlu0
        %v6547 = vpop.trf.xlu0
        %v6548 = vpop.trf.xlu0
        %v6549 = vpop.trf.xlu0
        %v6550 = vpop.trf.xlu0
        %v6551 = vpop.trf.xlu0
        %v6552 = vpop.trf.xlu0
        %v6553 = vpop.trf.xlu0
        %v6554 = vpop.trf.xlu0
        %s6555 = sld [smem:[#allocation2]]
        %v6556 = vstv %s6555
        %v6557 = vadd.f32 %v5003, %v6556
        %v6558 = vadd.f32 %v5035, %v6556
        %v6559 = vadd.f32 %v5067, %v6556
        %v6560 = vadd.f32 %v5099, %v6556
        %v6561 = vadd.f32 %v5131, %v6556
        %v6562 = vadd.f32 %v5163, %v6556
        %v6563 = vadd.f32 %v5195, %v6556
        %v6564 = vadd.f32 %v5227, %v6556
        %v6565 = vadd.f32 %v5259, %v6556
        %v6566 = vadd.f32 %v5291, %v6556
        %v6567 = vadd.f32 %v5323, %v6556
        %v6568 = vadd.f32 %v5355, %v6556
        %v6569 = vadd.f32 %v5387, %v6556
        %v6570 = vadd.f32 %v5419, %v6556
        %v6571 = vadd.f32 %v5451, %v6556
        %v6572 = vadd.f32 %v5483, %v6556
        %v6573 = vadd.f32 %v5515, %v6556
        %v6574 = vadd.f32 %v5547, %v6556
        %v6575 = vadd.f32 %v5579, %v6556
        %v6576 = vadd.f32 %v5611, %v6556
        %v6577 = vadd.f32 %v5643, %v6556
        %v6578 = vadd.f32 %v5675, %v6556
        %v6579 = vadd.f32 %v5707, %v6556
        %v6580 = vadd.f32 %v5739, %v6556
        %v6581 = vadd.f32 %v5771, %v6556
        %v6582 = vadd.f32 %v5803, %v6556
        %v6583 = vadd.f32 %v5835, %v6556
        %v6584 = vadd.f32 %v5867, %v6556
        %v6585 = vadd.f32 %v5899, %v6556
        %v6586 = vadd.f32 %v5931, %v6556
        %v6587 = vadd.f32 %v5963, %v6556
        %v6588 = vadd.f32 %v5995, %v6556
        %v6589 = vadd.f32 %v6027, %v6556
        %v6590 = vadd.f32 %v6059, %v6556
        %v6591 = vadd.f32 %v6091, %v6556
        %v6592 = vadd.f32 %v6123, %v6556
        %v6593 = vadd.f32 %v6155, %v6556
        %v6594 = vadd.f32 %v6187, %v6556
        %v6595 = vadd.f32 %v6219, %v6556
        %v6596 = vadd.f32 %v6251, %v6556
        %v6597 = vadd.f32 %v6283, %v6556
        %v6598 = vadd.f32 %v6315, %v6556
        %v6599 = vadd.f32 %v6347, %v6556
        %v6600 = vadd.f32 %v6379, %v6556
        %v6601 = vadd.f32 %v6411, %v6556
        %v6602 = vadd.f32 %v6443, %v6556
        %v6603 = vadd.f32 %v6475, %v6556
        %v6604 = vadd.f32 %v6507, %v6556
        %v6605 = vadd.f32 %v6539, %v6556
        %v6606 = vadd.f32 %v5004, %v6556
        %v6607 = vadd.f32 %v5036, %v6556
        %v6608 = vadd.f32 %v5068, %v6556
        %v6609 = vadd.f32 %v5100, %v6556
        %v6610 = vadd.f32 %v5132, %v6556
        %v6611 = vadd.f32 %v5164, %v6556
        %v6612 = vadd.f32 %v5196, %v6556
        %v6613 = vadd.f32 %v5228, %v6556
        %v6614 = vadd.f32 %v5260, %v6556
        %v6615 = vadd.f32 %v5292, %v6556
        %v6616 = vadd.f32 %v5324, %v6556
        %v6617 = vadd.f32 %v5356, %v6556
        %v6618 = vadd.f32 %v5388, %v6556
        %v6619 = vadd.f32 %v5420, %v6556
        %v6620 = vadd.f32 %v5452, %v6556
        %v6621 = vadd.f32 %v5484, %v6556
        %v6622 = vadd.f32 %v5516, %v6556
        %v6623 = vadd.f32 %v5548, %v6556
        %v6624 = vadd.f32 %v5580, %v6556
        %v6625 = vadd.f32 %v5612, %v6556
        %v6626 = vadd.f32 %v5644, %v6556
        %v6627 = vadd.f32 %v5676, %v6556
        %v6628 = vadd.f32 %v5708, %v6556
        %v6629 = vadd.f32 %v5740, %v6556
        %v6630 = vadd.f32 %v5772, %v6556
        %v6631 = vadd.f32 %v5804, %v6556
        %v6632 = vadd.f32 %v5836, %v6556
        %v6633 = vadd.f32 %v5868, %v6556
        %v6634 = vadd.f32 %v5900, %v6556
        %v6635 = vadd.f32 %v5932, %v6556
        %v6636 = vadd.f32 %v5964, %v6556
        %v6637 = vadd.f32 %v5996, %v6556
        %v6638 = vadd.f32 %v6028, %v6556
        %v6639 = vadd.f32 %v6060, %v6556
        %v6640 = vadd.f32 %v6092, %v6556
        %v6641 = vadd.f32 %v6124, %v6556
        %v6642 = vadd.f32 %v6156, %v6556
        %v6643 = vadd.f32 %v6188, %v6556
        %v6644 = vadd.f32 %v6220, %v6556
        %v6645 = vadd.f32 %v6252, %v6556
        %v6646 = vadd.f32 %v6284, %v6556
        %v6647 = vadd.f32 %v6316, %v6556
        %v6648 = vadd.f32 %v6348, %v6556
        %v6649 = vadd.f32 %v6380, %v6556
        %v6650 = vadd.f32 %v6412, %v6556
        %v6651 = vadd.f32 %v6444, %v6556
        %v6652 = vadd.f32 %v6476, %v6556
        %v6653 = vadd.f32 %v6508, %v6556
        %v6654 = vadd.f32 %v6540, %v6556
        %v6655 = vxor.u32 %v6557, 2147483648
        %v6656 = vxor.u32 %v6558, 2147483648
        %v6657 = vxor.u32 %v6559, 2147483648
        %v6658 = vxor.u32 %v6560, 2147483648
        %v6659 = vxor.u32 %v6561, 2147483648
        %v6660 = vxor.u32 %v6562, 2147483648
        %v6661 = vxor.u32 %v6563, 2147483648
        %v6662 = vxor.u32 %v6564, 2147483648
        %v6663 = vxor.u32 %v6565, 2147483648
        %v6664 = vxor.u32 %v6566, 2147483648
        %v6665 = vxor.u32 %v6567, 2147483648
        %v6666 = vxor.u32 %v6568, 2147483648
        %v6667 = vxor.u32 %v6569, 2147483648
        %v6668 = vxor.u32 %v6570, 2147483648
        %v6669 = vxor.u32 %v6571, 2147483648
        %v6670 = vxor.u32 %v6572, 2147483648
        %v6671 = vxor.u32 %v6573, 2147483648
        %v6672 = vxor.u32 %v6574, 2147483648
        %v6673 = vxor.u32 %v6575, 2147483648
        %v6674 = vxor.u32 %v6576, 2147483648
        %v6675 = vxor.u32 %v6577, 2147483648
        %v6676 = vxor.u32 %v6578, 2147483648
        %v6677 = vxor.u32 %v6579, 2147483648
        %v6678 = vxor.u32 %v6580, 2147483648
        %v6679 = vxor.u32 %v6581, 2147483648
        %v6680 = vxor.u32 %v6582, 2147483648
        %v6681 = vxor.u32 %v6583, 2147483648
        %v6682 = vxor.u32 %v6584, 2147483648
        %v6683 = vxor.u32 %v6585, 2147483648
        %v6684 = vxor.u32 %v6586, 2147483648
        %v6685 = vxor.u32 %v6587, 2147483648
        %v6686 = vxor.u32 %v6588, 2147483648
        %v6687 = vxor.u32 %v6589, 2147483648
        %v6688 = vxor.u32 %v6590, 2147483648
        %v6689 = vxor.u32 %v6591, 2147483648
        %v6690 = vxor.u32 %v6592, 2147483648
        %v6691 = vxor.u32 %v6593, 2147483648
        %v6692 = vxor.u32 %v6594, 2147483648
        %v6693 = vxor.u32 %v6595, 2147483648
        %v6694 = vxor.u32 %v6596, 2147483648
        %v6695 = vxor.u32 %v6597, 2147483648
        %v6696 = vxor.u32 %v6598, 2147483648
        %v6697 = vxor.u32 %v6599, 2147483648
        %v6698 = vxor.u32 %v6600, 2147483648
        %v6699 = vxor.u32 %v6601, 2147483648
        %v6700 = vxor.u32 %v6602, 2147483648
        %v6701 = vxor.u32 %v6603, 2147483648
        %v6702 = vxor.u32 %v6604, 2147483648
        %v6703 = vxor.u32 %v6605, 2147483648
        %v6704 = vxor.u32 %v6606, 2147483648
        %v6705 = vxor.u32 %v6607, 2147483648
        %v6706 = vxor.u32 %v6608, 2147483648
        %v6707 = vxor.u32 %v6609, 2147483648
        %v6708 = vxor.u32 %v6610, 2147483648
        %v6709 = vxor.u32 %v6611, 2147483648
        %v6710 = vxor.u32 %v6612, 2147483648
        %v6711 = vxor.u32 %v6613, 2147483648
        %v6712 = vxor.u32 %v6614, 2147483648
        %v6713 = vxor.u32 %v6615, 2147483648
        %v6714 = vxor.u32 %v6616, 2147483648
        %v6715 = vxor.u32 %v6617, 2147483648
        %v6716 = vxor.u32 %v6618, 2147483648
        %v6717 = vxor.u32 %v6619, 2147483648
        %v6718 = vxor.u32 %v6620, 2147483648
        %v6719 = vxor.u32 %v6621, 2147483648
        %v6720 = vxor.u32 %v6622, 2147483648
        %v6721 = vxor.u32 %v6623, 2147483648
        %v6722 = vxor.u32 %v6624, 2147483648
        %v6723 = vxor.u32 %v6625, 2147483648
        %v6724 = vxor.u32 %v6626, 2147483648
        %v6725 = vxor.u32 %v6627, 2147483648
        %v6726 = vxor.u32 %v6628, 2147483648
        %v6727 = vxor.u32 %v6629, 2147483648
        %v6728 = vxor.u32 %v6630, 2147483648
        %v6729 = vxor.u32 %v6631, 2147483648
        %v6730 = vxor.u32 %v6632, 2147483648
        %v6731 = vxor.u32 %v6633, 2147483648
        %v6732 = vxor.u32 %v6634, 2147483648
        %v6733 = vxor.u32 %v6635, 2147483648
        %v6734 = vxor.u32 %v6636, 2147483648
        %v6735 = vxor.u32 %v6637, 2147483648
        %v6736 = vxor.u32 %v6638, 2147483648
        %v6737 = vxor.u32 %v6639, 2147483648
        %v6738 = vxor.u32 %v6640, 2147483648
        %v6739 = vxor.u32 %v6641, 2147483648
        %v6740 = vxor.u32 %v6642, 2147483648
        %v6741 = vxor.u32 %v6643, 2147483648
        %v6742 = vxor.u32 %v6644, 2147483648
        %v6743 = vxor.u32 %v6645, 2147483648
        %v6744 = vxor.u32 %v6646, 2147483648
        %v6745 = vxor.u32 %v6647, 2147483648
        %v6746 = vxor.u32 %v6648, 2147483648
        %v6747 = vxor.u32 %v6649, 2147483648
        %v6748 = vxor.u32 %v6650, 2147483648
        %v6749 = vxor.u32 %v6651, 2147483648
        %v6750 = vxor.u32 %v6652, 2147483648
        %v6751 = vxor.u32 %v6653, 2147483648
        %v6752 = vxor.u32 %v6654, 2147483648
        %v6753 = vmul.f32 %v6655, 1.442695
        %v6754 = vpow.pop %v6753
        %v6755 = vmul.f32 %v6656, 1.442695
        %v6756 = vpow.pop %v6755
        %v6757 = vmul.f32 %v6657, 1.442695
        %v6758 = vpow.pop %v6757
        %v6759 = vmul.f32 %v6658, 1.442695
        %v6760 = vpow.pop %v6759
        %v6761 = vmul.f32 %v6659, 1.442695
        %v6762 = vpow.pop %v6761
        %v6763 = vmul.f32 %v6660, 1.442695
        %v6764 = vpow.pop %v6763
        %v6765 = vmul.f32 %v6661, 1.442695
        %v6766 = vpow.pop %v6765
        %v6767 = vmul.f32 %v6662, 1.442695
        %v6768 = vpow.pop %v6767
        %v6769 = vmul.f32 %v6663, 1.442695
        %v6770 = vpow.pop %v6769
        %v6771 = vmul.f32 %v6664, 1.442695
        %v6772 = vpow.pop %v6771
        %v6773 = vmul.f32 %v6665, 1.442695
        %v6774 = vpow.pop %v6773
        %v6775 = vmul.f32 %v6666, 1.442695
        %v6776 = vpow.pop %v6775
        %v6777 = vmul.f32 %v6667, 1.442695
        %v6778 = vpow.pop %v6777
        %v6779 = vmul.f32 %v6668, 1.442695
        %v6780 = vpow.pop %v6779
        %v6781 = vmul.f32 %v6669, 1.442695
        %v6782 = vpow.pop %v6781
        %v6783 = vmul.f32 %v6670, 1.442695
        %v6784 = vpow.pop %v6783
        %v6785 = vmul.f32 %v6671, 1.442695
        %v6786 = vpow.pop %v6785
        %v6787 = vmul.f32 %v6672, 1.442695
        %v6788 = vpow.pop %v6787
        %v6789 = vmul.f32 %v6673, 1.442695
        %v6790 = vpow.pop %v6789
        %v6791 = vmul.f32 %v6674, 1.442695
        %v6792 = vpow.pop %v6791
        %v6793 = vmul.f32 %v6675, 1.442695
        %v6794 = vpow.pop %v6793
        %v6795 = vmul.f32 %v6676, 1.442695
        %v6796 = vpow.pop %v6795
        %v6797 = vmul.f32 %v6677, 1.442695
        %v6798 = vpow.pop %v6797
        %v6799 = vmul.f32 %v6678, 1.442695
        %v6800 = vpow.pop %v6799
        %v6801 = vmul.f32 %v6679, 1.442695
        %v6802 = vpow.pop %v6801
        %v6803 = vmul.f32 %v6680, 1.442695
        %v6804 = vpow.pop %v6803
        %v6805 = vmul.f32 %v6681, 1.442695
        %v6806 = vpow.pop %v6805
        %v6807 = vmul.f32 %v6682, 1.442695
        %v6808 = vpow.pop %v6807
        %v6809 = vmul.f32 %v6683, 1.442695
        %v6810 = vpow.pop %v6809
        %v6811 = vmul.f32 %v6684, 1.442695
        %v6812 = vpow.pop %v6811
        %v6813 = vmul.f32 %v6685, 1.442695
        %v6814 = vpow.pop %v6813
        %v6815 = vmul.f32 %v6686, 1.442695
        %v6816 = vpow.pop %v6815
        %v6817 = vmul.f32 %v6687, 1.442695
        %v6818 = vpow.pop %v6817
        %v6819 = vmul.f32 %v6688, 1.442695
        %v6820 = vpow.pop %v6819
        %v6821 = vmul.f32 %v6689, 1.442695
        %v6822 = vpow.pop %v6821
        %v6823 = vmul.f32 %v6690, 1.442695
        %v6824 = vpow.pop %v6823
        %v6825 = vmul.f32 %v6691, 1.442695
        %v6826 = vpow.pop %v6825
        %v6827 = vmul.f32 %v6692, 1.442695
        %v6828 = vpow.pop %v6827
        %v6829 = vmul.f32 %v6693, 1.442695
        %v6830 = vpow.pop %v6829
        %v6831 = vmul.f32 %v6694, 1.442695
        %v6832 = vpow.pop %v6831
        %v6833 = vmul.f32 %v6695, 1.442695
        %v6834 = vpow.pop %v6833
        %v6835 = vmul.f32 %v6696, 1.442695
        %v6836 = vpow.pop %v6835
        %v6837 = vmul.f32 %v6697, 1.442695
        %v6838 = vpow.pop %v6837
        %v6839 = vmul.f32 %v6698, 1.442695
        %v6840 = vpow.pop %v6839
        %v6841 = vmul.f32 %v6699, 1.442695
        %v6842 = vpow.pop %v6841
        %v6843 = vmul.f32 %v6700, 1.442695
        %v6844 = vpow.pop %v6843
        %v6845 = vmul.f32 %v6701, 1.442695
        %v6846 = vpow.pop %v6845
        %v6847 = vmul.f32 %v6702, 1.442695
        %v6848 = vpow.pop %v6847
        %v6849 = vmul.f32 %v6703, 1.442695
        %v6850 = vpow.pop %v6849
        %v6851 = vmul.f32 %v6704, 1.442695
        %v6852 = vpow.pop %v6851
        %v6853 = vmul.f32 %v6705, 1.442695
        %v6854 = vpow.pop %v6853
        %v6855 = vmul.f32 %v6706, 1.442695
        %v6856 = vpow.pop %v6855
        %v6857 = vmul.f32 %v6707, 1.442695
        %v6858 = vpow.pop %v6857
        %v6859 = vmul.f32 %v6708, 1.442695
        %v6860 = vpow.pop %v6859
        %v6861 = vmul.f32 %v6709, 1.442695
        %v6862 = vpow.pop %v6861
        %v6863 = vmul.f32 %v6710, 1.442695
        %v6864 = vpow.pop %v6863
        %v6865 = vmul.f32 %v6711, 1.442695
        %v6866 = vpow.pop %v6865
        %v6867 = vmul.f32 %v6712, 1.442695
        %v6868 = vpow.pop %v6867
        %v6869 = vmul.f32 %v6713, 1.442695
        %v6870 = vpow.pop %v6869
        %v6871 = vmul.f32 %v6714, 1.442695
        %v6872 = vpow.pop %v6871
        %v6873 = vmul.f32 %v6715, 1.442695
        %v6874 = vpow.pop %v6873
        %v6875 = vmul.f32 %v6716, 1.442695
        %v6876 = vpow.pop %v6875
        %v6877 = vmul.f32 %v6717, 1.442695
        %v6878 = vpow.pop %v6877
        %v6879 = vmul.f32 %v6718, 1.442695
        %v6880 = vpow.pop %v6879
        %v6881 = vmul.f32 %v6719, 1.442695
        %v6882 = vpow.pop %v6881
        %v6883 = vmul.f32 %v6720, 1.442695
        %v6884 = vpow.pop %v6883
        %v6885 = vmul.f32 %v6721, 1.442695
        %v6886 = vpow.pop %v6885
        %v6887 = vmul.f32 %v6722, 1.442695
        %v6888 = vpow.pop %v6887
        %v6889 = vmul.f32 %v6723, 1.442695
        %v6890 = vpow.pop %v6889
        %v6891 = vmul.f32 %v6724, 1.442695
        %v6892 = vpow.pop %v6891
        %v6893 = vmul.f32 %v6725, 1.442695
        %v6894 = vpow.pop %v6893
        %v6895 = vmul.f32 %v6726, 1.442695
        %v6896 = vpow.pop %v6895
        %v6897 = vmul.f32 %v6727, 1.442695
        %v6898 = vpow.pop %v6897
        %v6899 = vmul.f32 %v6728, 1.442695
        %v6900 = vpow.pop %v6899
        %v6901 = vmul.f32 %v6729, 1.442695
        %v6902 = vpow.pop %v6901
        %v6903 = vmul.f32 %v6730, 1.442695
        %v6904 = vpow.pop %v6903
        %v6905 = vmul.f32 %v6731, 1.442695
        %v6906 = vpow.pop %v6905
        %v6907 = vmul.f32 %v6732, 1.442695
        %v6908 = vpow.pop %v6907
        %v6909 = vmul.f32 %v6733, 1.442695
        %v6910 = vpow.pop %v6909
        %v6911 = vmul.f32 %v6734, 1.442695
        %v6912 = vpow.pop %v6911
        %v6913 = vmul.f32 %v6735, 1.442695
        %v6914 = vpow.pop %v6913
        %v6915 = vmul.f32 %v6736, 1.442695
        %v6916 = vpow.pop %v6915
        %v6917 = vmul.f32 %v6737, 1.442695
        %v6918 = vpow.pop %v6917
        %v6919 = vmul.f32 %v6738, 1.442695
        %v6920 = vpow.pop %v6919
        %v6921 = vmul.f32 %v6739, 1.442695
        %v6922 = vpow.pop %v6921
        %v6923 = vmul.f32 %v6740, 1.442695
        %v6924 = vpow.pop %v6923
        %v6925 = vmul.f32 %v6741, 1.442695
        %v6926 = vpow.pop %v6925
        %v6927 = vmul.f32 %v6742, 1.442695
        %v6928 = vpow.pop %v6927
        %v6929 = vmul.f32 %v6743, 1.442695
        %v6930 = vpow.pop %v6929
        %v6931 = vmul.f32 %v6744, 1.442695
        %v6932 = vpow.pop %v6931
        %v6933 = vmul.f32 %v6745, 1.442695
        %v6934 = vpow.pop %v6933
        %v6935 = vmul.f32 %v6746, 1.442695
        %v6936 = vpow.pop %v6935
        %v6937 = vmul.f32 %v6747, 1.442695
        %v6938 = vpow.pop %v6937
        %v6939 = vmul.f32 %v6748, 1.442695
        %v6940 = vpow.pop %v6939
        %v6941 = vmul.f32 %v6749, 1.442695
        %v6942 = vpow.pop %v6941
        %v6943 = vmul.f32 %v6750, 1.442695
        %v6944 = vpow.pop %v6943
        %v6945 = vmul.f32 %v6751, 1.442695
        %v6946 = vpow.pop %v6945
        %v6947 = vmul.f32 %v6752, 1.442695
        %v6948 = vpow.pop %v6947
        %v6949 = vadd.f32 %v6754, 1.0
        %v6950 = vadd.f32 %v6756, 1.0
        %v6951 = vadd.f32 %v6758, 1.0
        %v6952 = vadd.f32 %v6760, 1.0
        %v6953 = vadd.f32 %v6762, 1.0
        %v6954 = vadd.f32 %v6764, 1.0
        %v6955 = vadd.f32 %v6766, 1.0
        %v6956 = vadd.f32 %v6768, 1.0
        %v6957 = vadd.f32 %v6770, 1.0
        %v6958 = vadd.f32 %v6772, 1.0
        %v6959 = vadd.f32 %v6774, 1.0
        %v6960 = vadd.f32 %v6776, 1.0
        %v6961 = vadd.f32 %v6778, 1.0
        %v6962 = vadd.f32 %v6780, 1.0
        %v6963 = vadd.f32 %v6782, 1.0
        %v6964 = vadd.f32 %v6784, 1.0
        %v6965 = vadd.f32 %v6786, 1.0
        %v6966 = vadd.f32 %v6788, 1.0
        %v6967 = vadd.f32 %v6790, 1.0
        %v6968 = vadd.f32 %v6792, 1.0
        %v6969 = vadd.f32 %v6794, 1.0
        %v6970 = vadd.f32 %v6796, 1.0
        %v6971 = vadd.f32 %v6798, 1.0
        %v6972 = vadd.f32 %v6800, 1.0
        %v6973 = vadd.f32 %v6802, 1.0
        %v6974 = vadd.f32 %v6804, 1.0
        %v6975 = vadd.f32 %v6806, 1.0
        %v6976 = vadd.f32 %v6808, 1.0
        %v6977 = vadd.f32 %v6810, 1.0
        %v6978 = vadd.f32 %v6812, 1.0
        %v6979 = vadd.f32 %v6814, 1.0
        %v6980 = vadd.f32 %v6816, 1.0
        %v6981 = vadd.f32 %v6818, 1.0
        %v6982 = vadd.f32 %v6820, 1.0
        %v6983 = vadd.f32 %v6822, 1.0
        %v6984 = vadd.f32 %v6824, 1.0
        %v6985 = vadd.f32 %v6826, 1.0
        %v6986 = vadd.f32 %v6828, 1.0
        %v6987 = vadd.f32 %v6830, 1.0
        %v6988 = vadd.f32 %v6832, 1.0
        %v6989 = vadd.f32 %v6834, 1.0
        %v6990 = vadd.f32 %v6836, 1.0
        %v6991 = vadd.f32 %v6838, 1.0
        %v6992 = vadd.f32 %v6840, 1.0
        %v6993 = vadd.f32 %v6842, 1.0
        %v6994 = vadd.f32 %v6844, 1.0
        %v6995 = vadd.f32 %v6846, 1.0
        %v6996 = vadd.f32 %v6848, 1.0
        %v6997 = vadd.f32 %v6850, 1.0
        %v6998 = vadd.f32 %v6852, 1.0
        %v6999 = vadd.f32 %v6854, 1.0
        %v7000 = vadd.f32 %v6856, 1.0
        %v7001 = vadd.f32 %v6858, 1.0
        %v7002 = vadd.f32 %v6860, 1.0
        %v7003 = vadd.f32 %v6862, 1.0
        %v7004 = vadd.f32 %v6864, 1.0
        %v7005 = vadd.f32 %v6866, 1.0
        %v7006 = vadd.f32 %v6868, 1.0
        %v7007 = vadd.f32 %v6870, 1.0
        %v7008 = vadd.f32 %v6872, 1.0
        %v7009 = vadd.f32 %v6874, 1.0
        %v7010 = vadd.f32 %v6876, 1.0
        %v7011 = vadd.f32 %v6878, 1.0
        %v7012 = vadd.f32 %v6880, 1.0
        %v7013 = vadd.f32 %v6882, 1.0
        %v7014 = vadd.f32 %v6884, 1.0
        %v7015 = vadd.f32 %v6886, 1.0
        %v7016 = vadd.f32 %v6888, 1.0
        %v7017 = vadd.f32 %v6890, 1.0
        %v7018 = vadd.f32 %v6892, 1.0
        %v7019 = vadd.f32 %v6894, 1.0
        %v7020 = vadd.f32 %v6896, 1.0
        %v7021 = vadd.f32 %v6898, 1.0
        %v7022 = vadd.f32 %v6900, 1.0
        %v7023 = vadd.f32 %v6902, 1.0
        %v7024 = vadd.f32 %v6904, 1.0
        %v7025 = vadd.f32 %v6906, 1.0
        %v7026 = vadd.f32 %v6908, 1.0
        %v7027 = vadd.f32 %v6910, 1.0
        %v7028 = vadd.f32 %v6912, 1.0
        %v7029 = vadd.f32 %v6914, 1.0
        %v7030 = vadd.f32 %v6916, 1.0
        %v7031 = vadd.f32 %v6918, 1.0
        %v7032 = vadd.f32 %v6920, 1.0
        %v7033 = vadd.f32 %v6922, 1.0
        %v7034 = vadd.f32 %v6924, 1.0
        %v7035 = vadd.f32 %v6926, 1.0
        %v7036 = vadd.f32 %v6928, 1.0
        %v7037 = vadd.f32 %v6930, 1.0
        %v7038 = vadd.f32 %v6932, 1.0
        %v7039 = vadd.f32 %v6934, 1.0
        %v7040 = vadd.f32 %v6936, 1.0
        %v7041 = vadd.f32 %v6938, 1.0
        %v7042 = vadd.f32 %v6940, 1.0
        %v7043 = vadd.f32 %v6942, 1.0
        %v7044 = vadd.f32 %v6944, 1.0
        %v7045 = vadd.f32 %v6946, 1.0
        %v7046 = vadd.f32 %v6948, 1.0
        %v7047 = vrcp.pop %v6949
        %v7048 = vmul.f32 1.0, %v7047
        %v7049 = vrcp.pop %v6950
        %v7050 = vmul.f32 1.0, %v7049
        %v7051 = vrcp.pop %v6951
        %v7052 = vmul.f32 1.0, %v7051
        %v7053 = vrcp.pop %v6952
        %v7054 = vmul.f32 1.0, %v7053
        %v7055 = vrcp.pop %v6953
        %v7056 = vmul.f32 1.0, %v7055
        %v7057 = vrcp.pop %v6954
        %v7058 = vmul.f32 1.0, %v7057
        %v7059 = vrcp.pop %v6955
        %v7060 = vmul.f32 1.0, %v7059
        %v7061 = vrcp.pop %v6956
        %v7062 = vmul.f32 1.0, %v7061
        %v7063 = vrcp.pop %v6957
        %v7064 = vmul.f32 1.0, %v7063
        %v7065 = vrcp.pop %v6958
        %v7066 = vmul.f32 1.0, %v7065
        %v7067 = vrcp.pop %v6959
        %v7068 = vmul.f32 1.0, %v7067
        %v7069 = vrcp.pop %v6960
        %v7070 = vmul.f32 1.0, %v7069
        %v7071 = vrcp.pop %v6961
        %v7072 = vmul.f32 1.0, %v7071
        %v7073 = vrcp.pop %v6962
        %v7074 = vmul.f32 1.0, %v7073
        %v7075 = vrcp.pop %v6963
        %v7076 = vmul.f32 1.0, %v7075
        %v7077 = vrcp.pop %v6964
        %v7078 = vmul.f32 1.0, %v7077
        %v7079 = vrcp.pop %v6965
        %v7080 = vmul.f32 1.0, %v7079
        %v7081 = vrcp.pop %v6966
        %v7082 = vmul.f32 1.0, %v7081
        %v7083 = vrcp.pop %v6967
        %v7084 = vmul.f32 1.0, %v7083
        %v7085 = vrcp.pop %v6968
        %v7086 = vmul.f32 1.0, %v7085
        %v7087 = vrcp.pop %v6969
        %v7088 = vmul.f32 1.0, %v7087
        %v7089 = vrcp.pop %v6970
        %v7090 = vmul.f32 1.0, %v7089
        %v7091 = vrcp.pop %v6971
        %v7092 = vmul.f32 1.0, %v7091
        %v7093 = vrcp.pop %v6972
        %v7094 = vmul.f32 1.0, %v7093
        %v7095 = vrcp.pop %v6973
        %v7096 = vmul.f32 1.0, %v7095
        %v7097 = vrcp.pop %v6974
        %v7098 = vmul.f32 1.0, %v7097
        %v7099 = vrcp.pop %v6975
        %v7100 = vmul.f32 1.0, %v7099
        %v7101 = vrcp.pop %v6976
        %v7102 = vmul.f32 1.0, %v7101
        %v7103 = vrcp.pop %v6977
        %v7104 = vmul.f32 1.0, %v7103
        %v7105 = vrcp.pop %v6978
        %v7106 = vmul.f32 1.0, %v7105
        %v7107 = vrcp.pop %v6979
        %v7108 = vmul.f32 1.0, %v7107
        %v7109 = vrcp.pop %v6980
        %v7110 = vmul.f32 1.0, %v7109
        %v7111 = vrcp.pop %v6981
        %v7112 = vmul.f32 1.0, %v7111
        %v7113 = vrcp.pop %v6982
        %v7114 = vmul.f32 1.0, %v7113
        %v7115 = vrcp.pop %v6983
        %v7116 = vmul.f32 1.0, %v7115
        %v7117 = vrcp.pop %v6984
        %v7118 = vmul.f32 1.0, %v7117
        %v7119 = vrcp.pop %v6985
        %v7120 = vmul.f32 1.0, %v7119
        %v7121 = vrcp.pop %v6986
        %v7122 = vmul.f32 1.0, %v7121
        %v7123 = vrcp.pop %v6987
        %v7124 = vmul.f32 1.0, %v7123
        %v7125 = vrcp.pop %v6988
        %v7126 = vmul.f32 1.0, %v7125
        %v7127 = vrcp.pop %v6989
        %v7128 = vmul.f32 1.0, %v7127
        %v7129 = vrcp.pop %v6990
        %v7130 = vmul.f32 1.0, %v7129
        %v7131 = vrcp.pop %v6991
        %v7132 = vmul.f32 1.0, %v7131
        %v7133 = vrcp.pop %v6992
        %v7134 = vmul.f32 1.0, %v7133
        %v7135 = vrcp.pop %v6993
        %v7136 = vmul.f32 1.0, %v7135
        %v7137 = vrcp.pop %v6994
        %v7138 = vmul.f32 1.0, %v7137
        %v7139 = vrcp.pop %v6995
        %v7140 = vmul.f32 1.0, %v7139
        %v7141 = vrcp.pop %v6996
        %v7142 = vmul.f32 1.0, %v7141
        %v7143 = vrcp.pop %v6997
        %v7144 = vmul.f32 1.0, %v7143
        %v7145 = vrcp.pop %v6998
        %v7146 = vmul.f32 1.0, %v7145
        %v7147 = vrcp.pop %v6999
        %v7148 = vmul.f32 1.0, %v7147
        %v7149 = vrcp.pop %v7000
        %v7150 = vmul.f32 1.0, %v7149
        %v7151 = vrcp.pop %v7001
        %v7152 = vmul.f32 1.0, %v7151
        %v7153 = vrcp.pop %v7002
        %v7154 = vmul.f32 1.0, %v7153
        %v7155 = vrcp.pop %v7003
        %v7156 = vmul.f32 1.0, %v7155
        %v7157 = vrcp.pop %v7004
        %v7158 = vmul.f32 1.0, %v7157
        %v7159 = vrcp.pop %v7005
        %v7160 = vmul.f32 1.0, %v7159
        %v7161 = vrcp.pop %v7006
        %v7162 = vmul.f32 1.0, %v7161
        %v7163 = vrcp.pop %v7007
        %v7164 = vmul.f32 1.0, %v7163
        %v7165 = vrcp.pop %v7008
        %v7166 = vmul.f32 1.0, %v7165
        %v7167 = vrcp.pop %v7009
        %v7168 = vmul.f32 1.0, %v7167
        %v7169 = vrcp.pop %v7010
        %v7170 = vmul.f32 1.0, %v7169
        %v7171 = vrcp.pop %v7011
        %v7172 = vmul.f32 1.0, %v7171
        %v7173 = vrcp.pop %v7012
        %v7174 = vmul.f32 1.0, %v7173
        %v7175 = vrcp.pop %v7013
        %v7176 = vmul.f32 1.0, %v7175
        %v7177 = vrcp.pop %v7014
        %v7178 = vmul.f32 1.0, %v7177
        %v7179 = vrcp.pop %v7015
        %v7180 = vmul.f32 1.0, %v7179
        %v7181 = vrcp.pop %v7016
        %v7182 = vmul.f32 1.0, %v7181
        %v7183 = vrcp.pop %v7017
        %v7184 = vmul.f32 1.0, %v7183
        %v7185 = vrcp.pop %v7018
        %v7186 = vmul.f32 1.0, %v7185
        %v7187 = vrcp.pop %v7019
        %v7188 = vmul.f32 1.0, %v7187
        %v7189 = vrcp.pop %v7020
        %v7190 = vmul.f32 1.0, %v7189
        %v7191 = vrcp.pop %v7021
        %v7192 = vmul.f32 1.0, %v7191
        %v7193 = vrcp.pop %v7022
        %v7194 = vmul.f32 1.0, %v7193
        %v7195 = vrcp.pop %v7023
        %v7196 = vmul.f32 1.0, %v7195
        %v7197 = vrcp.pop %v7024
        %v7198 = vmul.f32 1.0, %v7197
        %v7199 = vrcp.pop %v7025
        %v7200 = vmul.f32 1.0, %v7199
        %v7201 = vrcp.pop %v7026
        %v7202 = vmul.f32 1.0, %v7201
        %v7203 = vrcp.pop %v7027
        %v7204 = vmul.f32 1.0, %v7203
        %v7205 = vrcp.pop %v7028
        %v7206 = vmul.f32 1.0, %v7205
        %v7207 = vrcp.pop %v7029
        %v7208 = vmul.f32 1.0, %v7207
        %v7209 = vrcp.pop %v7030
        %v7210 = vmul.f32 1.0, %v7209
        %v7211 = vrcp.pop %v7031
        %v7212 = vmul.f32 1.0, %v7211
        %v7213 = vrcp.pop %v7032
        %v7214 = vmul.f32 1.0, %v7213
        %v7215 = vrcp.pop %v7033
        %v7216 = vmul.f32 1.0, %v7215
        %v7217 = vrcp.pop %v7034
        %v7218 = vmul.f32 1.0, %v7217
        %v7219 = vrcp.pop %v7035
        %v7220 = vmul.f32 1.0, %v7219
        %v7221 = vrcp.pop %v7036
        %v7222 = vmul.f32 1.0, %v7221
        %v7223 = vrcp.pop %v7037
        %v7224 = vmul.f32 1.0, %v7223
        %v7225 = vrcp.pop %v7038
        %v7226 = vmul.f32 1.0, %v7225
        %v7227 = vrcp.pop %v7039
        %v7228 = vmul.f32 1.0, %v7227
        %v7229 = vrcp.pop %v7040
        %v7230 = vmul.f32 1.0, %v7229
        %v7231 = vrcp.pop %v7041
        %v7232 = vmul.f32 1.0, %v7231
        %v7233 = vrcp.pop %v7042
        %v7234 = vmul.f32 1.0, %v7233
        %v7235 = vrcp.pop %v7043
        %v7236 = vmul.f32 1.0, %v7235
        %v7237 = vrcp.pop %v7044
        %v7238 = vmul.f32 1.0, %v7237
        %v7239 = vrcp.pop %v7045
        %v7240 = vmul.f32 1.0, %v7239
        %v7241 = vrcp.pop %v7046
        %v7242 = vmul.f32 1.0, %v7241
        %7243 = vst [vmem:[%s195] sm:$0xff] %v7048
        %7244 = vst [vmem:[%s195 + $0x8] sm:$0xff] %v7050
        %7245 = vst [vmem:[%s195 + $0x10] sm:$0xff] %v7052
        %7246 = vst [vmem:[%s195 + $0x18] sm:$0xff] %v7054
        %7247 = vst [vmem:[%s195 + $0x20] sm:$0xff] %v7056
        %7248 = vst [vmem:[%s195 + $0x28] sm:$0xff] %v7058
        %7249 = vst [vmem:[%s195 + $0x30] sm:$0xff] %v7060
        %7250 = vst [vmem:[%s195 + $0x38] sm:$0xff] %v7062
        %7251 = vst [vmem:[%s195 + $0x40] sm:$0xff] %v7064
        %7252 = vst [vmem:[%s195 + $0x48] sm:$0xff] %v7066
        %7253 = vst [vmem:[%s195 + $0x50] sm:$0xff] %v7068
        %7254 = vst [vmem:[%s195 + $0x58] sm:$0xff] %v7070
        %7255 = vst [vmem:[%s195 + $0x60] sm:$0xff] %v7072
        %7256 = vst [vmem:[%s195 + $0x68] sm:$0xff] %v7074
        %7257 = vst [vmem:[%s195 + $0x70] sm:$0xff] %v7076
        %7258 = vst [vmem:[%s195 + $0x78] sm:$0xff] %v7078
        %7259 = vst [vmem:[%s195 + $0x80] sm:$0xff] %v7080
        %7260 = vst [vmem:[%s195 + $0x88] sm:$0xff] %v7082
        %7261 = vst [vmem:[%s195 + $0x90] sm:$0xff] %v7084
        %7262 = vst [vmem:[%s195 + $0x98] sm:$0xff] %v7086
        %7263 = vst [vmem:[%s195 + $0xa0] sm:$0xff] %v7088
        %7264 = vst [vmem:[%s195 + $0xa8] sm:$0xff] %v7090
        %7265 = vst [vmem:[%s195 + $0xb0] sm:$0xff] %v7092
        %7266 = vst [vmem:[%s195 + $0xb8] sm:$0xff] %v7094
        %7267 = vst [vmem:[%s195 + $0xc0] sm:$0xff] %v7096
        %7268 = vst [vmem:[%s195 + $0xc8] sm:$0xff] %v7098
        %7269 = vst [vmem:[%s195 + $0xd0] sm:$0xff] %v7100
        %7270 = vst [vmem:[%s195 + $0xd8] sm:$0xff] %v7102
        %7271 = vst [vmem:[%s195 + $0xe0] sm:$0xff] %v7104
        %7272 = vst [vmem:[%s195 + $0xe8] sm:$0xff] %v7106
        %7273 = vst [vmem:[%s195 + $0xf0] sm:$0xff] %v7108
        %7274 = vst [vmem:[%s195 + $0xf8] sm:$0xff] %v7110
        %7275 = vst [vmem:[%s195 + $0x100] sm:$0xff] %v7112
        %7276 = vst [vmem:[%s195 + $0x108] sm:$0xff] %v7114
        %7277 = vst [vmem:[%s195 + $0x110] sm:$0xff] %v7116
        %7278 = vst [vmem:[%s195 + $0x118] sm:$0xff] %v7118
        %7279 = vst [vmem:[%s195 + $0x120] sm:$0xff] %v7120
        %7280 = vst [vmem:[%s195 + $0x128] sm:$0xff] %v7122
        %7281 = vst [vmem:[%s195 + $0x130] sm:$0xff] %v7124
        %7282 = vst [vmem:[%s195 + $0x138] sm:$0xff] %v7126
        %7283 = vst [vmem:[%s195 + $0x140] sm:$0xff] %v7128
        %7284 = vst [vmem:[%s195 + $0x148] sm:$0xff] %v7130
        %7285 = vst [vmem:[%s195 + $0x150] sm:$0xff] %v7132
        %7286 = vst [vmem:[%s195 + $0x158] sm:$0xff] %v7134
        %7287 = vst [vmem:[%s195 + $0x160] sm:$0xff] %v7136
        %7288 = vst [vmem:[%s195 + $0x168] sm:$0xff] %v7138
        %7289 = vst [vmem:[%s195 + $0x170] sm:$0xff] %v7140
        %7290 = vst [vmem:[%s195 + $0x178] sm:$0xff] %v7142
        %7291 = vst [vmem:[%s195 + $0x180] sm:$0xff] %v7144
        %7292 = vst [vmem:[%s195 + $0x188] sm:$0xff] %v7146
        %7293 = vst [vmem:[%s195 + $0x190] sm:$0xff] %v7148
        %7294 = vst [vmem:[%s195 + $0x198] sm:$0xff] %v7150
        %7295 = vst [vmem:[%s195 + $0x1a0] sm:$0xff] %v7152
        %7296 = vst [vmem:[%s195 + $0x1a8] sm:$0xff] %v7154
        %7297 = vst [vmem:[%s195 + $0x1b0] sm:$0xff] %v7156
        %7298 = vst [vmem:[%s195 + $0x1b8] sm:$0xff] %v7158
        %7299 = vst [vmem:[%s195 + $0x1c0] sm:$0xff] %v7160
        %7300 = vst [vmem:[%s195 + $0x1c8] sm:$0xff] %v7162
        %7301 = vst [vmem:[%s195 + $0x1d0] sm:$0xff] %v7164
        %7302 = vst [vmem:[%s195 + $0x1d8] sm:$0xff] %v7166
        %7303 = vst [vmem:[%s195 + $0x1e0] sm:$0xff] %v7168
        %7304 = vst [vmem:[%s195 + $0x1e8] sm:$0xff] %v7170
        %7305 = vst [vmem:[%s195 + $0x1f0] sm:$0xff] %v7172
        %7306 = vst [vmem:[%s195 + $0x1f8] sm:$0xff] %v7174
        %7307 = vst [vmem:[%s195 + $0x200] sm:$0xff] %v7176
        %7308 = vst [vmem:[%s195 + $0x208] sm:$0xff] %v7178
        %7309 = vst [vmem:[%s195 + $0x210] sm:$0xff] %v7180
        %7310 = vst [vmem:[%s195 + $0x218] sm:$0xff] %v7182
        %7311 = vst [vmem:[%s195 + $0x220] sm:$0xff] %v7184
        %7312 = vst [vmem:[%s195 + $0x228] sm:$0xff] %v7186
        %7313 = vst [vmem:[%s195 + $0x230] sm:$0xff] %v7188
        %7314 = vst [vmem:[%s195 + $0x238] sm:$0xff] %v7190
        %7315 = vst [vmem:[%s195 + $0x240] sm:$0xff] %v7192
        %7316 = vst [vmem:[%s195 + $0x248] sm:$0xff] %v7194
        %7317 = vst [vmem:[%s195 + $0x250] sm:$0xff] %v7196
        %7318 = vst [vmem:[%s195 + $0x258] sm:$0xff] %v7198
        %7319 = vst [vmem:[%s195 + $0x260] sm:$0xff] %v7200
        %7320 = vst [vmem:[%s195 + $0x268] sm:$0xff] %v7202
        %7321 = vst [vmem:[%s195 + $0x270] sm:$0xff] %v7204
        %7322 = vst [vmem:[%s195 + $0x278] sm:$0xff] %v7206
        %7323 = vst [vmem:[%s195 + $0x280] sm:$0xff] %v7208
        %7324 = vst [vmem:[%s195 + $0x288] sm:$0xff] %v7210
        %7325 = vst [vmem:[%s195 + $0x290] sm:$0xff] %v7212
        %7326 = vst [vmem:[%s195 + $0x298] sm:$0xff] %v7214
        %7327 = vst [vmem:[%s195 + $0x2a0] sm:$0xff] %v7216
        %7328 = vst [vmem:[%s195 + $0x2a8] sm:$0xff] %v7218
        %7329 = vst [vmem:[%s195 + $0x2b0] sm:$0xff] %v7220
        %7330 = vst [vmem:[%s195 + $0x2b8] sm:$0xff] %v7222
        %7331 = vst [vmem:[%s195 + $0x2c0] sm:$0xff] %v7224
        %7332 = vst [vmem:[%s195 + $0x2c8] sm:$0xff] %v7226
        %7333 = vst [vmem:[%s195 + $0x2d0] sm:$0xff] %v7228
        %7334 = vst [vmem:[%s195 + $0x2d8] sm:$0xff] %v7230
        %7335 = vst [vmem:[%s195 + $0x2e0] sm:$0xff] %v7232
        %7336 = vst [vmem:[%s195 + $0x2e8] sm:$0xff] %v7234
        %7337 = vst [vmem:[%s195 + $0x2f0] sm:$0xff] %v7236
        %7338 = vst [vmem:[%s195 + $0x2f8] sm:$0xff] %v7238
        %7339 = vst [vmem:[%s195 + $0x300] sm:$0xff] %v7240
        %7340 = vst [vmem:[%s195 + $0x308] sm:$0xff] %v7242
        %s7341 = sand.u32 %s97, 1
        %s7342 = scalar_lea.sflag [#allocation5], %s7341
        %s7343 = sand.u32 %s97, 1
        %s7344 = smul.addr %s7343, 784
        %s7345 = scalar_lea.vmem [#allocation6], %s7344
        // Predicated region
        $region37: #{tpu_custom_call.1} parent=31 // pred_check
          %p7346 = pneg %p107
        $region38: #{tpu_custom_call.1} parent=31 // pred_check_branch
          %7348 = sbr.rel (%p7346) target = $region40
        $region39: #{tpu_custom_call.1} parent=31 // pred_region
          %s7349 = smul.u32 49, %s21
          %s7351 = ssub.s32 12544, 12544
          %7352 = vsyncadd %s7342, %s7351
          %s7353 = smul.addr %s7349, 128
          %s7354 = scalar_lea.hbm %s3, %s7353
          %s7355 = sshll.u32 %s7345, 4
          %s7356 = int_to_ptr.vmem [resolvable:$true] %s7355
          %7361 = dma.vmem_to_hbm [thread:$0]  %s7356, 12544, %s7354, %s7342, 6272, 12544, 392
        $region40: #{tpu_custom_call.1} parent=31 // pred_fallthru
          _
      $region32: #{tpu_custom_call.1} parent=5 // pred_fallthru
        _
      %p7362 = scmp.le.s32.totalorder 2, %s16
      // Predicated region
      $region41: #{tpu_custom_call.1} parent=5 // pred_check
        %p7363 = pneg %p7362
      $region42: #{tpu_custom_call.1} parent=5 // pred_check_branch
        %7365 = sbr.rel (%p7363) target = $region44
      $region43: #{tpu_custom_call.1} parent=5 // pred_region
        %s7366 = ssub.s32 %s16, 2
        // Predicated region
        $region45: #{tpu_custom_call.1} parent=43 // pred_check
          %p7367 = pneg %p113
        $region46: #{tpu_custom_call.1} parent=43 // pred_check_branch
          %7369 = sbr.rel (%p7367) target = $region48
        $region47: #{tpu_custom_call.1} parent=43 // pred_region
          %s7370 = sand.u32 %s98, 1
          %s7371 = scalar_lea.sflag [#allocation5], %s7370
          %s7372 = sand.u32 %s98, 1
          %s7373 = smul.addr %s7372, 784
          %s7374 = scalar_lea.vmem [#allocation6], %s7373
          %7375 = dma.done %s7371, 12544
        $region48: #{tpu_custom_call.1} parent=43 // pred_fallthru
          _
      $region44: #{tpu_custom_call.1} parent=5 // pred_fallthru
        _
    $region6: #{tpu_custom_call.1} parent=1 // loop_footer
      %s20 = sadd.s32 1, %s16
    $region7: #{tpu_custom_call.1} parent=1 // loop_footer_branch
      %15 = sbr.rel target = $region3
    $region8: #{tpu_custom_call.1} parent=1 // loop_exit
      _
    %7376 = vsyncpa [#allocation4], 1
    %s7377 = scalar_lea.sflag [#allocation4], 1
    %7378 = vsyncpa %s7377, 1
    %7379 = vsyncpa [#allocation5], 1
    %s7380 = scalar_lea.sflag [#allocation5], 1
    %7381 = vsyncpa %s7380, 1

</llo_original>
